<compile_context>
chip_gen: v7x
topology: tpu7x:2x2x1
jax: 0.10.0
libtpu: 0.0.40
codegen_flags: <defaults>
</compile_context>

<pallas_src>
import jax
import jax.numpy as jnp
from jax import lax
from jax.experimental import pallas as pl
from jax.experimental.pallas import tpu as pltpu


def _gru3_kernel(x_ref,
                 wi0_ref, wh0_ref, b0_ref,
                 wi1_ref, wh1_ref, b1_ref,
                 wi2_ref, wh2_ref, b2_ref,
                 fcw_ref, fcb_ref,
                 out_ref):
    """3-layer GRU over the full sequence (one batch block) + linear head.

    x_ref   : (T, Bb, D)  bf16  input sequence block
    wiL_ref : (3, in, H)  bf16  per-gate input weights, gate order (r, z, n)
    whL_ref : (3, H, H)   bf16  per-gate hidden weights
    bL_ref  : (4, 1, H)   f32   [b_r (folded), b_z (folded), b_in, b_hn]
    fcw_ref : (H, NCp)    f32   classifier weight, lane-padded to 128
    fcb_ref : (1, NCp)    f32
    out_ref : (Bb, NCp)   f32
    """
    T, Bb, _ = x_ref.shape
    H = wh0_ref.shape[1]

    # Hoist bias broadcasts out of the (unrolled) time loop: 12 small (Bb, H)
    # f32 values.  JAX does not CSE broadcast_in_dim, so doing this per cell
    # would re-broadcast T * 3 times on the serial critical path.
    def load_bias(b_ref):
        return tuple(jnp.broadcast_to(b_ref[g], (Bb, H)) for g in range(4))

    bias0 = load_bias(b0_ref)
    bias1 = load_bias(b1_ref)
    bias2 = load_bias(b2_ref)

    def cell(inp, h_prev, wi_ref, wh_ref, bias):
        # PyTorch GRU cell, gate order (r, z, n):
        #   r = sigmoid(W_ir x + W_hr h + b_r)        (b_r = b_ir + b_hr, folded)
        #   z = sigmoid(W_iz x + W_hz h + b_z)        (b_z = b_iz + b_hz, folded)
        #   n = tanh  (W_in x + b_in + r * (W_hn h + b_hn))
        #   h = (1 - z) * n + z * h
        b_r, b_z, b_in, b_hn = bias
        xb = inp.astype(jnp.bfloat16)      # MXU inputs in bf16,
        hb = h_prev.astype(jnp.bfloat16)   # accumulation / gate math in f32.
        # Weights are read from the VMEM refs here (NOT hoisted before the
        # unrolled loop): vld is cheap (3/cycle), spilled weight vregs are not.
        r = jax.nn.sigmoid(
            jnp.dot(xb, wi_ref[0], preferred_element_type=jnp.float32)
            + jnp.dot(hb, wh_ref[0], preferred_element_type=jnp.float32)
            + b_r)
        z = jax.nn.sigmoid(
            jnp.dot(xb, wi_ref[1], preferred_element_type=jnp.float32)
            + jnp.dot(hb, wh_ref[1], preferred_element_type=jnp.float32)
            + b_z)
        n = jnp.tanh(
            jnp.dot(xb, wi_ref[2], preferred_element_type=jnp.float32) + b_in
            + r * (jnp.dot(hb, wh_ref[2], preferred_element_type=jnp.float32)
                   + b_hn))
        return (1.0 - z) * n + z * h_prev

    h0 = jnp.zeros((Bb, H), jnp.float32)
    h1 = jnp.zeros((Bb, H), jnp.float32)
    h2 = jnp.zeros((Bb, H), jnp.float32)

    # Fully unrolled time loop (T is small and static).  The kernel is
    # latency-bound on a serial chain of T*3 GRU cells; exposing all of it to
    # the scheduler lets cell k+1's matmuls overlap cell k's gate math.
    for t in range(T):
        x_t = x_ref[t]                     # (Bb, D), static index
        h0 = cell(x_t, h0, wi0_ref, wh0_ref, bias0)
        h1 = cell(h0, h1, wi1_ref, wh1_ref, bias1)
        h2 = cell(h1, h2, wi2_ref, wh2_ref, bias2)

    # Classifier on the last hidden state of the top layer.  Output block is
    # lane-dense (padded to a multiple of 128); single tiny f32 matmul.
    out_ref[...] = (jnp.dot(h2, fcw_ref[...],
                            preferred_element_type=jnp.float32)
                    + fcb_ref[...])


def init_params(key, dim_fc, hidden_dim, num_classes):
    """Deterministic init mirroring PyTorch GRU/Linear uniform(-k, k)."""
    params = {}
    keys = jax.random.split(key, 14)
    ki = iter(range(14))
    k_gru = 1.0 / jnp.sqrt(jnp.float32(hidden_dim))

    def uni(k, shape, bound):
        return jax.random.uniform(k, shape, jnp.float32, -bound, bound)

    for l in range(3):
        in_dim = dim_fc if l == 0 else hidden_dim
        params[f"w_ih_l{l}"] = uni(keys[next(ki)], (3 * hidden_dim, in_dim), k_gru)
        params[f"w_hh_l{l}"] = uni(keys[next(ki)], (3 * hidden_dim, hidden_dim), k_gru)
        params[f"b_ih_l{l}"] = uni(keys[next(ki)], (3 * hidden_dim,), k_gru)
        params[f"b_hh_l{l}"] = uni(keys[next(ki)], (3 * hidden_dim,), k_gru)

    k_fc = 1.0 / jnp.sqrt(jnp.float32(hidden_dim))
    params["fc_w"] = uni(keys[next(ki)], (num_classes, hidden_dim), k_fc)
    params["fc_b"] = uni(keys[next(ki)], (num_classes,), k_fc)
    return params


def _per_layer_args(params, layer, hidden_dim):
    """Pre-split / pre-fold one GRU layer's params for the kernel."""
    H = hidden_dim
    w_ih = jnp.asarray(params[f"w_ih_l{layer}"], jnp.float32)   # (3H, in)
    w_hh = jnp.asarray(params[f"w_hh_l{layer}"], jnp.float32)   # (3H, H)
    b_ih = jnp.asarray(params[f"b_ih_l{layer}"], jnp.float32)   # (3H,)
    b_hh = jnp.asarray(params[f"b_hh_l{layer}"], jnp.float32)   # (3H,)

    # Per-gate, transposed to (in, H) so each gate matmul result is
    # lane-aligned at offset 0; bf16 for the MXU (halves weight footprint).
    wi = jnp.stack([w_ih[g * H:(g + 1) * H, :].T for g in range(3)]
                   ).astype(jnp.bfloat16)                       # (3, in, H)
    wh = jnp.stack([w_hh[g * H:(g + 1) * H, :].T for g in range(3)]
                   ).astype(jnp.bfloat16)                       # (3, H, H)

    # Fold r/z input+hidden biases; keep n-gate biases separate because b_hn
    # sits inside the r * (W_hn h + b_hn) term.
    b_r = (b_ih[0:H] + b_hh[0:H]).reshape(1, H)
    b_z = (b_ih[H:2 * H] + b_hh[H:2 * H]).reshape(1, H)
    b_in = b_ih[2 * H:3 * H].reshape(1, H)
    b_hn = b_hh[2 * H:3 * H].reshape(1, H)
    bias = jnp.stack([b_r, b_z, b_in, b_hn]).astype(jnp.float32)  # (4, 1, H)
    return wi, wh, bias


def gru3v1_forward(x, params, hidden_dim, num_classes):
    """Matches GRU3V1.forward: returns (logits, [])."""
    B, C, Hh, W = x.shape
    D = C * Hh
    T = W
    H = hidden_dim

    # PyTorch: x0.view(B, -1, W).permute(0, 2, 1) -> (B, T=W, D=C*Hh).
    # Put time leading -> (T, B, D) so the in-kernel time loop statically
    # indexes the leading dim; cast to bf16 for the MXU.
    # NOTE: at these toy sizes each (B, D) timestep pads to an (8, 128) tile;
    # if T/D are ever scaled up, pack D toward a multiple of 128 first.
    x_tbd = x.reshape(B, D, W).transpose(2, 0, 1).astype(jnp.bfloat16)

    # Lane-dense classifier head: pad num_classes up to a multiple of 128 and
    # slice outside the kernel (keeps the only output store unmasked).
    nc_pad = ((num_classes + 127) // 128) * 128
    fc_w = jnp.asarray(params["fc_w"], jnp.float32)   # (num_classes, H)
    fc_b = jnp.asarray(params["fc_b"], jnp.float32)   # (num_classes,)
    fcw_pad = jnp.zeros((H, nc_pad), jnp.float32).at[:, :num_classes].set(fc_w.T)
    fcb_pad = jnp.zeros((1, nc_pad), jnp.float32).at[:, :num_classes].set(
        fc_b.reshape(1, -1))

    layer_args = []
    for l in range(3):
        layer_args.extend(_per_layer_args(params, l, H))

    # Batch grid axis: degenerate (grid of 1) at toy sizes, but marked
    # "parallel" so that with a larger B (and a sublane-friendly batch block,
    # i.e. a multiple of 8) the two TensorCores of a v7x chip both run.
    # For a scaled-up hidden_dim, weights would additionally be tiled /
    # vmem_limit_bytes raised; at H=32 everything is trivially VMEM-resident.
    b_blk = B
    grid = (pl.cdiv(B, b_blk),)

    def replicated(arr):
        zeros = (0,) * arr.ndim
        return pl.BlockSpec(arr.shape, lambda b: zeros)

    in_specs = [pl.BlockSpec((T, b_blk, D), lambda b: (0, b, 0))]
    in_specs += [replicated(a) for a in layer_args]
    in_specs += [replicated(fcw_pad), replicated(fcb_pad)]
    out_specs = pl.BlockSpec((b_blk, nc_pad), lambda b: (b, 0))

    logits_pad = pl.pallas_call(
        _gru3_kernel,
        out_shape=jax.ShapeDtypeStruct((B, nc_pad), jnp.float32),
        grid=grid,
        in_specs=in_specs,
        out_specs=out_specs,
        compiler_params=pltpu.CompilerParams(
            dimension_semantics=("parallel",)),
    )(x_tbd, *layer_args, fcw_pad, fcb_pad)

    return logits_pad[:, :num_classes], []


def reference_forward(x, params, hidden_dim, num_classes):
    """Pure-JAX (f32) reference of the PyTorch forward."""
    B, C, Hh, W = x.shape
    xs = x.reshape(B, C * Hh, W).transpose(0, 2, 1).astype(jnp.float32)
    H = hidden_dim
    h = [jnp.zeros((B, H), jnp.float32) for _ in range(3)]

    def cell(inp, hp, wih, whh, bih, bhh):
        gi = inp @ wih.T + bih
        gh = hp @ whh.T + bhh
        r = jax.nn.sigmoid(gi[:, :H] + gh[:, :H])
        z = jax.nn.sigmoid(gi[:, H:2 * H] + gh[:, H:2 * H])
        n = jnp.tanh(gi[:, 2 * H:] + r * gh[:, 2 * H:])
        return (1.0 - z) * n + z * hp

    for t in range(W):
        inp = xs[:, t, :]
        for l in range(3):
            h[l] = cell(inp, h[l],
                        params[f"w_ih_l{l}"], params[f"w_hh_l{l}"],
                        params[f"b_ih_l{l}"], params[f"b_hh_l{l}"])
            inp = h[l]
    return h[2] @ params["fc_w"].T + params["fc_b"]


if __name__ == "__main__":
    # Small shapes consistent with the module: x is NCHW, dim_fc = C * H,
    # sequence length = W.
    B, C, Hh, W = 2, 3, 8, 8          # dim_fc = 24, seq_len = 8
    hidden_dim = 32
    num_classes = 10

    key = jax.random.PRNGKey(0)
    kx, kp = jax.random.split(key)
    x = jax.random.normal(kx, (B, C, Hh, W), dtype=jnp.float32)
    params = init_params(kp, dim_fc=C * Hh, hidden_dim=hidden_dim,
                         num_classes=num_classes)

    logits, action_all = gru3v1_forward(x, params, hidden_dim, num_classes)
    logits = jax.block_until_ready(logits)

    ref = jax.block_until_ready(
        reference_forward(x, params, hidden_dim, num_classes))
    assert logits.shape == (B, num_classes)
    assert action_all == []
    # Kernel uses bf16 MXU inputs with f32 accumulation; reference is pure f32.
    assert jnp.allclose(logits, ref, rtol=5e-2, atol=5e-2), (
        f"mismatch: max abs diff {jnp.max(jnp.abs(logits - ref))}")

    print("KERNEL_OK")
</pallas_src>

<mosaic_0001>
module attributes {stable_mosaic.version = 11 : i64} {
  func.func @_gru3_kernel(%arg0: i32, %arg1: memref<8x2x24xbf16, #tpu.memory_space<vmem>>, %arg2: memref<3x24x32xbf16, #tpu.memory_space<vmem>>, %arg3: memref<3x32x32xbf16, #tpu.memory_space<vmem>>, %arg4: memref<4x1x32xf32, #tpu.memory_space<vmem>>, %arg5: memref<3x32x32xbf16, #tpu.memory_space<vmem>>, %arg6: memref<3x32x32xbf16, #tpu.memory_space<vmem>>, %arg7: memref<4x1x32xf32, #tpu.memory_space<vmem>>, %arg8: memref<3x32x32xbf16, #tpu.memory_space<vmem>>, %arg9: memref<3x32x32xbf16, #tpu.memory_space<vmem>>, %arg10: memref<4x1x32xf32, #tpu.memory_space<vmem>>, %arg11: memref<32x128xf32, #tpu.memory_space<vmem>>, %arg12: memref<1x128xf32, #tpu.memory_space<vmem>>, %arg13: memref<2x128xf32, #tpu.memory_space<vmem>>) attributes {dimension_semantics = [#tpu.dimension_semantics<parallel>], iteration_bounds = array<i64: 1>, scalar_prefetch = 0 : i64, scratch_operands = 0 : i64, tpu.core_type = #tpu.core_type<tc>, window_params = [{transform_indices = @transform_0, window_bounds = array<i64: 8, 2, 24>}, {pipeline_mode = #tpu.pipeline_mode<synchronous>, transform_indices = @transform_1, window_bounds = array<i64: 3, 24, 32>}, {pipeline_mode = #tpu.pipeline_mode<synchronous>, transform_indices = @transform_2, window_bounds = array<i64: 3, 32, 32>}, {pipeline_mode = #tpu.pipeline_mode<synchronous>, transform_indices = @transform_3, window_bounds = array<i64: 4, 1, 32>}, {pipeline_mode = #tpu.pipeline_mode<synchronous>, transform_indices = @transform_4, window_bounds = array<i64: 3, 32, 32>}, {pipeline_mode = #tpu.pipeline_mode<synchronous>, transform_indices = @transform_5, window_bounds = array<i64: 3, 32, 32>}, {pipeline_mode = #tpu.pipeline_mode<synchronous>, transform_indices = @transform_6, window_bounds = array<i64: 4, 1, 32>}, {pipeline_mode = #tpu.pipeline_mode<synchronous>, transform_indices = @transform_7, window_bounds = array<i64: 3, 32, 32>}, {pipeline_mode = #tpu.pipeline_mode<synchronous>, transform_indices = @transform_8, window_bounds = array<i64: 3, 32, 32>}, {pipeline_mode = #tpu.pipeline_mode<synchronous>, transform_indices = @transform_9, window_bounds = array<i64: 4, 1, 32>}, {pipeline_mode = #tpu.pipeline_mode<synchronous>, transform_indices = @transform_10, window_bounds = array<i64: 32, 128>}, {pipeline_mode = #tpu.pipeline_mode<synchronous>, transform_indices = @transform_11, window_bounds = array<i64: 1, 128>}, {transform_indices = @transform_12, window_bounds = array<i64: 2, 128>}]} {
    %c0 = arith.constant 0 : index
    %c0_0 = arith.constant 0 : index
    %c0_1 = arith.constant 0 : index
    %0 = vector.load %arg4[%c0, %c0_0, %c0_1] : memref<4x1x32xf32, #tpu.memory_space<vmem>>, vector<1x1x32xf32>
    %1 = vector.shape_cast %0 : vector<1x1x32xf32> to vector<1x32xf32>
    %2 = vector.shape_cast %1 : vector<1x32xf32> to vector<1x32xf32>
    %3 = vector.broadcast %2 : vector<1x32xf32> to vector<2x32xf32>
    %c1 = arith.constant 1 : index
    %c0_2 = arith.constant 0 : index
    %c0_3 = arith.constant 0 : index
    %4 = vector.load %arg4[%c1, %c0_2, %c0_3] : memref<4x1x32xf32, #tpu.memory_space<vmem>>, vector<1x1x32xf32>
    %5 = vector.shape_cast %4 : vector<1x1x32xf32> to vector<1x32xf32>
    %6 = vector.shape_cast %5 : vector<1x32xf32> to vector<1x32xf32>
    %7 = vector.broadcast %6 : vector<1x32xf32> to vector<2x32xf32>
    %c2 = arith.constant 2 : index
    %c0_4 = arith.constant 0 : index
    %c0_5 = arith.constant 0 : index
    %8 = vector.load %arg4[%c2, %c0_4, %c0_5] : memref<4x1x32xf32, #tpu.memory_space<vmem>>, vector<1x1x32xf32>
    %9 = vector.shape_cast %8 : vector<1x1x32xf32> to vector<1x32xf32>
    %10 = vector.shape_cast %9 : vector<1x32xf32> to vector<1x32xf32>
    %11 = vector.broadcast %10 : vector<1x32xf32> to vector<2x32xf32>
    %c3 = arith.constant 3 : index
    %c0_6 = arith.constant 0 : index
    %c0_7 = arith.constant 0 : index
    %12 = vector.load %arg4[%c3, %c0_6, %c0_7] : memref<4x1x32xf32, #tpu.memory_space<vmem>>, vector<1x1x32xf32>
    %13 = vector.shape_cast %12 : vector<1x1x32xf32> to vector<1x32xf32>
    %14 = vector.shape_cast %13 : vector<1x32xf32> to vector<1x32xf32>
    %15 = vector.broadcast %14 : vector<1x32xf32> to vector<2x32xf32>
    %c0_8 = arith.constant 0 : index
    %c0_9 = arith.constant 0 : index
    %c0_10 = arith.constant 0 : index
    %16 = vector.load %arg7[%c0_8, %c0_9, %c0_10] : memref<4x1x32xf32, #tpu.memory_space<vmem>>, vector<1x1x32xf32>
    %17 = vector.shape_cast %16 : vector<1x1x32xf32> to vector<1x32xf32>
    %18 = vector.shape_cast %17 : vector<1x32xf32> to vector<1x32xf32>
    %19 = vector.broadcast %18 : vector<1x32xf32> to vector<2x32xf32>
    %c1_11 = arith.constant 1 : index
    %c0_12 = arith.constant 0 : index
    %c0_13 = arith.constant 0 : index
    %20 = vector.load %arg7[%c1_11, %c0_12, %c0_13] : memref<4x1x32xf32, #tpu.memory_space<vmem>>, vector<1x1x32xf32>
    %21 = vector.shape_cast %20 : vector<1x1x32xf32> to vector<1x32xf32>
    %22 = vector.shape_cast %21 : vector<1x32xf32> to vector<1x32xf32>
    %23 = vector.broadcast %22 : vector<1x32xf32> to vector<2x32xf32>
    %c2_14 = arith.constant 2 : index
    %c0_15 = arith.constant 0 : index
    %c0_16 = arith.constant 0 : index
    %24 = vector.load %arg7[%c2_14, %c0_15, %c0_16] : memref<4x1x32xf32, #tpu.memory_space<vmem>>, vector<1x1x32xf32>
    %25 = vector.shape_cast %24 : vector<1x1x32xf32> to vector<1x32xf32>
    %26 = vector.shape_cast %25 : vector<1x32xf32> to vector<1x32xf32>
    %27 = vector.broadcast %26 : vector<1x32xf32> to vector<2x32xf32>
    %c3_17 = arith.constant 3 : index
    %c0_18 = arith.constant 0 : index
    %c0_19 = arith.constant 0 : index
    %28 = vector.load %arg7[%c3_17, %c0_18, %c0_19] : memref<4x1x32xf32, #tpu.memory_space<vmem>>, vector<1x1x32xf32>
    %29 = vector.shape_cast %28 : vector<1x1x32xf32> to vector<1x32xf32>
    %30 = vector.shape_cast %29 : vector<1x32xf32> to vector<1x32xf32>
    %31 = vector.broadcast %30 : vector<1x32xf32> to vector<2x32xf32>
    %c0_20 = arith.constant 0 : index
    %c0_21 = arith.constant 0 : index
    %c0_22 = arith.constant 0 : index
    %32 = vector.load %arg10[%c0_20, %c0_21, %c0_22] : memref<4x1x32xf32, #tpu.memory_space<vmem>>, vector<1x1x32xf32>
    %33 = vector.shape_cast %32 : vector<1x1x32xf32> to vector<1x32xf32>
    %34 = vector.shape_cast %33 : vector<1x32xf32> to vector<1x32xf32>
    %35 = vector.broadcast %34 : vector<1x32xf32> to vector<2x32xf32>
    %c1_23 = arith.constant 1 : index
    %c0_24 = arith.constant 0 : index
    %c0_25 = arith.constant 0 : index
    %36 = vector.load %arg10[%c1_23, %c0_24, %c0_25] : memref<4x1x32xf32, #tpu.memory_space<vmem>>, vector<1x1x32xf32>
    %37 = vector.shape_cast %36 : vector<1x1x32xf32> to vector<1x32xf32>
    %38 = vector.shape_cast %37 : vector<1x32xf32> to vector<1x32xf32>
    %39 = vector.broadcast %38 : vector<1x32xf32> to vector<2x32xf32>
    %c2_26 = arith.constant 2 : index
    %c0_27 = arith.constant 0 : index
    %c0_28 = arith.constant 0 : index
    %40 = vector.load %arg10[%c2_26, %c0_27, %c0_28] : memref<4x1x32xf32, #tpu.memory_space<vmem>>, vector<1x1x32xf32>
    %41 = vector.shape_cast %40 : vector<1x1x32xf32> to vector<1x32xf32>
    %42 = vector.shape_cast %41 : vector<1x32xf32> to vector<1x32xf32>
    %43 = vector.broadcast %42 : vector<1x32xf32> to vector<2x32xf32>
    %c3_29 = arith.constant 3 : index
    %c0_30 = arith.constant 0 : index
    %c0_31 = arith.constant 0 : index
    %44 = vector.load %arg10[%c3_29, %c0_30, %c0_31] : memref<4x1x32xf32, #tpu.memory_space<vmem>>, vector<1x1x32xf32>
    %45 = vector.shape_cast %44 : vector<1x1x32xf32> to vector<1x32xf32>
    %46 = vector.shape_cast %45 : vector<1x32xf32> to vector<1x32xf32>
    %47 = vector.broadcast %46 : vector<1x32xf32> to vector<2x32xf32>
    %cst = arith.constant 0.000000e+00 : f32
    %48 = vector.broadcast %cst : f32 to vector<2x32xf32>
    %cst_32 = arith.constant 0.000000e+00 : f32
    %49 = vector.broadcast %cst_32 : f32 to vector<2x32xf32>
    %cst_33 = arith.constant 0.000000e+00 : f32
    %50 = vector.broadcast %cst_33 : f32 to vector<2x32xf32>
    %c0_34 = arith.constant 0 : index
    %c0_35 = arith.constant 0 : index
    %c0_36 = arith.constant 0 : index
    %51 = vector.load %arg1[%c0_34, %c0_35, %c0_36] : memref<8x2x24xbf16, #tpu.memory_space<vmem>>, vector<1x2x24xbf16>
    %52 = vector.shape_cast %51 : vector<1x2x24xbf16> to vector<2x24xbf16>
    %53 = arith.truncf %48 : vector<2x32xf32> to vector<2x32xbf16>
    %c0_37 = arith.constant 0 : index
    %c0_38 = arith.constant 0 : index
    %c0_39 = arith.constant 0 : index
    %54 = vector.load %arg2[%c0_37, %c0_38, %c0_39] : memref<3x24x32xbf16, #tpu.memory_space<vmem>>, vector<1x24x32xbf16>
    %55 = vector.shape_cast %54 : vector<1x24x32xbf16> to vector<24x32xbf16>
    %cst_40 = arith.constant dense<0.000000e+00> : vector<2x32xf32>
    %56 = tpu.matmul %52, %55, %cst_40 {dimension_numbers = #tpu.dot_dimension_numbers<[1], [0], [0], [1], [0, 0, 1, 1], [], []>} : vector<2x24xbf16>, vector<24x32xbf16>, vector<2x32xf32> -> vector<2x32xf32>
    %c0_41 = arith.constant 0 : index
    %c0_42 = arith.constant 0 : index
    %c0_43 = arith.constant 0 : index
    %57 = vector.load %arg3[%c0_41, %c0_42, %c0_43] : memref<3x32x32xbf16, #tpu.memory_space<vmem>>, vector<1x32x32xbf16>
    %58 = vector.shape_cast %57 : vector<1x32x32xbf16> to vector<32x32xbf16>
    %cst_44 = arith.constant dense<0.000000e+00> : vector<2x32xf32>
    %59 = tpu.matmul %53, %58, %cst_44 {dimension_numbers = #tpu.dot_dimension_numbers<[1], [0], [0], [1], [0, 0, 1, 1], [], []>} : vector<2x32xbf16>, vector<32x32xbf16>, vector<2x32xf32> -> vector<2x32xf32>
    %60 = arith.addf %56, %59 : vector<2x32xf32>
    %61 = arith.addf %60, %3 : vector<2x32xf32>
    %62 = arith.negf %61 : vector<2x32xf32>
    %63 = math.exp %62 : vector<2x32xf32>
    %cst_45 = arith.constant 1.000000e+00 : f32
    %64 = vector.broadcast %cst_45 : f32 to vector<2x32xf32>
    %65 = arith.addf %64, %63 : vector<2x32xf32>
    %66 = arith.divf %64, %65 : vector<2x32xf32>
    %c1_46 = arith.constant 1 : index
    %c0_47 = arith.constant 0 : index
    %c0_48 = arith.constant 0 : index
    %67 = vector.load %arg2[%c1_46, %c0_47, %c0_48] : memref<3x24x32xbf16, #tpu.memory_space<vmem>>, vector<1x24x32xbf16>
    %68 = vector.shape_cast %67 : vector<1x24x32xbf16> to vector<24x32xbf16>
    %cst_49 = arith.constant dense<0.000000e+00> : vector<2x32xf32>
    %69 = tpu.matmul %52, %68, %cst_49 {dimension_numbers = #tpu.dot_dimension_numbers<[1], [0], [0], [1], [0, 0, 1, 1], [], []>} : vector<2x24xbf16>, vector<24x32xbf16>, vector<2x32xf32> -> vector<2x32xf32>
    %c1_50 = arith.constant 1 : index
    %c0_51 = arith.constant 0 : index
    %c0_52 = arith.constant 0 : index
    %70 = vector.load %arg3[%c1_50, %c0_51, %c0_52] : memref<3x32x32xbf16, #tpu.memory_space<vmem>>, vector<1x32x32xbf16>
    %71 = vector.shape_cast %70 : vector<1x32x32xbf16> to vector<32x32xbf16>
    %cst_53 = arith.constant dense<0.000000e+00> : vector<2x32xf32>
    %72 = tpu.matmul %53, %71, %cst_53 {dimension_numbers = #tpu.dot_dimension_numbers<[1], [0], [0], [1], [0, 0, 1, 1], [], []>} : vector<2x32xbf16>, vector<32x32xbf16>, vector<2x32xf32> -> vector<2x32xf32>
    %73 = arith.addf %69, %72 : vector<2x32xf32>
    %74 = arith.addf %73, %7 : vector<2x32xf32>
    %75 = arith.negf %74 : vector<2x32xf32>
    %76 = math.exp %75 : vector<2x32xf32>
    %cst_54 = arith.constant 1.000000e+00 : f32
    %77 = vector.broadcast %cst_54 : f32 to vector<2x32xf32>
    %78 = arith.addf %77, %76 : vector<2x32xf32>
    %79 = arith.divf %77, %78 : vector<2x32xf32>
    %c2_55 = arith.constant 2 : index
    %c0_56 = arith.constant 0 : index
    %c0_57 = arith.constant 0 : index
    %80 = vector.load %arg2[%c2_55, %c0_56, %c0_57] : memref<3x24x32xbf16, #tpu.memory_space<vmem>>, vector<1x24x32xbf16>
    %81 = vector.shape_cast %80 : vector<1x24x32xbf16> to vector<24x32xbf16>
    %cst_58 = arith.constant dense<0.000000e+00> : vector<2x32xf32>
    %82 = tpu.matmul %52, %81, %cst_58 {dimension_numbers = #tpu.dot_dimension_numbers<[1], [0], [0], [1], [0, 0, 1, 1], [], []>} : vector<2x24xbf16>, vector<24x32xbf16>, vector<2x32xf32> -> vector<2x32xf32>
    %83 = arith.addf %82, %11 : vector<2x32xf32>
    %c2_59 = arith.constant 2 : index
    %c0_60 = arith.constant 0 : index
    %c0_61 = arith.constant 0 : index
    %84 = vector.load %arg3[%c2_59, %c0_60, %c0_61] : memref<3x32x32xbf16, #tpu.memory_space<vmem>>, vector<1x32x32xbf16>
    %85 = vector.shape_cast %84 : vector<1x32x32xbf16> to vector<32x32xbf16>
    %cst_62 = arith.constant dense<0.000000e+00> : vector<2x32xf32>
    %86 = tpu.matmul %53, %85, %cst_62 {dimension_numbers = #tpu.dot_dimension_numbers<[1], [0], [0], [1], [0, 0, 1, 1], [], []>} : vector<2x32xbf16>, vector<32x32xbf16>, vector<2x32xf32> -> vector<2x32xf32>
    %87 = arith.addf %86, %15 : vector<2x32xf32>
    %88 = arith.mulf %66, %87 : vector<2x32xf32>
    %89 = arith.addf %83, %88 : vector<2x32xf32>
    %90 = math.tanh %89 : vector<2x32xf32>
    %cst_63 = arith.constant 1.000000e+00 : f32
    %91 = vector.broadcast %cst_63 : f32 to vector<2x32xf32>
    %92 = arith.subf %91, %79 : vector<2x32xf32>
    %93 = arith.mulf %92, %90 : vector<2x32xf32>
    %94 = arith.mulf %79, %48 : vector<2x32xf32>
    %95 = arith.addf %93, %94 : vector<2x32xf32>
    %96 = arith.truncf %95 : vector<2x32xf32> to vector<2x32xbf16>
    %97 = arith.truncf %49 : vector<2x32xf32> to vector<2x32xbf16>
    %c0_64 = arith.constant 0 : index
    %c0_65 = arith.constant 0 : index
    %c0_66 = arith.constant 0 : index
    %98 = vector.load %arg5[%c0_64, %c0_65, %c0_66] : memref<3x32x32xbf16, #tpu.memory_space<vmem>>, vector<1x32x32xbf16>
    %99 = vector.shape_cast %98 : vector<1x32x32xbf16> to vector<32x32xbf16>
    %cst_67 = arith.constant dense<0.000000e+00> : vector<2x32xf32>
    %100 = tpu.matmul %96, %99, %cst_67 {dimension_numbers = #tpu.dot_dimension_numbers<[1], [0], [0], [1], [0, 0, 1, 1], [], []>} : vector<2x32xbf16>, vector<32x32xbf16>, vector<2x32xf32> -> vector<2x32xf32>
    %c0_68 = arith.constant 0 : index
    %c0_69 = arith.constant 0 : index
    %c0_70 = arith.constant 0 : index
    %101 = vector.load %arg6[%c0_68, %c0_69, %c0_70] : memref<3x32x32xbf16, #tpu.memory_space<vmem>>, vector<1x32x32xbf16>
    %102 = vector.shape_cast %101 : vector<1x32x32xbf16> to vector<32x32xbf16>
    %cst_71 = arith.constant dense<0.000000e+00> : vector<2x32xf32>
    %103 = tpu.matmul %97, %102, %cst_71 {dimension_numbers = #tpu.dot_dimension_numbers<[1], [0], [0], [1], [0, 0, 1, 1], [], []>} : vector<2x32xbf16>, vector<32x32xbf16>, vector<2x32xf32> -> vector<2x32xf32>
    %104 = arith.addf %100, %103 : vector<2x32xf32>
    %105 = arith.addf %104, %19 : vector<2x32xf32>
    %106 = arith.negf %105 : vector<2x32xf32>
    %107 = math.exp %106 : vector<2x32xf32>
    %cst_72 = arith.constant 1.000000e+00 : f32
    %108 = vector.broadcast %cst_72 : f32 to vector<2x32xf32>
    %109 = arith.addf %108, %107 : vector<2x32xf32>
    %110 = arith.divf %108, %109 : vector<2x32xf32>
    %c1_73 = arith.constant 1 : index
    %c0_74 = arith.constant 0 : index
    %c0_75 = arith.constant 0 : index
    %111 = vector.load %arg5[%c1_73, %c0_74, %c0_75] : memref<3x32x32xbf16, #tpu.memory_space<vmem>>, vector<1x32x32xbf16>
    %112 = vector.shape_cast %111 : vector<1x32x32xbf16> to vector<32x32xbf16>
    %cst_76 = arith.constant dense<0.000000e+00> : vector<2x32xf32>
    %113 = tpu.matmul %96, %112, %cst_76 {dimension_numbers = #tpu.dot_dimension_numbers<[1], [0], [0], [1], [0, 0, 1, 1], [], []>} : vector<2x32xbf16>, vector<32x32xbf16>, vector<2x32xf32> -> vector<2x32xf32>
    %c1_77 = arith.constant 1 : index
    %c0_78 = arith.constant 0 : index
    %c0_79 = arith.constant 0 : index
    %114 = vector.load %arg6[%c1_77, %c0_78, %c0_79] : memref<3x32x32xbf16, #tpu.memory_space<vmem>>, vector<1x32x32xbf16>
    %115 = vector.shape_cast %114 : vector<1x32x32xbf16> to vector<32x32xbf16>
    %cst_80 = arith.constant dense<0.000000e+00> : vector<2x32xf32>
    %116 = tpu.matmul %97, %115, %cst_80 {dimension_numbers = #tpu.dot_dimension_numbers<[1], [0], [0], [1], [0, 0, 1, 1], [], []>} : vector<2x32xbf16>, vector<32x32xbf16>, vector<2x32xf32> -> vector<2x32xf32>
    %117 = arith.addf %113, %116 : vector<2x32xf32>
    %118 = arith.addf %117, %23 : vector<2x32xf32>
    %119 = arith.negf %118 : vector<2x32xf32>
    %120 = math.exp %119 : vector<2x32xf32>
    %cst_81 = arith.constant 1.000000e+00 : f32
    %121 = vector.broadcast %cst_81 : f32 to vector<2x32xf32>
    %122 = arith.addf %121, %120 : vector<2x32xf32>
    %123 = arith.divf %121, %122 : vector<2x32xf32>
    %c2_82 = arith.constant 2 : index
    %c0_83 = arith.constant 0 : index
    %c0_84 = arith.constant 0 : index
    %124 = vector.load %arg5[%c2_82, %c0_83, %c0_84] : memref<3x32x32xbf16, #tpu.memory_space<vmem>>, vector<1x32x32xbf16>
    %125 = vector.shape_cast %124 : vector<1x32x32xbf16> to vector<32x32xbf16>
    %cst_85 = arith.constant dense<0.000000e+00> : vector<2x32xf32>
    %126 = tpu.matmul %96, %125, %cst_85 {dimension_numbers = #tpu.dot_dimension_numbers<[1], [0], [0], [1], [0, 0, 1, 1], [], []>} : vector<2x32xbf16>, vector<32x32xbf16>, vector<2x32xf32> -> vector<2x32xf32>
    %127 = arith.addf %126, %27 : vector<2x32xf32>
    %c2_86 = arith.constant 2 : index
    %c0_87 = arith.constant 0 : index
    %c0_88 = arith.constant 0 : index
    %128 = vector.load %arg6[%c2_86, %c0_87, %c0_88] : memref<3x32x32xbf16, #tpu.memory_space<vmem>>, vector<1x32x32xbf16>
    %129 = vector.shape_cast %128 : vector<1x32x32xbf16> to vector<32x32xbf16>
    %cst_89 = arith.constant dense<0.000000e+00> : vector<2x32xf32>
    %130 = tpu.matmul %97, %129, %cst_89 {dimension_numbers = #tpu.dot_dimension_numbers<[1], [0], [0], [1], [0, 0, 1, 1], [], []>} : vector<2x32xbf16>, vector<32x32xbf16>, vector<2x32xf32> -> vector<2x32xf32>
    %131 = arith.addf %130, %31 : vector<2x32xf32>
    %132 = arith.mulf %110, %131 : vector<2x32xf32>
    %133 = arith.addf %127, %132 : vector<2x32xf32>
    %134 = math.tanh %133 : vector<2x32xf32>
    %cst_90 = arith.constant 1.000000e+00 : f32
    %135 = vector.broadcast %cst_90 : f32 to vector<2x32xf32>
    %136 = arith.subf %135, %123 : vector<2x32xf32>
    %137 = arith.mulf %136, %134 : vector<2x32xf32>
    %138 = arith.mulf %123, %49 : vector<2x32xf32>
    %139 = arith.addf %137, %138 : vector<2x32xf32>
    %140 = arith.truncf %139 : vector<2x32xf32> to vector<2x32xbf16>
    %141 = arith.truncf %50 : vector<2x32xf32> to vector<2x32xbf16>
    %c0_91 = arith.constant 0 : index
    %c0_92 = arith.constant 0 : index
    %c0_93 = arith.constant 0 : index
    %142 = vector.load %arg8[%c0_91, %c0_92, %c0_93] : memref<3x32x32xbf16, #tpu.memory_space<vmem>>, vector<1x32x32xbf16>
    %143 = vector.shape_cast %142 : vector<1x32x32xbf16> to vector<32x32xbf16>
    %cst_94 = arith.constant dense<0.000000e+00> : vector<2x32xf32>
    %144 = tpu.matmul %140, %143, %cst_94 {dimension_numbers = #tpu.dot_dimension_numbers<[1], [0], [0], [1], [0, 0, 1, 1], [], []>} : vector<2x32xbf16>, vector<32x32xbf16>, vector<2x32xf32> -> vector<2x32xf32>
    %c0_95 = arith.constant 0 : index
    %c0_96 = arith.constant 0 : index
    %c0_97 = arith.constant 0 : index
    %145 = vector.load %arg9[%c0_95, %c0_96, %c0_97] : memref<3x32x32xbf16, #tpu.memory_space<vmem>>, vector<1x32x32xbf16>
    %146 = vector.shape_cast %145 : vector<1x32x32xbf16> to vector<32x32xbf16>
    %cst_98 = arith.constant dense<0.000000e+00> : vector<2x32xf32>
    %147 = tpu.matmul %141, %146, %cst_98 {dimension_numbers = #tpu.dot_dimension_numbers<[1], [0], [0], [1], [0, 0, 1, 1], [], []>} : vector<2x32xbf16>, vector<32x32xbf16>, vector<2x32xf32> -> vector<2x32xf32>
    %148 = arith.addf %144, %147 : vector<2x32xf32>
    %149 = arith.addf %148, %35 : vector<2x32xf32>
    %150 = arith.negf %149 : vector<2x32xf32>
    %151 = math.exp %150 : vector<2x32xf32>
    %cst_99 = arith.constant 1.000000e+00 : f32
    %152 = vector.broadcast %cst_99 : f32 to vector<2x32xf32>
    %153 = arith.addf %152, %151 : vector<2x32xf32>
    %154 = arith.divf %152, %153 : vector<2x32xf32>
    %c1_100 = arith.constant 1 : index
    %c0_101 = arith.constant 0 : index
    %c0_102 = arith.constant 0 : index
    %155 = vector.load %arg8[%c1_100, %c0_101, %c0_102] : memref<3x32x32xbf16, #tpu.memory_space<vmem>>, vector<1x32x32xbf16>
    %156 = vector.shape_cast %155 : vector<1x32x32xbf16> to vector<32x32xbf16>
    %cst_103 = arith.constant dense<0.000000e+00> : vector<2x32xf32>
    %157 = tpu.matmul %140, %156, %cst_103 {dimension_numbers = #tpu.dot_dimension_numbers<[1], [0], [0], [1], [0, 0, 1, 1], [], []>} : vector<2x32xbf16>, vector<32x32xbf16>, vector<2x32xf32> -> vector<2x32xf32>
    %c1_104 = arith.constant 1 : index
    %c0_105 = arith.constant 0 : index
    %c0_106 = arith.constant 0 : index
    %158 = vector.load %arg9[%c1_104, %c0_105, %c0_106] : memref<3x32x32xbf16, #tpu.memory_space<vmem>>, vector<1x32x32xbf16>
    %159 = vector.shape_cast %158 : vector<1x32x32xbf16> to vector<32x32xbf16>
    %cst_107 = arith.constant dense<0.000000e+00> : vector<2x32xf32>
    %160 = tpu.matmul %141, %159, %cst_107 {dimension_numbers = #tpu.dot_dimension_numbers<[1], [0], [0], [1], [0, 0, 1, 1], [], []>} : vector<2x32xbf16>, vector<32x32xbf16>, vector<2x32xf32> -> vector<2x32xf32>
    %161 = arith.addf %157, %160 : vector<2x32xf32>
    %162 = arith.addf %161, %39 : vector<2x32xf32>
    %163 = arith.negf %162 : vector<2x32xf32>
    %164 = math.exp %163 : vector<2x32xf32>
    %cst_108 = arith.constant 1.000000e+00 : f32
    %165 = vector.broadcast %cst_108 : f32 to vector<2x32xf32>
    %166 = arith.addf %165, %164 : vector<2x32xf32>
    %167 = arith.divf %165, %166 : vector<2x32xf32>
    %c2_109 = arith.constant 2 : index
    %c0_110 = arith.constant 0 : index
    %c0_111 = arith.constant 0 : index
    %168 = vector.load %arg8[%c2_109, %c0_110, %c0_111] : memref<3x32x32xbf16, #tpu.memory_space<vmem>>, vector<1x32x32xbf16>
    %169 = vector.shape_cast %168 : vector<1x32x32xbf16> to vector<32x32xbf16>
    %cst_112 = arith.constant dense<0.000000e+00> : vector<2x32xf32>
    %170 = tpu.matmul %140, %169, %cst_112 {dimension_numbers = #tpu.dot_dimension_numbers<[1], [0], [0], [1], [0, 0, 1, 1], [], []>} : vector<2x32xbf16>, vector<32x32xbf16>, vector<2x32xf32> -> vector<2x32xf32>
    %171 = arith.addf %170, %43 : vector<2x32xf32>
    %c2_113 = arith.constant 2 : index
    %c0_114 = arith.constant 0 : index
    %c0_115 = arith.constant 0 : index
    %172 = vector.load %arg9[%c2_113, %c0_114, %c0_115] : memref<3x32x32xbf16, #tpu.memory_space<vmem>>, vector<1x32x32xbf16>
    %173 = vector.shape_cast %172 : vector<1x32x32xbf16> to vector<32x32xbf16>
    %cst_116 = arith.constant dense<0.000000e+00> : vector<2x32xf32>
    %174 = tpu.matmul %141, %173, %cst_116 {dimension_numbers = #tpu.dot_dimension_numbers<[1], [0], [0], [1], [0, 0, 1, 1], [], []>} : vector<2x32xbf16>, vector<32x32xbf16>, vector<2x32xf32> -> vector<2x32xf32>
    %175 = arith.addf %174, %47 : vector<2x32xf32>
    %176 = arith.mulf %154, %175 : vector<2x32xf32>
    %177 = arith.addf %171, %176 : vector<2x32xf32>
    %178 = math.tanh %177 : vector<2x32xf32>
    %cst_117 = arith.constant 1.000000e+00 : f32
    %179 = vector.broadcast %cst_117 : f32 to vector<2x32xf32>
    %180 = arith.subf %179, %167 : vector<2x32xf32>
    %181 = arith.mulf %180, %178 : vector<2x32xf32>
    %182 = arith.mulf %167, %50 : vector<2x32xf32>
    %183 = arith.addf %181, %182 : vector<2x32xf32>
    %c1_118 = arith.constant 1 : index
    %c0_119 = arith.constant 0 : index
    %c0_120 = arith.constant 0 : index
    %184 = vector.load %arg1[%c1_118, %c0_119, %c0_120] : memref<8x2x24xbf16, #tpu.memory_space<vmem>>, vector<1x2x24xbf16>
    %185 = vector.shape_cast %184 : vector<1x2x24xbf16> to vector<2x24xbf16>
    %186 = arith.truncf %95 : vector<2x32xf32> to vector<2x32xbf16>
    %c0_121 = arith.constant 0 : index
    %c0_122 = arith.constant 0 : index
    %c0_123 = arith.constant 0 : index
    %187 = vector.load %arg2[%c0_121, %c0_122, %c0_123] : memref<3x24x32xbf16, #tpu.memory_space<vmem>>, vector<1x24x32xbf16>
    %188 = vector.shape_cast %187 : vector<1x24x32xbf16> to vector<24x32xbf16>
    %cst_124 = arith.constant dense<0.000000e+00> : vector<2x32xf32>
    %189 = tpu.matmul %185, %188, %cst_124 {dimension_numbers = #tpu.dot_dimension_numbers<[1], [0], [0], [1], [0, 0, 1, 1], [], []>} : vector<2x24xbf16>, vector<24x32xbf16>, vector<2x32xf32> -> vector<2x32xf32>
    %c0_125 = arith.constant 0 : index
    %c0_126 = arith.constant 0 : index
    %c0_127 = arith.constant 0 : index
    %190 = vector.load %arg3[%c0_125, %c0_126, %c0_127] : memref<3x32x32xbf16, #tpu.memory_space<vmem>>, vector<1x32x32xbf16>
    %191 = vector.shape_cast %190 : vector<1x32x32xbf16> to vector<32x32xbf16>
    %cst_128 = arith.constant dense<0.000000e+00> : vector<2x32xf32>
    %192 = tpu.matmul %186, %191, %cst_128 {dimension_numbers = #tpu.dot_dimension_numbers<[1], [0], [0], [1], [0, 0, 1, 1], [], []>} : vector<2x32xbf16>, vector<32x32xbf16>, vector<2x32xf32> -> vector<2x32xf32>
    %193 = arith.addf %189, %192 : vector<2x32xf32>
    %194 = arith.addf %193, %3 : vector<2x32xf32>
    %195 = arith.negf %194 : vector<2x32xf32>
    %196 = math.exp %195 : vector<2x32xf32>
    %cst_129 = arith.constant 1.000000e+00 : f32
    %197 = vector.broadcast %cst_129 : f32 to vector<2x32xf32>
    %198 = arith.addf %197, %196 : vector<2x32xf32>
    %199 = arith.divf %197, %198 : vector<2x32xf32>
    %c1_130 = arith.constant 1 : index
    %c0_131 = arith.constant 0 : index
    %c0_132 = arith.constant 0 : index
    %200 = vector.load %arg2[%c1_130, %c0_131, %c0_132] : memref<3x24x32xbf16, #tpu.memory_space<vmem>>, vector<1x24x32xbf16>
    %201 = vector.shape_cast %200 : vector<1x24x32xbf16> to vector<24x32xbf16>
    %cst_133 = arith.constant dense<0.000000e+00> : vector<2x32xf32>
    %202 = tpu.matmul %185, %201, %cst_133 {dimension_numbers = #tpu.dot_dimension_numbers<[1], [0], [0], [1], [0, 0, 1, 1], [], []>} : vector<2x24xbf16>, vector<24x32xbf16>, vector<2x32xf32> -> vector<2x32xf32>
    %c1_134 = arith.constant 1 : index
    %c0_135 = arith.constant 0 : index
    %c0_136 = arith.constant 0 : index
    %203 = vector.load %arg3[%c1_134, %c0_135, %c0_136] : memref<3x32x32xbf16, #tpu.memory_space<vmem>>, vector<1x32x32xbf16>
    %204 = vector.shape_cast %203 : vector<1x32x32xbf16> to vector<32x32xbf16>
    %cst_137 = arith.constant dense<0.000000e+00> : vector<2x32xf32>
    %205 = tpu.matmul %186, %204, %cst_137 {dimension_numbers = #tpu.dot_dimension_numbers<[1], [0], [0], [1], [0, 0, 1, 1], [], []>} : vector<2x32xbf16>, vector<32x32xbf16>, vector<2x32xf32> -> vector<2x32xf32>
    %206 = arith.addf %202, %205 : vector<2x32xf32>
    %207 = arith.addf %206, %7 : vector<2x32xf32>
    %208 = arith.negf %207 : vector<2x32xf32>
    %209 = math.exp %208 : vector<2x32xf32>
    %cst_138 = arith.constant 1.000000e+00 : f32
    %210 = vector.broadcast %cst_138 : f32 to vector<2x32xf32>
    %211 = arith.addf %210, %209 : vector<2x32xf32>
    %212 = arith.divf %210, %211 : vector<2x32xf32>
    %c2_139 = arith.constant 2 : index
    %c0_140 = arith.constant 0 : index
    %c0_141 = arith.constant 0 : index
    %213 = vector.load %arg2[%c2_139, %c0_140, %c0_141] : memref<3x24x32xbf16, #tpu.memory_space<vmem>>, vector<1x24x32xbf16>
    %214 = vector.shape_cast %213 : vector<1x24x32xbf16> to vector<24x32xbf16>
    %cst_142 = arith.constant dense<0.000000e+00> : vector<2x32xf32>
    %215 = tpu.matmul %185, %214, %cst_142 {dimension_numbers = #tpu.dot_dimension_numbers<[1], [0], [0], [1], [0, 0, 1, 1], [], []>} : vector<2x24xbf16>, vector<24x32xbf16>, vector<2x32xf32> -> vector<2x32xf32>
    %216 = arith.addf %215, %11 : vector<2x32xf32>
    %c2_143 = arith.constant 2 : index
    %c0_144 = arith.constant 0 : index
    %c0_145 = arith.constant 0 : index
    %217 = vector.load %arg3[%c2_143, %c0_144, %c0_145] : memref<3x32x32xbf16, #tpu.memory_space<vmem>>, vector<1x32x32xbf16>
    %218 = vector.shape_cast %217 : vector<1x32x32xbf16> to vector<32x32xbf16>
    %cst_146 = arith.constant dense<0.000000e+00> : vector<2x32xf32>
    %219 = tpu.matmul %186, %218, %cst_146 {dimension_numbers = #tpu.dot_dimension_numbers<[1], [0], [0], [1], [0, 0, 1, 1], [], []>} : vector<2x32xbf16>, vector<32x32xbf16>, vector<2x32xf32> -> vector<2x32xf32>
    %220 = arith.addf %219, %15 : vector<2x32xf32>
    %221 = arith.mulf %199, %220 : vector<2x32xf32>
    %222 = arith.addf %216, %221 : vector<2x32xf32>
    %223 = math.tanh %222 : vector<2x32xf32>
    %cst_147 = arith.constant 1.000000e+00 : f32
    %224 = vector.broadcast %cst_147 : f32 to vector<2x32xf32>
    %225 = arith.subf %224, %212 : vector<2x32xf32>
    %226 = arith.mulf %225, %223 : vector<2x32xf32>
    %227 = arith.mulf %212, %95 : vector<2x32xf32>
    %228 = arith.addf %226, %227 : vector<2x32xf32>
    %229 = arith.truncf %228 : vector<2x32xf32> to vector<2x32xbf16>
    %230 = arith.truncf %139 : vector<2x32xf32> to vector<2x32xbf16>
    %c0_148 = arith.constant 0 : index
    %c0_149 = arith.constant 0 : index
    %c0_150 = arith.constant 0 : index
    %231 = vector.load %arg5[%c0_148, %c0_149, %c0_150] : memref<3x32x32xbf16, #tpu.memory_space<vmem>>, vector<1x32x32xbf16>
    %232 = vector.shape_cast %231 : vector<1x32x32xbf16> to vector<32x32xbf16>
    %cst_151 = arith.constant dense<0.000000e+00> : vector<2x32xf32>
    %233 = tpu.matmul %229, %232, %cst_151 {dimension_numbers = #tpu.dot_dimension_numbers<[1], [0], [0], [1], [0, 0, 1, 1], [], []>} : vector<2x32xbf16>, vector<32x32xbf16>, vector<2x32xf32> -> vector<2x32xf32>
    %c0_152 = arith.constant 0 : index
    %c0_153 = arith.constant 0 : index
    %c0_154 = arith.constant 0 : index
    %234 = vector.load %arg6[%c0_152, %c0_153, %c0_154] : memref<3x32x32xbf16, #tpu.memory_space<vmem>>, vector<1x32x32xbf16>
    %235 = vector.shape_cast %234 : vector<1x32x32xbf16> to vector<32x32xbf16>
    %cst_155 = arith.constant dense<0.000000e+00> : vector<2x32xf32>
    %236 = tpu.matmul %230, %235, %cst_155 {dimension_numbers = #tpu.dot_dimension_numbers<[1], [0], [0], [1], [0, 0, 1, 1], [], []>} : vector<2x32xbf16>, vector<32x32xbf16>, vector<2x32xf32> -> vector<2x32xf32>
    %237 = arith.addf %233, %236 : vector<2x32xf32>
    %238 = arith.addf %237, %19 : vector<2x32xf32>
    %239 = arith.negf %238 : vector<2x32xf32>
    %240 = math.exp %239 : vector<2x32xf32>
    %cst_156 = arith.constant 1.000000e+00 : f32
    %241 = vector.broadcast %cst_156 : f32 to vector<2x32xf32>
    %242 = arith.addf %241, %240 : vector<2x32xf32>
    %243 = arith.divf %241, %242 : vector<2x32xf32>
    %c1_157 = arith.constant 1 : index
    %c0_158 = arith.constant 0 : index
    %c0_159 = arith.constant 0 : index
    %244 = vector.load %arg5[%c1_157, %c0_158, %c0_159] : memref<3x32x32xbf16, #tpu.memory_space<vmem>>, vector<1x32x32xbf16>
    %245 = vector.shape_cast %244 : vector<1x32x32xbf16> to vector<32x32xbf16>
    %cst_160 = arith.constant dense<0.000000e+00> : vector<2x32xf32>
    %246 = tpu.matmul %229, %245, %cst_160 {dimension_numbers = #tpu.dot_dimension_numbers<[1], [0], [0], [1], [0, 0, 1, 1], [], []>} : vector<2x32xbf16>, vector<32x32xbf16>, vector<2x32xf32> -> vector<2x32xf32>
    %c1_161 = arith.constant 1 : index
    %c0_162 = arith.constant 0 : index
    %c0_163 = arith.constant 0 : index
    %247 = vector.load %arg6[%c1_161, %c0_162, %c0_163] : memref<3x32x32xbf16, #tpu.memory_space<vmem>>, vector<1x32x32xbf16>
    %248 = vector.shape_cast %247 : vector<1x32x32xbf16> to vector<32x32xbf16>
    %cst_164 = arith.constant dense<0.000000e+00> : vector<2x32xf32>
    %249 = tpu.matmul %230, %248, %cst_164 {dimension_numbers = #tpu.dot_dimension_numbers<[1], [0], [0], [1], [0, 0, 1, 1], [], []>} : vector<2x32xbf16>, vector<32x32xbf16>, vector<2x32xf32> -> vector<2x32xf32>
    %250 = arith.addf %246, %249 : vector<2x32xf32>
    %251 = arith.addf %250, %23 : vector<2x32xf32>
    %252 = arith.negf %251 : vector<2x32xf32>
    %253 = math.exp %252 : vector<2x32xf32>
    %cst_165 = arith.constant 1.000000e+00 : f32
    %254 = vector.broadcast %cst_165 : f32 to vector<2x32xf32>
    %255 = arith.addf %254, %253 : vector<2x32xf32>
    %256 = arith.divf %254, %255 : vector<2x32xf32>
    %c2_166 = arith.constant 2 : index
    %c0_167 = arith.constant 0 : index
    %c0_168 = arith.constant 0 : index
    %257 = vector.load %arg5[%c2_166, %c0_167, %c0_168] : memref<3x32x32xbf16, #tpu.memory_space<vmem>>, vector<1x32x32xbf16>
    %258 = vector.shape_cast %257 : vector<1x32x32xbf16> to vector<32x32xbf16>
    %cst_169 = arith.constant dense<0.000000e+00> : vector<2x32xf32>
    %259 = tpu.matmul %229, %258, %cst_169 {dimension_numbers = #tpu.dot_dimension_numbers<[1], [0], [0], [1], [0, 0, 1, 1], [], []>} : vector<2x32xbf16>, vector<32x32xbf16>, vector<2x32xf32> -> vector<2x32xf32>
    %260 = arith.addf %259, %27 : vector<2x32xf32>
    %c2_170 = arith.constant 2 : index
    %c0_171 = arith.constant 0 : index
    %c0_172 = arith.constant 0 : index
    %261 = vector.load %arg6[%c2_170, %c0_171, %c0_172] : memref<3x32x32xbf16, #tpu.memory_space<vmem>>, vector<1x32x32xbf16>
    %262 = vector.shape_cast %261 : vector<1x32x32xbf16> to vector<32x32xbf16>
    %cst_173 = arith.constant dense<0.000000e+00> : vector<2x32xf32>
    %263 = tpu.matmul %230, %262, %cst_173 {dimension_numbers = #tpu.dot_dimension_numbers<[1], [0], [0], [1], [0, 0, 1, 1], [], []>} : vector<2x32xbf16>, vector<32x32xbf16>, vector<2x32xf32> -> vector<2x32xf32>
    %264 = arith.addf %263, %31 : vector<2x32xf32>
    %265 = arith.mulf %243, %264 : vector<2x32xf32>
    %266 = arith.addf %260, %265 : vector<2x32xf32>
    %267 = math.tanh %266 : vector<2x32xf32>
    %cst_174 = arith.constant 1.000000e+00 : f32
    %268 = vector.broadcast %cst_174 : f32 to vector<2x32xf32>
    %269 = arith.subf %268, %256 : vector<2x32xf32>
    %270 = arith.mulf %269, %267 : vector<2x32xf32>
    %271 = arith.mulf %256, %139 : vector<2x32xf32>
    %272 = arith.addf %270, %271 : vector<2x32xf32>
    %273 = arith.truncf %272 : vector<2x32xf32> to vector<2x32xbf16>
    %274 = arith.truncf %183 : vector<2x32xf32> to vector<2x32xbf16>
    %c0_175 = arith.constant 0 : index
    %c0_176 = arith.constant 0 : index
    %c0_177 = arith.constant 0 : index
    %275 = vector.load %arg8[%c0_175, %c0_176, %c0_177] : memref<3x32x32xbf16, #tpu.memory_space<vmem>>, vector<1x32x32xbf16>
    %276 = vector.shape_cast %275 : vector<1x32x32xbf16> to vector<32x32xbf16>
    %cst_178 = arith.constant dense<0.000000e+00> : vector<2x32xf32>
    %277 = tpu.matmul %273, %276, %cst_178 {dimension_numbers = #tpu.dot_dimension_numbers<[1], [0], [0], [1], [0, 0, 1, 1], [], []>} : vector<2x32xbf16>, vector<32x32xbf16>, vector<2x32xf32> -> vector<2x32xf32>
    %c0_179 = arith.constant 0 : index
    %c0_180 = arith.constant 0 : index
    %c0_181 = arith.constant 0 : index
    %278 = vector.load %arg9[%c0_179, %c0_180, %c0_181] : memref<3x32x32xbf16, #tpu.memory_space<vmem>>, vector<1x32x32xbf16>
    %279 = vector.shape_cast %278 : vector<1x32x32xbf16> to vector<32x32xbf16>
    %cst_182 = arith.constant dense<0.000000e+00> : vector<2x32xf32>
    %280 = tpu.matmul %274, %279, %cst_182 {dimension_numbers = #tpu.dot_dimension_numbers<[1], [0], [0], [1], [0, 0, 1, 1], [], []>} : vector<2x32xbf16>, vector<32x32xbf16>, vector<2x32xf32> -> vector<2x32xf32>
    %281 = arith.addf %277, %280 : vector<2x32xf32>
    %282 = arith.addf %281, %35 : vector<2x32xf32>
    %283 = arith.negf %282 : vector<2x32xf32>
    %284 = math.exp %283 : vector<2x32xf32>
    %cst_183 = arith.constant 1.000000e+00 : f32
    %285 = vector.broadcast %cst_183 : f32 to vector<2x32xf32>
    %286 = arith.addf %285, %284 : vector<2x32xf32>
    %287 = arith.divf %285, %286 : vector<2x32xf32>
    %c1_184 = arith.constant 1 : index
    %c0_185 = arith.constant 0 : index
    %c0_186 = arith.constant 0 : index
    %288 = vector.load %arg8[%c1_184, %c0_185, %c0_186] : memref<3x32x32xbf16, #tpu.memory_space<vmem>>, vector<1x32x32xbf16>
    %289 = vector.shape_cast %288 : vector<1x32x32xbf16> to vector<32x32xbf16>
    %cst_187 = arith.constant dense<0.000000e+00> : vector<2x32xf32>
    %290 = tpu.matmul %273, %289, %cst_187 {dimension_numbers = #tpu.dot_dimension_numbers<[1], [0], [0], [1], [0, 0, 1, 1], [], []>} : vector<2x32xbf16>, vector<32x32xbf16>, vector<2x32xf32> -> vector<2x32xf32>
    %c1_188 = arith.constant 1 : index
    %c0_189 = arith.constant 0 : index
    %c0_190 = arith.constant 0 : index
    %291 = vector.load %arg9[%c1_188, %c0_189, %c0_190] : memref<3x32x32xbf16, #tpu.memory_space<vmem>>, vector<1x32x32xbf16>
    %292 = vector.shape_cast %291 : vector<1x32x32xbf16> to vector<32x32xbf16>
    %cst_191 = arith.constant dense<0.000000e+00> : vector<2x32xf32>
    %293 = tpu.matmul %274, %292, %cst_191 {dimension_numbers = #tpu.dot_dimension_numbers<[1], [0], [0], [1], [0, 0, 1, 1], [], []>} : vector<2x32xbf16>, vector<32x32xbf16>, vector<2x32xf32> -> vector<2x32xf32>
    %294 = arith.addf %290, %293 : vector<2x32xf32>
    %295 = arith.addf %294, %39 : vector<2x32xf32>
    %296 = arith.negf %295 : vector<2x32xf32>
    %297 = math.exp %296 : vector<2x32xf32>
    %cst_192 = arith.constant 1.000000e+00 : f32
    %298 = vector.broadcast %cst_192 : f32 to vector<2x32xf32>
    %299 = arith.addf %298, %297 : vector<2x32xf32>
    %300 = arith.divf %298, %299 : vector<2x32xf32>
    %c2_193 = arith.constant 2 : index
    %c0_194 = arith.constant 0 : index
    %c0_195 = arith.constant 0 : index
    %301 = vector.load %arg8[%c2_193, %c0_194, %c0_195] : memref<3x32x32xbf16, #tpu.memory_space<vmem>>, vector<1x32x32xbf16>
    %302 = vector.shape_cast %301 : vector<1x32x32xbf16> to vector<32x32xbf16>
    %cst_196 = arith.constant dense<0.000000e+00> : vector<2x32xf32>
    %303 = tpu.matmul %273, %302, %cst_196 {dimension_numbers = #tpu.dot_dimension_numbers<[1], [0], [0], [1], [0, 0, 1, 1], [], []>} : vector<2x32xbf16>, vector<32x32xbf16>, vector<2x32xf32> -> vector<2x32xf32>
    %304 = arith.addf %303, %43 : vector<2x32xf32>
    %c2_197 = arith.constant 2 : index
    %c0_198 = arith.constant 0 : index
    %c0_199 = arith.constant 0 : index
    %305 = vector.load %arg9[%c2_197, %c0_198, %c0_199] : memref<3x32x32xbf16, #tpu.memory_space<vmem>>, vector<1x32x32xbf16>
    %306 = vector.shape_cast %305 : vector<1x32x32xbf16> to vector<32x32xbf16>
    %cst_200 = arith.constant dense<0.000000e+00> : vector<2x32xf32>
    %307 = tpu.matmul %274, %306, %cst_200 {dimension_numbers = #tpu.dot_dimension_numbers<[1], [0], [0], [1], [0, 0, 1, 1], [], []>} : vector<2x32xbf16>, vector<32x32xbf16>, vector<2x32xf32> -> vector<2x32xf32>
    %308 = arith.addf %307, %47 : vector<2x32xf32>
    %309 = arith.mulf %287, %308 : vector<2x32xf32>
    %310 = arith.addf %304, %309 : vector<2x32xf32>
    %311 = math.tanh %310 : vector<2x32xf32>
    %cst_201 = arith.constant 1.000000e+00 : f32
    %312 = vector.broadcast %cst_201 : f32 to vector<2x32xf32>
    %313 = arith.subf %312, %300 : vector<2x32xf32>
    %314 = arith.mulf %313, %311 : vector<2x32xf32>
    %315 = arith.mulf %300, %183 : vector<2x32xf32>
    %316 = arith.addf %314, %315 : vector<2x32xf32>
    %c2_202 = arith.constant 2 : index
    %c0_203 = arith.constant 0 : index
    %c0_204 = arith.constant 0 : index
    %317 = vector.load %arg1[%c2_202, %c0_203, %c0_204] : memref<8x2x24xbf16, #tpu.memory_space<vmem>>, vector<1x2x24xbf16>
    %318 = vector.shape_cast %317 : vector<1x2x24xbf16> to vector<2x24xbf16>
    %319 = arith.truncf %228 : vector<2x32xf32> to vector<2x32xbf16>
    %c0_205 = arith.constant 0 : index
    %c0_206 = arith.constant 0 : index
    %c0_207 = arith.constant 0 : index
    %320 = vector.load %arg2[%c0_205, %c0_206, %c0_207] : memref<3x24x32xbf16, #tpu.memory_space<vmem>>, vector<1x24x32xbf16>
    %321 = vector.shape_cast %320 : vector<1x24x32xbf16> to vector<24x32xbf16>
    %cst_208 = arith.constant dense<0.000000e+00> : vector<2x32xf32>
    %322 = tpu.matmul %318, %321, %cst_208 {dimension_numbers = #tpu.dot_dimension_numbers<[1], [0], [0], [1], [0, 0, 1, 1], [], []>} : vector<2x24xbf16>, vector<24x32xbf16>, vector<2x32xf32> -> vector<2x32xf32>
    %c0_209 = arith.constant 0 : index
    %c0_210 = arith.constant 0 : index
    %c0_211 = arith.constant 0 : index
    %323 = vector.load %arg3[%c0_209, %c0_210, %c0_211] : memref<3x32x32xbf16, #tpu.memory_space<vmem>>, vector<1x32x32xbf16>
    %324 = vector.shape_cast %323 : vector<1x32x32xbf16> to vector<32x32xbf16>
    %cst_212 = arith.constant dense<0.000000e+00> : vector<2x32xf32>
    %325 = tpu.matmul %319, %324, %cst_212 {dimension_numbers = #tpu.dot_dimension_numbers<[1], [0], [0], [1], [0, 0, 1, 1], [], []>} : vector<2x32xbf16>, vector<32x32xbf16>, vector<2x32xf32> -> vector<2x32xf32>
    %326 = arith.addf %322, %325 : vector<2x32xf32>
    %327 = arith.addf %326, %3 : vector<2x32xf32>
    %328 = arith.negf %327 : vector<2x32xf32>
    %329 = math.exp %328 : vector<2x32xf32>
    %cst_213 = arith.constant 1.000000e+00 : f32
    %330 = vector.broadcast %cst_213 : f32 to vector<2x32xf32>
    %331 = arith.addf %330, %329 : vector<2x32xf32>
    %332 = arith.divf %330, %331 : vector<2x32xf32>
    %c1_214 = arith.constant 1 : index
    %c0_215 = arith.constant 0 : index
    %c0_216 = arith.constant 0 : index
    %333 = vector.load %arg2[%c1_214, %c0_215, %c0_216] : memref<3x24x32xbf16, #tpu.memory_space<vmem>>, vector<1x24x32xbf16>
    %334 = vector.shape_cast %333 : vector<1x24x32xbf16> to vector<24x32xbf16>
    %cst_217 = arith.constant dense<0.000000e+00> : vector<2x32xf32>
    %335 = tpu.matmul %318, %334, %cst_217 {dimension_numbers = #tpu.dot_dimension_numbers<[1], [0], [0], [1], [0, 0, 1, 1], [], []>} : vector<2x24xbf16>, vector<24x32xbf16>, vector<2x32xf32> -> vector<2x32xf32>
    %c1_218 = arith.constant 1 : index
    %c0_219 = arith.constant 0 : index
    %c0_220 = arith.constant 0 : index
    %336 = vector.load %arg3[%c1_218, %c0_219, %c0_220] : memref<3x32x32xbf16, #tpu.memory_space<vmem>>, vector<1x32x32xbf16>
    %337 = vector.shape_cast %336 : vector<1x32x32xbf16> to vector<32x32xbf16>
    %cst_221 = arith.constant dense<0.000000e+00> : vector<2x32xf32>
    %338 = tpu.matmul %319, %337, %cst_221 {dimension_numbers = #tpu.dot_dimension_numbers<[1], [0], [0], [1], [0, 0, 1, 1], [], []>} : vector<2x32xbf16>, vector<32x32xbf16>, vector<2x32xf32> -> vector<2x32xf32>
    %339 = arith.addf %335, %338 : vector<2x32xf32>
    %340 = arith.addf %339, %7 : vector<2x32xf32>
    %341 = arith.negf %340 : vector<2x32xf32>
    %342 = math.exp %341 : vector<2x32xf32>
    %cst_222 = arith.constant 1.000000e+00 : f32
    %343 = vector.broadcast %cst_222 : f32 to vector<2x32xf32>
    %344 = arith.addf %343, %342 : vector<2x32xf32>
    %345 = arith.divf %343, %344 : vector<2x32xf32>
    %c2_223 = arith.constant 2 : index
    %c0_224 = arith.constant 0 : index
    %c0_225 = arith.constant 0 : index
    %346 = vector.load %arg2[%c2_223, %c0_224, %c0_225] : memref<3x24x32xbf16, #tpu.memory_space<vmem>>, vector<1x24x32xbf16>
    %347 = vector.shape_cast %346 : vector<1x24x32xbf16> to vector<24x32xbf16>
    %cst_226 = arith.constant dense<0.000000e+00> : vector<2x32xf32>
    %348 = tpu.matmul %318, %347, %cst_226 {dimension_numbers = #tpu.dot_dimension_numbers<[1], [0], [0], [1], [0, 0, 1, 1], [], []>} : vector<2x24xbf16>, vector<24x32xbf16>, vector<2x32xf32> -> vector<2x32xf32>
    %349 = arith.addf %348, %11 : vector<2x32xf32>
    %c2_227 = arith.constant 2 : index
    %c0_228 = arith.constant 0 : index
    %c0_229 = arith.constant 0 : index
    %350 = vector.load %arg3[%c2_227, %c0_228, %c0_229] : memref<3x32x32xbf16, #tpu.memory_space<vmem>>, vector<1x32x32xbf16>
    %351 = vector.shape_cast %350 : vector<1x32x32xbf16> to vector<32x32xbf16>
    %cst_230 = arith.constant dense<0.000000e+00> : vector<2x32xf32>
    %352 = tpu.matmul %319, %351, %cst_230 {dimension_numbers = #tpu.dot_dimension_numbers<[1], [0], [0], [1], [0, 0, 1, 1], [], []>} : vector<2x32xbf16>, vector<32x32xbf16>, vector<2x32xf32> -> vector<2x32xf32>
    %353 = arith.addf %352, %15 : vector<2x32xf32>
    %354 = arith.mulf %332, %353 : vector<2x32xf32>
    %355 = arith.addf %349, %354 : vector<2x32xf32>
    %356 = math.tanh %355 : vector<2x32xf32>
    %cst_231 = arith.constant 1.000000e+00 : f32
    %357 = vector.broadcast %cst_231 : f32 to vector<2x32xf32>
    %358 = arith.subf %357, %345 : vector<2x32xf32>
    %359 = arith.mulf %358, %356 : vector<2x32xf32>
    %360 = arith.mulf %345, %228 : vector<2x32xf32>
    %361 = arith.addf %359, %360 : vector<2x32xf32>
    %362 = arith.truncf %361 : vector<2x32xf32> to vector<2x32xbf16>
    %363 = arith.truncf %272 : vector<2x32xf32> to vector<2x32xbf16>
    %c0_232 = arith.constant 0 : index
    %c0_233 = arith.constant 0 : index
    %c0_234 = arith.constant 0 : index
    %364 = vector.load %arg5[%c0_232, %c0_233, %c0_234] : memref<3x32x32xbf16, #tpu.memory_space<vmem>>, vector<1x32x32xbf16>
    %365 = vector.shape_cast %364 : vector<1x32x32xbf16> to vector<32x32xbf16>
    %cst_235 = arith.constant dense<0.000000e+00> : vector<2x32xf32>
    %366 = tpu.matmul %362, %365, %cst_235 {dimension_numbers = #tpu.dot_dimension_numbers<[1], [0], [0], [1], [0, 0, 1, 1], [], []>} : vector<2x32xbf16>, vector<32x32xbf16>, vector<2x32xf32> -> vector<2x32xf32>
    %c0_236 = arith.constant 0 : index
    %c0_237 = arith.constant 0 : index
    %c0_238 = arith.constant 0 : index
    %367 = vector.load %arg6[%c0_236, %c0_237, %c0_238] : memref<3x32x32xbf16, #tpu.memory_space<vmem>>, vector<1x32x32xbf16>
    %368 = vector.shape_cast %367 : vector<1x32x32xbf16> to vector<32x32xbf16>
    %cst_239 = arith.constant dense<0.000000e+00> : vector<2x32xf32>
    %369 = tpu.matmul %363, %368, %cst_239 {dimension_numbers = #tpu.dot_dimension_numbers<[1], [0], [0], [1], [0, 0, 1, 1], [], []>} : vector<2x32xbf16>, vector<32x32xbf16>, vector<2x32xf32> -> vector<2x32xf32>
    %370 = arith.addf %366, %369 : vector<2x32xf32>
    %371 = arith.addf %370, %19 : vector<2x32xf32>
    %372 = arith.negf %371 : vector<2x32xf32>
    %373 = math.exp %372 : vector<2x32xf32>
    %cst_240 = arith.constant 1.000000e+00 : f32
    %374 = vector.broadcast %cst_240 : f32 to vector<2x32xf32>
    %375 = arith.addf %374, %373 : vector<2x32xf32>
    %376 = arith.divf %374, %375 : vector<2x32xf32>
    %c1_241 = arith.constant 1 : index
    %c0_242 = arith.constant 0 : index
    %c0_243 = arith.constant 0 : index
    %377 = vector.load %arg5[%c1_241, %c0_242, %c0_243] : memref<3x32x32xbf16, #tpu.memory_space<vmem>>, vector<1x32x32xbf16>
    %378 = vector.shape_cast %377 : vector<1x32x32xbf16> to vector<32x32xbf16>
    %cst_244 = arith.constant dense<0.000000e+00> : vector<2x32xf32>
    %379 = tpu.matmul %362, %378, %cst_244 {dimension_numbers = #tpu.dot_dimension_numbers<[1], [0], [0], [1], [0, 0, 1, 1], [], []>} : vector<2x32xbf16>, vector<32x32xbf16>, vector<2x32xf32> -> vector<2x32xf32>
    %c1_245 = arith.constant 1 : index
    %c0_246 = arith.constant 0 : index
    %c0_247 = arith.constant 0 : index
    %380 = vector.load %arg6[%c1_245, %c0_246, %c0_247] : memref<3x32x32xbf16, #tpu.memory_space<vmem>>, vector<1x32x32xbf16>
    %381 = vector.shape_cast %380 : vector<1x32x32xbf16> to vector<32x32xbf16>
    %cst_248 = arith.constant dense<0.000000e+00> : vector<2x32xf32>
    %382 = tpu.matmul %363, %381, %cst_248 {dimension_numbers = #tpu.dot_dimension_numbers<[1], [0], [0], [1], [0, 0, 1, 1], [], []>} : vector<2x32xbf16>, vector<32x32xbf16>, vector<2x32xf32> -> vector<2x32xf32>
    %383 = arith.addf %379, %382 : vector<2x32xf32>
    %384 = arith.addf %383, %23 : vector<2x32xf32>
    %385 = arith.negf %384 : vector<2x32xf32>
    %386 = math.exp %385 : vector<2x32xf32>
    %cst_249 = arith.constant 1.000000e+00 : f32
    %387 = vector.broadcast %cst_249 : f32 to vector<2x32xf32>
    %388 = arith.addf %387, %386 : vector<2x32xf32>
    %389 = arith.divf %387, %388 : vector<2x32xf32>
    %c2_250 = arith.constant 2 : index
    %c0_251 = arith.constant 0 : index
    %c0_252 = arith.constant 0 : index
    %390 = vector.load %arg5[%c2_250, %c0_251, %c0_252] : memref<3x32x32xbf16, #tpu.memory_space<vmem>>, vector<1x32x32xbf16>
    %391 = vector.shape_cast %390 : vector<1x32x32xbf16> to vector<32x32xbf16>
    %cst_253 = arith.constant dense<0.000000e+00> : vector<2x32xf32>
    %392 = tpu.matmul %362, %391, %cst_253 {dimension_numbers = #tpu.dot_dimension_numbers<[1], [0], [0], [1], [0, 0, 1, 1], [], []>} : vector<2x32xbf16>, vector<32x32xbf16>, vector<2x32xf32> -> vector<2x32xf32>
    %393 = arith.addf %392, %27 : vector<2x32xf32>
    %c2_254 = arith.constant 2 : index
    %c0_255 = arith.constant 0 : index
    %c0_256 = arith.constant 0 : index
    %394 = vector.load %arg6[%c2_254, %c0_255, %c0_256] : memref<3x32x32xbf16, #tpu.memory_space<vmem>>, vector<1x32x32xbf16>
    %395 = vector.shape_cast %394 : vector<1x32x32xbf16> to vector<32x32xbf16>
    %cst_257 = arith.constant dense<0.000000e+00> : vector<2x32xf32>
    %396 = tpu.matmul %363, %395, %cst_257 {dimension_numbers = #tpu.dot_dimension_numbers<[1], [0], [0], [1], [0, 0, 1, 1], [], []>} : vector<2x32xbf16>, vector<32x32xbf16>, vector<2x32xf32> -> vector<2x32xf32>
    %397 = arith.addf %396, %31 : vector<2x32xf32>
    %398 = arith.mulf %376, %397 : vector<2x32xf32>
    %399 = arith.addf %393, %398 : vector<2x32xf32>
    %400 = math.tanh %399 : vector<2x32xf32>
    %cst_258 = arith.constant 1.000000e+00 : f32
    %401 = vector.broadcast %cst_258 : f32 to vector<2x32xf32>
    %402 = arith.subf %401, %389 : vector<2x32xf32>
    %403 = arith.mulf %402, %400 : vector<2x32xf32>
    %404 = arith.mulf %389, %272 : vector<2x32xf32>
    %405 = arith.addf %403, %404 : vector<2x32xf32>
    %406 = arith.truncf %405 : vector<2x32xf32> to vector<2x32xbf16>
    %407 = arith.truncf %316 : vector<2x32xf32> to vector<2x32xbf16>
    %c0_259 = arith.constant 0 : index
    %c0_260 = arith.constant 0 : index
    %c0_261 = arith.constant 0 : index
    %408 = vector.load %arg8[%c0_259, %c0_260, %c0_261] : memref<3x32x32xbf16, #tpu.memory_space<vmem>>, vector<1x32x32xbf16>
    %409 = vector.shape_cast %408 : vector<1x32x32xbf16> to vector<32x32xbf16>
    %cst_262 = arith.constant dense<0.000000e+00> : vector<2x32xf32>
    %410 = tpu.matmul %406, %409, %cst_262 {dimension_numbers = #tpu.dot_dimension_numbers<[1], [0], [0], [1], [0, 0, 1, 1], [], []>} : vector<2x32xbf16>, vector<32x32xbf16>, vector<2x32xf32> -> vector<2x32xf32>
    %c0_263 = arith.constant 0 : index
    %c0_264 = arith.constant 0 : index
    %c0_265 = arith.constant 0 : index
    %411 = vector.load %arg9[%c0_263, %c0_264, %c0_265] : memref<3x32x32xbf16, #tpu.memory_space<vmem>>, vector<1x32x32xbf16>
    %412 = vector.shape_cast %411 : vector<1x32x32xbf16> to vector<32x32xbf16>
    %cst_266 = arith.constant dense<0.000000e+00> : vector<2x32xf32>
    %413 = tpu.matmul %407, %412, %cst_266 {dimension_numbers = #tpu.dot_dimension_numbers<[1], [0], [0], [1], [0, 0, 1, 1], [], []>} : vector<2x32xbf16>, vector<32x32xbf16>, vector<2x32xf32> -> vector<2x32xf32>
    %414 = arith.addf %410, %413 : vector<2x32xf32>
    %415 = arith.addf %414, %35 : vector<2x32xf32>
    %416 = arith.negf %415 : vector<2x32xf32>
    %417 = math.exp %416 : vector<2x32xf32>
    %cst_267 = arith.constant 1.000000e+00 : f32
    %418 = vector.broadcast %cst_267 : f32 to vector<2x32xf32>
    %419 = arith.addf %418, %417 : vector<2x32xf32>
    %420 = arith.divf %418, %419 : vector<2x32xf32>
    %c1_268 = arith.constant 1 : index
    %c0_269 = arith.constant 0 : index
    %c0_270 = arith.constant 0 : index
    %421 = vector.load %arg8[%c1_268, %c0_269, %c0_270] : memref<3x32x32xbf16, #tpu.memory_space<vmem>>, vector<1x32x32xbf16>
    %422 = vector.shape_cast %421 : vector<1x32x32xbf16> to vector<32x32xbf16>
    %cst_271 = arith.constant dense<0.000000e+00> : vector<2x32xf32>
    %423 = tpu.matmul %406, %422, %cst_271 {dimension_numbers = #tpu.dot_dimension_numbers<[1], [0], [0], [1], [0, 0, 1, 1], [], []>} : vector<2x32xbf16>, vector<32x32xbf16>, vector<2x32xf32> -> vector<2x32xf32>
    %c1_272 = arith.constant 1 : index
    %c0_273 = arith.constant 0 : index
    %c0_274 = arith.constant 0 : index
    %424 = vector.load %arg9[%c1_272, %c0_273, %c0_274] : memref<3x32x32xbf16, #tpu.memory_space<vmem>>, vector<1x32x32xbf16>
    %425 = vector.shape_cast %424 : vector<1x32x32xbf16> to vector<32x32xbf16>
    %cst_275 = arith.constant dense<0.000000e+00> : vector<2x32xf32>
    %426 = tpu.matmul %407, %425, %cst_275 {dimension_numbers = #tpu.dot_dimension_numbers<[1], [0], [0], [1], [0, 0, 1, 1], [], []>} : vector<2x32xbf16>, vector<32x32xbf16>, vector<2x32xf32> -> vector<2x32xf32>
    %427 = arith.addf %423, %426 : vector<2x32xf32>
    %428 = arith.addf %427, %39 : vector<2x32xf32>
    %429 = arith.negf %428 : vector<2x32xf32>
    %430 = math.exp %429 : vector<2x32xf32>
    %cst_276 = arith.constant 1.000000e+00 : f32
    %431 = vector.broadcast %cst_276 : f32 to vector<2x32xf32>
    %432 = arith.addf %431, %430 : vector<2x32xf32>
    %433 = arith.divf %431, %432 : vector<2x32xf32>
    %c2_277 = arith.constant 2 : index
    %c0_278 = arith.constant 0 : index
    %c0_279 = arith.constant 0 : index
    %434 = vector.load %arg8[%c2_277, %c0_278, %c0_279] : memref<3x32x32xbf16, #tpu.memory_space<vmem>>, vector<1x32x32xbf16>
    %435 = vector.shape_cast %434 : vector<1x32x32xbf16> to vector<32x32xbf16>
    %cst_280 = arith.constant dense<0.000000e+00> : vector<2x32xf32>
    %436 = tpu.matmul %406, %435, %cst_280 {dimension_numbers = #tpu.dot_dimension_numbers<[1], [0], [0], [1], [0, 0, 1, 1], [], []>} : vector<2x32xbf16>, vector<32x32xbf16>, vector<2x32xf32> -> vector<2x32xf32>
    %437 = arith.addf %436, %43 : vector<2x32xf32>
    %c2_281 = arith.constant 2 : index
    %c0_282 = arith.constant 0 : index
    %c0_283 = arith.constant 0 : index
    %438 = vector.load %arg9[%c2_281, %c0_282, %c0_283] : memref<3x32x32xbf16, #tpu.memory_space<vmem>>, vector<1x32x32xbf16>
    %439 = vector.shape_cast %438 : vector<1x32x32xbf16> to vector<32x32xbf16>
    %cst_284 = arith.constant dense<0.000000e+00> : vector<2x32xf32>
    %440 = tpu.matmul %407, %439, %cst_284 {dimension_numbers = #tpu.dot_dimension_numbers<[1], [0], [0], [1], [0, 0, 1, 1], [], []>} : vector<2x32xbf16>, vector<32x32xbf16>, vector<2x32xf32> -> vector<2x32xf32>
    %441 = arith.addf %440, %47 : vector<2x32xf32>
    %442 = arith.mulf %420, %441 : vector<2x32xf32>
    %443 = arith.addf %437, %442 : vector<2x32xf32>
    %444 = math.tanh %443 : vector<2x32xf32>
    %cst_285 = arith.constant 1.000000e+00 : f32
    %445 = vector.broadcast %cst_285 : f32 to vector<2x32xf32>
    %446 = arith.subf %445, %433 : vector<2x32xf32>
    %447 = arith.mulf %446, %444 : vector<2x32xf32>
    %448 = arith.mulf %433, %316 : vector<2x32xf32>
    %449 = arith.addf %447, %448 : vector<2x32xf32>
    %c3_286 = arith.constant 3 : index
    %c0_287 = arith.constant 0 : index
    %c0_288 = arith.constant 0 : index
    %450 = vector.load %arg1[%c3_286, %c0_287, %c0_288] : memref<8x2x24xbf16, #tpu.memory_space<vmem>>, vector<1x2x24xbf16>
    %451 = vector.shape_cast %450 : vector<1x2x24xbf16> to vector<2x24xbf16>
    %452 = arith.truncf %361 : vector<2x32xf32> to vector<2x32xbf16>
    %c0_289 = arith.constant 0 : index
    %c0_290 = arith.constant 0 : index
    %c0_291 = arith.constant 0 : index
    %453 = vector.load %arg2[%c0_289, %c0_290, %c0_291] : memref<3x24x32xbf16, #tpu.memory_space<vmem>>, vector<1x24x32xbf16>
    %454 = vector.shape_cast %453 : vector<1x24x32xbf16> to vector<24x32xbf16>
    %cst_292 = arith.constant dense<0.000000e+00> : vector<2x32xf32>
    %455 = tpu.matmul %451, %454, %cst_292 {dimension_numbers = #tpu.dot_dimension_numbers<[1], [0], [0], [1], [0, 0, 1, 1], [], []>} : vector<2x24xbf16>, vector<24x32xbf16>, vector<2x32xf32> -> vector<2x32xf32>
    %c0_293 = arith.constant 0 : index
    %c0_294 = arith.constant 0 : index
    %c0_295 = arith.constant 0 : index
    %456 = vector.load %arg3[%c0_293, %c0_294, %c0_295] : memref<3x32x32xbf16, #tpu.memory_space<vmem>>, vector<1x32x32xbf16>
    %457 = vector.shape_cast %456 : vector<1x32x32xbf16> to vector<32x32xbf16>
    %cst_296 = arith.constant dense<0.000000e+00> : vector<2x32xf32>
    %458 = tpu.matmul %452, %457, %cst_296 {dimension_numbers = #tpu.dot_dimension_numbers<[1], [0], [0], [1], [0, 0, 1, 1], [], []>} : vector<2x32xbf16>, vector<32x32xbf16>, vector<2x32xf32> -> vector<2x32xf32>
    %459 = arith.addf %455, %458 : vector<2x32xf32>
    %460 = arith.addf %459, %3 : vector<2x32xf32>
    %461 = arith.negf %460 : vector<2x32xf32>
    %462 = math.exp %461 : vector<2x32xf32>
    %cst_297 = arith.constant 1.000000e+00 : f32
    %463 = vector.broadcast %cst_297 : f32 to vector<2x32xf32>
    %464 = arith.addf %463, %462 : vector<2x32xf32>
    %465 = arith.divf %463, %464 : vector<2x32xf32>
    %c1_298 = arith.constant 1 : index
    %c0_299 = arith.constant 0 : index
    %c0_300 = arith.constant 0 : index
    %466 = vector.load %arg2[%c1_298, %c0_299, %c0_300] : memref<3x24x32xbf16, #tpu.memory_space<vmem>>, vector<1x24x32xbf16>
    %467 = vector.shape_cast %466 : vector<1x24x32xbf16> to vector<24x32xbf16>
    %cst_301 = arith.constant dense<0.000000e+00> : vector<2x32xf32>
    %468 = tpu.matmul %451, %467, %cst_301 {dimension_numbers = #tpu.dot_dimension_numbers<[1], [0], [0], [1], [0, 0, 1, 1], [], []>} : vector<2x24xbf16>, vector<24x32xbf16>, vector<2x32xf32> -> vector<2x32xf32>
    %c1_302 = arith.constant 1 : index
    %c0_303 = arith.constant 0 : index
    %c0_304 = arith.constant 0 : index
    %469 = vector.load %arg3[%c1_302, %c0_303, %c0_304] : memref<3x32x32xbf16, #tpu.memory_space<vmem>>, vector<1x32x32xbf16>
    %470 = vector.shape_cast %469 : vector<1x32x32xbf16> to vector<32x32xbf16>
    %cst_305 = arith.constant dense<0.000000e+00> : vector<2x32xf32>
    %471 = tpu.matmul %452, %470, %cst_305 {dimension_numbers = #tpu.dot_dimension_numbers<[1], [0], [0], [1], [0, 0, 1, 1], [], []>} : vector<2x32xbf16>, vector<32x32xbf16>, vector<2x32xf32> -> vector<2x32xf32>
    %472 = arith.addf %468, %471 : vector<2x32xf32>
    %473 = arith.addf %472, %7 : vector<2x32xf32>
    %474 = arith.negf %473 : vector<2x32xf32>
    %475 = math.exp %474 : vector<2x32xf32>
    %cst_306 = arith.constant 1.000000e+00 : f32
    %476 = vector.broadcast %cst_306 : f32 to vector<2x32xf32>
    %477 = arith.addf %476, %475 : vector<2x32xf32>
    %478 = arith.divf %476, %477 : vector<2x32xf32>
    %c2_307 = arith.constant 2 : index
    %c0_308 = arith.constant 0 : index
    %c0_309 = arith.constant 0 : index
    %479 = vector.load %arg2[%c2_307, %c0_308, %c0_309] : memref<3x24x32xbf16, #tpu.memory_space<vmem>>, vector<1x24x32xbf16>
    %480 = vector.shape_cast %479 : vector<1x24x32xbf16> to vector<24x32xbf16>
    %cst_310 = arith.constant dense<0.000000e+00> : vector<2x32xf32>
    %481 = tpu.matmul %451, %480, %cst_310 {dimension_numbers = #tpu.dot_dimension_numbers<[1], [0], [0], [1], [0, 0, 1, 1], [], []>} : vector<2x24xbf16>, vector<24x32xbf16>, vector<2x32xf32> -> vector<2x32xf32>
    %482 = arith.addf %481, %11 : vector<2x32xf32>
    %c2_311 = arith.constant 2 : index
    %c0_312 = arith.constant 0 : index
    %c0_313 = arith.constant 0 : index
    %483 = vector.load %arg3[%c2_311, %c0_312, %c0_313] : memref<3x32x32xbf16, #tpu.memory_space<vmem>>, vector<1x32x32xbf16>
    %484 = vector.shape_cast %483 : vector<1x32x32xbf16> to vector<32x32xbf16>
    %cst_314 = arith.constant dense<0.000000e+00> : vector<2x32xf32>
    %485 = tpu.matmul %452, %484, %cst_314 {dimension_numbers = #tpu.dot_dimension_numbers<[1], [0], [0], [1], [0, 0, 1, 1], [], []>} : vector<2x32xbf16>, vector<32x32xbf16>, vector<2x32xf32> -> vector<2x32xf32>
    %486 = arith.addf %485, %15 : vector<2x32xf32>
    %487 = arith.mulf %465, %486 : vector<2x32xf32>
    %488 = arith.addf %482, %487 : vector<2x32xf32>
    %489 = math.tanh %488 : vector<2x32xf32>
    %cst_315 = arith.constant 1.000000e+00 : f32
    %490 = vector.broadcast %cst_315 : f32 to vector<2x32xf32>
    %491 = arith.subf %490, %478 : vector<2x32xf32>
    %492 = arith.mulf %491, %489 : vector<2x32xf32>
    %493 = arith.mulf %478, %361 : vector<2x32xf32>
    %494 = arith.addf %492, %493 : vector<2x32xf32>
    %495 = arith.truncf %494 : vector<2x32xf32> to vector<2x32xbf16>
    %496 = arith.truncf %405 : vector<2x32xf32> to vector<2x32xbf16>
    %c0_316 = arith.constant 0 : index
    %c0_317 = arith.constant 0 : index
    %c0_318 = arith.constant 0 : index
    %497 = vector.load %arg5[%c0_316, %c0_317, %c0_318] : memref<3x32x32xbf16, #tpu.memory_space<vmem>>, vector<1x32x32xbf16>
    %498 = vector.shape_cast %497 : vector<1x32x32xbf16> to vector<32x32xbf16>
    %cst_319 = arith.constant dense<0.000000e+00> : vector<2x32xf32>
    %499 = tpu.matmul %495, %498, %cst_319 {dimension_numbers = #tpu.dot_dimension_numbers<[1], [0], [0], [1], [0, 0, 1, 1], [], []>} : vector<2x32xbf16>, vector<32x32xbf16>, vector<2x32xf32> -> vector<2x32xf32>
    %c0_320 = arith.constant 0 : index
    %c0_321 = arith.constant 0 : index
    %c0_322 = arith.constant 0 : index
    %500 = vector.load %arg6[%c0_320, %c0_321, %c0_322] : memref<3x32x32xbf16, #tpu.memory_space<vmem>>, vector<1x32x32xbf16>
    %501 = vector.shape_cast %500 : vector<1x32x32xbf16> to vector<32x32xbf16>
    %cst_323 = arith.constant dense<0.000000e+00> : vector<2x32xf32>
    %502 = tpu.matmul %496, %501, %cst_323 {dimension_numbers = #tpu.dot_dimension_numbers<[1], [0], [0], [1], [0, 0, 1, 1], [], []>} : vector<2x32xbf16>, vector<32x32xbf16>, vector<2x32xf32> -> vector<2x32xf32>
    %503 = arith.addf %499, %502 : vector<2x32xf32>
    %504 = arith.addf %503, %19 : vector<2x32xf32>
    %505 = arith.negf %504 : vector<2x32xf32>
    %506 = math.exp %505 : vector<2x32xf32>
    %cst_324 = arith.constant 1.000000e+00 : f32
    %507 = vector.broadcast %cst_324 : f32 to vector<2x32xf32>
    %508 = arith.addf %507, %506 : vector<2x32xf32>
    %509 = arith.divf %507, %508 : vector<2x32xf32>
    %c1_325 = arith.constant 1 : index
    %c0_326 = arith.constant 0 : index
    %c0_327 = arith.constant 0 : index
    %510 = vector.load %arg5[%c1_325, %c0_326, %c0_327] : memref<3x32x32xbf16, #tpu.memory_space<vmem>>, vector<1x32x32xbf16>
    %511 = vector.shape_cast %510 : vector<1x32x32xbf16> to vector<32x32xbf16>
    %cst_328 = arith.constant dense<0.000000e+00> : vector<2x32xf32>
    %512 = tpu.matmul %495, %511, %cst_328 {dimension_numbers = #tpu.dot_dimension_numbers<[1], [0], [0], [1], [0, 0, 1, 1], [], []>} : vector<2x32xbf16>, vector<32x32xbf16>, vector<2x32xf32> -> vector<2x32xf32>
    %c1_329 = arith.constant 1 : index
    %c0_330 = arith.constant 0 : index
    %c0_331 = arith.constant 0 : index
    %513 = vector.load %arg6[%c1_329, %c0_330, %c0_331] : memref<3x32x32xbf16, #tpu.memory_space<vmem>>, vector<1x32x32xbf16>
    %514 = vector.shape_cast %513 : vector<1x32x32xbf16> to vector<32x32xbf16>
    %cst_332 = arith.constant dense<0.000000e+00> : vector<2x32xf32>
    %515 = tpu.matmul %496, %514, %cst_332 {dimension_numbers = #tpu.dot_dimension_numbers<[1], [0], [0], [1], [0, 0, 1, 1], [], []>} : vector<2x32xbf16>, vector<32x32xbf16>, vector<2x32xf32> -> vector<2x32xf32>
    %516 = arith.addf %512, %515 : vector<2x32xf32>
    %517 = arith.addf %516, %23 : vector<2x32xf32>
    %518 = arith.negf %517 : vector<2x32xf32>
    %519 = math.exp %518 : vector<2x32xf32>
    %cst_333 = arith.constant 1.000000e+00 : f32
    %520 = vector.broadcast %cst_333 : f32 to vector<2x32xf32>
    %521 = arith.addf %520, %519 : vector<2x32xf32>
    %522 = arith.divf %520, %521 : vector<2x32xf32>
    %c2_334 = arith.constant 2 : index
    %c0_335 = arith.constant 0 : index
    %c0_336 = arith.constant 0 : index
    %523 = vector.load %arg5[%c2_334, %c0_335, %c0_336] : memref<3x32x32xbf16, #tpu.memory_space<vmem>>, vector<1x32x32xbf16>
    %524 = vector.shape_cast %523 : vector<1x32x32xbf16> to vector<32x32xbf16>
    %cst_337 = arith.constant dense<0.000000e+00> : vector<2x32xf32>
    %525 = tpu.matmul %495, %524, %cst_337 {dimension_numbers = #tpu.dot_dimension_numbers<[1], [0], [0], [1], [0, 0, 1, 1], [], []>} : vector<2x32xbf16>, vector<32x32xbf16>, vector<2x32xf32> -> vector<2x32xf32>
    %526 = arith.addf %525, %27 : vector<2x32xf32>
    %c2_338 = arith.constant 2 : index
    %c0_339 = arith.constant 0 : index
    %c0_340 = arith.constant 0 : index
    %527 = vector.load %arg6[%c2_338, %c0_339, %c0_340] : memref<3x32x32xbf16, #tpu.memory_space<vmem>>, vector<1x32x32xbf16>
    %528 = vector.shape_cast %527 : vector<1x32x32xbf16> to vector<32x32xbf16>
    %cst_341 = arith.constant dense<0.000000e+00> : vector<2x32xf32>
    %529 = tpu.matmul %496, %528, %cst_341 {dimension_numbers = #tpu.dot_dimension_numbers<[1], [0], [0], [1], [0, 0, 1, 1], [], []>} : vector<2x32xbf16>, vector<32x32xbf16>, vector<2x32xf32> -> vector<2x32xf32>
    %530 = arith.addf %529, %31 : vector<2x32xf32>
    %531 = arith.mulf %509, %530 : vector<2x32xf32>
    %532 = arith.addf %526, %531 : vector<2x32xf32>
    %533 = math.tanh %532 : vector<2x32xf32>
    %cst_342 = arith.constant 1.000000e+00 : f32
    %534 = vector.broadcast %cst_342 : f32 to vector<2x32xf32>
    %535 = arith.subf %534, %522 : vector<2x32xf32>
    %536 = arith.mulf %535, %533 : vector<2x32xf32>
    %537 = arith.mulf %522, %405 : vector<2x32xf32>
    %538 = arith.addf %536, %537 : vector<2x32xf32>
    %539 = arith.truncf %538 : vector<2x32xf32> to vector<2x32xbf16>
    %540 = arith.truncf %449 : vector<2x32xf32> to vector<2x32xbf16>
    %c0_343 = arith.constant 0 : index
    %c0_344 = arith.constant 0 : index
    %c0_345 = arith.constant 0 : index
    %541 = vector.load %arg8[%c0_343, %c0_344, %c0_345] : memref<3x32x32xbf16, #tpu.memory_space<vmem>>, vector<1x32x32xbf16>
    %542 = vector.shape_cast %541 : vector<1x32x32xbf16> to vector<32x32xbf16>
    %cst_346 = arith.constant dense<0.000000e+00> : vector<2x32xf32>
    %543 = tpu.matmul %539, %542, %cst_346 {dimension_numbers = #tpu.dot_dimension_numbers<[1], [0], [0], [1], [0, 0, 1, 1], [], []>} : vector<2x32xbf16>, vector<32x32xbf16>, vector<2x32xf32> -> vector<2x32xf32>
    %c0_347 = arith.constant 0 : index
    %c0_348 = arith.constant 0 : index
    %c0_349 = arith.constant 0 : index
    %544 = vector.load %arg9[%c0_347, %c0_348, %c0_349] : memref<3x32x32xbf16, #tpu.memory_space<vmem>>, vector<1x32x32xbf16>
    %545 = vector.shape_cast %544 : vector<1x32x32xbf16> to vector<32x32xbf16>
    %cst_350 = arith.constant dense<0.000000e+00> : vector<2x32xf32>
    %546 = tpu.matmul %540, %545, %cst_350 {dimension_numbers = #tpu.dot_dimension_numbers<[1], [0], [0], [1], [0, 0, 1, 1], [], []>} : vector<2x32xbf16>, vector<32x32xbf16>, vector<2x32xf32> -> vector<2x32xf32>
    %547 = arith.addf %543, %546 : vector<2x32xf32>
    %548 = arith.addf %547, %35 : vector<2x32xf32>
    %549 = arith.negf %548 : vector<2x32xf32>
    %550 = math.exp %549 : vector<2x32xf32>
    %cst_351 = arith.constant 1.000000e+00 : f32
    %551 = vector.broadcast %cst_351 : f32 to vector<2x32xf32>
    %552 = arith.addf %551, %550 : vector<2x32xf32>
    %553 = arith.divf %551, %552 : vector<2x32xf32>
    %c1_352 = arith.constant 1 : index
    %c0_353 = arith.constant 0 : index
    %c0_354 = arith.constant 0 : index
    %554 = vector.load %arg8[%c1_352, %c0_353, %c0_354] : memref<3x32x32xbf16, #tpu.memory_space<vmem>>, vector<1x32x32xbf16>
    %555 = vector.shape_cast %554 : vector<1x32x32xbf16> to vector<32x32xbf16>
    %cst_355 = arith.constant dense<0.000000e+00> : vector<2x32xf32>
    %556 = tpu.matmul %539, %555, %cst_355 {dimension_numbers = #tpu.dot_dimension_numbers<[1], [0], [0], [1], [0, 0, 1, 1], [], []>} : vector<2x32xbf16>, vector<32x32xbf16>, vector<2x32xf32> -> vector<2x32xf32>
    %c1_356 = arith.constant 1 : index
    %c0_357 = arith.constant 0 : index
    %c0_358 = arith.constant 0 : index
    %557 = vector.load %arg9[%c1_356, %c0_357, %c0_358] : memref<3x32x32xbf16, #tpu.memory_space<vmem>>, vector<1x32x32xbf16>
    %558 = vector.shape_cast %557 : vector<1x32x32xbf16> to vector<32x32xbf16>
    %cst_359 = arith.constant dense<0.000000e+00> : vector<2x32xf32>
    %559 = tpu.matmul %540, %558, %cst_359 {dimension_numbers = #tpu.dot_dimension_numbers<[1], [0], [0], [1], [0, 0, 1, 1], [], []>} : vector<2x32xbf16>, vector<32x32xbf16>, vector<2x32xf32> -> vector<2x32xf32>
    %560 = arith.addf %556, %559 : vector<2x32xf32>
    %561 = arith.addf %560, %39 : vector<2x32xf32>
    %562 = arith.negf %561 : vector<2x32xf32>
    %563 = math.exp %562 : vector<2x32xf32>
    %cst_360 = arith.constant 1.000000e+00 : f32
    %564 = vector.broadcast %cst_360 : f32 to vector<2x32xf32>
    %565 = arith.addf %564, %563 : vector<2x32xf32>
    %566 = arith.divf %564, %565 : vector<2x32xf32>
    %c2_361 = arith.constant 2 : index
    %c0_362 = arith.constant 0 : index
    %c0_363 = arith.constant 0 : index
    %567 = vector.load %arg8[%c2_361, %c0_362, %c0_363] : memref<3x32x32xbf16, #tpu.memory_space<vmem>>, vector<1x32x32xbf16>
    %568 = vector.shape_cast %567 : vector<1x32x32xbf16> to vector<32x32xbf16>
    %cst_364 = arith.constant dense<0.000000e+00> : vector<2x32xf32>
    %569 = tpu.matmul %539, %568, %cst_364 {dimension_numbers = #tpu.dot_dimension_numbers<[1], [0], [0], [1], [0, 0, 1, 1], [], []>} : vector<2x32xbf16>, vector<32x32xbf16>, vector<2x32xf32> -> vector<2x32xf32>
    %570 = arith.addf %569, %43 : vector<2x32xf32>
    %c2_365 = arith.constant 2 : index
    %c0_366 = arith.constant 0 : index
    %c0_367 = arith.constant 0 : index
    %571 = vector.load %arg9[%c2_365, %c0_366, %c0_367] : memref<3x32x32xbf16, #tpu.memory_space<vmem>>, vector<1x32x32xbf16>
    %572 = vector.shape_cast %571 : vector<1x32x32xbf16> to vector<32x32xbf16>
    %cst_368 = arith.constant dense<0.000000e+00> : vector<2x32xf32>
    %573 = tpu.matmul %540, %572, %cst_368 {dimension_numbers = #tpu.dot_dimension_numbers<[1], [0], [0], [1], [0, 0, 1, 1], [], []>} : vector<2x32xbf16>, vector<32x32xbf16>, vector<2x32xf32> -> vector<2x32xf32>
    %574 = arith.addf %573, %47 : vector<2x32xf32>
    %575 = arith.mulf %553, %574 : vector<2x32xf32>
    %576 = arith.addf %570, %575 : vector<2x32xf32>
    %577 = math.tanh %576 : vector<2x32xf32>
    %cst_369 = arith.constant 1.000000e+00 : f32
    %578 = vector.broadcast %cst_369 : f32 to vector<2x32xf32>
    %579 = arith.subf %578, %566 : vector<2x32xf32>
    %580 = arith.mulf %579, %577 : vector<2x32xf32>
    %581 = arith.mulf %566, %449 : vector<2x32xf32>
    %582 = arith.addf %580, %581 : vector<2x32xf32>
    %c4 = arith.constant 4 : index
    %c0_370 = arith.constant 0 : index
    %c0_371 = arith.constant 0 : index
    %583 = vector.load %arg1[%c4, %c0_370, %c0_371] : memref<8x2x24xbf16, #tpu.memory_space<vmem>>, vector<1x2x24xbf16>
    %584 = vector.shape_cast %583 : vector<1x2x24xbf16> to vector<2x24xbf16>
    %585 = arith.truncf %494 : vector<2x32xf32> to vector<2x32xbf16>
    %c0_372 = arith.constant 0 : index
    %c0_373 = arith.constant 0 : index
    %c0_374 = arith.constant 0 : index
    %586 = vector.load %arg2[%c0_372, %c0_373, %c0_374] : memref<3x24x32xbf16, #tpu.memory_space<vmem>>, vector<1x24x32xbf16>
    %587 = vector.shape_cast %586 : vector<1x24x32xbf16> to vector<24x32xbf16>
    %cst_375 = arith.constant dense<0.000000e+00> : vector<2x32xf32>
    %588 = tpu.matmul %584, %587, %cst_375 {dimension_numbers = #tpu.dot_dimension_numbers<[1], [0], [0], [1], [0, 0, 1, 1], [], []>} : vector<2x24xbf16>, vector<24x32xbf16>, vector<2x32xf32> -> vector<2x32xf32>
    %c0_376 = arith.constant 0 : index
    %c0_377 = arith.constant 0 : index
    %c0_378 = arith.constant 0 : index
    %589 = vector.load %arg3[%c0_376, %c0_377, %c0_378] : memref<3x32x32xbf16, #tpu.memory_space<vmem>>, vector<1x32x32xbf16>
    %590 = vector.shape_cast %589 : vector<1x32x32xbf16> to vector<32x32xbf16>
    %cst_379 = arith.constant dense<0.000000e+00> : vector<2x32xf32>
    %591 = tpu.matmul %585, %590, %cst_379 {dimension_numbers = #tpu.dot_dimension_numbers<[1], [0], [0], [1], [0, 0, 1, 1], [], []>} : vector<2x32xbf16>, vector<32x32xbf16>, vector<2x32xf32> -> vector<2x32xf32>
    %592 = arith.addf %588, %591 : vector<2x32xf32>
    %593 = arith.addf %592, %3 : vector<2x32xf32>
    %594 = arith.negf %593 : vector<2x32xf32>
    %595 = math.exp %594 : vector<2x32xf32>
    %cst_380 = arith.constant 1.000000e+00 : f32
    %596 = vector.broadcast %cst_380 : f32 to vector<2x32xf32>
    %597 = arith.addf %596, %595 : vector<2x32xf32>
    %598 = arith.divf %596, %597 : vector<2x32xf32>
    %c1_381 = arith.constant 1 : index
    %c0_382 = arith.constant 0 : index
    %c0_383 = arith.constant 0 : index
    %599 = vector.load %arg2[%c1_381, %c0_382, %c0_383] : memref<3x24x32xbf16, #tpu.memory_space<vmem>>, vector<1x24x32xbf16>
    %600 = vector.shape_cast %599 : vector<1x24x32xbf16> to vector<24x32xbf16>
    %cst_384 = arith.constant dense<0.000000e+00> : vector<2x32xf32>
    %601 = tpu.matmul %584, %600, %cst_384 {dimension_numbers = #tpu.dot_dimension_numbers<[1], [0], [0], [1], [0, 0, 1, 1], [], []>} : vector<2x24xbf16>, vector<24x32xbf16>, vector<2x32xf32> -> vector<2x32xf32>
    %c1_385 = arith.constant 1 : index
    %c0_386 = arith.constant 0 : index
    %c0_387 = arith.constant 0 : index
    %602 = vector.load %arg3[%c1_385, %c0_386, %c0_387] : memref<3x32x32xbf16, #tpu.memory_space<vmem>>, vector<1x32x32xbf16>
    %603 = vector.shape_cast %602 : vector<1x32x32xbf16> to vector<32x32xbf16>
    %cst_388 = arith.constant dense<0.000000e+00> : vector<2x32xf32>
    %604 = tpu.matmul %585, %603, %cst_388 {dimension_numbers = #tpu.dot_dimension_numbers<[1], [0], [0], [1], [0, 0, 1, 1], [], []>} : vector<2x32xbf16>, vector<32x32xbf16>, vector<2x32xf32> -> vector<2x32xf32>
    %605 = arith.addf %601, %604 : vector<2x32xf32>
    %606 = arith.addf %605, %7 : vector<2x32xf32>
    %607 = arith.negf %606 : vector<2x32xf32>
    %608 = math.exp %607 : vector<2x32xf32>
    %cst_389 = arith.constant 1.000000e+00 : f32
    %609 = vector.broadcast %cst_389 : f32 to vector<2x32xf32>
    %610 = arith.addf %609, %608 : vector<2x32xf32>
    %611 = arith.divf %609, %610 : vector<2x32xf32>
    %c2_390 = arith.constant 2 : index
    %c0_391 = arith.constant 0 : index
    %c0_392 = arith.constant 0 : index
    %612 = vector.load %arg2[%c2_390, %c0_391, %c0_392] : memref<3x24x32xbf16, #tpu.memory_space<vmem>>, vector<1x24x32xbf16>
    %613 = vector.shape_cast %612 : vector<1x24x32xbf16> to vector<24x32xbf16>
    %cst_393 = arith.constant dense<0.000000e+00> : vector<2x32xf32>
    %614 = tpu.matmul %584, %613, %cst_393 {dimension_numbers = #tpu.dot_dimension_numbers<[1], [0], [0], [1], [0, 0, 1, 1], [], []>} : vector<2x24xbf16>, vector<24x32xbf16>, vector<2x32xf32> -> vector<2x32xf32>
    %615 = arith.addf %614, %11 : vector<2x32xf32>
    %c2_394 = arith.constant 2 : index
    %c0_395 = arith.constant 0 : index
    %c0_396 = arith.constant 0 : index
    %616 = vector.load %arg3[%c2_394, %c0_395, %c0_396] : memref<3x32x32xbf16, #tpu.memory_space<vmem>>, vector<1x32x32xbf16>
    %617 = vector.shape_cast %616 : vector<1x32x32xbf16> to vector<32x32xbf16>
    %cst_397 = arith.constant dense<0.000000e+00> : vector<2x32xf32>
    %618 = tpu.matmul %585, %617, %cst_397 {dimension_numbers = #tpu.dot_dimension_numbers<[1], [0], [0], [1], [0, 0, 1, 1], [], []>} : vector<2x32xbf16>, vector<32x32xbf16>, vector<2x32xf32> -> vector<2x32xf32>
    %619 = arith.addf %618, %15 : vector<2x32xf32>
    %620 = arith.mulf %598, %619 : vector<2x32xf32>
    %621 = arith.addf %615, %620 : vector<2x32xf32>
    %622 = math.tanh %621 : vector<2x32xf32>
    %cst_398 = arith.constant 1.000000e+00 : f32
    %623 = vector.broadcast %cst_398 : f32 to vector<2x32xf32>
    %624 = arith.subf %623, %611 : vector<2x32xf32>
    %625 = arith.mulf %624, %622 : vector<2x32xf32>
    %626 = arith.mulf %611, %494 : vector<2x32xf32>
    %627 = arith.addf %625, %626 : vector<2x32xf32>
    %628 = arith.truncf %627 : vector<2x32xf32> to vector<2x32xbf16>
    %629 = arith.truncf %538 : vector<2x32xf32> to vector<2x32xbf16>
    %c0_399 = arith.constant 0 : index
    %c0_400 = arith.constant 0 : index
    %c0_401 = arith.constant 0 : index
    %630 = vector.load %arg5[%c0_399, %c0_400, %c0_401] : memref<3x32x32xbf16, #tpu.memory_space<vmem>>, vector<1x32x32xbf16>
    %631 = vector.shape_cast %630 : vector<1x32x32xbf16> to vector<32x32xbf16>
    %cst_402 = arith.constant dense<0.000000e+00> : vector<2x32xf32>
    %632 = tpu.matmul %628, %631, %cst_402 {dimension_numbers = #tpu.dot_dimension_numbers<[1], [0], [0], [1], [0, 0, 1, 1], [], []>} : vector<2x32xbf16>, vector<32x32xbf16>, vector<2x32xf32> -> vector<2x32xf32>
    %c0_403 = arith.constant 0 : index
    %c0_404 = arith.constant 0 : index
    %c0_405 = arith.constant 0 : index
    %633 = vector.load %arg6[%c0_403, %c0_404, %c0_405] : memref<3x32x32xbf16, #tpu.memory_space<vmem>>, vector<1x32x32xbf16>
    %634 = vector.shape_cast %633 : vector<1x32x32xbf16> to vector<32x32xbf16>
    %cst_406 = arith.constant dense<0.000000e+00> : vector<2x32xf32>
    %635 = tpu.matmul %629, %634, %cst_406 {dimension_numbers = #tpu.dot_dimension_numbers<[1], [0], [0], [1], [0, 0, 1, 1], [], []>} : vector<2x32xbf16>, vector<32x32xbf16>, vector<2x32xf32> -> vector<2x32xf32>
    %636 = arith.addf %632, %635 : vector<2x32xf32>
    %637 = arith.addf %636, %19 : vector<2x32xf32>
    %638 = arith.negf %637 : vector<2x32xf32>
    %639 = math.exp %638 : vector<2x32xf32>
    %cst_407 = arith.constant 1.000000e+00 : f32
    %640 = vector.broadcast %cst_407 : f32 to vector<2x32xf32>
    %641 = arith.addf %640, %639 : vector<2x32xf32>
    %642 = arith.divf %640, %641 : vector<2x32xf32>
    %c1_408 = arith.constant 1 : index
    %c0_409 = arith.constant 0 : index
    %c0_410 = arith.constant 0 : index
    %643 = vector.load %arg5[%c1_408, %c0_409, %c0_410] : memref<3x32x32xbf16, #tpu.memory_space<vmem>>, vector<1x32x32xbf16>
    %644 = vector.shape_cast %643 : vector<1x32x32xbf16> to vector<32x32xbf16>
    %cst_411 = arith.constant dense<0.000000e+00> : vector<2x32xf32>
    %645 = tpu.matmul %628, %644, %cst_411 {dimension_numbers = #tpu.dot_dimension_numbers<[1], [0], [0], [1], [0, 0, 1, 1], [], []>} : vector<2x32xbf16>, vector<32x32xbf16>, vector<2x32xf32> -> vector<2x32xf32>
    %c1_412 = arith.constant 1 : index
    %c0_413 = arith.constant 0 : index
    %c0_414 = arith.constant 0 : index
    %646 = vector.load %arg6[%c1_412, %c0_413, %c0_414] : memref<3x32x32xbf16, #tpu.memory_space<vmem>>, vector<1x32x32xbf16>
    %647 = vector.shape_cast %646 : vector<1x32x32xbf16> to vector<32x32xbf16>
    %cst_415 = arith.constant dense<0.000000e+00> : vector<2x32xf32>
    %648 = tpu.matmul %629, %647, %cst_415 {dimension_numbers = #tpu.dot_dimension_numbers<[1], [0], [0], [1], [0, 0, 1, 1], [], []>} : vector<2x32xbf16>, vector<32x32xbf16>, vector<2x32xf32> -> vector<2x32xf32>
    %649 = arith.addf %645, %648 : vector<2x32xf32>
    %650 = arith.addf %649, %23 : vector<2x32xf32>
    %651 = arith.negf %650 : vector<2x32xf32>
    %652 = math.exp %651 : vector<2x32xf32>
    %cst_416 = arith.constant 1.000000e+00 : f32
    %653 = vector.broadcast %cst_416 : f32 to vector<2x32xf32>
    %654 = arith.addf %653, %652 : vector<2x32xf32>
    %655 = arith.divf %653, %654 : vector<2x32xf32>
    %c2_417 = arith.constant 2 : index
    %c0_418 = arith.constant 0 : index
    %c0_419 = arith.constant 0 : index
    %656 = vector.load %arg5[%c2_417, %c0_418, %c0_419] : memref<3x32x32xbf16, #tpu.memory_space<vmem>>, vector<1x32x32xbf16>
    %657 = vector.shape_cast %656 : vector<1x32x32xbf16> to vector<32x32xbf16>
    %cst_420 = arith.constant dense<0.000000e+00> : vector<2x32xf32>
    %658 = tpu.matmul %628, %657, %cst_420 {dimension_numbers = #tpu.dot_dimension_numbers<[1], [0], [0], [1], [0, 0, 1, 1], [], []>} : vector<2x32xbf16>, vector<32x32xbf16>, vector<2x32xf32> -> vector<2x32xf32>
    %659 = arith.addf %658, %27 : vector<2x32xf32>
    %c2_421 = arith.constant 2 : index
    %c0_422 = arith.constant 0 : index
    %c0_423 = arith.constant 0 : index
    %660 = vector.load %arg6[%c2_421, %c0_422, %c0_423] : memref<3x32x32xbf16, #tpu.memory_space<vmem>>, vector<1x32x32xbf16>
    %661 = vector.shape_cast %660 : vector<1x32x32xbf16> to vector<32x32xbf16>
    %cst_424 = arith.constant dense<0.000000e+00> : vector<2x32xf32>
    %662 = tpu.matmul %629, %661, %cst_424 {dimension_numbers = #tpu.dot_dimension_numbers<[1], [0], [0], [1], [0, 0, 1, 1], [], []>} : vector<2x32xbf16>, vector<32x32xbf16>, vector<2x32xf32> -> vector<2x32xf32>
    %663 = arith.addf %662, %31 : vector<2x32xf32>
    %664 = arith.mulf %642, %663 : vector<2x32xf32>
    %665 = arith.addf %659, %664 : vector<2x32xf32>
    %666 = math.tanh %665 : vector<2x32xf32>
    %cst_425 = arith.constant 1.000000e+00 : f32
    %667 = vector.broadcast %cst_425 : f32 to vector<2x32xf32>
    %668 = arith.subf %667, %655 : vector<2x32xf32>
    %669 = arith.mulf %668, %666 : vector<2x32xf32>
    %670 = arith.mulf %655, %538 : vector<2x32xf32>
    %671 = arith.addf %669, %670 : vector<2x32xf32>
    %672 = arith.truncf %671 : vector<2x32xf32> to vector<2x32xbf16>
    %673 = arith.truncf %582 : vector<2x32xf32> to vector<2x32xbf16>
    %c0_426 = arith.constant 0 : index
    %c0_427 = arith.constant 0 : index
    %c0_428 = arith.constant 0 : index
    %674 = vector.load %arg8[%c0_426, %c0_427, %c0_428] : memref<3x32x32xbf16, #tpu.memory_space<vmem>>, vector<1x32x32xbf16>
    %675 = vector.shape_cast %674 : vector<1x32x32xbf16> to vector<32x32xbf16>
    %cst_429 = arith.constant dense<0.000000e+00> : vector<2x32xf32>
    %676 = tpu.matmul %672, %675, %cst_429 {dimension_numbers = #tpu.dot_dimension_numbers<[1], [0], [0], [1], [0, 0, 1, 1], [], []>} : vector<2x32xbf16>, vector<32x32xbf16>, vector<2x32xf32> -> vector<2x32xf32>
    %c0_430 = arith.constant 0 : index
    %c0_431 = arith.constant 0 : index
    %c0_432 = arith.constant 0 : index
    %677 = vector.load %arg9[%c0_430, %c0_431, %c0_432] : memref<3x32x32xbf16, #tpu.memory_space<vmem>>, vector<1x32x32xbf16>
    %678 = vector.shape_cast %677 : vector<1x32x32xbf16> to vector<32x32xbf16>
    %cst_433 = arith.constant dense<0.000000e+00> : vector<2x32xf32>
    %679 = tpu.matmul %673, %678, %cst_433 {dimension_numbers = #tpu.dot_dimension_numbers<[1], [0], [0], [1], [0, 0, 1, 1], [], []>} : vector<2x32xbf16>, vector<32x32xbf16>, vector<2x32xf32> -> vector<2x32xf32>
    %680 = arith.addf %676, %679 : vector<2x32xf32>
    %681 = arith.addf %680, %35 : vector<2x32xf32>
    %682 = arith.negf %681 : vector<2x32xf32>
    %683 = math.exp %682 : vector<2x32xf32>
    %cst_434 = arith.constant 1.000000e+00 : f32
    %684 = vector.broadcast %cst_434 : f32 to vector<2x32xf32>
    %685 = arith.addf %684, %683 : vector<2x32xf32>
    %686 = arith.divf %684, %685 : vector<2x32xf32>
    %c1_435 = arith.constant 1 : index
    %c0_436 = arith.constant 0 : index
    %c0_437 = arith.constant 0 : index
    %687 = vector.load %arg8[%c1_435, %c0_436, %c0_437] : memref<3x32x32xbf16, #tpu.memory_space<vmem>>, vector<1x32x32xbf16>
    %688 = vector.shape_cast %687 : vector<1x32x32xbf16> to vector<32x32xbf16>
    %cst_438 = arith.constant dense<0.000000e+00> : vector<2x32xf32>
    %689 = tpu.matmul %672, %688, %cst_438 {dimension_numbers = #tpu.dot_dimension_numbers<[1], [0], [0], [1], [0, 0, 1, 1], [], []>} : vector<2x32xbf16>, vector<32x32xbf16>, vector<2x32xf32> -> vector<2x32xf32>
    %c1_439 = arith.constant 1 : index
    %c0_440 = arith.constant 0 : index
    %c0_441 = arith.constant 0 : index
    %690 = vector.load %arg9[%c1_439, %c0_440, %c0_441] : memref<3x32x32xbf16, #tpu.memory_space<vmem>>, vector<1x32x32xbf16>
    %691 = vector.shape_cast %690 : vector<1x32x32xbf16> to vector<32x32xbf16>
    %cst_442 = arith.constant dense<0.000000e+00> : vector<2x32xf32>
    %692 = tpu.matmul %673, %691, %cst_442 {dimension_numbers = #tpu.dot_dimension_numbers<[1], [0], [0], [1], [0, 0, 1, 1], [], []>} : vector<2x32xbf16>, vector<32x32xbf16>, vector<2x32xf32> -> vector<2x32xf32>
    %693 = arith.addf %689, %692 : vector<2x32xf32>
    %694 = arith.addf %693, %39 : vector<2x32xf32>
    %695 = arith.negf %694 : vector<2x32xf32>
    %696 = math.exp %695 : vector<2x32xf32>
    %cst_443 = arith.constant 1.000000e+00 : f32
    %697 = vector.broadcast %cst_443 : f32 to vector<2x32xf32>
    %698 = arith.addf %697, %696 : vector<2x32xf32>
    %699 = arith.divf %697, %698 : vector<2x32xf32>
    %c2_444 = arith.constant 2 : index
    %c0_445 = arith.constant 0 : index
    %c0_446 = arith.constant 0 : index
    %700 = vector.load %arg8[%c2_444, %c0_445, %c0_446] : memref<3x32x32xbf16, #tpu.memory_space<vmem>>, vector<1x32x32xbf16>
    %701 = vector.shape_cast %700 : vector<1x32x32xbf16> to vector<32x32xbf16>
    %cst_447 = arith.constant dense<0.000000e+00> : vector<2x32xf32>
    %702 = tpu.matmul %672, %701, %cst_447 {dimension_numbers = #tpu.dot_dimension_numbers<[1], [0], [0], [1], [0, 0, 1, 1], [], []>} : vector<2x32xbf16>, vector<32x32xbf16>, vector<2x32xf32> -> vector<2x32xf32>
    %703 = arith.addf %702, %43 : vector<2x32xf32>
    %c2_448 = arith.constant 2 : index
    %c0_449 = arith.constant 0 : index
    %c0_450 = arith.constant 0 : index
    %704 = vector.load %arg9[%c2_448, %c0_449, %c0_450] : memref<3x32x32xbf16, #tpu.memory_space<vmem>>, vector<1x32x32xbf16>
    %705 = vector.shape_cast %704 : vector<1x32x32xbf16> to vector<32x32xbf16>
    %cst_451 = arith.constant dense<0.000000e+00> : vector<2x32xf32>
    %706 = tpu.matmul %673, %705, %cst_451 {dimension_numbers = #tpu.dot_dimension_numbers<[1], [0], [0], [1], [0, 0, 1, 1], [], []>} : vector<2x32xbf16>, vector<32x32xbf16>, vector<2x32xf32> -> vector<2x32xf32>
    %707 = arith.addf %706, %47 : vector<2x32xf32>
    %708 = arith.mulf %686, %707 : vector<2x32xf32>
    %709 = arith.addf %703, %708 : vector<2x32xf32>
    %710 = math.tanh %709 : vector<2x32xf32>
    %cst_452 = arith.constant 1.000000e+00 : f32
    %711 = vector.broadcast %cst_452 : f32 to vector<2x32xf32>
    %712 = arith.subf %711, %699 : vector<2x32xf32>
    %713 = arith.mulf %712, %710 : vector<2x32xf32>
    %714 = arith.mulf %699, %582 : vector<2x32xf32>
    %715 = arith.addf %713, %714 : vector<2x32xf32>
    %c5 = arith.constant 5 : index
    %c0_453 = arith.constant 0 : index
    %c0_454 = arith.constant 0 : index
    %716 = vector.load %arg1[%c5, %c0_453, %c0_454] : memref<8x2x24xbf16, #tpu.memory_space<vmem>>, vector<1x2x24xbf16>
    %717 = vector.shape_cast %716 : vector<1x2x24xbf16> to vector<2x24xbf16>
    %718 = arith.truncf %627 : vector<2x32xf32> to vector<2x32xbf16>
    %c0_455 = arith.constant 0 : index
    %c0_456 = arith.constant 0 : index
    %c0_457 = arith.constant 0 : index
    %719 = vector.load %arg2[%c0_455, %c0_456, %c0_457] : memref<3x24x32xbf16, #tpu.memory_space<vmem>>, vector<1x24x32xbf16>
    %720 = vector.shape_cast %719 : vector<1x24x32xbf16> to vector<24x32xbf16>
    %cst_458 = arith.constant dense<0.000000e+00> : vector<2x32xf32>
    %721 = tpu.matmul %717, %720, %cst_458 {dimension_numbers = #tpu.dot_dimension_numbers<[1], [0], [0], [1], [0, 0, 1, 1], [], []>} : vector<2x24xbf16>, vector<24x32xbf16>, vector<2x32xf32> -> vector<2x32xf32>
    %c0_459 = arith.constant 0 : index
    %c0_460 = arith.constant 0 : index
    %c0_461 = arith.constant 0 : index
    %722 = vector.load %arg3[%c0_459, %c0_460, %c0_461] : memref<3x32x32xbf16, #tpu.memory_space<vmem>>, vector<1x32x32xbf16>
    %723 = vector.shape_cast %722 : vector<1x32x32xbf16> to vector<32x32xbf16>
    %cst_462 = arith.constant dense<0.000000e+00> : vector<2x32xf32>
    %724 = tpu.matmul %718, %723, %cst_462 {dimension_numbers = #tpu.dot_dimension_numbers<[1], [0], [0], [1], [0, 0, 1, 1], [], []>} : vector<2x32xbf16>, vector<32x32xbf16>, vector<2x32xf32> -> vector<2x32xf32>
    %725 = arith.addf %721, %724 : vector<2x32xf32>
    %726 = arith.addf %725, %3 : vector<2x32xf32>
    %727 = arith.negf %726 : vector<2x32xf32>
    %728 = math.exp %727 : vector<2x32xf32>
    %cst_463 = arith.constant 1.000000e+00 : f32
    %729 = vector.broadcast %cst_463 : f32 to vector<2x32xf32>
    %730 = arith.addf %729, %728 : vector<2x32xf32>
    %731 = arith.divf %729, %730 : vector<2x32xf32>
    %c1_464 = arith.constant 1 : index
    %c0_465 = arith.constant 0 : index
    %c0_466 = arith.constant 0 : index
    %732 = vector.load %arg2[%c1_464, %c0_465, %c0_466] : memref<3x24x32xbf16, #tpu.memory_space<vmem>>, vector<1x24x32xbf16>
    %733 = vector.shape_cast %732 : vector<1x24x32xbf16> to vector<24x32xbf16>
    %cst_467 = arith.constant dense<0.000000e+00> : vector<2x32xf32>
    %734 = tpu.matmul %717, %733, %cst_467 {dimension_numbers = #tpu.dot_dimension_numbers<[1], [0], [0], [1], [0, 0, 1, 1], [], []>} : vector<2x24xbf16>, vector<24x32xbf16>, vector<2x32xf32> -> vector<2x32xf32>
    %c1_468 = arith.constant 1 : index
    %c0_469 = arith.constant 0 : index
    %c0_470 = arith.constant 0 : index
    %735 = vector.load %arg3[%c1_468, %c0_469, %c0_470] : memref<3x32x32xbf16, #tpu.memory_space<vmem>>, vector<1x32x32xbf16>
    %736 = vector.shape_cast %735 : vector<1x32x32xbf16> to vector<32x32xbf16>
    %cst_471 = arith.constant dense<0.000000e+00> : vector<2x32xf32>
    %737 = tpu.matmul %718, %736, %cst_471 {dimension_numbers = #tpu.dot_dimension_numbers<[1], [0], [0], [1], [0, 0, 1, 1], [], []>} : vector<2x32xbf16>, vector<32x32xbf16>, vector<2x32xf32> -> vector<2x32xf32>
    %738 = arith.addf %734, %737 : vector<2x32xf32>
    %739 = arith.addf %738, %7 : vector<2x32xf32>
    %740 = arith.negf %739 : vector<2x32xf32>
    %741 = math.exp %740 : vector<2x32xf32>
    %cst_472 = arith.constant 1.000000e+00 : f32
    %742 = vector.broadcast %cst_472 : f32 to vector<2x32xf32>
    %743 = arith.addf %742, %741 : vector<2x32xf32>
    %744 = arith.divf %742, %743 : vector<2x32xf32>
    %c2_473 = arith.constant 2 : index
    %c0_474 = arith.constant 0 : index
    %c0_475 = arith.constant 0 : index
    %745 = vector.load %arg2[%c2_473, %c0_474, %c0_475] : memref<3x24x32xbf16, #tpu.memory_space<vmem>>, vector<1x24x32xbf16>
    %746 = vector.shape_cast %745 : vector<1x24x32xbf16> to vector<24x32xbf16>
    %cst_476 = arith.constant dense<0.000000e+00> : vector<2x32xf32>
    %747 = tpu.matmul %717, %746, %cst_476 {dimension_numbers = #tpu.dot_dimension_numbers<[1], [0], [0], [1], [0, 0, 1, 1], [], []>} : vector<2x24xbf16>, vector<24x32xbf16>, vector<2x32xf32> -> vector<2x32xf32>
    %748 = arith.addf %747, %11 : vector<2x32xf32>
    %c2_477 = arith.constant 2 : index
    %c0_478 = arith.constant 0 : index
    %c0_479 = arith.constant 0 : index
    %749 = vector.load %arg3[%c2_477, %c0_478, %c0_479] : memref<3x32x32xbf16, #tpu.memory_space<vmem>>, vector<1x32x32xbf16>
    %750 = vector.shape_cast %749 : vector<1x32x32xbf16> to vector<32x32xbf16>
    %cst_480 = arith.constant dense<0.000000e+00> : vector<2x32xf32>
    %751 = tpu.matmul %718, %750, %cst_480 {dimension_numbers = #tpu.dot_dimension_numbers<[1], [0], [0], [1], [0, 0, 1, 1], [], []>} : vector<2x32xbf16>, vector<32x32xbf16>, vector<2x32xf32> -> vector<2x32xf32>
    %752 = arith.addf %751, %15 : vector<2x32xf32>
    %753 = arith.mulf %731, %752 : vector<2x32xf32>
    %754 = arith.addf %748, %753 : vector<2x32xf32>
    %755 = math.tanh %754 : vector<2x32xf32>
    %cst_481 = arith.constant 1.000000e+00 : f32
    %756 = vector.broadcast %cst_481 : f32 to vector<2x32xf32>
    %757 = arith.subf %756, %744 : vector<2x32xf32>
    %758 = arith.mulf %757, %755 : vector<2x32xf32>
    %759 = arith.mulf %744, %627 : vector<2x32xf32>
    %760 = arith.addf %758, %759 : vector<2x32xf32>
    %761 = arith.truncf %760 : vector<2x32xf32> to vector<2x32xbf16>
    %762 = arith.truncf %671 : vector<2x32xf32> to vector<2x32xbf16>
    %c0_482 = arith.constant 0 : index
    %c0_483 = arith.constant 0 : index
    %c0_484 = arith.constant 0 : index
    %763 = vector.load %arg5[%c0_482, %c0_483, %c0_484] : memref<3x32x32xbf16, #tpu.memory_space<vmem>>, vector<1x32x32xbf16>
    %764 = vector.shape_cast %763 : vector<1x32x32xbf16> to vector<32x32xbf16>
    %cst_485 = arith.constant dense<0.000000e+00> : vector<2x32xf32>
    %765 = tpu.matmul %761, %764, %cst_485 {dimension_numbers = #tpu.dot_dimension_numbers<[1], [0], [0], [1], [0, 0, 1, 1], [], []>} : vector<2x32xbf16>, vector<32x32xbf16>, vector<2x32xf32> -> vector<2x32xf32>
    %c0_486 = arith.constant 0 : index
    %c0_487 = arith.constant 0 : index
    %c0_488 = arith.constant 0 : index
    %766 = vector.load %arg6[%c0_486, %c0_487, %c0_488] : memref<3x32x32xbf16, #tpu.memory_space<vmem>>, vector<1x32x32xbf16>
    %767 = vector.shape_cast %766 : vector<1x32x32xbf16> to vector<32x32xbf16>
    %cst_489 = arith.constant dense<0.000000e+00> : vector<2x32xf32>
    %768 = tpu.matmul %762, %767, %cst_489 {dimension_numbers = #tpu.dot_dimension_numbers<[1], [0], [0], [1], [0, 0, 1, 1], [], []>} : vector<2x32xbf16>, vector<32x32xbf16>, vector<2x32xf32> -> vector<2x32xf32>
    %769 = arith.addf %765, %768 : vector<2x32xf32>
    %770 = arith.addf %769, %19 : vector<2x32xf32>
    %771 = arith.negf %770 : vector<2x32xf32>
    %772 = math.exp %771 : vector<2x32xf32>
    %cst_490 = arith.constant 1.000000e+00 : f32
    %773 = vector.broadcast %cst_490 : f32 to vector<2x32xf32>
    %774 = arith.addf %773, %772 : vector<2x32xf32>
    %775 = arith.divf %773, %774 : vector<2x32xf32>
    %c1_491 = arith.constant 1 : index
    %c0_492 = arith.constant 0 : index
    %c0_493 = arith.constant 0 : index
    %776 = vector.load %arg5[%c1_491, %c0_492, %c0_493] : memref<3x32x32xbf16, #tpu.memory_space<vmem>>, vector<1x32x32xbf16>
    %777 = vector.shape_cast %776 : vector<1x32x32xbf16> to vector<32x32xbf16>
    %cst_494 = arith.constant dense<0.000000e+00> : vector<2x32xf32>
    %778 = tpu.matmul %761, %777, %cst_494 {dimension_numbers = #tpu.dot_dimension_numbers<[1], [0], [0], [1], [0, 0, 1, 1], [], []>} : vector<2x32xbf16>, vector<32x32xbf16>, vector<2x32xf32> -> vector<2x32xf32>
    %c1_495 = arith.constant 1 : index
    %c0_496 = arith.constant 0 : index
    %c0_497 = arith.constant 0 : index
    %779 = vector.load %arg6[%c1_495, %c0_496, %c0_497] : memref<3x32x32xbf16, #tpu.memory_space<vmem>>, vector<1x32x32xbf16>
    %780 = vector.shape_cast %779 : vector<1x32x32xbf16> to vector<32x32xbf16>
    %cst_498 = arith.constant dense<0.000000e+00> : vector<2x32xf32>
    %781 = tpu.matmul %762, %780, %cst_498 {dimension_numbers = #tpu.dot_dimension_numbers<[1], [0], [0], [1], [0, 0, 1, 1], [], []>} : vector<2x32xbf16>, vector<32x32xbf16>, vector<2x32xf32> -> vector<2x32xf32>
    %782 = arith.addf %778, %781 : vector<2x32xf32>
    %783 = arith.addf %782, %23 : vector<2x32xf32>
    %784 = arith.negf %783 : vector<2x32xf32>
    %785 = math.exp %784 : vector<2x32xf32>
    %cst_499 = arith.constant 1.000000e+00 : f32
    %786 = vector.broadcast %cst_499 : f32 to vector<2x32xf32>
    %787 = arith.addf %786, %785 : vector<2x32xf32>
    %788 = arith.divf %786, %787 : vector<2x32xf32>
    %c2_500 = arith.constant 2 : index
    %c0_501 = arith.constant 0 : index
    %c0_502 = arith.constant 0 : index
    %789 = vector.load %arg5[%c2_500, %c0_501, %c0_502] : memref<3x32x32xbf16, #tpu.memory_space<vmem>>, vector<1x32x32xbf16>
    %790 = vector.shape_cast %789 : vector<1x32x32xbf16> to vector<32x32xbf16>
    %cst_503 = arith.constant dense<0.000000e+00> : vector<2x32xf32>
    %791 = tpu.matmul %761, %790, %cst_503 {dimension_numbers = #tpu.dot_dimension_numbers<[1], [0], [0], [1], [0, 0, 1, 1], [], []>} : vector<2x32xbf16>, vector<32x32xbf16>, vector<2x32xf32> -> vector<2x32xf32>
    %792 = arith.addf %791, %27 : vector<2x32xf32>
    %c2_504 = arith.constant 2 : index
    %c0_505 = arith.constant 0 : index
    %c0_506 = arith.constant 0 : index
    %793 = vector.load %arg6[%c2_504, %c0_505, %c0_506] : memref<3x32x32xbf16, #tpu.memory_space<vmem>>, vector<1x32x32xbf16>
    %794 = vector.shape_cast %793 : vector<1x32x32xbf16> to vector<32x32xbf16>
    %cst_507 = arith.constant dense<0.000000e+00> : vector<2x32xf32>
    %795 = tpu.matmul %762, %794, %cst_507 {dimension_numbers = #tpu.dot_dimension_numbers<[1], [0], [0], [1], [0, 0, 1, 1], [], []>} : vector<2x32xbf16>, vector<32x32xbf16>, vector<2x32xf32> -> vector<2x32xf32>
    %796 = arith.addf %795, %31 : vector<2x32xf32>
    %797 = arith.mulf %775, %796 : vector<2x32xf32>
    %798 = arith.addf %792, %797 : vector<2x32xf32>
    %799 = math.tanh %798 : vector<2x32xf32>
    %cst_508 = arith.constant 1.000000e+00 : f32
    %800 = vector.broadcast %cst_508 : f32 to vector<2x32xf32>
    %801 = arith.subf %800, %788 : vector<2x32xf32>
    %802 = arith.mulf %801, %799 : vector<2x32xf32>
    %803 = arith.mulf %788, %671 : vector<2x32xf32>
    %804 = arith.addf %802, %803 : vector<2x32xf32>
    %805 = arith.truncf %804 : vector<2x32xf32> to vector<2x32xbf16>
    %806 = arith.truncf %715 : vector<2x32xf32> to vector<2x32xbf16>
    %c0_509 = arith.constant 0 : index
    %c0_510 = arith.constant 0 : index
    %c0_511 = arith.constant 0 : index
    %807 = vector.load %arg8[%c0_509, %c0_510, %c0_511] : memref<3x32x32xbf16, #tpu.memory_space<vmem>>, vector<1x32x32xbf16>
    %808 = vector.shape_cast %807 : vector<1x32x32xbf16> to vector<32x32xbf16>
    %cst_512 = arith.constant dense<0.000000e+00> : vector<2x32xf32>
    %809 = tpu.matmul %805, %808, %cst_512 {dimension_numbers = #tpu.dot_dimension_numbers<[1], [0], [0], [1], [0, 0, 1, 1], [], []>} : vector<2x32xbf16>, vector<32x32xbf16>, vector<2x32xf32> -> vector<2x32xf32>
    %c0_513 = arith.constant 0 : index
    %c0_514 = arith.constant 0 : index
    %c0_515 = arith.constant 0 : index
    %810 = vector.load %arg9[%c0_513, %c0_514, %c0_515] : memref<3x32x32xbf16, #tpu.memory_space<vmem>>, vector<1x32x32xbf16>
    %811 = vector.shape_cast %810 : vector<1x32x32xbf16> to vector<32x32xbf16>
    %cst_516 = arith.constant dense<0.000000e+00> : vector<2x32xf32>
    %812 = tpu.matmul %806, %811, %cst_516 {dimension_numbers = #tpu.dot_dimension_numbers<[1], [0], [0], [1], [0, 0, 1, 1], [], []>} : vector<2x32xbf16>, vector<32x32xbf16>, vector<2x32xf32> -> vector<2x32xf32>
    %813 = arith.addf %809, %812 : vector<2x32xf32>
    %814 = arith.addf %813, %35 : vector<2x32xf32>
    %815 = arith.negf %814 : vector<2x32xf32>
    %816 = math.exp %815 : vector<2x32xf32>
    %cst_517 = arith.constant 1.000000e+00 : f32
    %817 = vector.broadcast %cst_517 : f32 to vector<2x32xf32>
    %818 = arith.addf %817, %816 : vector<2x32xf32>
    %819 = arith.divf %817, %818 : vector<2x32xf32>
    %c1_518 = arith.constant 1 : index
    %c0_519 = arith.constant 0 : index
    %c0_520 = arith.constant 0 : index
    %820 = vector.load %arg8[%c1_518, %c0_519, %c0_520] : memref<3x32x32xbf16, #tpu.memory_space<vmem>>, vector<1x32x32xbf16>
    %821 = vector.shape_cast %820 : vector<1x32x32xbf16> to vector<32x32xbf16>
    %cst_521 = arith.constant dense<0.000000e+00> : vector<2x32xf32>
    %822 = tpu.matmul %805, %821, %cst_521 {dimension_numbers = #tpu.dot_dimension_numbers<[1], [0], [0], [1], [0, 0, 1, 1], [], []>} : vector<2x32xbf16>, vector<32x32xbf16>, vector<2x32xf32> -> vector<2x32xf32>
    %c1_522 = arith.constant 1 : index
    %c0_523 = arith.constant 0 : index
    %c0_524 = arith.constant 0 : index
    %823 = vector.load %arg9[%c1_522, %c0_523, %c0_524] : memref<3x32x32xbf16, #tpu.memory_space<vmem>>, vector<1x32x32xbf16>
    %824 = vector.shape_cast %823 : vector<1x32x32xbf16> to vector<32x32xbf16>
    %cst_525 = arith.constant dense<0.000000e+00> : vector<2x32xf32>
    %825 = tpu.matmul %806, %824, %cst_525 {dimension_numbers = #tpu.dot_dimension_numbers<[1], [0], [0], [1], [0, 0, 1, 1], [], []>} : vector<2x32xbf16>, vector<32x32xbf16>, vector<2x32xf32> -> vector<2x32xf32>
    %826 = arith.addf %822, %825 : vector<2x32xf32>
    %827 = arith.addf %826, %39 : vector<2x32xf32>
    %828 = arith.negf %827 : vector<2x32xf32>
    %829 = math.exp %828 : vector<2x32xf32>
    %cst_526 = arith.constant 1.000000e+00 : f32
    %830 = vector.broadcast %cst_526 : f32 to vector<2x32xf32>
    %831 = arith.addf %830, %829 : vector<2x32xf32>
    %832 = arith.divf %830, %831 : vector<2x32xf32>
    %c2_527 = arith.constant 2 : index
    %c0_528 = arith.constant 0 : index
    %c0_529 = arith.constant 0 : index
    %833 = vector.load %arg8[%c2_527, %c0_528, %c0_529] : memref<3x32x32xbf16, #tpu.memory_space<vmem>>, vector<1x32x32xbf16>
    %834 = vector.shape_cast %833 : vector<1x32x32xbf16> to vector<32x32xbf16>
    %cst_530 = arith.constant dense<0.000000e+00> : vector<2x32xf32>
    %835 = tpu.matmul %805, %834, %cst_530 {dimension_numbers = #tpu.dot_dimension_numbers<[1], [0], [0], [1], [0, 0, 1, 1], [], []>} : vector<2x32xbf16>, vector<32x32xbf16>, vector<2x32xf32> -> vector<2x32xf32>
    %836 = arith.addf %835, %43 : vector<2x32xf32>
    %c2_531 = arith.constant 2 : index
    %c0_532 = arith.constant 0 : index
    %c0_533 = arith.constant 0 : index
    %837 = vector.load %arg9[%c2_531, %c0_532, %c0_533] : memref<3x32x32xbf16, #tpu.memory_space<vmem>>, vector<1x32x32xbf16>
    %838 = vector.shape_cast %837 : vector<1x32x32xbf16> to vector<32x32xbf16>
    %cst_534 = arith.constant dense<0.000000e+00> : vector<2x32xf32>
    %839 = tpu.matmul %806, %838, %cst_534 {dimension_numbers = #tpu.dot_dimension_numbers<[1], [0], [0], [1], [0, 0, 1, 1], [], []>} : vector<2x32xbf16>, vector<32x32xbf16>, vector<2x32xf32> -> vector<2x32xf32>
    %840 = arith.addf %839, %47 : vector<2x32xf32>
    %841 = arith.mulf %819, %840 : vector<2x32xf32>
    %842 = arith.addf %836, %841 : vector<2x32xf32>
    %843 = math.tanh %842 : vector<2x32xf32>
    %cst_535 = arith.constant 1.000000e+00 : f32
    %844 = vector.broadcast %cst_535 : f32 to vector<2x32xf32>
    %845 = arith.subf %844, %832 : vector<2x32xf32>
    %846 = arith.mulf %845, %843 : vector<2x32xf32>
    %847 = arith.mulf %832, %715 : vector<2x32xf32>
    %848 = arith.addf %846, %847 : vector<2x32xf32>
    %c6 = arith.constant 6 : index
    %c0_536 = arith.constant 0 : index
    %c0_537 = arith.constant 0 : index
    %849 = vector.load %arg1[%c6, %c0_536, %c0_537] : memref<8x2x24xbf16, #tpu.memory_space<vmem>>, vector<1x2x24xbf16>
    %850 = vector.shape_cast %849 : vector<1x2x24xbf16> to vector<2x24xbf16>
    %851 = arith.truncf %760 : vector<2x32xf32> to vector<2x32xbf16>
    %c0_538 = arith.constant 0 : index
    %c0_539 = arith.constant 0 : index
    %c0_540 = arith.constant 0 : index
    %852 = vector.load %arg2[%c0_538, %c0_539, %c0_540] : memref<3x24x32xbf16, #tpu.memory_space<vmem>>, vector<1x24x32xbf16>
    %853 = vector.shape_cast %852 : vector<1x24x32xbf16> to vector<24x32xbf16>
    %cst_541 = arith.constant dense<0.000000e+00> : vector<2x32xf32>
    %854 = tpu.matmul %850, %853, %cst_541 {dimension_numbers = #tpu.dot_dimension_numbers<[1], [0], [0], [1], [0, 0, 1, 1], [], []>} : vector<2x24xbf16>, vector<24x32xbf16>, vector<2x32xf32> -> vector<2x32xf32>
    %c0_542 = arith.constant 0 : index
    %c0_543 = arith.constant 0 : index
    %c0_544 = arith.constant 0 : index
    %855 = vector.load %arg3[%c0_542, %c0_543, %c0_544] : memref<3x32x32xbf16, #tpu.memory_space<vmem>>, vector<1x32x32xbf16>
    %856 = vector.shape_cast %855 : vector<1x32x32xbf16> to vector<32x32xbf16>
    %cst_545 = arith.constant dense<0.000000e+00> : vector<2x32xf32>
    %857 = tpu.matmul %851, %856, %cst_545 {dimension_numbers = #tpu.dot_dimension_numbers<[1], [0], [0], [1], [0, 0, 1, 1], [], []>} : vector<2x32xbf16>, vector<32x32xbf16>, vector<2x32xf32> -> vector<2x32xf32>
    %858 = arith.addf %854, %857 : vector<2x32xf32>
    %859 = arith.addf %858, %3 : vector<2x32xf32>
    %860 = arith.negf %859 : vector<2x32xf32>
    %861 = math.exp %860 : vector<2x32xf32>
    %cst_546 = arith.constant 1.000000e+00 : f32
    %862 = vector.broadcast %cst_546 : f32 to vector<2x32xf32>
    %863 = arith.addf %862, %861 : vector<2x32xf32>
    %864 = arith.divf %862, %863 : vector<2x32xf32>
    %c1_547 = arith.constant 1 : index
    %c0_548 = arith.constant 0 : index
    %c0_549 = arith.constant 0 : index
    %865 = vector.load %arg2[%c1_547, %c0_548, %c0_549] : memref<3x24x32xbf16, #tpu.memory_space<vmem>>, vector<1x24x32xbf16>
    %866 = vector.shape_cast %865 : vector<1x24x32xbf16> to vector<24x32xbf16>
    %cst_550 = arith.constant dense<0.000000e+00> : vector<2x32xf32>
    %867 = tpu.matmul %850, %866, %cst_550 {dimension_numbers = #tpu.dot_dimension_numbers<[1], [0], [0], [1], [0, 0, 1, 1], [], []>} : vector<2x24xbf16>, vector<24x32xbf16>, vector<2x32xf32> -> vector<2x32xf32>
    %c1_551 = arith.constant 1 : index
    %c0_552 = arith.constant 0 : index
    %c0_553 = arith.constant 0 : index
    %868 = vector.load %arg3[%c1_551, %c0_552, %c0_553] : memref<3x32x32xbf16, #tpu.memory_space<vmem>>, vector<1x32x32xbf16>
    %869 = vector.shape_cast %868 : vector<1x32x32xbf16> to vector<32x32xbf16>
    %cst_554 = arith.constant dense<0.000000e+00> : vector<2x32xf32>
    %870 = tpu.matmul %851, %869, %cst_554 {dimension_numbers = #tpu.dot_dimension_numbers<[1], [0], [0], [1], [0, 0, 1, 1], [], []>} : vector<2x32xbf16>, vector<32x32xbf16>, vector<2x32xf32> -> vector<2x32xf32>
    %871 = arith.addf %867, %870 : vector<2x32xf32>
    %872 = arith.addf %871, %7 : vector<2x32xf32>
    %873 = arith.negf %872 : vector<2x32xf32>
    %874 = math.exp %873 : vector<2x32xf32>
    %cst_555 = arith.constant 1.000000e+00 : f32
    %875 = vector.broadcast %cst_555 : f32 to vector<2x32xf32>
    %876 = arith.addf %875, %874 : vector<2x32xf32>
    %877 = arith.divf %875, %876 : vector<2x32xf32>
    %c2_556 = arith.constant 2 : index
    %c0_557 = arith.constant 0 : index
    %c0_558 = arith.constant 0 : index
    %878 = vector.load %arg2[%c2_556, %c0_557, %c0_558] : memref<3x24x32xbf16, #tpu.memory_space<vmem>>, vector<1x24x32xbf16>
    %879 = vector.shape_cast %878 : vector<1x24x32xbf16> to vector<24x32xbf16>
    %cst_559 = arith.constant dense<0.000000e+00> : vector<2x32xf32>
    %880 = tpu.matmul %850, %879, %cst_559 {dimension_numbers = #tpu.dot_dimension_numbers<[1], [0], [0], [1], [0, 0, 1, 1], [], []>} : vector<2x24xbf16>, vector<24x32xbf16>, vector<2x32xf32> -> vector<2x32xf32>
    %881 = arith.addf %880, %11 : vector<2x32xf32>
    %c2_560 = arith.constant 2 : index
    %c0_561 = arith.constant 0 : index
    %c0_562 = arith.constant 0 : index
    %882 = vector.load %arg3[%c2_560, %c0_561, %c0_562] : memref<3x32x32xbf16, #tpu.memory_space<vmem>>, vector<1x32x32xbf16>
    %883 = vector.shape_cast %882 : vector<1x32x32xbf16> to vector<32x32xbf16>
    %cst_563 = arith.constant dense<0.000000e+00> : vector<2x32xf32>
    %884 = tpu.matmul %851, %883, %cst_563 {dimension_numbers = #tpu.dot_dimension_numbers<[1], [0], [0], [1], [0, 0, 1, 1], [], []>} : vector<2x32xbf16>, vector<32x32xbf16>, vector<2x32xf32> -> vector<2x32xf32>
    %885 = arith.addf %884, %15 : vector<2x32xf32>
    %886 = arith.mulf %864, %885 : vector<2x32xf32>
    %887 = arith.addf %881, %886 : vector<2x32xf32>
    %888 = math.tanh %887 : vector<2x32xf32>
    %cst_564 = arith.constant 1.000000e+00 : f32
    %889 = vector.broadcast %cst_564 : f32 to vector<2x32xf32>
    %890 = arith.subf %889, %877 : vector<2x32xf32>
    %891 = arith.mulf %890, %888 : vector<2x32xf32>
    %892 = arith.mulf %877, %760 : vector<2x32xf32>
    %893 = arith.addf %891, %892 : vector<2x32xf32>
    %894 = arith.truncf %893 : vector<2x32xf32> to vector<2x32xbf16>
    %895 = arith.truncf %804 : vector<2x32xf32> to vector<2x32xbf16>
    %c0_565 = arith.constant 0 : index
    %c0_566 = arith.constant 0 : index
    %c0_567 = arith.constant 0 : index
    %896 = vector.load %arg5[%c0_565, %c0_566, %c0_567] : memref<3x32x32xbf16, #tpu.memory_space<vmem>>, vector<1x32x32xbf16>
    %897 = vector.shape_cast %896 : vector<1x32x32xbf16> to vector<32x32xbf16>
    %cst_568 = arith.constant dense<0.000000e+00> : vector<2x32xf32>
    %898 = tpu.matmul %894, %897, %cst_568 {dimension_numbers = #tpu.dot_dimension_numbers<[1], [0], [0], [1], [0, 0, 1, 1], [], []>} : vector<2x32xbf16>, vector<32x32xbf16>, vector<2x32xf32> -> vector<2x32xf32>
    %c0_569 = arith.constant 0 : index
    %c0_570 = arith.constant 0 : index
    %c0_571 = arith.constant 0 : index
    %899 = vector.load %arg6[%c0_569, %c0_570, %c0_571] : memref<3x32x32xbf16, #tpu.memory_space<vmem>>, vector<1x32x32xbf16>
    %900 = vector.shape_cast %899 : vector<1x32x32xbf16> to vector<32x32xbf16>
    %cst_572 = arith.constant dense<0.000000e+00> : vector<2x32xf32>
    %901 = tpu.matmul %895, %900, %cst_572 {dimension_numbers = #tpu.dot_dimension_numbers<[1], [0], [0], [1], [0, 0, 1, 1], [], []>} : vector<2x32xbf16>, vector<32x32xbf16>, vector<2x32xf32> -> vector<2x32xf32>
    %902 = arith.addf %898, %901 : vector<2x32xf32>
    %903 = arith.addf %902, %19 : vector<2x32xf32>
    %904 = arith.negf %903 : vector<2x32xf32>
    %905 = math.exp %904 : vector<2x32xf32>
    %cst_573 = arith.constant 1.000000e+00 : f32
    %906 = vector.broadcast %cst_573 : f32 to vector<2x32xf32>
    %907 = arith.addf %906, %905 : vector<2x32xf32>
    %908 = arith.divf %906, %907 : vector<2x32xf32>
    %c1_574 = arith.constant 1 : index
    %c0_575 = arith.constant 0 : index
    %c0_576 = arith.constant 0 : index
    %909 = vector.load %arg5[%c1_574, %c0_575, %c0_576] : memref<3x32x32xbf16, #tpu.memory_space<vmem>>, vector<1x32x32xbf16>
    %910 = vector.shape_cast %909 : vector<1x32x32xbf16> to vector<32x32xbf16>
    %cst_577 = arith.constant dense<0.000000e+00> : vector<2x32xf32>
    %911 = tpu.matmul %894, %910, %cst_577 {dimension_numbers = #tpu.dot_dimension_numbers<[1], [0], [0], [1], [0, 0, 1, 1], [], []>} : vector<2x32xbf16>, vector<32x32xbf16>, vector<2x32xf32> -> vector<2x32xf32>
    %c1_578 = arith.constant 1 : index
    %c0_579 = arith.constant 0 : index
    %c0_580 = arith.constant 0 : index
    %912 = vector.load %arg6[%c1_578, %c0_579, %c0_580] : memref<3x32x32xbf16, #tpu.memory_space<vmem>>, vector<1x32x32xbf16>
    %913 = vector.shape_cast %912 : vector<1x32x32xbf16> to vector<32x32xbf16>
    %cst_581 = arith.constant dense<0.000000e+00> : vector<2x32xf32>
    %914 = tpu.matmul %895, %913, %cst_581 {dimension_numbers = #tpu.dot_dimension_numbers<[1], [0], [0], [1], [0, 0, 1, 1], [], []>} : vector<2x32xbf16>, vector<32x32xbf16>, vector<2x32xf32> -> vector<2x32xf32>
    %915 = arith.addf %911, %914 : vector<2x32xf32>
    %916 = arith.addf %915, %23 : vector<2x32xf32>
    %917 = arith.negf %916 : vector<2x32xf32>
    %918 = math.exp %917 : vector<2x32xf32>
    %cst_582 = arith.constant 1.000000e+00 : f32
    %919 = vector.broadcast %cst_582 : f32 to vector<2x32xf32>
    %920 = arith.addf %919, %918 : vector<2x32xf32>
    %921 = arith.divf %919, %920 : vector<2x32xf32>
    %c2_583 = arith.constant 2 : index
    %c0_584 = arith.constant 0 : index
    %c0_585 = arith.constant 0 : index
    %922 = vector.load %arg5[%c2_583, %c0_584, %c0_585] : memref<3x32x32xbf16, #tpu.memory_space<vmem>>, vector<1x32x32xbf16>
    %923 = vector.shape_cast %922 : vector<1x32x32xbf16> to vector<32x32xbf16>
    %cst_586 = arith.constant dense<0.000000e+00> : vector<2x32xf32>
    %924 = tpu.matmul %894, %923, %cst_586 {dimension_numbers = #tpu.dot_dimension_numbers<[1], [0], [0], [1], [0, 0, 1, 1], [], []>} : vector<2x32xbf16>, vector<32x32xbf16>, vector<2x32xf32> -> vector<2x32xf32>
    %925 = arith.addf %924, %27 : vector<2x32xf32>
    %c2_587 = arith.constant 2 : index
    %c0_588 = arith.constant 0 : index
    %c0_589 = arith.constant 0 : index
    %926 = vector.load %arg6[%c2_587, %c0_588, %c0_589] : memref<3x32x32xbf16, #tpu.memory_space<vmem>>, vector<1x32x32xbf16>
    %927 = vector.shape_cast %926 : vector<1x32x32xbf16> to vector<32x32xbf16>
    %cst_590 = arith.constant dense<0.000000e+00> : vector<2x32xf32>
    %928 = tpu.matmul %895, %927, %cst_590 {dimension_numbers = #tpu.dot_dimension_numbers<[1], [0], [0], [1], [0, 0, 1, 1], [], []>} : vector<2x32xbf16>, vector<32x32xbf16>, vector<2x32xf32> -> vector<2x32xf32>
    %929 = arith.addf %928, %31 : vector<2x32xf32>
    %930 = arith.mulf %908, %929 : vector<2x32xf32>
    %931 = arith.addf %925, %930 : vector<2x32xf32>
    %932 = math.tanh %931 : vector<2x32xf32>
    %cst_591 = arith.constant 1.000000e+00 : f32
    %933 = vector.broadcast %cst_591 : f32 to vector<2x32xf32>
    %934 = arith.subf %933, %921 : vector<2x32xf32>
    %935 = arith.mulf %934, %932 : vector<2x32xf32>
    %936 = arith.mulf %921, %804 : vector<2x32xf32>
    %937 = arith.addf %935, %936 : vector<2x32xf32>
    %938 = arith.truncf %937 : vector<2x32xf32> to vector<2x32xbf16>
    %939 = arith.truncf %848 : vector<2x32xf32> to vector<2x32xbf16>
    %c0_592 = arith.constant 0 : index
    %c0_593 = arith.constant 0 : index
    %c0_594 = arith.constant 0 : index
    %940 = vector.load %arg8[%c0_592, %c0_593, %c0_594] : memref<3x32x32xbf16, #tpu.memory_space<vmem>>, vector<1x32x32xbf16>
    %941 = vector.shape_cast %940 : vector<1x32x32xbf16> to vector<32x32xbf16>
    %cst_595 = arith.constant dense<0.000000e+00> : vector<2x32xf32>
    %942 = tpu.matmul %938, %941, %cst_595 {dimension_numbers = #tpu.dot_dimension_numbers<[1], [0], [0], [1], [0, 0, 1, 1], [], []>} : vector<2x32xbf16>, vector<32x32xbf16>, vector<2x32xf32> -> vector<2x32xf32>
    %c0_596 = arith.constant 0 : index
    %c0_597 = arith.constant 0 : index
    %c0_598 = arith.constant 0 : index
    %943 = vector.load %arg9[%c0_596, %c0_597, %c0_598] : memref<3x32x32xbf16, #tpu.memory_space<vmem>>, vector<1x32x32xbf16>
    %944 = vector.shape_cast %943 : vector<1x32x32xbf16> to vector<32x32xbf16>
    %cst_599 = arith.constant dense<0.000000e+00> : vector<2x32xf32>
    %945 = tpu.matmul %939, %944, %cst_599 {dimension_numbers = #tpu.dot_dimension_numbers<[1], [0], [0], [1], [0, 0, 1, 1], [], []>} : vector<2x32xbf16>, vector<32x32xbf16>, vector<2x32xf32> -> vector<2x32xf32>
    %946 = arith.addf %942, %945 : vector<2x32xf32>
    %947 = arith.addf %946, %35 : vector<2x32xf32>
    %948 = arith.negf %947 : vector<2x32xf32>
    %949 = math.exp %948 : vector<2x32xf32>
    %cst_600 = arith.constant 1.000000e+00 : f32
    %950 = vector.broadcast %cst_600 : f32 to vector<2x32xf32>
    %951 = arith.addf %950, %949 : vector<2x32xf32>
    %952 = arith.divf %950, %951 : vector<2x32xf32>
    %c1_601 = arith.constant 1 : index
    %c0_602 = arith.constant 0 : index
    %c0_603 = arith.constant 0 : index
    %953 = vector.load %arg8[%c1_601, %c0_602, %c0_603] : memref<3x32x32xbf16, #tpu.memory_space<vmem>>, vector<1x32x32xbf16>
    %954 = vector.shape_cast %953 : vector<1x32x32xbf16> to vector<32x32xbf16>
    %cst_604 = arith.constant dense<0.000000e+00> : vector<2x32xf32>
    %955 = tpu.matmul %938, %954, %cst_604 {dimension_numbers = #tpu.dot_dimension_numbers<[1], [0], [0], [1], [0, 0, 1, 1], [], []>} : vector<2x32xbf16>, vector<32x32xbf16>, vector<2x32xf32> -> vector<2x32xf32>
    %c1_605 = arith.constant 1 : index
    %c0_606 = arith.constant 0 : index
    %c0_607 = arith.constant 0 : index
    %956 = vector.load %arg9[%c1_605, %c0_606, %c0_607] : memref<3x32x32xbf16, #tpu.memory_space<vmem>>, vector<1x32x32xbf16>
    %957 = vector.shape_cast %956 : vector<1x32x32xbf16> to vector<32x32xbf16>
    %cst_608 = arith.constant dense<0.000000e+00> : vector<2x32xf32>
    %958 = tpu.matmul %939, %957, %cst_608 {dimension_numbers = #tpu.dot_dimension_numbers<[1], [0], [0], [1], [0, 0, 1, 1], [], []>} : vector<2x32xbf16>, vector<32x32xbf16>, vector<2x32xf32> -> vector<2x32xf32>
    %959 = arith.addf %955, %958 : vector<2x32xf32>
    %960 = arith.addf %959, %39 : vector<2x32xf32>
    %961 = arith.negf %960 : vector<2x32xf32>
    %962 = math.exp %961 : vector<2x32xf32>
    %cst_609 = arith.constant 1.000000e+00 : f32
    %963 = vector.broadcast %cst_609 : f32 to vector<2x32xf32>
    %964 = arith.addf %963, %962 : vector<2x32xf32>
    %965 = arith.divf %963, %964 : vector<2x32xf32>
    %c2_610 = arith.constant 2 : index
    %c0_611 = arith.constant 0 : index
    %c0_612 = arith.constant 0 : index
    %966 = vector.load %arg8[%c2_610, %c0_611, %c0_612] : memref<3x32x32xbf16, #tpu.memory_space<vmem>>, vector<1x32x32xbf16>
    %967 = vector.shape_cast %966 : vector<1x32x32xbf16> to vector<32x32xbf16>
    %cst_613 = arith.constant dense<0.000000e+00> : vector<2x32xf32>
    %968 = tpu.matmul %938, %967, %cst_613 {dimension_numbers = #tpu.dot_dimension_numbers<[1], [0], [0], [1], [0, 0, 1, 1], [], []>} : vector<2x32xbf16>, vector<32x32xbf16>, vector<2x32xf32> -> vector<2x32xf32>
    %969 = arith.addf %968, %43 : vector<2x32xf32>
    %c2_614 = arith.constant 2 : index
    %c0_615 = arith.constant 0 : index
    %c0_616 = arith.constant 0 : index
    %970 = vector.load %arg9[%c2_614, %c0_615, %c0_616] : memref<3x32x32xbf16, #tpu.memory_space<vmem>>, vector<1x32x32xbf16>
    %971 = vector.shape_cast %970 : vector<1x32x32xbf16> to vector<32x32xbf16>
    %cst_617 = arith.constant dense<0.000000e+00> : vector<2x32xf32>
    %972 = tpu.matmul %939, %971, %cst_617 {dimension_numbers = #tpu.dot_dimension_numbers<[1], [0], [0], [1], [0, 0, 1, 1], [], []>} : vector<2x32xbf16>, vector<32x32xbf16>, vector<2x32xf32> -> vector<2x32xf32>
    %973 = arith.addf %972, %47 : vector<2x32xf32>
    %974 = arith.mulf %952, %973 : vector<2x32xf32>
    %975 = arith.addf %969, %974 : vector<2x32xf32>
    %976 = math.tanh %975 : vector<2x32xf32>
    %cst_618 = arith.constant 1.000000e+00 : f32
    %977 = vector.broadcast %cst_618 : f32 to vector<2x32xf32>
    %978 = arith.subf %977, %965 : vector<2x32xf32>
    %979 = arith.mulf %978, %976 : vector<2x32xf32>
    %980 = arith.mulf %965, %848 : vector<2x32xf32>
    %981 = arith.addf %979, %980 : vector<2x32xf32>
    %c7 = arith.constant 7 : index
    %c0_619 = arith.constant 0 : index
    %c0_620 = arith.constant 0 : index
    %982 = vector.load %arg1[%c7, %c0_619, %c0_620] : memref<8x2x24xbf16, #tpu.memory_space<vmem>>, vector<1x2x24xbf16>
    %983 = vector.shape_cast %982 : vector<1x2x24xbf16> to vector<2x24xbf16>
    %984 = arith.truncf %893 : vector<2x32xf32> to vector<2x32xbf16>
    %c0_621 = arith.constant 0 : index
    %c0_622 = arith.constant 0 : index
    %c0_623 = arith.constant 0 : index
    %985 = vector.load %arg2[%c0_621, %c0_622, %c0_623] : memref<3x24x32xbf16, #tpu.memory_space<vmem>>, vector<1x24x32xbf16>
    %986 = vector.shape_cast %985 : vector<1x24x32xbf16> to vector<24x32xbf16>
    %cst_624 = arith.constant dense<0.000000e+00> : vector<2x32xf32>
    %987 = tpu.matmul %983, %986, %cst_624 {dimension_numbers = #tpu.dot_dimension_numbers<[1], [0], [0], [1], [0, 0, 1, 1], [], []>} : vector<2x24xbf16>, vector<24x32xbf16>, vector<2x32xf32> -> vector<2x32xf32>
    %c0_625 = arith.constant 0 : index
    %c0_626 = arith.constant 0 : index
    %c0_627 = arith.constant 0 : index
    %988 = vector.load %arg3[%c0_625, %c0_626, %c0_627] : memref<3x32x32xbf16, #tpu.memory_space<vmem>>, vector<1x32x32xbf16>
    %989 = vector.shape_cast %988 : vector<1x32x32xbf16> to vector<32x32xbf16>
    %cst_628 = arith.constant dense<0.000000e+00> : vector<2x32xf32>
    %990 = tpu.matmul %984, %989, %cst_628 {dimension_numbers = #tpu.dot_dimension_numbers<[1], [0], [0], [1], [0, 0, 1, 1], [], []>} : vector<2x32xbf16>, vector<32x32xbf16>, vector<2x32xf32> -> vector<2x32xf32>
    %991 = arith.addf %987, %990 : vector<2x32xf32>
    %992 = arith.addf %991, %3 : vector<2x32xf32>
    %993 = arith.negf %992 : vector<2x32xf32>
    %994 = math.exp %993 : vector<2x32xf32>
    %cst_629 = arith.constant 1.000000e+00 : f32
    %995 = vector.broadcast %cst_629 : f32 to vector<2x32xf32>
    %996 = arith.addf %995, %994 : vector<2x32xf32>
    %997 = arith.divf %995, %996 : vector<2x32xf32>
    %c1_630 = arith.constant 1 : index
    %c0_631 = arith.constant 0 : index
    %c0_632 = arith.constant 0 : index
    %998 = vector.load %arg2[%c1_630, %c0_631, %c0_632] : memref<3x24x32xbf16, #tpu.memory_space<vmem>>, vector<1x24x32xbf16>
    %999 = vector.shape_cast %998 : vector<1x24x32xbf16> to vector<24x32xbf16>
    %cst_633 = arith.constant dense<0.000000e+00> : vector<2x32xf32>
    %1000 = tpu.matmul %983, %999, %cst_633 {dimension_numbers = #tpu.dot_dimension_numbers<[1], [0], [0], [1], [0, 0, 1, 1], [], []>} : vector<2x24xbf16>, vector<24x32xbf16>, vector<2x32xf32> -> vector<2x32xf32>
    %c1_634 = arith.constant 1 : index
    %c0_635 = arith.constant 0 : index
    %c0_636 = arith.constant 0 : index
    %1001 = vector.load %arg3[%c1_634, %c0_635, %c0_636] : memref<3x32x32xbf16, #tpu.memory_space<vmem>>, vector<1x32x32xbf16>
    %1002 = vector.shape_cast %1001 : vector<1x32x32xbf16> to vector<32x32xbf16>
    %cst_637 = arith.constant dense<0.000000e+00> : vector<2x32xf32>
    %1003 = tpu.matmul %984, %1002, %cst_637 {dimension_numbers = #tpu.dot_dimension_numbers<[1], [0], [0], [1], [0, 0, 1, 1], [], []>} : vector<2x32xbf16>, vector<32x32xbf16>, vector<2x32xf32> -> vector<2x32xf32>
    %1004 = arith.addf %1000, %1003 : vector<2x32xf32>
    %1005 = arith.addf %1004, %7 : vector<2x32xf32>
    %1006 = arith.negf %1005 : vector<2x32xf32>
    %1007 = math.exp %1006 : vector<2x32xf32>
    %cst_638 = arith.constant 1.000000e+00 : f32
    %1008 = vector.broadcast %cst_638 : f32 to vector<2x32xf32>
    %1009 = arith.addf %1008, %1007 : vector<2x32xf32>
    %1010 = arith.divf %1008, %1009 : vector<2x32xf32>
    %c2_639 = arith.constant 2 : index
    %c0_640 = arith.constant 0 : index
    %c0_641 = arith.constant 0 : index
    %1011 = vector.load %arg2[%c2_639, %c0_640, %c0_641] : memref<3x24x32xbf16, #tpu.memory_space<vmem>>, vector<1x24x32xbf16>
    %1012 = vector.shape_cast %1011 : vector<1x24x32xbf16> to vector<24x32xbf16>
    %cst_642 = arith.constant dense<0.000000e+00> : vector<2x32xf32>
    %1013 = tpu.matmul %983, %1012, %cst_642 {dimension_numbers = #tpu.dot_dimension_numbers<[1], [0], [0], [1], [0, 0, 1, 1], [], []>} : vector<2x24xbf16>, vector<24x32xbf16>, vector<2x32xf32> -> vector<2x32xf32>
    %1014 = arith.addf %1013, %11 : vector<2x32xf32>
    %c2_643 = arith.constant 2 : index
    %c0_644 = arith.constant 0 : index
    %c0_645 = arith.constant 0 : index
    %1015 = vector.load %arg3[%c2_643, %c0_644, %c0_645] : memref<3x32x32xbf16, #tpu.memory_space<vmem>>, vector<1x32x32xbf16>
    %1016 = vector.shape_cast %1015 : vector<1x32x32xbf16> to vector<32x32xbf16>
    %cst_646 = arith.constant dense<0.000000e+00> : vector<2x32xf32>
    %1017 = tpu.matmul %984, %1016, %cst_646 {dimension_numbers = #tpu.dot_dimension_numbers<[1], [0], [0], [1], [0, 0, 1, 1], [], []>} : vector<2x32xbf16>, vector<32x32xbf16>, vector<2x32xf32> -> vector<2x32xf32>
    %1018 = arith.addf %1017, %15 : vector<2x32xf32>
    %1019 = arith.mulf %997, %1018 : vector<2x32xf32>
    %1020 = arith.addf %1014, %1019 : vector<2x32xf32>
    %1021 = math.tanh %1020 : vector<2x32xf32>
    %cst_647 = arith.constant 1.000000e+00 : f32
    %1022 = vector.broadcast %cst_647 : f32 to vector<2x32xf32>
    %1023 = arith.subf %1022, %1010 : vector<2x32xf32>
    %1024 = arith.mulf %1023, %1021 : vector<2x32xf32>
    %1025 = arith.mulf %1010, %893 : vector<2x32xf32>
    %1026 = arith.addf %1024, %1025 : vector<2x32xf32>
    %1027 = arith.truncf %1026 : vector<2x32xf32> to vector<2x32xbf16>
    %1028 = arith.truncf %937 : vector<2x32xf32> to vector<2x32xbf16>
    %c0_648 = arith.constant 0 : index
    %c0_649 = arith.constant 0 : index
    %c0_650 = arith.constant 0 : index
    %1029 = vector.load %arg5[%c0_648, %c0_649, %c0_650] : memref<3x32x32xbf16, #tpu.memory_space<vmem>>, vector<1x32x32xbf16>
    %1030 = vector.shape_cast %1029 : vector<1x32x32xbf16> to vector<32x32xbf16>
    %cst_651 = arith.constant dense<0.000000e+00> : vector<2x32xf32>
    %1031 = tpu.matmul %1027, %1030, %cst_651 {dimension_numbers = #tpu.dot_dimension_numbers<[1], [0], [0], [1], [0, 0, 1, 1], [], []>} : vector<2x32xbf16>, vector<32x32xbf16>, vector<2x32xf32> -> vector<2x32xf32>
    %c0_652 = arith.constant 0 : index
    %c0_653 = arith.constant 0 : index
    %c0_654 = arith.constant 0 : index
    %1032 = vector.load %arg6[%c0_652, %c0_653, %c0_654] : memref<3x32x32xbf16, #tpu.memory_space<vmem>>, vector<1x32x32xbf16>
    %1033 = vector.shape_cast %1032 : vector<1x32x32xbf16> to vector<32x32xbf16>
    %cst_655 = arith.constant dense<0.000000e+00> : vector<2x32xf32>
    %1034 = tpu.matmul %1028, %1033, %cst_655 {dimension_numbers = #tpu.dot_dimension_numbers<[1], [0], [0], [1], [0, 0, 1, 1], [], []>} : vector<2x32xbf16>, vector<32x32xbf16>, vector<2x32xf32> -> vector<2x32xf32>
    %1035 = arith.addf %1031, %1034 : vector<2x32xf32>
    %1036 = arith.addf %1035, %19 : vector<2x32xf32>
    %1037 = arith.negf %1036 : vector<2x32xf32>
    %1038 = math.exp %1037 : vector<2x32xf32>
    %cst_656 = arith.constant 1.000000e+00 : f32
    %1039 = vector.broadcast %cst_656 : f32 to vector<2x32xf32>
    %1040 = arith.addf %1039, %1038 : vector<2x32xf32>
    %1041 = arith.divf %1039, %1040 : vector<2x32xf32>
    %c1_657 = arith.constant 1 : index
    %c0_658 = arith.constant 0 : index
    %c0_659 = arith.constant 0 : index
    %1042 = vector.load %arg5[%c1_657, %c0_658, %c0_659] : memref<3x32x32xbf16, #tpu.memory_space<vmem>>, vector<1x32x32xbf16>
    %1043 = vector.shape_cast %1042 : vector<1x32x32xbf16> to vector<32x32xbf16>
    %cst_660 = arith.constant dense<0.000000e+00> : vector<2x32xf32>
    %1044 = tpu.matmul %1027, %1043, %cst_660 {dimension_numbers = #tpu.dot_dimension_numbers<[1], [0], [0], [1], [0, 0, 1, 1], [], []>} : vector<2x32xbf16>, vector<32x32xbf16>, vector<2x32xf32> -> vector<2x32xf32>
    %c1_661 = arith.constant 1 : index
    %c0_662 = arith.constant 0 : index
    %c0_663 = arith.constant 0 : index
    %1045 = vector.load %arg6[%c1_661, %c0_662, %c0_663] : memref<3x32x32xbf16, #tpu.memory_space<vmem>>, vector<1x32x32xbf16>
    %1046 = vector.shape_cast %1045 : vector<1x32x32xbf16> to vector<32x32xbf16>
    %cst_664 = arith.constant dense<0.000000e+00> : vector<2x32xf32>
    %1047 = tpu.matmul %1028, %1046, %cst_664 {dimension_numbers = #tpu.dot_dimension_numbers<[1], [0], [0], [1], [0, 0, 1, 1], [], []>} : vector<2x32xbf16>, vector<32x32xbf16>, vector<2x32xf32> -> vector<2x32xf32>
    %1048 = arith.addf %1044, %1047 : vector<2x32xf32>
    %1049 = arith.addf %1048, %23 : vector<2x32xf32>
    %1050 = arith.negf %1049 : vector<2x32xf32>
    %1051 = math.exp %1050 : vector<2x32xf32>
    %cst_665 = arith.constant 1.000000e+00 : f32
    %1052 = vector.broadcast %cst_665 : f32 to vector<2x32xf32>
    %1053 = arith.addf %1052, %1051 : vector<2x32xf32>
    %1054 = arith.divf %1052, %1053 : vector<2x32xf32>
    %c2_666 = arith.constant 2 : index
    %c0_667 = arith.constant 0 : index
    %c0_668 = arith.constant 0 : index
    %1055 = vector.load %arg5[%c2_666, %c0_667, %c0_668] : memref<3x32x32xbf16, #tpu.memory_space<vmem>>, vector<1x32x32xbf16>
    %1056 = vector.shape_cast %1055 : vector<1x32x32xbf16> to vector<32x32xbf16>
    %cst_669 = arith.constant dense<0.000000e+00> : vector<2x32xf32>
    %1057 = tpu.matmul %1027, %1056, %cst_669 {dimension_numbers = #tpu.dot_dimension_numbers<[1], [0], [0], [1], [0, 0, 1, 1], [], []>} : vector<2x32xbf16>, vector<32x32xbf16>, vector<2x32xf32> -> vector<2x32xf32>
    %1058 = arith.addf %1057, %27 : vector<2x32xf32>
    %c2_670 = arith.constant 2 : index
    %c0_671 = arith.constant 0 : index
    %c0_672 = arith.constant 0 : index
    %1059 = vector.load %arg6[%c2_670, %c0_671, %c0_672] : memref<3x32x32xbf16, #tpu.memory_space<vmem>>, vector<1x32x32xbf16>
    %1060 = vector.shape_cast %1059 : vector<1x32x32xbf16> to vector<32x32xbf16>
    %cst_673 = arith.constant dense<0.000000e+00> : vector<2x32xf32>
    %1061 = tpu.matmul %1028, %1060, %cst_673 {dimension_numbers = #tpu.dot_dimension_numbers<[1], [0], [0], [1], [0, 0, 1, 1], [], []>} : vector<2x32xbf16>, vector<32x32xbf16>, vector<2x32xf32> -> vector<2x32xf32>
    %1062 = arith.addf %1061, %31 : vector<2x32xf32>
    %1063 = arith.mulf %1041, %1062 : vector<2x32xf32>
    %1064 = arith.addf %1058, %1063 : vector<2x32xf32>
    %1065 = math.tanh %1064 : vector<2x32xf32>
    %cst_674 = arith.constant 1.000000e+00 : f32
    %1066 = vector.broadcast %cst_674 : f32 to vector<2x32xf32>
    %1067 = arith.subf %1066, %1054 : vector<2x32xf32>
    %1068 = arith.mulf %1067, %1065 : vector<2x32xf32>
    %1069 = arith.mulf %1054, %937 : vector<2x32xf32>
    %1070 = arith.addf %1068, %1069 : vector<2x32xf32>
    %1071 = arith.truncf %1070 : vector<2x32xf32> to vector<2x32xbf16>
    %1072 = arith.truncf %981 : vector<2x32xf32> to vector<2x32xbf16>
    %c0_675 = arith.constant 0 : index
    %c0_676 = arith.constant 0 : index
    %c0_677 = arith.constant 0 : index
    %1073 = vector.load %arg8[%c0_675, %c0_676, %c0_677] : memref<3x32x32xbf16, #tpu.memory_space<vmem>>, vector<1x32x32xbf16>
    %1074 = vector.shape_cast %1073 : vector<1x32x32xbf16> to vector<32x32xbf16>
    %cst_678 = arith.constant dense<0.000000e+00> : vector<2x32xf32>
    %1075 = tpu.matmul %1071, %1074, %cst_678 {dimension_numbers = #tpu.dot_dimension_numbers<[1], [0], [0], [1], [0, 0, 1, 1], [], []>} : vector<2x32xbf16>, vector<32x32xbf16>, vector<2x32xf32> -> vector<2x32xf32>
    %c0_679 = arith.constant 0 : index
    %c0_680 = arith.constant 0 : index
    %c0_681 = arith.constant 0 : index
    %1076 = vector.load %arg9[%c0_679, %c0_680, %c0_681] : memref<3x32x32xbf16, #tpu.memory_space<vmem>>, vector<1x32x32xbf16>
    %1077 = vector.shape_cast %1076 : vector<1x32x32xbf16> to vector<32x32xbf16>
    %cst_682 = arith.constant dense<0.000000e+00> : vector<2x32xf32>
    %1078 = tpu.matmul %1072, %1077, %cst_682 {dimension_numbers = #tpu.dot_dimension_numbers<[1], [0], [0], [1], [0, 0, 1, 1], [], []>} : vector<2x32xbf16>, vector<32x32xbf16>, vector<2x32xf32> -> vector<2x32xf32>
    %1079 = arith.addf %1075, %1078 : vector<2x32xf32>
    %1080 = arith.addf %1079, %35 : vector<2x32xf32>
    %1081 = arith.negf %1080 : vector<2x32xf32>
    %1082 = math.exp %1081 : vector<2x32xf32>
    %cst_683 = arith.constant 1.000000e+00 : f32
    %1083 = vector.broadcast %cst_683 : f32 to vector<2x32xf32>
    %1084 = arith.addf %1083, %1082 : vector<2x32xf32>
    %1085 = arith.divf %1083, %1084 : vector<2x32xf32>
    %c1_684 = arith.constant 1 : index
    %c0_685 = arith.constant 0 : index
    %c0_686 = arith.constant 0 : index
    %1086 = vector.load %arg8[%c1_684, %c0_685, %c0_686] : memref<3x32x32xbf16, #tpu.memory_space<vmem>>, vector<1x32x32xbf16>
    %1087 = vector.shape_cast %1086 : vector<1x32x32xbf16> to vector<32x32xbf16>
    %cst_687 = arith.constant dense<0.000000e+00> : vector<2x32xf32>
    %1088 = tpu.matmul %1071, %1087, %cst_687 {dimension_numbers = #tpu.dot_dimension_numbers<[1], [0], [0], [1], [0, 0, 1, 1], [], []>} : vector<2x32xbf16>, vector<32x32xbf16>, vector<2x32xf32> -> vector<2x32xf32>
    %c1_688 = arith.constant 1 : index
    %c0_689 = arith.constant 0 : index
    %c0_690 = arith.constant 0 : index
    %1089 = vector.load %arg9[%c1_688, %c0_689, %c0_690] : memref<3x32x32xbf16, #tpu.memory_space<vmem>>, vector<1x32x32xbf16>
    %1090 = vector.shape_cast %1089 : vector<1x32x32xbf16> to vector<32x32xbf16>
    %cst_691 = arith.constant dense<0.000000e+00> : vector<2x32xf32>
    %1091 = tpu.matmul %1072, %1090, %cst_691 {dimension_numbers = #tpu.dot_dimension_numbers<[1], [0], [0], [1], [0, 0, 1, 1], [], []>} : vector<2x32xbf16>, vector<32x32xbf16>, vector<2x32xf32> -> vector<2x32xf32>
    %1092 = arith.addf %1088, %1091 : vector<2x32xf32>
    %1093 = arith.addf %1092, %39 : vector<2x32xf32>
    %1094 = arith.negf %1093 : vector<2x32xf32>
    %1095 = math.exp %1094 : vector<2x32xf32>
    %cst_692 = arith.constant 1.000000e+00 : f32
    %1096 = vector.broadcast %cst_692 : f32 to vector<2x32xf32>
    %1097 = arith.addf %1096, %1095 : vector<2x32xf32>
    %1098 = arith.divf %1096, %1097 : vector<2x32xf32>
    %c2_693 = arith.constant 2 : index
    %c0_694 = arith.constant 0 : index
    %c0_695 = arith.constant 0 : index
    %1099 = vector.load %arg8[%c2_693, %c0_694, %c0_695] : memref<3x32x32xbf16, #tpu.memory_space<vmem>>, vector<1x32x32xbf16>
    %1100 = vector.shape_cast %1099 : vector<1x32x32xbf16> to vector<32x32xbf16>
    %cst_696 = arith.constant dense<0.000000e+00> : vector<2x32xf32>
    %1101 = tpu.matmul %1071, %1100, %cst_696 {dimension_numbers = #tpu.dot_dimension_numbers<[1], [0], [0], [1], [0, 0, 1, 1], [], []>} : vector<2x32xbf16>, vector<32x32xbf16>, vector<2x32xf32> -> vector<2x32xf32>
    %1102 = arith.addf %1101, %43 : vector<2x32xf32>
    %c2_697 = arith.constant 2 : index
    %c0_698 = arith.constant 0 : index
    %c0_699 = arith.constant 0 : index
    %1103 = vector.load %arg9[%c2_697, %c0_698, %c0_699] : memref<3x32x32xbf16, #tpu.memory_space<vmem>>, vector<1x32x32xbf16>
    %1104 = vector.shape_cast %1103 : vector<1x32x32xbf16> to vector<32x32xbf16>
    %cst_700 = arith.constant dense<0.000000e+00> : vector<2x32xf32>
    %1105 = tpu.matmul %1072, %1104, %cst_700 {dimension_numbers = #tpu.dot_dimension_numbers<[1], [0], [0], [1], [0, 0, 1, 1], [], []>} : vector<2x32xbf16>, vector<32x32xbf16>, vector<2x32xf32> -> vector<2x32xf32>
    %1106 = arith.addf %1105, %47 : vector<2x32xf32>
    %1107 = arith.mulf %1085, %1106 : vector<2x32xf32>
    %1108 = arith.addf %1102, %1107 : vector<2x32xf32>
    %1109 = math.tanh %1108 : vector<2x32xf32>
    %cst_701 = arith.constant 1.000000e+00 : f32
    %1110 = vector.broadcast %cst_701 : f32 to vector<2x32xf32>
    %1111 = arith.subf %1110, %1098 : vector<2x32xf32>
    %1112 = arith.mulf %1111, %1109 : vector<2x32xf32>
    %1113 = arith.mulf %1098, %981 : vector<2x32xf32>
    %1114 = arith.addf %1112, %1113 : vector<2x32xf32>
    %c0_702 = arith.constant 0 : index
    %c0_703 = arith.constant 0 : index
    %1115 = vector.load %arg11[%c0_702, %c0_703] : memref<32x128xf32, #tpu.memory_space<vmem>>, vector<32x128xf32>
    %cst_704 = arith.constant dense<0.000000e+00> : vector<2x128xf32>
    %1116 = tpu.matmul %1114, %1115, %cst_704 {dimension_numbers = #tpu.dot_dimension_numbers<[1], [0], [0], [1], [0, 0, 1, 1], [], []>} : vector<2x32xf32>, vector<32x128xf32>, vector<2x128xf32> -> vector<2x128xf32>
    %c0_705 = arith.constant 0 : index
    %c0_706 = arith.constant 0 : index
    %1117 = vector.load %arg12[%c0_705, %c0_706] : memref<1x128xf32, #tpu.memory_space<vmem>>, vector<1x128xf32>
    %1118 = vector.broadcast %1117 : vector<1x128xf32> to vector<2x128xf32>
    %1119 = arith.addf %1116, %1118 : vector<2x128xf32>
    %c0_707 = arith.constant 0 : index
    %c0_708 = arith.constant 0 : index
    %1120 = vector.load %arg13[%c0_707, %c0_708] : memref<2x128xf32, #tpu.memory_space<vmem>>, vector<2x128xf32>
    tpu.vector_store %arg13[%c0_707, %c0_708], %1119 {strides = array<i32>} : memref<2x128xf32, #tpu.memory_space<vmem>>, vector<2x128xf32>,
    return
  }
  func.func @transform_0(%arg0: i32) -> (i32, i32, i32) {
    %c0_i32 = arith.constant 0 : i32
    %c0_i32_0 = arith.constant 0 : i32
    %c0_i32_1 = arith.constant 0 : i32
    return %c0_i32, %arg0, %c0_i32_0 : i32, i32, i32
  }
  func.func @transform_1(%arg0: i32) -> (i32, i32, i32) {
    %c0_i32 = arith.constant 0 : i32
    %c0_i32_0 = arith.constant 0 : i32
    %c0_i32_1 = arith.constant 0 : i32
    %c0_i32_2 = arith.constant 0 : i32
    return %c0_i32, %c0_i32_0, %c0_i32_1 : i32, i32, i32
  }
  func.func @transform_2(%arg0: i32) -> (i32, i32, i32) {
    %c0_i32 = arith.constant 0 : i32
    %c0_i32_0 = arith.constant 0 : i32
    %c0_i32_1 = arith.constant 0 : i32
    %c0_i32_2 = arith.constant 0 : i32
    return %c0_i32, %c0_i32_0, %c0_i32_1 : i32, i32, i32
  }
  func.func @transform_3(%arg0: i32) -> (i32, i32, i32) {
    %c0_i32 = arith.constant 0 : i32
    %c0_i32_0 = arith.constant 0 : i32
    %c0_i32_1 = arith.constant 0 : i32
    %c0_i32_2 = arith.constant 0 : i32
    return %c0_i32, %c0_i32_0, %c0_i32_1 : i32, i32, i32
  }
  func.func @transform_4(%arg0: i32) -> (i32, i32, i32) {
    %c0_i32 = arith.constant 0 : i32
    %c0_i32_0 = arith.constant 0 : i32
    %c0_i32_1 = arith.constant 0 : i32
    %c0_i32_2 = arith.constant 0 : i32
    return %c0_i32, %c0_i32_0, %c0_i32_1 : i32, i32, i32
  }
  func.func @transform_5(%arg0: i32) -> (i32, i32, i32) {
    %c0_i32 = arith.constant 0 : i32
    %c0_i32_0 = arith.constant 0 : i32
    %c0_i32_1 = arith.constant 0 : i32
    %c0_i32_2 = arith.constant 0 : i32
    return %c0_i32, %c0_i32_0, %c0_i32_1 : i32, i32, i32
  }
  func.func @transform_6(%arg0: i32) -> (i32, i32, i32) {
    %c0_i32 = arith.constant 0 : i32
    %c0_i32_0 = arith.constant 0 : i32
    %c0_i32_1 = arith.constant 0 : i32
    %c0_i32_2 = arith.constant 0 : i32
    return %c0_i32, %c0_i32_0, %c0_i32_1 : i32, i32, i32
  }
  func.func @transform_7(%arg0: i32) -> (i32, i32, i32) {
    %c0_i32 = arith.constant 0 : i32
    %c0_i32_0 = arith.constant 0 : i32
    %c0_i32_1 = arith.constant 0 : i32
    %c0_i32_2 = arith.constant 0 : i32
    return %c0_i32, %c0_i32_0, %c0_i32_1 : i32, i32, i32
  }
  func.func @transform_8(%arg0: i32) -> (i32, i32, i32) {
    %c0_i32 = arith.constant 0 : i32
    %c0_i32_0 = arith.constant 0 : i32
    %c0_i32_1 = arith.constant 0 : i32
    %c0_i32_2 = arith.constant 0 : i32
    return %c0_i32, %c0_i32_0, %c0_i32_1 : i32, i32, i32
  }
  func.func @transform_9(%arg0: i32) -> (i32, i32, i32) {
    %c0_i32 = arith.constant 0 : i32
    %c0_i32_0 = arith.constant 0 : i32
    %c0_i32_1 = arith.constant 0 : i32
    %c0_i32_2 = arith.constant 0 : i32
    return %c0_i32, %c0_i32_0, %c0_i32_1 : i32, i32, i32
  }
  func.func @transform_10(%arg0: i32) -> (i32, i32) {
    %c0_i32 = arith.constant 0 : i32
    %c0_i32_0 = arith.constant 0 : i32
    %c0_i32_1 = arith.constant 0 : i32
    return %c0_i32, %c0_i32_0 : i32, i32
  }
  func.func @transform_11(%arg0: i32) -> (i32, i32) {
    %c0_i32 = arith.constant 0 : i32
    %c0_i32_0 = arith.constant 0 : i32
    %c0_i32_1 = arith.constant 0 : i32
    return %c0_i32, %c0_i32_0 : i32, i32
  }
  func.func @transform_12(%arg0: i32) -> (i32, i32) {
    %c0_i32 = arith.constant 0 : i32
    %c0_i32_0 = arith.constant 0 : i32
    return %arg0, %c0_i32 : i32, i32
  }
}

</mosaic_0001>

<llo_original>
// kernel: tpu_custom_call.1
$region0: #{tpu_custom_call.1}
  #allocation0 [shape = 'u32[]', space=smem, size = 0x4, offset = 0x4, fixed_abs, tag = 'smem constant byte address 0x4 - core index']
  #allocation1 [shape = 'u32[144,128]{1,0:T(1,128)}', space=vmem, size = 0x12000, scoped, tag = 'internal scratch']
  %s0 = inlined_call_operand.hbm [shape: bf16[8,2,24], index: 0, kind: input, shape index: {}]
  %s1 = inlined_call_operand.hbm [shape: bf16[3,24,32], index: 1, kind: input, shape index: {}]
  %s2 = inlined_call_operand.hbm [shape: bf16[3,32,32], index: 2, kind: input, shape index: {}]
  %s3 = inlined_call_operand.vmem [shape: f32[4,1,32], index: 3, kind: input, shape index: {}]
  %s4 = inlined_call_operand.hbm [shape: bf16[3,32,32], index: 4, kind: input, shape index: {}]
  %s5 = inlined_call_operand.hbm [shape: bf16[3,32,32], index: 5, kind: input, shape index: {}]
  %s6 = inlined_call_operand.hbm [shape: f32[4,1,32], index: 6, kind: input, shape index: {}]
  %s7 = inlined_call_operand.hbm [shape: bf16[3,32,32], index: 7, kind: input, shape index: {}]
  %s8 = inlined_call_operand.hbm [shape: bf16[3,32,32], index: 8, kind: input, shape index: {}]
  %s9 = inlined_call_operand.hbm [shape: f32[4,1,32], index: 9, kind: input, shape index: {}]
  %s10 = inlined_call_operand.vmem [shape: f32[32,128], index: 10, kind: input, shape index: {}]
  %s11 = inlined_call_operand.vmem [shape: f32[1,128], index: 11, kind: input, shape index: {}]
  %s12 = inlined_call_operand.hbm [shape: f32[2,128], index: 12, kind: output, shape index: {}]
  %s13 = sld [smem:[#allocation0]]
  $region94: #{tpu_custom_call.1} parent=0
    _
  %s15 = ssub.s32 1, %s13
  %s16 = scalar_select 0, %s15, %s13
  $region1: #{tpu_custom_call.1} parent=0
    #allocation2 [shape = 'u8[4096]{0}', space=vmem, size = 0x1000, scoped, tag = 'input window, operand 0, single buffered']
    #allocation3 [shape = 's32[1]{0}', space=sflag, size = 0x4, scoped, tag = 'scoped memory for tpu_custom_call.1']
    #allocation4 [shape = 's32[1]{0}', space=sflag, size = 0x4, scoped, tag = 'scoped memory for tpu_custom_call.1']
    #allocation5 [shape = 'u8[18432]{0}', space=vmem, size = 0x4800, scoped, tag = 'input window, operand 1, single buffered']
    #allocation6 [shape = 's32[1]{0}', space=sflag, size = 0x4, scoped, tag = 'scoped memory for tpu_custom_call.1']
    #allocation7 [shape = 'u8[24576]{0}', space=vmem, size = 0x6000, scoped, tag = 'input window, operand 2, single buffered']
    #allocation8 [shape = 'u8[24576]{0}', space=vmem, size = 0x6000, scoped, tag = 'input window, operand 4, single buffered']
    #allocation9 [shape = 's32[1]{0}', space=sflag, size = 0x4, scoped, tag = 'scoped memory for tpu_custom_call.1']
    #allocation10 [shape = 'u8[24576]{0}', space=vmem, size = 0x6000, scoped, tag = 'input window, operand 5, single buffered']
    #allocation11 [shape = 'u8[2048]{0}', space=vmem, size = 0x800, scoped, tag = 'input window, operand 6, single buffered']
    #allocation12 [shape = 's32[1]{0}', space=sflag, size = 0x4, scoped, tag = 'scoped memory for tpu_custom_call.1']
    #allocation13 [shape = 'u8[24576]{0}', space=vmem, size = 0x6000, scoped, tag = 'input window, operand 7, single buffered']
    #allocation14 [shape = 'u8[24576]{0}', space=vmem, size = 0x6000, scoped, tag = 'input window, operand 8, single buffered']
    #allocation15 [shape = 's32[1]{0}', space=sflag, size = 0x4, scoped, tag = 'scoped memory for tpu_custom_call.1']
    #allocation16 [shape = 'u8[2048]{0}', space=vmem, size = 0x800, scoped, tag = 'input window, operand 9, single buffered']
    #allocation17 [shape = 'u8[1024]{0}', space=vmem, size = 0x400, scoped, tag = 'output window, operand 0, single buffered']
    %17 = vsyncpa [#allocation3], 0
    %18 = vsyncpa [#allocation6], 0
    %19 = vsyncpa [#allocation9], 0
    %20 = vsyncpa [#allocation12], 0
    %21 = vsyncpa [#allocation15], 0
    %22 = vsyncpa [#allocation4], 0
    // Predicated region
    $region2: #{tpu_custom_call.1} parent=1 // pred_check
      _
    $region3: #{tpu_custom_call.1} parent=1 // pred_check_branch
      %24 = sbr.rel (0) target = $region5
    $region4: #{tpu_custom_call.1} parent=1 // pred_region
      %s26 = ssub.s32 128, 128
      %27 = vsyncadd [#allocation3], %s26
      %s28 = sshll.u32 [#allocation2], 4
      %s29 = int_to_ptr.vmem [resolvable:$true] %s28
      %34 = dma.hbm_to_vmem [thread:$0]  %s0, 128, %s29, [#allocation3], 16, 16, 1
    $region5: #{tpu_custom_call.1} parent=1 // pred_fallthru
      _
    // Predicated region
    $region6: #{tpu_custom_call.1} parent=1 // pred_check
      _
    $region7: #{tpu_custom_call.1} parent=1 // pred_check_branch
      %36 = sbr.rel (0) target = $region9
    $region8: #{tpu_custom_call.1} parent=1 // pred_region
      %s38 = ssub.s32 576, 576
      %39 = vsyncadd [#allocation6], %s38
      %s40 = sshll.u32 [#allocation5], 4
      %s41 = int_to_ptr.vmem [resolvable:$true] %s40
      %46 = dma.hbm_to_vmem [thread:$0]  %s1, 576, %s41, [#allocation6], 64, 64, 4
    $region9: #{tpu_custom_call.1} parent=1 // pred_fallthru
      _
    // Predicated region
    $region10: #{tpu_custom_call.1} parent=1 // pred_check
      _
    $region11: #{tpu_custom_call.1} parent=1 // pred_check_branch
      %48 = sbr.rel (0) target = $region13
    $region12: #{tpu_custom_call.1} parent=1 // pred_region
      %s50 = ssub.s32 768, 768
      %51 = vsyncadd [#allocation6], %s50
      %s52 = sshll.u32 [#allocation7], 4
      %s53 = int_to_ptr.vmem [resolvable:$true] %s52
      %58 = dma.hbm_to_vmem [thread:$0]  %s2, 768, %s53, [#allocation6], 64, 64, 4
    $region13: #{tpu_custom_call.1} parent=1 // pred_fallthru
      _
    // Predicated region
    $region14: #{tpu_custom_call.1} parent=1 // pred_check
      _
    $region15: #{tpu_custom_call.1} parent=1 // pred_check_branch
      %60 = sbr.rel (0) target = $region17
    $region16: #{tpu_custom_call.1} parent=1 // pred_region
      _
    $region17: #{tpu_custom_call.1} parent=1 // pred_fallthru
      _
    // Predicated region
    $region18: #{tpu_custom_call.1} parent=1 // pred_check
      _
    $region19: #{tpu_custom_call.1} parent=1 // pred_check_branch
      %62 = sbr.rel (0) target = $region21
    $region20: #{tpu_custom_call.1} parent=1 // pred_region
      %s64 = ssub.s32 768, 768
      %65 = vsyncadd [#allocation9], %s64
      %s66 = sshll.u32 [#allocation8], 4
      %s67 = int_to_ptr.vmem [resolvable:$true] %s66
      %72 = dma.hbm_to_vmem [thread:$0]  %s4, 768, %s67, [#allocation9], 64, 64, 4
    $region21: #{tpu_custom_call.1} parent=1 // pred_fallthru
      _
    // Predicated region
    $region22: #{tpu_custom_call.1} parent=1 // pred_check
      _
    $region23: #{tpu_custom_call.1} parent=1 // pred_check_branch
      %74 = sbr.rel (0) target = $region25
    $region24: #{tpu_custom_call.1} parent=1 // pred_region
      %s76 = ssub.s32 768, 768
      %77 = vsyncadd [#allocation9], %s76
      %s78 = sshll.u32 [#allocation10], 4
      %s79 = int_to_ptr.vmem [resolvable:$true] %s78
      %84 = dma.hbm_to_vmem [thread:$0]  %s5, 768, %s79, [#allocation9], 64, 64, 4
    $region25: #{tpu_custom_call.1} parent=1 // pred_fallthru
      _
    // Predicated region
    $region26: #{tpu_custom_call.1} parent=1 // pred_check
      _
    $region27: #{tpu_custom_call.1} parent=1 // pred_check_branch
      %86 = sbr.rel (0) target = $region29
    $region28: #{tpu_custom_call.1} parent=1 // pred_region
      %s88 = ssub.s32 64, 64
      %89 = vsyncadd [#allocation12], %s88
      %s90 = sshll.u32 [#allocation11], 4
      %s91 = int_to_ptr.vmem [resolvable:$true] %s90
      %96 = dma.hbm_to_vmem [thread:$0]  %s6, 64, %s91, [#allocation12], 16, 16, 1
    $region29: #{tpu_custom_call.1} parent=1 // pred_fallthru
      _
    // Predicated region
    $region30: #{tpu_custom_call.1} parent=1 // pred_check
      _
    $region31: #{tpu_custom_call.1} parent=1 // pred_check_branch
      %98 = sbr.rel (0) target = $region33
    $region32: #{tpu_custom_call.1} parent=1 // pred_region
      %s100 = ssub.s32 768, 768
      %101 = vsyncadd [#allocation12], %s100
      %s102 = sshll.u32 [#allocation13], 4
      %s103 = int_to_ptr.vmem [resolvable:$true] %s102
      %108 = dma.hbm_to_vmem [thread:$0]  %s7, 768, %s103, [#allocation12], 64, 64, 4
    $region33: #{tpu_custom_call.1} parent=1 // pred_fallthru
      _
    // Predicated region
    $region34: #{tpu_custom_call.1} parent=1 // pred_check
      _
    $region35: #{tpu_custom_call.1} parent=1 // pred_check_branch
      %110 = sbr.rel (0) target = $region37
    $region36: #{tpu_custom_call.1} parent=1 // pred_region
      %s112 = ssub.s32 768, 768
      %113 = vsyncadd [#allocation15], %s112
      %s114 = sshll.u32 [#allocation14], 4
      %s115 = int_to_ptr.vmem [resolvable:$true] %s114
      %120 = dma.hbm_to_vmem [thread:$0]  %s8, 768, %s115, [#allocation15], 64, 64, 4
    $region37: #{tpu_custom_call.1} parent=1 // pred_fallthru
      _
    // Predicated region
    $region38: #{tpu_custom_call.1} parent=1 // pred_check
      _
    $region39: #{tpu_custom_call.1} parent=1 // pred_check_branch
      %122 = sbr.rel (0) target = $region41
    $region40: #{tpu_custom_call.1} parent=1 // pred_region
      %s124 = ssub.s32 64, 64
      %125 = vsyncadd [#allocation15], %s124
      %s126 = sshll.u32 [#allocation16], 4
      %s127 = int_to_ptr.vmem [resolvable:$true] %s126
      %132 = dma.hbm_to_vmem [thread:$0]  %s9, 64, %s127, [#allocation15], 16, 16, 1
    $region41: #{tpu_custom_call.1} parent=1 // pred_fallthru
      _
    // Predicated region
    $region42: #{tpu_custom_call.1} parent=1 // pred_check
      _
    $region43: #{tpu_custom_call.1} parent=1 // pred_check_branch
      %134 = sbr.rel (0) target = $region45
    $region44: #{tpu_custom_call.1} parent=1 // pred_region
      _
    $region45: #{tpu_custom_call.1} parent=1 // pred_fallthru
      _
    // Predicated region
    $region46: #{tpu_custom_call.1} parent=1 // pred_check
      _
    $region47: #{tpu_custom_call.1} parent=1 // pred_check_branch
      %136 = sbr.rel (0) target = $region49
    $region48: #{tpu_custom_call.1} parent=1 // pred_region
      _
    $region49: #{tpu_custom_call.1} parent=1 // pred_fallthru
      _
    // Predicated region
    $region50: #{tpu_custom_call.1} parent=1 // pred_check
      _
    $region51: #{tpu_custom_call.1} parent=1 // pred_check_branch
      %138 = sbr.rel (0) target = $region53
    $region52: #{tpu_custom_call.1} parent=1 // pred_region
      %139 = dma.done [#allocation3], 128
    $region53: #{tpu_custom_call.1} parent=1 // pred_fallthru
      _
    // Predicated region
    $region54: #{tpu_custom_call.1} parent=1 // pred_check
      _
    $region55: #{tpu_custom_call.1} parent=1 // pred_check_branch
      %141 = sbr.rel (0) target = $region57
    $region56: #{tpu_custom_call.1} parent=1 // pred_region
      %142 = dma.done [#allocation6], 576
    $region57: #{tpu_custom_call.1} parent=1 // pred_fallthru
      _
    // Predicated region
    $region58: #{tpu_custom_call.1} parent=1 // pred_check
      _
    $region59: #{tpu_custom_call.1} parent=1 // pred_check_branch
      %144 = sbr.rel (0) target = $region61
    $region60: #{tpu_custom_call.1} parent=1 // pred_region
      %145 = dma.done [#allocation6], 768
    $region61: #{tpu_custom_call.1} parent=1 // pred_fallthru
      _
    // Predicated region
    $region62: #{tpu_custom_call.1} parent=1 // pred_check
      _
    $region63: #{tpu_custom_call.1} parent=1 // pred_check_branch
      %147 = sbr.rel (0) target = $region65
    $region64: #{tpu_custom_call.1} parent=1 // pred_region
      %148 = dma.done [#allocation9], 768
    $region65: #{tpu_custom_call.1} parent=1 // pred_fallthru
      _
    // Predicated region
    $region66: #{tpu_custom_call.1} parent=1 // pred_check
      _
    $region67: #{tpu_custom_call.1} parent=1 // pred_check_branch
      %150 = sbr.rel (0) target = $region69
    $region68: #{tpu_custom_call.1} parent=1 // pred_region
      %151 = dma.done [#allocation9], 768
    $region69: #{tpu_custom_call.1} parent=1 // pred_fallthru
      _
    // Predicated region
    $region70: #{tpu_custom_call.1} parent=1 // pred_check
      _
    $region71: #{tpu_custom_call.1} parent=1 // pred_check_branch
      %153 = sbr.rel (0) target = $region73
    $region72: #{tpu_custom_call.1} parent=1 // pred_region
      %154 = dma.done [#allocation12], 64
    $region73: #{tpu_custom_call.1} parent=1 // pred_fallthru
      _
    // Predicated region
    $region74: #{tpu_custom_call.1} parent=1 // pred_check
      _
    $region75: #{tpu_custom_call.1} parent=1 // pred_check_branch
      %156 = sbr.rel (0) target = $region77
    $region76: #{tpu_custom_call.1} parent=1 // pred_region
      %157 = dma.done [#allocation12], 768
    $region77: #{tpu_custom_call.1} parent=1 // pred_fallthru
      _
    // Predicated region
    $region78: #{tpu_custom_call.1} parent=1 // pred_check
      _
    $region79: #{tpu_custom_call.1} parent=1 // pred_check_branch
      %159 = sbr.rel (0) target = $region81
    $region80: #{tpu_custom_call.1} parent=1 // pred_region
      %160 = dma.done [#allocation15], 768
    $region81: #{tpu_custom_call.1} parent=1 // pred_fallthru
      _
    // Predicated region
    $region82: #{tpu_custom_call.1} parent=1 // pred_check
      _
    $region83: #{tpu_custom_call.1} parent=1 // pred_check_branch
      %162 = sbr.rel (0) target = $region85
    $region84: #{tpu_custom_call.1} parent=1 // pred_region
      %163 = dma.done [#allocation15], 64
    $region85: #{tpu_custom_call.1} parent=1 // pred_fallthru
      _
    %v165 = vld [vmem:[%s3] sm:$0x1]
    %v167 = vlaneseq
    %v168 = vshrl.u32 %v167, 7
    %v169 = vsub.s32 0, %v168
    %v170 = vrot.slane %v165, %v169
    %s172 = scalar_lea.vmem %s3, 1
    %v173 = vld [vmem:[%s172] sm:$0x1]
    %v175 = vlaneseq
    %v176 = vshrl.u32 %v175, 7
    %v177 = vsub.s32 0, %v176
    %v178 = vrot.slane %v173, %v177
    %s180 = scalar_lea.vmem %s3, 2
    %v181 = vld [vmem:[%s180] sm:$0x1]
    %v183 = vlaneseq
    %v184 = vshrl.u32 %v183, 7
    %v185 = vsub.s32 0, %v184
    %v186 = vrot.slane %v181, %v185
    %s188 = scalar_lea.vmem %s3, 3
    %v189 = vld [vmem:[%s188] sm:$0x1]
    %v191 = vlaneseq
    %v192 = vshrl.u32 %v191, 7
    %v193 = vsub.s32 0, %v192
    %v194 = vrot.slane %v189, %v193
    %v196 = vld [vmem:[#allocation11] sm:$0x1]
    %v198 = vlaneseq
    %v199 = vshrl.u32 %v198, 7
    %v200 = vsub.s32 0, %v199
    %v201 = vrot.slane %v196, %v200
    %s203 = scalar_lea.vmem [#allocation11], 1
    %v204 = vld [vmem:[%s203] sm:$0x1]
    %v206 = vlaneseq
    %v207 = vshrl.u32 %v206, 7
    %v208 = vsub.s32 0, %v207
    %v209 = vrot.slane %v204, %v208
    %s211 = scalar_lea.vmem [#allocation11], 2
    %v212 = vld [vmem:[%s211] sm:$0x1]
    %v214 = vlaneseq
    %v215 = vshrl.u32 %v214, 7
    %v216 = vsub.s32 0, %v215
    %v217 = vrot.slane %v212, %v216
    %s219 = scalar_lea.vmem [#allocation11], 3
    %v220 = vld [vmem:[%s219] sm:$0x1]
    %v222 = vlaneseq
    %v223 = vshrl.u32 %v222, 7
    %v224 = vsub.s32 0, %v223
    %v225 = vrot.slane %v220, %v224
    %v227 = vld [vmem:[#allocation16] sm:$0x1]
    %v229 = vlaneseq
    %v230 = vshrl.u32 %v229, 7
    %v231 = vsub.s32 0, %v230
    %v232 = vrot.slane %v227, %v231
    %s234 = scalar_lea.vmem [#allocation16], 1
    %v235 = vld [vmem:[%s234] sm:$0x1]
    %v237 = vlaneseq
    %v238 = vshrl.u32 %v237, 7
    %v239 = vsub.s32 0, %v238
    %v240 = vrot.slane %v235, %v239
    %s242 = scalar_lea.vmem [#allocation16], 2
    %v243 = vld [vmem:[%s242] sm:$0x1]
    %v245 = vlaneseq
    %v246 = vshrl.u32 %v245, 7
    %v247 = vsub.s32 0, %v246
    %v248 = vrot.slane %v243, %v247
    %s250 = scalar_lea.vmem [#allocation16], 3
    %v251 = vld [vmem:[%s250] sm:$0x1]
    %v253 = vlaneseq
    %v254 = vshrl.u32 %v253, 7
    %v255 = vsub.s32 0, %v254
    %v256 = vrot.slane %v251, %v255
    %v258 = vld [vmem:[#allocation2] sm:$0x1]
    %v259 = vld [vmem:[#allocation5] sm:$0xf]
    %v260 = vld [vmem:[#allocation5 + $0x4] sm:$0xf]
    %v261 = vld [vmem:[#allocation5 + $0x8] sm:$0xf]
    %v262 = vld [vmem:[#allocation7] sm:$0xf]
    %v263 = vld [vmem:[#allocation7 + $0x4] sm:$0xf]
    %v264 = vld [vmem:[#allocation7 + $0x8] sm:$0xf]
    %v265 = vld [vmem:[#allocation7 + $0xc] sm:$0xf]
    %v270 = vunpack.c.l.b16 %v262
    %v271 = vunpack.c.l.b16 %v263
    %v272 = vunpack.c.l.b16 %v264
    %v273 = vunpack.c.l.b16 %v265
    %v274 = vpack.c.b16 %v271, %v270
    %v275 = vpack.c.b16 %v273, %v272
    %vm278 = vcmask 261120
    %v280 = vsel %vm278, 0, 0
    %282 = vmatprep.subr.bf16.mxu0 0
    %283 = vmatpush1.bf16.msra.mxu0 %v274
    %284 = vmatprep.subr.bf16.mxu0 0
    %285 = vmatpush1.bf16.msra.mxu0 %v275
    %286 = vmatprep.subr.bf16.mxu0 0
    %287 = vmatpush1.bf16.msra.mxu0 0
    %288 = vmatprep.subr.bf16.mxu0 0
    %289 = vmatpush1.bf16.msra.mxu0 0
    %290 = vmatprep.subr.bf16.mxu0 0
    %291 = vmatpush1.bf16.msra.mxu0 0
    %292 = vmatprep.subr.bf16.mxu0 0
    %293 = vmatpush1.bf16.msra.mxu0 0
    %294 = vmatprep.subr.bf16.mxu0 0
    %295 = vmatpush1.bf16.msra.mxu0 0
    %296 = vmatprep.subr.bf16.mxu0 0
    %297 = vmatpush1.bf16.msra.mxu0 0
    %298 = vmatprep.subr.bf16.mxu0 0
    %299 = vmatpush1.bf16.msra.mxu0 0
    %300 = vmatprep.subr.bf16.mxu0 0
    %301 = vmatpush1.bf16.msra.mxu0 0
    %302 = vmatprep.subr.bf16.mxu0 0
    %303 = vmatpush1.bf16.msra.mxu0 0
    %304 = vmatprep.subr.bf16.mxu0 0
    %305 = vmatpush1.bf16.msra.mxu0 0
    %306 = vmatprep.subr.bf16.mxu0 0
    %307 = vmatpush1.bf16.msra.mxu0 0
    %308 = vmatprep.subr.bf16.mxu0 0
    %309 = vmatpush1.bf16.msra.mxu0 0
    %310 = vmatprep.subr.bf16.mxu0 0
    %311 = vmatpush1.bf16.msra.mxu0 0
    %312 = vmatprep.subr.bf16.mxu0 0
    %313 = vmatpush1.bf16.msra.mxu0 0
    %314 = vmatprep.mubr.bf16.mxu0 0
    %315 = vmatmul.mubr.bf16.gmra.mrb[0].mxu0 %v280
    %v316 = vpop.f32.mrb[0].mxu0
    %v317 = vadd.f32 0.0, %v316
    %v318 = vpop.f32.mrb[0].mxu0
    %v319 = vpop.f32.mrb[0].mxu0
    %v320 = vpop.f32.mrb[0].mxu0
    %321 = vdwg.mxu0
    %v325 = vunpack.c.l.b16 %v259
    %v326 = vunpack.c.l.b16 %v260
    %v327 = vunpack.c.l.b16 %v261
    %v328 = vpack.c.b16 %v326, %v325
    %v329 = vpack.c.b16 %v327, %v327
    %vm331 = vcmask 195584
    %v333 = vsel %vm331, %v258, 0
    %vm335 = vcmask 1043456
    %v337 = vsel %vm335, %v329, 0
    %339 = vmatprep.subr.bf16.mxu0 0
    %340 = vmatpush1.bf16.msra.mxu0 %v328
    %341 = vmatprep.subr.bf16.mxu0 0
    %342 = vmatpush1.bf16.msra.mxu0 %v337
    %343 = vmatprep.subr.bf16.mxu0 0
    %344 = vmatpush1.bf16.msra.mxu0 0
    %345 = vmatprep.subr.bf16.mxu0 0
    %346 = vmatpush1.bf16.msra.mxu0 0
    %347 = vmatprep.subr.bf16.mxu0 0
    %348 = vmatpush1.bf16.msra.mxu0 0
    %349 = vmatprep.subr.bf16.mxu0 0
    %350 = vmatpush1.bf16.msra.mxu0 0
    %351 = vmatprep.subr.bf16.mxu0 0
    %352 = vmatpush1.bf16.msra.mxu0 0
    %353 = vmatprep.subr.bf16.mxu0 0
    %354 = vmatpush1.bf16.msra.mxu0 0
    %355 = vmatprep.subr.bf16.mxu0 0
    %356 = vmatpush1.bf16.msra.mxu0 0
    %357 = vmatprep.subr.bf16.mxu0 0
    %358 = vmatpush1.bf16.msra.mxu0 0
    %359 = vmatprep.subr.bf16.mxu0 0
    %360 = vmatpush1.bf16.msra.mxu0 0
    %361 = vmatprep.subr.bf16.mxu0 0
    %362 = vmatpush1.bf16.msra.mxu0 0
    %363 = vmatprep.subr.bf16.mxu0 0
    %364 = vmatpush1.bf16.msra.mxu0 0
    %365 = vmatprep.subr.bf16.mxu0 0
    %366 = vmatpush1.bf16.msra.mxu0 0
    %367 = vmatprep.subr.bf16.mxu0 0
    %368 = vmatpush1.bf16.msra.mxu0 0
    %369 = vmatprep.subr.bf16.mxu0 0
    %370 = vmatpush1.bf16.msra.mxu0 0
    %371 = vmatprep.mubr.bf16.mxu0 0
    %372 = vmatmul.mubr.bf16.gmra.mrb[0].mxu0 %v333
    %v373 = vpop.f32.mrb[0].mxu0
    %v374 = vadd.f32 %v317, %v373
    %v375 = vpop.f32.mrb[0].mxu0
    %v376 = vpop.f32.mrb[0].mxu0
    %v377 = vpop.f32.mrb[0].mxu0
    %378 = vdwg.mxu0
    %v379 = vadd.f32 %v374, %v170
    %v380 = vxor.u32 %v379, 2147483648
    %v381 = vmul.f32 %v380, 1.442695
    %v382 = vpow.pop %v381
    %v383 = vadd.f32 %v382, 1.0
    %v384 = vrcp.pop %v383
    %v385 = vmul.f32 1.0, %v384
    %s386 = scalar_lea.vmem [#allocation5], 12
    %v387 = vld [vmem:[%s386] sm:$0xf]
    %v388 = vld [vmem:[%s386 + $0x4] sm:$0xf]
    %v389 = vld [vmem:[%s386 + $0x8] sm:$0xf]
    %s390 = scalar_lea.vmem [#allocation7], 16
    %v391 = vld [vmem:[%s390] sm:$0xf]
    %v392 = vld [vmem:[%s390 + $0x4] sm:$0xf]
    %v393 = vld [vmem:[%s390 + $0x8] sm:$0xf]
    %v394 = vld [vmem:[%s390 + $0xc] sm:$0xf]
    %v399 = vunpack.c.l.b16 %v391
    %v400 = vunpack.c.l.b16 %v392
    %v401 = vunpack.c.l.b16 %v393
    %v402 = vunpack.c.l.b16 %v394
    %v403 = vpack.c.b16 %v400, %v399
    %v404 = vpack.c.b16 %v402, %v401
    %407 = vmatprep.subr.bf16.mxu0 0
    %408 = vmatpush1.bf16.msra.mxu0 %v403
    %409 = vmatprep.subr.bf16.mxu0 0
    %410 = vmatpush1.bf16.msra.mxu0 %v404
    %411 = vmatprep.subr.bf16.mxu0 0
    %412 = vmatpush1.bf16.msra.mxu0 0
    %413 = vmatprep.subr.bf16.mxu0 0
    %414 = vmatpush1.bf16.msra.mxu0 0
    %415 = vmatprep.subr.bf16.mxu0 0
    %416 = vmatpush1.bf16.msra.mxu0 0
    %417 = vmatprep.subr.bf16.mxu0 0
    %418 = vmatpush1.bf16.msra.mxu0 0
    %419 = vmatprep.subr.bf16.mxu0 0
    %420 = vmatpush1.bf16.msra.mxu0 0
    %421 = vmatprep.subr.bf16.mxu0 0
    %422 = vmatpush1.bf16.msra.mxu0 0
    %423 = vmatprep.subr.bf16.mxu0 0
    %424 = vmatpush1.bf16.msra.mxu0 0
    %425 = vmatprep.subr.bf16.mxu0 0
    %426 = vmatpush1.bf16.msra.mxu0 0
    %427 = vmatprep.subr.bf16.mxu0 0
    %428 = vmatpush1.bf16.msra.mxu0 0
    %429 = vmatprep.subr.bf16.mxu0 0
    %430 = vmatpush1.bf16.msra.mxu0 0
    %431 = vmatprep.subr.bf16.mxu0 0
    %432 = vmatpush1.bf16.msra.mxu0 0
    %433 = vmatprep.subr.bf16.mxu0 0
    %434 = vmatpush1.bf16.msra.mxu0 0
    %435 = vmatprep.subr.bf16.mxu0 0
    %436 = vmatpush1.bf16.msra.mxu0 0
    %437 = vmatprep.subr.bf16.mxu0 0
    %438 = vmatpush1.bf16.msra.mxu0 0
    %439 = vmatprep.mubr.bf16.mxu0 0
    %440 = vmatmul.mubr.bf16.gmra.mrb[0].mxu0 %v280
    %v441 = vpop.f32.mrb[0].mxu0
    %v442 = vadd.f32 0.0, %v441
    %v443 = vpop.f32.mrb[0].mxu0
    %v444 = vpop.f32.mrb[0].mxu0
    %v445 = vpop.f32.mrb[0].mxu0
    %446 = vdwg.mxu0
    %v450 = vunpack.c.l.b16 %v387
    %v451 = vunpack.c.l.b16 %v388
    %v452 = vunpack.c.l.b16 %v389
    %v453 = vpack.c.b16 %v451, %v450
    %v454 = vpack.c.b16 %v452, %v452
    %v457 = vsel %vm335, %v454, 0
    %459 = vmatprep.subr.bf16.mxu0 0
    %460 = vmatpush1.bf16.msra.mxu0 %v453
    %461 = vmatprep.subr.bf16.mxu0 0
    %462 = vmatpush1.bf16.msra.mxu0 %v457
    %463 = vmatprep.subr.bf16.mxu0 0
    %464 = vmatpush1.bf16.msra.mxu0 0
    %465 = vmatprep.subr.bf16.mxu0 0
    %466 = vmatpush1.bf16.msra.mxu0 0
    %467 = vmatprep.subr.bf16.mxu0 0
    %468 = vmatpush1.bf16.msra.mxu0 0
    %469 = vmatprep.subr.bf16.mxu0 0
    %470 = vmatpush1.bf16.msra.mxu0 0
    %471 = vmatprep.subr.bf16.mxu0 0
    %472 = vmatpush1.bf16.msra.mxu0 0
    %473 = vmatprep.subr.bf16.mxu0 0
    %474 = vmatpush1.bf16.msra.mxu0 0
    %475 = vmatprep.subr.bf16.mxu0 0
    %476 = vmatpush1.bf16.msra.mxu0 0
    %477 = vmatprep.subr.bf16.mxu0 0
    %478 = vmatpush1.bf16.msra.mxu0 0
    %479 = vmatprep.subr.bf16.mxu0 0
    %480 = vmatpush1.bf16.msra.mxu0 0
    %481 = vmatprep.subr.bf16.mxu0 0
    %482 = vmatpush1.bf16.msra.mxu0 0
    %483 = vmatprep.subr.bf16.mxu0 0
    %484 = vmatpush1.bf16.msra.mxu0 0
    %485 = vmatprep.subr.bf16.mxu0 0
    %486 = vmatpush1.bf16.msra.mxu0 0
    %487 = vmatprep.subr.bf16.mxu0 0
    %488 = vmatpush1.bf16.msra.mxu0 0
    %489 = vmatprep.subr.bf16.mxu0 0
    %490 = vmatpush1.bf16.msra.mxu0 0
    %491 = vmatprep.mubr.bf16.mxu0 0
    %492 = vmatmul.mubr.bf16.gmra.mrb[0].mxu0 %v333
    %v493 = vpop.f32.mrb[0].mxu0
    %v494 = vadd.f32 %v442, %v493
    %v495 = vpop.f32.mrb[0].mxu0
    %v496 = vpop.f32.mrb[0].mxu0
    %v497 = vpop.f32.mrb[0].mxu0
    %498 = vdwg.mxu0
    %v499 = vadd.f32 %v494, %v178
    %v500 = vxor.u32 %v499, 2147483648
    %v501 = vmul.f32 %v500, 1.442695
    %v502 = vpow.pop %v501
    %v503 = vadd.f32 %v502, 1.0
    %v504 = vrcp.pop %v503
    %v505 = vmul.f32 1.0, %v504
    %s506 = scalar_lea.vmem [#allocation5], 24
    %v507 = vld [vmem:[%s506] sm:$0xf]
    %v508 = vld [vmem:[%s506 + $0x4] sm:$0xf]
    %v509 = vld [vmem:[%s506 + $0x8] sm:$0xf]
    %v513 = vunpack.c.l.b16 %v507
    %v514 = vunpack.c.l.b16 %v508
    %v515 = vunpack.c.l.b16 %v509
    %v516 = vpack.c.b16 %v514, %v513
    %v517 = vpack.c.b16 %v515, %v515
    %v520 = vsel %vm335, %v517, 0
    %522 = vmatprep.subr.bf16.mxu0 0
    %523 = vmatpush1.bf16.msra.mxu0 %v516
    %524 = vmatprep.subr.bf16.mxu0 0
    %525 = vmatpush1.bf16.msra.mxu0 %v520
    %526 = vmatprep.subr.bf16.mxu0 0
    %527 = vmatpush1.bf16.msra.mxu0 0
    %528 = vmatprep.subr.bf16.mxu0 0
    %529 = vmatpush1.bf16.msra.mxu0 0
    %530 = vmatprep.subr.bf16.mxu0 0
    %531 = vmatpush1.bf16.msra.mxu0 0
    %532 = vmatprep.subr.bf16.mxu0 0
    %533 = vmatpush1.bf16.msra.mxu0 0
    %534 = vmatprep.subr.bf16.mxu0 0
    %535 = vmatpush1.bf16.msra.mxu0 0
    %536 = vmatprep.subr.bf16.mxu0 0
    %537 = vmatpush1.bf16.msra.mxu0 0
    %538 = vmatprep.subr.bf16.mxu0 0
    %539 = vmatpush1.bf16.msra.mxu0 0
    %540 = vmatprep.subr.bf16.mxu0 0
    %541 = vmatpush1.bf16.msra.mxu0 0
    %542 = vmatprep.subr.bf16.mxu0 0
    %543 = vmatpush1.bf16.msra.mxu0 0
    %544 = vmatprep.subr.bf16.mxu0 0
    %545 = vmatpush1.bf16.msra.mxu0 0
    %546 = vmatprep.subr.bf16.mxu0 0
    %547 = vmatpush1.bf16.msra.mxu0 0
    %548 = vmatprep.subr.bf16.mxu0 0
    %549 = vmatpush1.bf16.msra.mxu0 0
    %550 = vmatprep.subr.bf16.mxu0 0
    %551 = vmatpush1.bf16.msra.mxu0 0
    %552 = vmatprep.subr.bf16.mxu0 0
    %553 = vmatpush1.bf16.msra.mxu0 0
    %554 = vmatprep.mubr.bf16.mxu0 0
    %555 = vmatmul.mubr.bf16.gmra.mrb[0].mxu0 %v333
    %v556 = vpop.f32.mrb[0].mxu0
    %v557 = vadd.f32 %v186, %v556
    %v558 = vpop.f32.mrb[0].mxu0
    %v559 = vpop.f32.mrb[0].mxu0
    %v560 = vpop.f32.mrb[0].mxu0
    %561 = vdwg.mxu0
    %s562 = scalar_lea.vmem [#allocation7], 32
    %v563 = vld [vmem:[%s562] sm:$0xf]
    %v564 = vld [vmem:[%s562 + $0x4] sm:$0xf]
    %v565 = vld [vmem:[%s562 + $0x8] sm:$0xf]
    %v566 = vld [vmem:[%s562 + $0xc] sm:$0xf]
    %v571 = vunpack.c.l.b16 %v563
    %v572 = vunpack.c.l.b16 %v564
    %v573 = vunpack.c.l.b16 %v565
    %v574 = vunpack.c.l.b16 %v566
    %v575 = vpack.c.b16 %v572, %v571
    %v576 = vpack.c.b16 %v574, %v573
    %579 = vmatprep.subr.bf16.mxu0 0
    %580 = vmatpush1.bf16.msra.mxu0 %v575
    %581 = vmatprep.subr.bf16.mxu0 0
    %582 = vmatpush1.bf16.msra.mxu0 %v576
    %583 = vmatprep.subr.bf16.mxu0 0
    %584 = vmatpush1.bf16.msra.mxu0 0
    %585 = vmatprep.subr.bf16.mxu0 0
    %586 = vmatpush1.bf16.msra.mxu0 0
    %587 = vmatprep.subr.bf16.mxu0 0
    %588 = vmatpush1.bf16.msra.mxu0 0
    %589 = vmatprep.subr.bf16.mxu0 0
    %590 = vmatpush1.bf16.msra.mxu0 0
    %591 = vmatprep.subr.bf16.mxu0 0
    %592 = vmatpush1.bf16.msra.mxu0 0
    %593 = vmatprep.subr.bf16.mxu0 0
    %594 = vmatpush1.bf16.msra.mxu0 0
    %595 = vmatprep.subr.bf16.mxu0 0
    %596 = vmatpush1.bf16.msra.mxu0 0
    %597 = vmatprep.subr.bf16.mxu0 0
    %598 = vmatpush1.bf16.msra.mxu0 0
    %599 = vmatprep.subr.bf16.mxu0 0
    %600 = vmatpush1.bf16.msra.mxu0 0
    %601 = vmatprep.subr.bf16.mxu0 0
    %602 = vmatpush1.bf16.msra.mxu0 0
    %603 = vmatprep.subr.bf16.mxu0 0
    %604 = vmatpush1.bf16.msra.mxu0 0
    %605 = vmatprep.subr.bf16.mxu0 0
    %606 = vmatpush1.bf16.msra.mxu0 0
    %607 = vmatprep.subr.bf16.mxu0 0
    %608 = vmatpush1.bf16.msra.mxu0 0
    %609 = vmatprep.subr.bf16.mxu0 0
    %610 = vmatpush1.bf16.msra.mxu0 0
    %611 = vmatprep.mubr.bf16.mxu0 0
    %612 = vmatmul.mubr.bf16.gmra.mrb[0].mxu0 %v280
    %v613 = vpop.f32.mrb[0].mxu0
    %v614 = vadd.f32 %v194, %v613
    %v615 = vpop.f32.mrb[0].mxu0
    %v616 = vpop.f32.mrb[0].mxu0
    %v617 = vpop.f32.mrb[0].mxu0
    %618 = vdwg.mxu0
    %v619 = vmul.f32 %v385, %v614
    %v620 = vadd.f32 %v557, %v619
    %v621 = vtanh.pop %v620
    %v622 = vsub.f32 1.0, %v505
    %v623 = vmul.f32 %v622, %v621
    %v624 = vmul.f32 %v505, 0.0
    %v625 = vadd.f32 %v623, %v624
    %v626 = vpack.c.bf16 %v625, %v625
    %v627 = vld [vmem:[#allocation8] sm:$0xf]
    %v628 = vld [vmem:[#allocation8 + $0x4] sm:$0xf]
    %v629 = vld [vmem:[#allocation8 + $0x8] sm:$0xf]
    %v630 = vld [vmem:[#allocation8 + $0xc] sm:$0xf]
    %v631 = vld [vmem:[#allocation10] sm:$0xf]
    %v632 = vld [vmem:[#allocation10 + $0x4] sm:$0xf]
    %v633 = vld [vmem:[#allocation10 + $0x8] sm:$0xf]
    %v634 = vld [vmem:[#allocation10 + $0xc] sm:$0xf]
    %v639 = vunpack.c.l.b16 %v631
    %v640 = vunpack.c.l.b16 %v632
    %v641 = vunpack.c.l.b16 %v633
    %v642 = vunpack.c.l.b16 %v634
    %v643 = vpack.c.b16 %v640, %v639
    %v644 = vpack.c.b16 %v642, %v641
    %647 = vmatprep.subr.bf16.mxu0 0
    %648 = vmatpush1.bf16.msra.mxu0 %v643
    %649 = vmatprep.subr.bf16.mxu0 0
    %650 = vmatpush1.bf16.msra.mxu0 %v644
    %651 = vmatprep.subr.bf16.mxu0 0
    %652 = vmatpush1.bf16.msra.mxu0 0
    %653 = vmatprep.subr.bf16.mxu0 0
    %654 = vmatpush1.bf16.msra.mxu0 0
    %655 = vmatprep.subr.bf16.mxu0 0
    %656 = vmatpush1.bf16.msra.mxu0 0
    %657 = vmatprep.subr.bf16.mxu0 0
    %658 = vmatpush1.bf16.msra.mxu0 0
    %659 = vmatprep.subr.bf16.mxu0 0
    %660 = vmatpush1.bf16.msra.mxu0 0
    %661 = vmatprep.subr.bf16.mxu0 0
    %662 = vmatpush1.bf16.msra.mxu0 0
    %663 = vmatprep.subr.bf16.mxu0 0
    %664 = vmatpush1.bf16.msra.mxu0 0
    %665 = vmatprep.subr.bf16.mxu0 0
    %666 = vmatpush1.bf16.msra.mxu0 0
    %667 = vmatprep.subr.bf16.mxu0 0
    %668 = vmatpush1.bf16.msra.mxu0 0
    %669 = vmatprep.subr.bf16.mxu0 0
    %670 = vmatpush1.bf16.msra.mxu0 0
    %671 = vmatprep.subr.bf16.mxu0 0
    %672 = vmatpush1.bf16.msra.mxu0 0
    %673 = vmatprep.subr.bf16.mxu0 0
    %674 = vmatpush1.bf16.msra.mxu0 0
    %675 = vmatprep.subr.bf16.mxu0 0
    %676 = vmatpush1.bf16.msra.mxu0 0
    %677 = vmatprep.subr.bf16.mxu0 0
    %678 = vmatpush1.bf16.msra.mxu0 0
    %679 = vmatprep.mubr.bf16.mxu0 0
    %680 = vmatmul.mubr.bf16.gmra.mrb[0].mxu0 %v280
    %v681 = vpop.f32.mrb[0].mxu0
    %v682 = vadd.f32 0.0, %v681
    %v683 = vpop.f32.mrb[0].mxu0
    %v684 = vpop.f32.mrb[0].mxu0
    %v685 = vpop.f32.mrb[0].mxu0
    %686 = vdwg.mxu0
    %v691 = vunpack.c.l.b16 %v627
    %v692 = vunpack.c.l.b16 %v628
    %v693 = vunpack.c.l.b16 %v629
    %v694 = vunpack.c.l.b16 %v630
    %v695 = vpack.c.b16 %v692, %v691
    %v696 = vpack.c.b16 %v694, %v693
    %v700 = vsel %vm278, %v626, 0
    %702 = vmatprep.subr.bf16.mxu0 0
    %703 = vmatpush1.bf16.msra.mxu0 %v695
    %704 = vmatprep.subr.bf16.mxu0 0
    %705 = vmatpush1.bf16.msra.mxu0 %v696
    %706 = vmatprep.subr.bf16.mxu0 0
    %707 = vmatpush1.bf16.msra.mxu0 0
    %708 = vmatprep.subr.bf16.mxu0 0
    %709 = vmatpush1.bf16.msra.mxu0 0
    %710 = vmatprep.subr.bf16.mxu0 0
    %711 = vmatpush1.bf16.msra.mxu0 0
    %712 = vmatprep.subr.bf16.mxu0 0
    %713 = vmatpush1.bf16.msra.mxu0 0
    %714 = vmatprep.subr.bf16.mxu0 0
    %715 = vmatpush1.bf16.msra.mxu0 0
    %716 = vmatprep.subr.bf16.mxu0 0
    %717 = vmatpush1.bf16.msra.mxu0 0
    %718 = vmatprep.subr.bf16.mxu0 0
    %719 = vmatpush1.bf16.msra.mxu0 0
    %720 = vmatprep.subr.bf16.mxu0 0
    %721 = vmatpush1.bf16.msra.mxu0 0
    %722 = vmatprep.subr.bf16.mxu0 0
    %723 = vmatpush1.bf16.msra.mxu0 0
    %724 = vmatprep.subr.bf16.mxu0 0
    %725 = vmatpush1.bf16.msra.mxu0 0
    %726 = vmatprep.subr.bf16.mxu0 0
    %727 = vmatpush1.bf16.msra.mxu0 0
    %728 = vmatprep.subr.bf16.mxu0 0
    %729 = vmatpush1.bf16.msra.mxu0 0
    %730 = vmatprep.subr.bf16.mxu0 0
    %731 = vmatpush1.bf16.msra.mxu0 0
    %732 = vmatprep.subr.bf16.mxu0 0
    %733 = vmatpush1.bf16.msra.mxu0 0
    %734 = vmatprep.mubr.bf16.mxu0 0
    %735 = vmatmul.mubr.bf16.gmra.mrb[0].mxu0 %v700
    %v736 = vpop.f32.mrb[0].mxu0
    %v737 = vadd.f32 %v682, %v736
    %v738 = vpop.f32.mrb[0].mxu0
    %v739 = vpop.f32.mrb[0].mxu0
    %v740 = vpop.f32.mrb[0].mxu0
    %741 = vdwg.mxu0
    %v742 = vadd.f32 %v737, %v201
    %v743 = vxor.u32 %v742, 2147483648
    %v744 = vmul.f32 %v743, 1.442695
    %v745 = vpow.pop %v744
    %v746 = vadd.f32 %v745, 1.0
    %v747 = vrcp.pop %v746
    %v748 = vmul.f32 1.0, %v747
    %s749 = scalar_lea.vmem [#allocation8], 16
    %v750 = vld [vmem:[%s749] sm:$0xf]
    %v751 = vld [vmem:[%s749 + $0x4] sm:$0xf]
    %v752 = vld [vmem:[%s749 + $0x8] sm:$0xf]
    %v753 = vld [vmem:[%s749 + $0xc] sm:$0xf]
    %s754 = scalar_lea.vmem [#allocation10], 16
    %v755 = vld [vmem:[%s754] sm:$0xf]
    %v756 = vld [vmem:[%s754 + $0x4] sm:$0xf]
    %v757 = vld [vmem:[%s754 + $0x8] sm:$0xf]
    %v758 = vld [vmem:[%s754 + $0xc] sm:$0xf]
    %v763 = vunpack.c.l.b16 %v755
    %v764 = vunpack.c.l.b16 %v756
    %v765 = vunpack.c.l.b16 %v757
    %v766 = vunpack.c.l.b16 %v758
    %v767 = vpack.c.b16 %v764, %v763
    %v768 = vpack.c.b16 %v766, %v765
    %771 = vmatprep.subr.bf16.mxu0 0
    %772 = vmatpush1.bf16.msra.mxu0 %v767
    %773 = vmatprep.subr.bf16.mxu0 0
    %774 = vmatpush1.bf16.msra.mxu0 %v768
    %775 = vmatprep.subr.bf16.mxu0 0
    %776 = vmatpush1.bf16.msra.mxu0 0
    %777 = vmatprep.subr.bf16.mxu0 0
    %778 = vmatpush1.bf16.msra.mxu0 0
    %779 = vmatprep.subr.bf16.mxu0 0
    %780 = vmatpush1.bf16.msra.mxu0 0
    %781 = vmatprep.subr.bf16.mxu0 0
    %782 = vmatpush1.bf16.msra.mxu0 0
    %783 = vmatprep.subr.bf16.mxu0 0
    %784 = vmatpush1.bf16.msra.mxu0 0
    %785 = vmatprep.subr.bf16.mxu0 0
    %786 = vmatpush1.bf16.msra.mxu0 0
    %787 = vmatprep.subr.bf16.mxu0 0
    %788 = vmatpush1.bf16.msra.mxu0 0
    %789 = vmatprep.subr.bf16.mxu0 0
    %790 = vmatpush1.bf16.msra.mxu0 0
    %791 = vmatprep.subr.bf16.mxu0 0
    %792 = vmatpush1.bf16.msra.mxu0 0
    %793 = vmatprep.subr.bf16.mxu0 0
    %794 = vmatpush1.bf16.msra.mxu0 0
    %795 = vmatprep.subr.bf16.mxu0 0
    %796 = vmatpush1.bf16.msra.mxu0 0
    %797 = vmatprep.subr.bf16.mxu0 0
    %798 = vmatpush1.bf16.msra.mxu0 0
    %799 = vmatprep.subr.bf16.mxu0 0
    %800 = vmatpush1.bf16.msra.mxu0 0
    %801 = vmatprep.subr.bf16.mxu0 0
    %802 = vmatpush1.bf16.msra.mxu0 0
    %803 = vmatprep.mubr.bf16.mxu0 0
    %804 = vmatmul.mubr.bf16.gmra.mrb[0].mxu0 %v280
    %v805 = vpop.f32.mrb[0].mxu0
    %v806 = vadd.f32 0.0, %v805
    %v807 = vpop.f32.mrb[0].mxu0
    %v808 = vpop.f32.mrb[0].mxu0
    %v809 = vpop.f32.mrb[0].mxu0
    %810 = vdwg.mxu0
    %v815 = vunpack.c.l.b16 %v750
    %v816 = vunpack.c.l.b16 %v751
    %v817 = vunpack.c.l.b16 %v752
    %v818 = vunpack.c.l.b16 %v753
    %v819 = vpack.c.b16 %v816, %v815
    %v820 = vpack.c.b16 %v818, %v817
    %823 = vmatprep.subr.bf16.mxu0 0
    %824 = vmatpush1.bf16.msra.mxu0 %v819
    %825 = vmatprep.subr.bf16.mxu0 0
    %826 = vmatpush1.bf16.msra.mxu0 %v820
    %827 = vmatprep.subr.bf16.mxu0 0
    %828 = vmatpush1.bf16.msra.mxu0 0
    %829 = vmatprep.subr.bf16.mxu0 0
    %830 = vmatpush1.bf16.msra.mxu0 0
    %831 = vmatprep.subr.bf16.mxu0 0
    %832 = vmatpush1.bf16.msra.mxu0 0
    %833 = vmatprep.subr.bf16.mxu0 0
    %834 = vmatpush1.bf16.msra.mxu0 0
    %835 = vmatprep.subr.bf16.mxu0 0
    %836 = vmatpush1.bf16.msra.mxu0 0
    %837 = vmatprep.subr.bf16.mxu0 0
    %838 = vmatpush1.bf16.msra.mxu0 0
    %839 = vmatprep.subr.bf16.mxu0 0
    %840 = vmatpush1.bf16.msra.mxu0 0
    %841 = vmatprep.subr.bf16.mxu0 0
    %842 = vmatpush1.bf16.msra.mxu0 0
    %843 = vmatprep.subr.bf16.mxu0 0
    %844 = vmatpush1.bf16.msra.mxu0 0
    %845 = vmatprep.subr.bf16.mxu0 0
    %846 = vmatpush1.bf16.msra.mxu0 0
    %847 = vmatprep.subr.bf16.mxu0 0
    %848 = vmatpush1.bf16.msra.mxu0 0
    %849 = vmatprep.subr.bf16.mxu0 0
    %850 = vmatpush1.bf16.msra.mxu0 0
    %851 = vmatprep.subr.bf16.mxu0 0
    %852 = vmatpush1.bf16.msra.mxu0 0
    %853 = vmatprep.subr.bf16.mxu0 0
    %854 = vmatpush1.bf16.msra.mxu0 0
    %855 = vmatprep.mubr.bf16.mxu0 0
    %856 = vmatmul.mubr.bf16.gmra.mrb[0].mxu0 %v700
    %v857 = vpop.f32.mrb[0].mxu0
    %v858 = vadd.f32 %v806, %v857
    %v859 = vpop.f32.mrb[0].mxu0
    %v860 = vpop.f32.mrb[0].mxu0
    %v861 = vpop.f32.mrb[0].mxu0
    %862 = vdwg.mxu0
    %v863 = vadd.f32 %v858, %v209
    %v864 = vxor.u32 %v863, 2147483648
    %v865 = vmul.f32 %v864, 1.442695
    %v866 = vpow.pop %v865
    %v867 = vadd.f32 %v866, 1.0
    %v868 = vrcp.pop %v867
    %v869 = vmul.f32 1.0, %v868
    %s870 = scalar_lea.vmem [#allocation8], 32
    %v871 = vld [vmem:[%s870] sm:$0xf]
    %v872 = vld [vmem:[%s870 + $0x4] sm:$0xf]
    %v873 = vld [vmem:[%s870 + $0x8] sm:$0xf]
    %v874 = vld [vmem:[%s870 + $0xc] sm:$0xf]
    %v879 = vunpack.c.l.b16 %v871
    %v880 = vunpack.c.l.b16 %v872
    %v881 = vunpack.c.l.b16 %v873
    %v882 = vunpack.c.l.b16 %v874
    %v883 = vpack.c.b16 %v880, %v879
    %v884 = vpack.c.b16 %v882, %v881
    %887 = vmatprep.subr.bf16.mxu0 0
    %888 = vmatpush1.bf16.msra.mxu0 %v883
    %889 = vmatprep.subr.bf16.mxu0 0
    %890 = vmatpush1.bf16.msra.mxu0 %v884
    %891 = vmatprep.subr.bf16.mxu0 0
    %892 = vmatpush1.bf16.msra.mxu0 0
    %893 = vmatprep.subr.bf16.mxu0 0
    %894 = vmatpush1.bf16.msra.mxu0 0
    %895 = vmatprep.subr.bf16.mxu0 0
    %896 = vmatpush1.bf16.msra.mxu0 0
    %897 = vmatprep.subr.bf16.mxu0 0
    %898 = vmatpush1.bf16.msra.mxu0 0
    %899 = vmatprep.subr.bf16.mxu0 0
    %900 = vmatpush1.bf16.msra.mxu0 0
    %901 = vmatprep.subr.bf16.mxu0 0
    %902 = vmatpush1.bf16.msra.mxu0 0
    %903 = vmatprep.subr.bf16.mxu0 0
    %904 = vmatpush1.bf16.msra.mxu0 0
    %905 = vmatprep.subr.bf16.mxu0 0
    %906 = vmatpush1.bf16.msra.mxu0 0
    %907 = vmatprep.subr.bf16.mxu0 0
    %908 = vmatpush1.bf16.msra.mxu0 0
    %909 = vmatprep.subr.bf16.mxu0 0
    %910 = vmatpush1.bf16.msra.mxu0 0
    %911 = vmatprep.subr.bf16.mxu0 0
    %912 = vmatpush1.bf16.msra.mxu0 0
    %913 = vmatprep.subr.bf16.mxu0 0
    %914 = vmatpush1.bf16.msra.mxu0 0
    %915 = vmatprep.subr.bf16.mxu0 0
    %916 = vmatpush1.bf16.msra.mxu0 0
    %917 = vmatprep.subr.bf16.mxu0 0
    %918 = vmatpush1.bf16.msra.mxu0 0
    %919 = vmatprep.mubr.bf16.mxu0 0
    %920 = vmatmul.mubr.bf16.gmra.mrb[0].mxu0 %v700
    %v921 = vpop.f32.mrb[0].mxu0
    %v922 = vadd.f32 %v217, %v921
    %v923 = vpop.f32.mrb[0].mxu0
    %v924 = vpop.f32.mrb[0].mxu0
    %v925 = vpop.f32.mrb[0].mxu0
    %926 = vdwg.mxu0
    %s927 = scalar_lea.vmem [#allocation10], 32
    %v928 = vld [vmem:[%s927] sm:$0xf]
    %v929 = vld [vmem:[%s927 + $0x4] sm:$0xf]
    %v930 = vld [vmem:[%s927 + $0x8] sm:$0xf]
    %v931 = vld [vmem:[%s927 + $0xc] sm:$0xf]
    %v936 = vunpack.c.l.b16 %v928
    %v937 = vunpack.c.l.b16 %v929
    %v938 = vunpack.c.l.b16 %v930
    %v939 = vunpack.c.l.b16 %v931
    %v940 = vpack.c.b16 %v937, %v936
    %v941 = vpack.c.b16 %v939, %v938
    %944 = vmatprep.subr.bf16.mxu0 0
    %945 = vmatpush1.bf16.msra.mxu0 %v940
    %946 = vmatprep.subr.bf16.mxu0 0
    %947 = vmatpush1.bf16.msra.mxu0 %v941
    %948 = vmatprep.subr.bf16.mxu0 0
    %949 = vmatpush1.bf16.msra.mxu0 0
    %950 = vmatprep.subr.bf16.mxu0 0
    %951 = vmatpush1.bf16.msra.mxu0 0
    %952 = vmatprep.subr.bf16.mxu0 0
    %953 = vmatpush1.bf16.msra.mxu0 0
    %954 = vmatprep.subr.bf16.mxu0 0
    %955 = vmatpush1.bf16.msra.mxu0 0
    %956 = vmatprep.subr.bf16.mxu0 0
    %957 = vmatpush1.bf16.msra.mxu0 0
    %958 = vmatprep.subr.bf16.mxu0 0
    %959 = vmatpush1.bf16.msra.mxu0 0
    %960 = vmatprep.subr.bf16.mxu0 0
    %961 = vmatpush1.bf16.msra.mxu0 0
    %962 = vmatprep.subr.bf16.mxu0 0
    %963 = vmatpush1.bf16.msra.mxu0 0
    %964 = vmatprep.subr.bf16.mxu0 0
    %965 = vmatpush1.bf16.msra.mxu0 0
    %966 = vmatprep.subr.bf16.mxu0 0
    %967 = vmatpush1.bf16.msra.mxu0 0
    %968 = vmatprep.subr.bf16.mxu0 0
    %969 = vmatpush1.bf16.msra.mxu0 0
    %970 = vmatprep.subr.bf16.mxu0 0
    %971 = vmatpush1.bf16.msra.mxu0 0
    %972 = vmatprep.subr.bf16.mxu0 0
    %973 = vmatpush1.bf16.msra.mxu0 0
    %974 = vmatprep.subr.bf16.mxu0 0
    %975 = vmatpush1.bf16.msra.mxu0 0
    %976 = vmatprep.mubr.bf16.mxu0 0
    %977 = vmatmul.mubr.bf16.gmra.mrb[0].mxu0 %v280
    %v978 = vpop.f32.mrb[0].mxu0
    %v979 = vadd.f32 %v225, %v978
    %v980 = vpop.f32.mrb[0].mxu0
    %v981 = vpop.f32.mrb[0].mxu0
    %v982 = vpop.f32.mrb[0].mxu0
    %983 = vdwg.mxu0
    %v984 = vmul.f32 %v748, %v979
    %v985 = vadd.f32 %v922, %v984
    %v986 = vtanh.pop %v985
    %v987 = vsub.f32 1.0, %v869
    %v988 = vmul.f32 %v987, %v986
    %v989 = vmul.f32 %v869, 0.0
    %v990 = vadd.f32 %v988, %v989
    %v991 = vpack.c.bf16 %v990, %v990
    %v992 = vld [vmem:[#allocation13] sm:$0xf]
    %v993 = vld [vmem:[#allocation13 + $0x4] sm:$0xf]
    %v994 = vld [vmem:[#allocation13 + $0x8] sm:$0xf]
    %v995 = vld [vmem:[#allocation13 + $0xc] sm:$0xf]
    %v996 = vld [vmem:[#allocation14] sm:$0xf]
    %v997 = vld [vmem:[#allocation14 + $0x4] sm:$0xf]
    %v998 = vld [vmem:[#allocation14 + $0x8] sm:$0xf]
    %v999 = vld [vmem:[#allocation14 + $0xc] sm:$0xf]
    %v1004 = vunpack.c.l.b16 %v996
    %v1005 = vunpack.c.l.b16 %v997
    %v1006 = vunpack.c.l.b16 %v998
    %v1007 = vunpack.c.l.b16 %v999
    %v1008 = vpack.c.b16 %v1005, %v1004
    %v1009 = vpack.c.b16 %v1007, %v1006
    %1012 = vmatprep.subr.bf16.mxu0 0
    %1013 = vmatpush1.bf16.msra.mxu0 %v1008
    %1014 = vmatprep.subr.bf16.mxu0 0
    %1015 = vmatpush1.bf16.msra.mxu0 %v1009
    %1016 = vmatprep.subr.bf16.mxu0 0
    %1017 = vmatpush1.bf16.msra.mxu0 0
    %1018 = vmatprep.subr.bf16.mxu0 0
    %1019 = vmatpush1.bf16.msra.mxu0 0
    %1020 = vmatprep.subr.bf16.mxu0 0
    %1021 = vmatpush1.bf16.msra.mxu0 0
    %1022 = vmatprep.subr.bf16.mxu0 0
    %1023 = vmatpush1.bf16.msra.mxu0 0
    %1024 = vmatprep.subr.bf16.mxu0 0
    %1025 = vmatpush1.bf16.msra.mxu0 0
    %1026 = vmatprep.subr.bf16.mxu0 0
    %1027 = vmatpush1.bf16.msra.mxu0 0
    %1028 = vmatprep.subr.bf16.mxu0 0
    %1029 = vmatpush1.bf16.msra.mxu0 0
    %1030 = vmatprep.subr.bf16.mxu0 0
    %1031 = vmatpush1.bf16.msra.mxu0 0
    %1032 = vmatprep.subr.bf16.mxu0 0
    %1033 = vmatpush1.bf16.msra.mxu0 0
    %1034 = vmatprep.subr.bf16.mxu0 0
    %1035 = vmatpush1.bf16.msra.mxu0 0
    %1036 = vmatprep.subr.bf16.mxu0 0
    %1037 = vmatpush1.bf16.msra.mxu0 0
    %1038 = vmatprep.subr.bf16.mxu0 0
    %1039 = vmatpush1.bf16.msra.mxu0 0
    %1040 = vmatprep.subr.bf16.mxu0 0
    %1041 = vmatpush1.bf16.msra.mxu0 0
    %1042 = vmatprep.subr.bf16.mxu0 0
    %1043 = vmatpush1.bf16.msra.mxu0 0
    %1044 = vmatprep.mubr.bf16.mxu0 0
    %1045 = vmatmul.mubr.bf16.gmra.mrb[0].mxu0 %v280
    %v1046 = vpop.f32.mrb[0].mxu0
    %v1047 = vadd.f32 0.0, %v1046
    %v1048 = vpop.f32.mrb[0].mxu0
    %v1049 = vpop.f32.mrb[0].mxu0
    %v1050 = vpop.f32.mrb[0].mxu0
    %1051 = vdwg.mxu0
    %v1056 = vunpack.c.l.b16 %v992
    %v1057 = vunpack.c.l.b16 %v993
    %v1058 = vunpack.c.l.b16 %v994
    %v1059 = vunpack.c.l.b16 %v995
    %v1060 = vpack.c.b16 %v1057, %v1056
    %v1061 = vpack.c.b16 %v1059, %v1058
    %v1065 = vsel %vm278, %v991, 0
    %1067 = vmatprep.subr.bf16.mxu0 0
    %1068 = vmatpush1.bf16.msra.mxu0 %v1060
    %1069 = vmatprep.subr.bf16.mxu0 0
    %1070 = vmatpush1.bf16.msra.mxu0 %v1061
    %1071 = vmatprep.subr.bf16.mxu0 0
    %1072 = vmatpush1.bf16.msra.mxu0 0
    %1073 = vmatprep.subr.bf16.mxu0 0
    %1074 = vmatpush1.bf16.msra.mxu0 0
    %1075 = vmatprep.subr.bf16.mxu0 0
    %1076 = vmatpush1.bf16.msra.mxu0 0
    %1077 = vmatprep.subr.bf16.mxu0 0
    %1078 = vmatpush1.bf16.msra.mxu0 0
    %1079 = vmatprep.subr.bf16.mxu0 0
    %1080 = vmatpush1.bf16.msra.mxu0 0
    %1081 = vmatprep.subr.bf16.mxu0 0
    %1082 = vmatpush1.bf16.msra.mxu0 0
    %1083 = vmatprep.subr.bf16.mxu0 0
    %1084 = vmatpush1.bf16.msra.mxu0 0
    %1085 = vmatprep.subr.bf16.mxu0 0
    %1086 = vmatpush1.bf16.msra.mxu0 0
    %1087 = vmatprep.subr.bf16.mxu0 0
    %1088 = vmatpush1.bf16.msra.mxu0 0
    %1089 = vmatprep.subr.bf16.mxu0 0
    %1090 = vmatpush1.bf16.msra.mxu0 0
    %1091 = vmatprep.subr.bf16.mxu0 0
    %1092 = vmatpush1.bf16.msra.mxu0 0
    %1093 = vmatprep.subr.bf16.mxu0 0
    %1094 = vmatpush1.bf16.msra.mxu0 0
    %1095 = vmatprep.subr.bf16.mxu0 0
    %1096 = vmatpush1.bf16.msra.mxu0 0
    %1097 = vmatprep.subr.bf16.mxu0 0
    %1098 = vmatpush1.bf16.msra.mxu0 0
    %1099 = vmatprep.mubr.bf16.mxu0 0
    %1100 = vmatmul.mubr.bf16.gmra.mrb[0].mxu0 %v1065
    %v1101 = vpop.f32.mrb[0].mxu0
    %v1102 = vadd.f32 %v1047, %v1101
    %v1103 = vpop.f32.mrb[0].mxu0
    %v1104 = vpop.f32.mrb[0].mxu0
    %v1105 = vpop.f32.mrb[0].mxu0
    %1106 = vdwg.mxu0
    %v1107 = vadd.f32 %v1102, %v232
    %v1108 = vxor.u32 %v1107, 2147483648
    %v1109 = vmul.f32 %v1108, 1.442695
    %v1110 = vpow.pop %v1109
    %v1111 = vadd.f32 %v1110, 1.0
    %v1112 = vrcp.pop %v1111
    %v1113 = vmul.f32 1.0, %v1112
    %s1114 = scalar_lea.vmem [#allocation13], 16
    %v1115 = vld [vmem:[%s1114] sm:$0xf]
    %v1116 = vld [vmem:[%s1114 + $0x4] sm:$0xf]
    %v1117 = vld [vmem:[%s1114 + $0x8] sm:$0xf]
    %v1118 = vld [vmem:[%s1114 + $0xc] sm:$0xf]
    %s1119 = scalar_lea.vmem [#allocation14], 16
    %v1120 = vld [vmem:[%s1119] sm:$0xf]
    %v1121 = vld [vmem:[%s1119 + $0x4] sm:$0xf]
    %v1122 = vld [vmem:[%s1119 + $0x8] sm:$0xf]
    %v1123 = vld [vmem:[%s1119 + $0xc] sm:$0xf]
    %v1128 = vunpack.c.l.b16 %v1120
    %v1129 = vunpack.c.l.b16 %v1121
    %v1130 = vunpack.c.l.b16 %v1122
    %v1131 = vunpack.c.l.b16 %v1123
    %v1132 = vpack.c.b16 %v1129, %v1128
    %v1133 = vpack.c.b16 %v1131, %v1130
    %1136 = vmatprep.subr.bf16.mxu0 0
    %1137 = vmatpush1.bf16.msra.mxu0 %v1132
    %1138 = vmatprep.subr.bf16.mxu0 0
    %1139 = vmatpush1.bf16.msra.mxu0 %v1133
    %1140 = vmatprep.subr.bf16.mxu0 0
    %1141 = vmatpush1.bf16.msra.mxu0 0
    %1142 = vmatprep.subr.bf16.mxu0 0
    %1143 = vmatpush1.bf16.msra.mxu0 0
    %1144 = vmatprep.subr.bf16.mxu0 0
    %1145 = vmatpush1.bf16.msra.mxu0 0
    %1146 = vmatprep.subr.bf16.mxu0 0
    %1147 = vmatpush1.bf16.msra.mxu0 0
    %1148 = vmatprep.subr.bf16.mxu0 0
    %1149 = vmatpush1.bf16.msra.mxu0 0
    %1150 = vmatprep.subr.bf16.mxu0 0
    %1151 = vmatpush1.bf16.msra.mxu0 0
    %1152 = vmatprep.subr.bf16.mxu0 0
    %1153 = vmatpush1.bf16.msra.mxu0 0
    %1154 = vmatprep.subr.bf16.mxu0 0
    %1155 = vmatpush1.bf16.msra.mxu0 0
    %1156 = vmatprep.subr.bf16.mxu0 0
    %1157 = vmatpush1.bf16.msra.mxu0 0
    %1158 = vmatprep.subr.bf16.mxu0 0
    %1159 = vmatpush1.bf16.msra.mxu0 0
    %1160 = vmatprep.subr.bf16.mxu0 0
    %1161 = vmatpush1.bf16.msra.mxu0 0
    %1162 = vmatprep.subr.bf16.mxu0 0
    %1163 = vmatpush1.bf16.msra.mxu0 0
    %1164 = vmatprep.subr.bf16.mxu0 0
    %1165 = vmatpush1.bf16.msra.mxu0 0
    %1166 = vmatprep.subr.bf16.mxu0 0
    %1167 = vmatpush1.bf16.msra.mxu0 0
    %1168 = vmatprep.mubr.bf16.mxu0 0
    %1169 = vmatmul.mubr.bf16.gmra.mrb[0].mxu0 %v280
    %v1170 = vpop.f32.mrb[0].mxu0
    %v1171 = vadd.f32 0.0, %v1170
    %v1172 = vpop.f32.mrb[0].mxu0
    %v1173 = vpop.f32.mrb[0].mxu0
    %v1174 = vpop.f32.mrb[0].mxu0
    %1175 = vdwg.mxu0
    %v1180 = vunpack.c.l.b16 %v1115
    %v1181 = vunpack.c.l.b16 %v1116
    %v1182 = vunpack.c.l.b16 %v1117
    %v1183 = vunpack.c.l.b16 %v1118
    %v1184 = vpack.c.b16 %v1181, %v1180
    %v1185 = vpack.c.b16 %v1183, %v1182
    %1188 = vmatprep.subr.bf16.mxu0 0
    %1189 = vmatpush1.bf16.msra.mxu0 %v1184
    %1190 = vmatprep.subr.bf16.mxu0 0
    %1191 = vmatpush1.bf16.msra.mxu0 %v1185
    %1192 = vmatprep.subr.bf16.mxu0 0
    %1193 = vmatpush1.bf16.msra.mxu0 0
    %1194 = vmatprep.subr.bf16.mxu0 0
    %1195 = vmatpush1.bf16.msra.mxu0 0
    %1196 = vmatprep.subr.bf16.mxu0 0
    %1197 = vmatpush1.bf16.msra.mxu0 0
    %1198 = vmatprep.subr.bf16.mxu0 0
    %1199 = vmatpush1.bf16.msra.mxu0 0
    %1200 = vmatprep.subr.bf16.mxu0 0
    %1201 = vmatpush1.bf16.msra.mxu0 0
    %1202 = vmatprep.subr.bf16.mxu0 0
    %1203 = vmatpush1.bf16.msra.mxu0 0
    %1204 = vmatprep.subr.bf16.mxu0 0
    %1205 = vmatpush1.bf16.msra.mxu0 0
    %1206 = vmatprep.subr.bf16.mxu0 0
    %1207 = vmatpush1.bf16.msra.mxu0 0
    %1208 = vmatprep.subr.bf16.mxu0 0
    %1209 = vmatpush1.bf16.msra.mxu0 0
    %1210 = vmatprep.subr.bf16.mxu0 0
    %1211 = vmatpush1.bf16.msra.mxu0 0
    %1212 = vmatprep.subr.bf16.mxu0 0
    %1213 = vmatpush1.bf16.msra.mxu0 0
    %1214 = vmatprep.subr.bf16.mxu0 0
    %1215 = vmatpush1.bf16.msra.mxu0 0
    %1216 = vmatprep.subr.bf16.mxu0 0
    %1217 = vmatpush1.bf16.msra.mxu0 0
    %1218 = vmatprep.subr.bf16.mxu0 0
    %1219 = vmatpush1.bf16.msra.mxu0 0
    %1220 = vmatprep.mubr.bf16.mxu0 0
    %1221 = vmatmul.mubr.bf16.gmra.mrb[0].mxu0 %v1065
    %v1222 = vpop.f32.mrb[0].mxu0
    %v1223 = vadd.f32 %v1171, %v1222
    %v1224 = vpop.f32.mrb[0].mxu0
    %v1225 = vpop.f32.mrb[0].mxu0
    %v1226 = vpop.f32.mrb[0].mxu0
    %1227 = vdwg.mxu0
    %v1228 = vadd.f32 %v1223, %v240
    %v1229 = vxor.u32 %v1228, 2147483648
    %v1230 = vmul.f32 %v1229, 1.442695
    %v1231 = vpow.pop %v1230
    %v1232 = vadd.f32 %v1231, 1.0
    %v1233 = vrcp.pop %v1232
    %v1234 = vmul.f32 1.0, %v1233
    %s1235 = scalar_lea.vmem [#allocation13], 32
    %v1236 = vld [vmem:[%s1235] sm:$0xf]
    %v1237 = vld [vmem:[%s1235 + $0x4] sm:$0xf]
    %v1238 = vld [vmem:[%s1235 + $0x8] sm:$0xf]
    %v1239 = vld [vmem:[%s1235 + $0xc] sm:$0xf]
    %v1244 = vunpack.c.l.b16 %v1236
    %v1245 = vunpack.c.l.b16 %v1237
    %v1246 = vunpack.c.l.b16 %v1238
    %v1247 = vunpack.c.l.b16 %v1239
    %v1248 = vpack.c.b16 %v1245, %v1244
    %v1249 = vpack.c.b16 %v1247, %v1246
    %1252 = vmatprep.subr.bf16.mxu0 0
    %1253 = vmatpush1.bf16.msra.mxu0 %v1248
    %1254 = vmatprep.subr.bf16.mxu0 0
    %1255 = vmatpush1.bf16.msra.mxu0 %v1249
    %1256 = vmatprep.subr.bf16.mxu0 0
    %1257 = vmatpush1.bf16.msra.mxu0 0
    %1258 = vmatprep.subr.bf16.mxu0 0
    %1259 = vmatpush1.bf16.msra.mxu0 0
    %1260 = vmatprep.subr.bf16.mxu0 0
    %1261 = vmatpush1.bf16.msra.mxu0 0
    %1262 = vmatprep.subr.bf16.mxu0 0
    %1263 = vmatpush1.bf16.msra.mxu0 0
    %1264 = vmatprep.subr.bf16.mxu0 0
    %1265 = vmatpush1.bf16.msra.mxu0 0
    %1266 = vmatprep.subr.bf16.mxu0 0
    %1267 = vmatpush1.bf16.msra.mxu0 0
    %1268 = vmatprep.subr.bf16.mxu0 0
    %1269 = vmatpush1.bf16.msra.mxu0 0
    %1270 = vmatprep.subr.bf16.mxu0 0
    %1271 = vmatpush1.bf16.msra.mxu0 0
    %1272 = vmatprep.subr.bf16.mxu0 0
    %1273 = vmatpush1.bf16.msra.mxu0 0
    %1274 = vmatprep.subr.bf16.mxu0 0
    %1275 = vmatpush1.bf16.msra.mxu0 0
    %1276 = vmatprep.subr.bf16.mxu0 0
    %1277 = vmatpush1.bf16.msra.mxu0 0
    %1278 = vmatprep.subr.bf16.mxu0 0
    %1279 = vmatpush1.bf16.msra.mxu0 0
    %1280 = vmatprep.subr.bf16.mxu0 0
    %1281 = vmatpush1.bf16.msra.mxu0 0
    %1282 = vmatprep.subr.bf16.mxu0 0
    %1283 = vmatpush1.bf16.msra.mxu0 0
    %1284 = vmatprep.mubr.bf16.mxu0 0
    %1285 = vmatmul.mubr.bf16.gmra.mrb[0].mxu0 %v1065
    %v1286 = vpop.f32.mrb[0].mxu0
    %v1287 = vadd.f32 %v248, %v1286
    %v1288 = vpop.f32.mrb[0].mxu0
    %v1289 = vpop.f32.mrb[0].mxu0
    %v1290 = vpop.f32.mrb[0].mxu0
    %1291 = vdwg.mxu0
    %s1292 = scalar_lea.vmem [#allocation14], 32
    %v1293 = vld [vmem:[%s1292] sm:$0xf]
    %v1294 = vld [vmem:[%s1292 + $0x4] sm:$0xf]
    %v1295 = vld [vmem:[%s1292 + $0x8] sm:$0xf]
    %v1296 = vld [vmem:[%s1292 + $0xc] sm:$0xf]
    %v1301 = vunpack.c.l.b16 %v1293
    %v1302 = vunpack.c.l.b16 %v1294
    %v1303 = vunpack.c.l.b16 %v1295
    %v1304 = vunpack.c.l.b16 %v1296
    %v1305 = vpack.c.b16 %v1302, %v1301
    %v1306 = vpack.c.b16 %v1304, %v1303
    %1309 = vmatprep.subr.bf16.mxu0 0
    %1310 = vmatpush1.bf16.msra.mxu0 %v1305
    %1311 = vmatprep.subr.bf16.mxu0 0
    %1312 = vmatpush1.bf16.msra.mxu0 %v1306
    %1313 = vmatprep.subr.bf16.mxu0 0
    %1314 = vmatpush1.bf16.msra.mxu0 0
    %1315 = vmatprep.subr.bf16.mxu0 0
    %1316 = vmatpush1.bf16.msra.mxu0 0
    %1317 = vmatprep.subr.bf16.mxu0 0
    %1318 = vmatpush1.bf16.msra.mxu0 0
    %1319 = vmatprep.subr.bf16.mxu0 0
    %1320 = vmatpush1.bf16.msra.mxu0 0
    %1321 = vmatprep.subr.bf16.mxu0 0
    %1322 = vmatpush1.bf16.msra.mxu0 0
    %1323 = vmatprep.subr.bf16.mxu0 0
    %1324 = vmatpush1.bf16.msra.mxu0 0
    %1325 = vmatprep.subr.bf16.mxu0 0
    %1326 = vmatpush1.bf16.msra.mxu0 0
    %1327 = vmatprep.subr.bf16.mxu0 0
    %1328 = vmatpush1.bf16.msra.mxu0 0
    %1329 = vmatprep.subr.bf16.mxu0 0
    %1330 = vmatpush1.bf16.msra.mxu0 0
    %1331 = vmatprep.subr.bf16.mxu0 0
    %1332 = vmatpush1.bf16.msra.mxu0 0
    %1333 = vmatprep.subr.bf16.mxu0 0
    %1334 = vmatpush1.bf16.msra.mxu0 0
    %1335 = vmatprep.subr.bf16.mxu0 0
    %1336 = vmatpush1.bf16.msra.mxu0 0
    %1337 = vmatprep.subr.bf16.mxu0 0
    %1338 = vmatpush1.bf16.msra.mxu0 0
    %1339 = vmatprep.subr.bf16.mxu0 0
    %1340 = vmatpush1.bf16.msra.mxu0 0
    %1341 = vmatprep.mubr.bf16.mxu0 0
    %1342 = vmatmul.mubr.bf16.gmra.mrb[0].mxu0 %v280
    %v1343 = vpop.f32.mrb[0].mxu0
    %v1344 = vadd.f32 %v256, %v1343
    %v1345 = vpop.f32.mrb[0].mxu0
    %v1346 = vpop.f32.mrb[0].mxu0
    %v1347 = vpop.f32.mrb[0].mxu0
    %1348 = vdwg.mxu0
    %v1349 = vmul.f32 %v1113, %v1344
    %v1350 = vadd.f32 %v1287, %v1349
    %v1351 = vtanh.pop %v1350
    %v1352 = vsub.f32 1.0, %v1234
    %v1353 = vmul.f32 %v1352, %v1351
    %v1354 = vmul.f32 %v1234, 0.0
    %v1355 = vadd.f32 %v1353, %v1354
    %s1356 = scalar_lea.vmem [#allocation2], 1
    %v1357 = vld [vmem:[%s1356] sm:$0x1]
    %1358 = vmatprep.subr.bf16.mxu0 0
    %1359 = vmatpush1.bf16.msra.mxu0 %v274
    %1360 = vmatprep.subr.bf16.mxu0 0
    %1361 = vmatpush1.bf16.msra.mxu0 %v275
    %1362 = vmatprep.subr.bf16.mxu0 0
    %1363 = vmatpush1.bf16.msra.mxu0 0
    %1364 = vmatprep.subr.bf16.mxu0 0
    %1365 = vmatpush1.bf16.msra.mxu0 0
    %1366 = vmatprep.subr.bf16.mxu0 0
    %1367 = vmatpush1.bf16.msra.mxu0 0
    %1368 = vmatprep.subr.bf16.mxu0 0
    %1369 = vmatpush1.bf16.msra.mxu0 0
    %1370 = vmatprep.subr.bf16.mxu0 0
    %1371 = vmatpush1.bf16.msra.mxu0 0
    %1372 = vmatprep.subr.bf16.mxu0 0
    %1373 = vmatpush1.bf16.msra.mxu0 0
    %1374 = vmatprep.subr.bf16.mxu0 0
    %1375 = vmatpush1.bf16.msra.mxu0 0
    %1376 = vmatprep.subr.bf16.mxu0 0
    %1377 = vmatpush1.bf16.msra.mxu0 0
    %1378 = vmatprep.subr.bf16.mxu0 0
    %1379 = vmatpush1.bf16.msra.mxu0 0
    %1380 = vmatprep.subr.bf16.mxu0 0
    %1381 = vmatpush1.bf16.msra.mxu0 0
    %1382 = vmatprep.subr.bf16.mxu0 0
    %1383 = vmatpush1.bf16.msra.mxu0 0
    %1384 = vmatprep.subr.bf16.mxu0 0
    %1385 = vmatpush1.bf16.msra.mxu0 0
    %1386 = vmatprep.subr.bf16.mxu0 0
    %1387 = vmatpush1.bf16.msra.mxu0 0
    %1388 = vmatprep.subr.bf16.mxu0 0
    %1389 = vmatpush1.bf16.msra.mxu0 0
    %1390 = vmatprep.mubr.bf16.mxu0 0
    %1391 = vmatmul.mubr.bf16.gmra.mrb[0].mxu0 %v700
    %v1392 = vpop.f32.mrb[0].mxu0
    %v1393 = vadd.f32 0.0, %v1392
    %v1394 = vpop.f32.mrb[0].mxu0
    %v1395 = vpop.f32.mrb[0].mxu0
    %v1396 = vpop.f32.mrb[0].mxu0
    %1397 = vdwg.mxu0
    %v1399 = vsel %vm331, %v1357, 0
    %1401 = vmatprep.subr.bf16.mxu0 0
    %1402 = vmatpush1.bf16.msra.mxu0 %v328
    %1403 = vmatprep.subr.bf16.mxu0 0
    %1404 = vmatpush1.bf16.msra.mxu0 %v337
    %1405 = vmatprep.subr.bf16.mxu0 0
    %1406 = vmatpush1.bf16.msra.mxu0 0
    %1407 = vmatprep.subr.bf16.mxu0 0
    %1408 = vmatpush1.bf16.msra.mxu0 0
    %1409 = vmatprep.subr.bf16.mxu0 0
    %1410 = vmatpush1.bf16.msra.mxu0 0
    %1411 = vmatprep.subr.bf16.mxu0 0
    %1412 = vmatpush1.bf16.msra.mxu0 0
    %1413 = vmatprep.subr.bf16.mxu0 0
    %1414 = vmatpush1.bf16.msra.mxu0 0
    %1415 = vmatprep.subr.bf16.mxu0 0
    %1416 = vmatpush1.bf16.msra.mxu0 0
    %1417 = vmatprep.subr.bf16.mxu0 0
    %1418 = vmatpush1.bf16.msra.mxu0 0
    %1419 = vmatprep.subr.bf16.mxu0 0
    %1420 = vmatpush1.bf16.msra.mxu0 0
    %1421 = vmatprep.subr.bf16.mxu0 0
    %1422 = vmatpush1.bf16.msra.mxu0 0
    %1423 = vmatprep.subr.bf16.mxu0 0
    %1424 = vmatpush1.bf16.msra.mxu0 0
    %1425 = vmatprep.subr.bf16.mxu0 0
    %1426 = vmatpush1.bf16.msra.mxu0 0
    %1427 = vmatprep.subr.bf16.mxu0 0
    %1428 = vmatpush1.bf16.msra.mxu0 0
    %1429 = vmatprep.subr.bf16.mxu0 0
    %1430 = vmatpush1.bf16.msra.mxu0 0
    %1431 = vmatprep.subr.bf16.mxu0 0
    %1432 = vmatpush1.bf16.msra.mxu0 0
    %1433 = vmatprep.mubr.bf16.mxu0 0
    %1434 = vmatmul.mubr.bf16.gmra.mrb[0].mxu0 %v1399
    %v1435 = vpop.f32.mrb[0].mxu0
    %v1436 = vadd.f32 %v1393, %v1435
    %v1437 = vpop.f32.mrb[0].mxu0
    %v1438 = vpop.f32.mrb[0].mxu0
    %v1439 = vpop.f32.mrb[0].mxu0
    %1440 = vdwg.mxu0
    %v1441 = vadd.f32 %v1436, %v170
    %v1442 = vxor.u32 %v1441, 2147483648
    %v1443 = vmul.f32 %v1442, 1.442695
    %v1444 = vpow.pop %v1443
    %v1445 = vadd.f32 %v1444, 1.0
    %v1446 = vrcp.pop %v1445
    %v1447 = vmul.f32 1.0, %v1446
    %1448 = vmatprep.subr.bf16.mxu0 0
    %1449 = vmatpush1.bf16.msra.mxu0 %v403
    %1450 = vmatprep.subr.bf16.mxu0 0
    %1451 = vmatpush1.bf16.msra.mxu0 %v404
    %1452 = vmatprep.subr.bf16.mxu0 0
    %1453 = vmatpush1.bf16.msra.mxu0 0
    %1454 = vmatprep.subr.bf16.mxu0 0
    %1455 = vmatpush1.bf16.msra.mxu0 0
    %1456 = vmatprep.subr.bf16.mxu0 0
    %1457 = vmatpush1.bf16.msra.mxu0 0
    %1458 = vmatprep.subr.bf16.mxu0 0
    %1459 = vmatpush1.bf16.msra.mxu0 0
    %1460 = vmatprep.subr.bf16.mxu0 0
    %1461 = vmatpush1.bf16.msra.mxu0 0
    %1462 = vmatprep.subr.bf16.mxu0 0
    %1463 = vmatpush1.bf16.msra.mxu0 0
    %1464 = vmatprep.subr.bf16.mxu0 0
    %1465 = vmatpush1.bf16.msra.mxu0 0
    %1466 = vmatprep.subr.bf16.mxu0 0
    %1467 = vmatpush1.bf16.msra.mxu0 0
    %1468 = vmatprep.subr.bf16.mxu0 0
    %1469 = vmatpush1.bf16.msra.mxu0 0
    %1470 = vmatprep.subr.bf16.mxu0 0
    %1471 = vmatpush1.bf16.msra.mxu0 0
    %1472 = vmatprep.subr.bf16.mxu0 0
    %1473 = vmatpush1.bf16.msra.mxu0 0
    %1474 = vmatprep.subr.bf16.mxu0 0
    %1475 = vmatpush1.bf16.msra.mxu0 0
    %1476 = vmatprep.subr.bf16.mxu0 0
    %1477 = vmatpush1.bf16.msra.mxu0 0
    %1478 = vmatprep.subr.bf16.mxu0 0
    %1479 = vmatpush1.bf16.msra.mxu0 0
    %1480 = vmatprep.mubr.bf16.mxu0 0
    %1481 = vmatmul.mubr.bf16.gmra.mrb[0].mxu0 %v700
    %v1482 = vpop.f32.mrb[0].mxu0
    %v1483 = vadd.f32 0.0, %v1482
    %v1484 = vpop.f32.mrb[0].mxu0
    %v1485 = vpop.f32.mrb[0].mxu0
    %v1486 = vpop.f32.mrb[0].mxu0
    %1487 = vdwg.mxu0
    %1488 = vmatprep.subr.bf16.mxu0 0
    %1489 = vmatpush1.bf16.msra.mxu0 %v453
    %1490 = vmatprep.subr.bf16.mxu0 0
    %1491 = vmatpush1.bf16.msra.mxu0 %v457
    %1492 = vmatprep.subr.bf16.mxu0 0
    %1493 = vmatpush1.bf16.msra.mxu0 0
    %1494 = vmatprep.subr.bf16.mxu0 0
    %1495 = vmatpush1.bf16.msra.mxu0 0
    %1496 = vmatprep.subr.bf16.mxu0 0
    %1497 = vmatpush1.bf16.msra.mxu0 0
    %1498 = vmatprep.subr.bf16.mxu0 0
    %1499 = vmatpush1.bf16.msra.mxu0 0
    %1500 = vmatprep.subr.bf16.mxu0 0
    %1501 = vmatpush1.bf16.msra.mxu0 0
    %1502 = vmatprep.subr.bf16.mxu0 0
    %1503 = vmatpush1.bf16.msra.mxu0 0
    %1504 = vmatprep.subr.bf16.mxu0 0
    %1505 = vmatpush1.bf16.msra.mxu0 0
    %1506 = vmatprep.subr.bf16.mxu0 0
    %1507 = vmatpush1.bf16.msra.mxu0 0
    %1508 = vmatprep.subr.bf16.mxu0 0
    %1509 = vmatpush1.bf16.msra.mxu0 0
    %1510 = vmatprep.subr.bf16.mxu0 0
    %1511 = vmatpush1.bf16.msra.mxu0 0
    %1512 = vmatprep.subr.bf16.mxu0 0
    %1513 = vmatpush1.bf16.msra.mxu0 0
    %1514 = vmatprep.subr.bf16.mxu0 0
    %1515 = vmatpush1.bf16.msra.mxu0 0
    %1516 = vmatprep.subr.bf16.mxu0 0
    %1517 = vmatpush1.bf16.msra.mxu0 0
    %1518 = vmatprep.subr.bf16.mxu0 0
    %1519 = vmatpush1.bf16.msra.mxu0 0
    %1520 = vmatprep.mubr.bf16.mxu0 0
    %1521 = vmatmul.mubr.bf16.gmra.mrb[0].mxu0 %v1399
    %v1522 = vpop.f32.mrb[0].mxu0
    %v1523 = vadd.f32 %v1483, %v1522
    %v1524 = vpop.f32.mrb[0].mxu0
    %v1525 = vpop.f32.mrb[0].mxu0
    %v1526 = vpop.f32.mrb[0].mxu0
    %1527 = vdwg.mxu0
    %v1528 = vadd.f32 %v1523, %v178
    %v1529 = vxor.u32 %v1528, 2147483648
    %v1530 = vmul.f32 %v1529, 1.442695
    %v1531 = vpow.pop %v1530
    %v1532 = vadd.f32 %v1531, 1.0
    %v1533 = vrcp.pop %v1532
    %v1534 = vmul.f32 1.0, %v1533
    %1535 = vmatprep.subr.bf16.mxu0 0
    %1536 = vmatpush1.bf16.msra.mxu0 %v516
    %1537 = vmatprep.subr.bf16.mxu0 0
    %1538 = vmatpush1.bf16.msra.mxu0 %v520
    %1539 = vmatprep.subr.bf16.mxu0 0
    %1540 = vmatpush1.bf16.msra.mxu0 0
    %1541 = vmatprep.subr.bf16.mxu0 0
    %1542 = vmatpush1.bf16.msra.mxu0 0
    %1543 = vmatprep.subr.bf16.mxu0 0
    %1544 = vmatpush1.bf16.msra.mxu0 0
    %1545 = vmatprep.subr.bf16.mxu0 0
    %1546 = vmatpush1.bf16.msra.mxu0 0
    %1547 = vmatprep.subr.bf16.mxu0 0
    %1548 = vmatpush1.bf16.msra.mxu0 0
    %1549 = vmatprep.subr.bf16.mxu0 0
    %1550 = vmatpush1.bf16.msra.mxu0 0
    %1551 = vmatprep.subr.bf16.mxu0 0
    %1552 = vmatpush1.bf16.msra.mxu0 0
    %1553 = vmatprep.subr.bf16.mxu0 0
    %1554 = vmatpush1.bf16.msra.mxu0 0
    %1555 = vmatprep.subr.bf16.mxu0 0
    %1556 = vmatpush1.bf16.msra.mxu0 0
    %1557 = vmatprep.subr.bf16.mxu0 0
    %1558 = vmatpush1.bf16.msra.mxu0 0
    %1559 = vmatprep.subr.bf16.mxu0 0
    %1560 = vmatpush1.bf16.msra.mxu0 0
    %1561 = vmatprep.subr.bf16.mxu0 0
    %1562 = vmatpush1.bf16.msra.mxu0 0
    %1563 = vmatprep.subr.bf16.mxu0 0
    %1564 = vmatpush1.bf16.msra.mxu0 0
    %1565 = vmatprep.subr.bf16.mxu0 0
    %1566 = vmatpush1.bf16.msra.mxu0 0
    %1567 = vmatprep.mubr.bf16.mxu0 0
    %1568 = vmatmul.mubr.bf16.gmra.mrb[0].mxu0 %v1399
    %v1569 = vpop.f32.mrb[0].mxu0
    %v1570 = vadd.f32 %v186, %v1569
    %v1571 = vpop.f32.mrb[0].mxu0
    %v1572 = vpop.f32.mrb[0].mxu0
    %v1573 = vpop.f32.mrb[0].mxu0
    %1574 = vdwg.mxu0
    %1575 = vmatprep.subr.bf16.mxu0 0
    %1576 = vmatpush1.bf16.msra.mxu0 %v575
    %1577 = vmatprep.subr.bf16.mxu0 0
    %1578 = vmatpush1.bf16.msra.mxu0 %v576
    %1579 = vmatprep.subr.bf16.mxu0 0
    %1580 = vmatpush1.bf16.msra.mxu0 0
    %1581 = vmatprep.subr.bf16.mxu0 0
    %1582 = vmatpush1.bf16.msra.mxu0 0
    %1583 = vmatprep.subr.bf16.mxu0 0
    %1584 = vmatpush1.bf16.msra.mxu0 0
    %1585 = vmatprep.subr.bf16.mxu0 0
    %1586 = vmatpush1.bf16.msra.mxu0 0
    %1587 = vmatprep.subr.bf16.mxu0 0
    %1588 = vmatpush1.bf16.msra.mxu0 0
    %1589 = vmatprep.subr.bf16.mxu0 0
    %1590 = vmatpush1.bf16.msra.mxu0 0
    %1591 = vmatprep.subr.bf16.mxu0 0
    %1592 = vmatpush1.bf16.msra.mxu0 0
    %1593 = vmatprep.subr.bf16.mxu0 0
    %1594 = vmatpush1.bf16.msra.mxu0 0
    %1595 = vmatprep.subr.bf16.mxu0 0
    %1596 = vmatpush1.bf16.msra.mxu0 0
    %1597 = vmatprep.subr.bf16.mxu0 0
    %1598 = vmatpush1.bf16.msra.mxu0 0
    %1599 = vmatprep.subr.bf16.mxu0 0
    %1600 = vmatpush1.bf16.msra.mxu0 0
    %1601 = vmatprep.subr.bf16.mxu0 0
    %1602 = vmatpush1.bf16.msra.mxu0 0
    %1603 = vmatprep.subr.bf16.mxu0 0
    %1604 = vmatpush1.bf16.msra.mxu0 0
    %1605 = vmatprep.subr.bf16.mxu0 0
    %1606 = vmatpush1.bf16.msra.mxu0 0
    %1607 = vmatprep.mubr.bf16.mxu0 0
    %1608 = vmatmul.mubr.bf16.gmra.mrb[0].mxu0 %v700
    %v1609 = vpop.f32.mrb[0].mxu0
    %v1610 = vadd.f32 %v194, %v1609
    %v1611 = vpop.f32.mrb[0].mxu0
    %v1612 = vpop.f32.mrb[0].mxu0
    %v1613 = vpop.f32.mrb[0].mxu0
    %1614 = vdwg.mxu0
    %v1615 = vmul.f32 %v1447, %v1610
    %v1616 = vadd.f32 %v1570, %v1615
    %v1617 = vtanh.pop %v1616
    %v1618 = vsub.f32 1.0, %v1534
    %v1619 = vmul.f32 %v1618, %v1617
    %v1620 = vmul.f32 %v1534, %v625
    %v1621 = vadd.f32 %v1619, %v1620
    %v1622 = vpack.c.bf16 %v1621, %v1621
    %1623 = vmatprep.subr.bf16.mxu0 0
    %1624 = vmatpush1.bf16.msra.mxu0 %v643
    %1625 = vmatprep.subr.bf16.mxu0 0
    %1626 = vmatpush1.bf16.msra.mxu0 %v644
    %1627 = vmatprep.subr.bf16.mxu0 0
    %1628 = vmatpush1.bf16.msra.mxu0 0
    %1629 = vmatprep.subr.bf16.mxu0 0
    %1630 = vmatpush1.bf16.msra.mxu0 0
    %1631 = vmatprep.subr.bf16.mxu0 0
    %1632 = vmatpush1.bf16.msra.mxu0 0
    %1633 = vmatprep.subr.bf16.mxu0 0
    %1634 = vmatpush1.bf16.msra.mxu0 0
    %1635 = vmatprep.subr.bf16.mxu0 0
    %1636 = vmatpush1.bf16.msra.mxu0 0
    %1637 = vmatprep.subr.bf16.mxu0 0
    %1638 = vmatpush1.bf16.msra.mxu0 0
    %1639 = vmatprep.subr.bf16.mxu0 0
    %1640 = vmatpush1.bf16.msra.mxu0 0
    %1641 = vmatprep.subr.bf16.mxu0 0
    %1642 = vmatpush1.bf16.msra.mxu0 0
    %1643 = vmatprep.subr.bf16.mxu0 0
    %1644 = vmatpush1.bf16.msra.mxu0 0
    %1645 = vmatprep.subr.bf16.mxu0 0
    %1646 = vmatpush1.bf16.msra.mxu0 0
    %1647 = vmatprep.subr.bf16.mxu0 0
    %1648 = vmatpush1.bf16.msra.mxu0 0
    %1649 = vmatprep.subr.bf16.mxu0 0
    %1650 = vmatpush1.bf16.msra.mxu0 0
    %1651 = vmatprep.subr.bf16.mxu0 0
    %1652 = vmatpush1.bf16.msra.mxu0 0
    %1653 = vmatprep.subr.bf16.mxu0 0
    %1654 = vmatpush1.bf16.msra.mxu0 0
    %1655 = vmatprep.mubr.bf16.mxu0 0
    %1656 = vmatmul.mubr.bf16.gmra.mrb[0].mxu0 %v1065
    %v1657 = vpop.f32.mrb[0].mxu0
    %v1658 = vadd.f32 0.0, %v1657
    %v1659 = vpop.f32.mrb[0].mxu0
    %v1660 = vpop.f32.mrb[0].mxu0
    %v1661 = vpop.f32.mrb[0].mxu0
    %1662 = vdwg.mxu0
    %v1664 = vsel %vm278, %v1622, 0
    %1666 = vmatprep.subr.bf16.mxu0 0
    %1667 = vmatpush1.bf16.msra.mxu0 %v695
    %1668 = vmatprep.subr.bf16.mxu0 0
    %1669 = vmatpush1.bf16.msra.mxu0 %v696
    %1670 = vmatprep.subr.bf16.mxu0 0
    %1671 = vmatpush1.bf16.msra.mxu0 0
    %1672 = vmatprep.subr.bf16.mxu0 0
    %1673 = vmatpush1.bf16.msra.mxu0 0
    %1674 = vmatprep.subr.bf16.mxu0 0
    %1675 = vmatpush1.bf16.msra.mxu0 0
    %1676 = vmatprep.subr.bf16.mxu0 0
    %1677 = vmatpush1.bf16.msra.mxu0 0
    %1678 = vmatprep.subr.bf16.mxu0 0
    %1679 = vmatpush1.bf16.msra.mxu0 0
    %1680 = vmatprep.subr.bf16.mxu0 0
    %1681 = vmatpush1.bf16.msra.mxu0 0
    %1682 = vmatprep.subr.bf16.mxu0 0
    %1683 = vmatpush1.bf16.msra.mxu0 0
    %1684 = vmatprep.subr.bf16.mxu0 0
    %1685 = vmatpush1.bf16.msra.mxu0 0
    %1686 = vmatprep.subr.bf16.mxu0 0
    %1687 = vmatpush1.bf16.msra.mxu0 0
    %1688 = vmatprep.subr.bf16.mxu0 0
    %1689 = vmatpush1.bf16.msra.mxu0 0
    %1690 = vmatprep.subr.bf16.mxu0 0
    %1691 = vmatpush1.bf16.msra.mxu0 0
    %1692 = vmatprep.subr.bf16.mxu0 0
    %1693 = vmatpush1.bf16.msra.mxu0 0
    %1694 = vmatprep.subr.bf16.mxu0 0
    %1695 = vmatpush1.bf16.msra.mxu0 0
    %1696 = vmatprep.subr.bf16.mxu0 0
    %1697 = vmatpush1.bf16.msra.mxu0 0
    %1698 = vmatprep.mubr.bf16.mxu0 0
    %1699 = vmatmul.mubr.bf16.gmra.mrb[0].mxu0 %v1664
    %v1700 = vpop.f32.mrb[0].mxu0
    %v1701 = vadd.f32 %v1658, %v1700
    %v1702 = vpop.f32.mrb[0].mxu0
    %v1703 = vpop.f32.mrb[0].mxu0
    %v1704 = vpop.f32.mrb[0].mxu0
    %1705 = vdwg.mxu0
    %v1706 = vadd.f32 %v1701, %v201
    %v1707 = vxor.u32 %v1706, 2147483648
    %v1708 = vmul.f32 %v1707, 1.442695
    %v1709 = vpow.pop %v1708
    %v1710 = vadd.f32 %v1709, 1.0
    %v1711 = vrcp.pop %v1710
    %v1712 = vmul.f32 1.0, %v1711
    %1713 = vmatprep.subr.bf16.mxu0 0
    %1714 = vmatpush1.bf16.msra.mxu0 %v767
    %1715 = vmatprep.subr.bf16.mxu0 0
    %1716 = vmatpush1.bf16.msra.mxu0 %v768
    %1717 = vmatprep.subr.bf16.mxu0 0
    %1718 = vmatpush1.bf16.msra.mxu0 0
    %1719 = vmatprep.subr.bf16.mxu0 0
    %1720 = vmatpush1.bf16.msra.mxu0 0
    %1721 = vmatprep.subr.bf16.mxu0 0
    %1722 = vmatpush1.bf16.msra.mxu0 0
    %1723 = vmatprep.subr.bf16.mxu0 0
    %1724 = vmatpush1.bf16.msra.mxu0 0
    %1725 = vmatprep.subr.bf16.mxu0 0
    %1726 = vmatpush1.bf16.msra.mxu0 0
    %1727 = vmatprep.subr.bf16.mxu0 0
    %1728 = vmatpush1.bf16.msra.mxu0 0
    %1729 = vmatprep.subr.bf16.mxu0 0
    %1730 = vmatpush1.bf16.msra.mxu0 0
    %1731 = vmatprep.subr.bf16.mxu0 0
    %1732 = vmatpush1.bf16.msra.mxu0 0
    %1733 = vmatprep.subr.bf16.mxu0 0
    %1734 = vmatpush1.bf16.msra.mxu0 0
    %1735 = vmatprep.subr.bf16.mxu0 0
    %1736 = vmatpush1.bf16.msra.mxu0 0
    %1737 = vmatprep.subr.bf16.mxu0 0
    %1738 = vmatpush1.bf16.msra.mxu0 0
    %1739 = vmatprep.subr.bf16.mxu0 0
    %1740 = vmatpush1.bf16.msra.mxu0 0
    %1741 = vmatprep.subr.bf16.mxu0 0
    %1742 = vmatpush1.bf16.msra.mxu0 0
    %1743 = vmatprep.subr.bf16.mxu0 0
    %1744 = vmatpush1.bf16.msra.mxu0 0
    %1745 = vmatprep.mubr.bf16.mxu0 0
    %1746 = vmatmul.mubr.bf16.gmra.mrb[0].mxu0 %v1065
    %v1747 = vpop.f32.mrb[0].mxu0
    %v1748 = vadd.f32 0.0, %v1747
    %v1749 = vpop.f32.mrb[0].mxu0
    %v1750 = vpop.f32.mrb[0].mxu0
    %v1751 = vpop.f32.mrb[0].mxu0
    %1752 = vdwg.mxu0
    %1753 = vmatprep.subr.bf16.mxu0 0
    %1754 = vmatpush1.bf16.msra.mxu0 %v819
    %1755 = vmatprep.subr.bf16.mxu0 0
    %1756 = vmatpush1.bf16.msra.mxu0 %v820
    %1757 = vmatprep.subr.bf16.mxu0 0
    %1758 = vmatpush1.bf16.msra.mxu0 0
    %1759 = vmatprep.subr.bf16.mxu0 0
    %1760 = vmatpush1.bf16.msra.mxu0 0
    %1761 = vmatprep.subr.bf16.mxu0 0
    %1762 = vmatpush1.bf16.msra.mxu0 0
    %1763 = vmatprep.subr.bf16.mxu0 0
    %1764 = vmatpush1.bf16.msra.mxu0 0
    %1765 = vmatprep.subr.bf16.mxu0 0
    %1766 = vmatpush1.bf16.msra.mxu0 0
    %1767 = vmatprep.subr.bf16.mxu0 0
    %1768 = vmatpush1.bf16.msra.mxu0 0
    %1769 = vmatprep.subr.bf16.mxu0 0
    %1770 = vmatpush1.bf16.msra.mxu0 0
    %1771 = vmatprep.subr.bf16.mxu0 0
    %1772 = vmatpush1.bf16.msra.mxu0 0
    %1773 = vmatprep.subr.bf16.mxu0 0
    %1774 = vmatpush1.bf16.msra.mxu0 0
    %1775 = vmatprep.subr.bf16.mxu0 0
    %1776 = vmatpush1.bf16.msra.mxu0 0
    %1777 = vmatprep.subr.bf16.mxu0 0
    %1778 = vmatpush1.bf16.msra.mxu0 0
    %1779 = vmatprep.subr.bf16.mxu0 0
    %1780 = vmatpush1.bf16.msra.mxu0 0
    %1781 = vmatprep.subr.bf16.mxu0 0
    %1782 = vmatpush1.bf16.msra.mxu0 0
    %1783 = vmatprep.subr.bf16.mxu0 0
    %1784 = vmatpush1.bf16.msra.mxu0 0
    %1785 = vmatprep.mubr.bf16.mxu0 0
    %1786 = vmatmul.mubr.bf16.gmra.mrb[0].mxu0 %v1664
    %v1787 = vpop.f32.mrb[0].mxu0
    %v1788 = vadd.f32 %v1748, %v1787
    %v1789 = vpop.f32.mrb[0].mxu0
    %v1790 = vpop.f32.mrb[0].mxu0
    %v1791 = vpop.f32.mrb[0].mxu0
    %1792 = vdwg.mxu0
    %v1793 = vadd.f32 %v1788, %v209
    %v1794 = vxor.u32 %v1793, 2147483648
    %v1795 = vmul.f32 %v1794, 1.442695
    %v1796 = vpow.pop %v1795
    %v1797 = vadd.f32 %v1796, 1.0
    %v1798 = vrcp.pop %v1797
    %v1799 = vmul.f32 1.0, %v1798
    %1800 = vmatprep.subr.bf16.mxu0 0
    %1801 = vmatpush1.bf16.msra.mxu0 %v883
    %1802 = vmatprep.subr.bf16.mxu0 0
    %1803 = vmatpush1.bf16.msra.mxu0 %v884
    %1804 = vmatprep.subr.bf16.mxu0 0
    %1805 = vmatpush1.bf16.msra.mxu0 0
    %1806 = vmatprep.subr.bf16.mxu0 0
    %1807 = vmatpush1.bf16.msra.mxu0 0
    %1808 = vmatprep.subr.bf16.mxu0 0
    %1809 = vmatpush1.bf16.msra.mxu0 0
    %1810 = vmatprep.subr.bf16.mxu0 0
    %1811 = vmatpush1.bf16.msra.mxu0 0
    %1812 = vmatprep.subr.bf16.mxu0 0
    %1813 = vmatpush1.bf16.msra.mxu0 0
    %1814 = vmatprep.subr.bf16.mxu0 0
    %1815 = vmatpush1.bf16.msra.mxu0 0
    %1816 = vmatprep.subr.bf16.mxu0 0
    %1817 = vmatpush1.bf16.msra.mxu0 0
    %1818 = vmatprep.subr.bf16.mxu0 0
    %1819 = vmatpush1.bf16.msra.mxu0 0
    %1820 = vmatprep.subr.bf16.mxu0 0
    %1821 = vmatpush1.bf16.msra.mxu0 0
    %1822 = vmatprep.subr.bf16.mxu0 0
    %1823 = vmatpush1.bf16.msra.mxu0 0
    %1824 = vmatprep.subr.bf16.mxu0 0
    %1825 = vmatpush1.bf16.msra.mxu0 0
    %1826 = vmatprep.subr.bf16.mxu0 0
    %1827 = vmatpush1.bf16.msra.mxu0 0
    %1828 = vmatprep.subr.bf16.mxu0 0
    %1829 = vmatpush1.bf16.msra.mxu0 0
    %1830 = vmatprep.subr.bf16.mxu0 0
    %1831 = vmatpush1.bf16.msra.mxu0 0
    %1832 = vmatprep.mubr.bf16.mxu0 0
    %1833 = vmatmul.mubr.bf16.gmra.mrb[0].mxu0 %v1664
    %v1834 = vpop.f32.mrb[0].mxu0
    %v1835 = vadd.f32 %v217, %v1834
    %v1836 = vpop.f32.mrb[0].mxu0
    %v1837 = vpop.f32.mrb[0].mxu0
    %v1838 = vpop.f32.mrb[0].mxu0
    %1839 = vdwg.mxu0
    %1840 = vmatprep.subr.bf16.mxu0 0
    %1841 = vmatpush1.bf16.msra.mxu0 %v940
    %1842 = vmatprep.subr.bf16.mxu0 0
    %1843 = vmatpush1.bf16.msra.mxu0 %v941
    %1844 = vmatprep.subr.bf16.mxu0 0
    %1845 = vmatpush1.bf16.msra.mxu0 0
    %1846 = vmatprep.subr.bf16.mxu0 0
    %1847 = vmatpush1.bf16.msra.mxu0 0
    %1848 = vmatprep.subr.bf16.mxu0 0
    %1849 = vmatpush1.bf16.msra.mxu0 0
    %1850 = vmatprep.subr.bf16.mxu0 0
    %1851 = vmatpush1.bf16.msra.mxu0 0
    %1852 = vmatprep.subr.bf16.mxu0 0
    %1853 = vmatpush1.bf16.msra.mxu0 0
    %1854 = vmatprep.subr.bf16.mxu0 0
    %1855 = vmatpush1.bf16.msra.mxu0 0
    %1856 = vmatprep.subr.bf16.mxu0 0
    %1857 = vmatpush1.bf16.msra.mxu0 0
    %1858 = vmatprep.subr.bf16.mxu0 0
    %1859 = vmatpush1.bf16.msra.mxu0 0
    %1860 = vmatprep.subr.bf16.mxu0 0
    %1861 = vmatpush1.bf16.msra.mxu0 0
    %1862 = vmatprep.subr.bf16.mxu0 0
    %1863 = vmatpush1.bf16.msra.mxu0 0
    %1864 = vmatprep.subr.bf16.mxu0 0
    %1865 = vmatpush1.bf16.msra.mxu0 0
    %1866 = vmatprep.subr.bf16.mxu0 0
    %1867 = vmatpush1.bf16.msra.mxu0 0
    %1868 = vmatprep.subr.bf16.mxu0 0
    %1869 = vmatpush1.bf16.msra.mxu0 0
    %1870 = vmatprep.subr.bf16.mxu0 0
    %1871 = vmatpush1.bf16.msra.mxu0 0
    %1872 = vmatprep.mubr.bf16.mxu0 0
    %1873 = vmatmul.mubr.bf16.gmra.mrb[0].mxu0 %v1065
    %v1874 = vpop.f32.mrb[0].mxu0
    %v1875 = vadd.f32 %v225, %v1874
    %v1876 = vpop.f32.mrb[0].mxu0
    %v1877 = vpop.f32.mrb[0].mxu0
    %v1878 = vpop.f32.mrb[0].mxu0
    %1879 = vdwg.mxu0
    %v1880 = vmul.f32 %v1712, %v1875
    %v1881 = vadd.f32 %v1835, %v1880
    %v1882 = vtanh.pop %v1881
    %v1883 = vsub.f32 1.0, %v1799
    %v1884 = vmul.f32 %v1883, %v1882
    %v1885 = vmul.f32 %v1799, %v990
    %v1886 = vadd.f32 %v1884, %v1885
    %v1887 = vpack.c.bf16 %v1886, %v1886
    %v1888 = vpack.c.bf16 %v1355, %v1355
    %v1890 = vsel %vm278, %v1888, 0
    %1892 = vmatprep.subr.bf16.mxu0 0
    %1893 = vmatpush1.bf16.msra.mxu0 %v1008
    %1894 = vmatprep.subr.bf16.mxu0 0
    %1895 = vmatpush1.bf16.msra.mxu0 %v1009
    %1896 = vmatprep.subr.bf16.mxu0 0
    %1897 = vmatpush1.bf16.msra.mxu0 0
    %1898 = vmatprep.subr.bf16.mxu0 0
    %1899 = vmatpush1.bf16.msra.mxu0 0
    %1900 = vmatprep.subr.bf16.mxu0 0
    %1901 = vmatpush1.bf16.msra.mxu0 0
    %1902 = vmatprep.subr.bf16.mxu0 0
    %1903 = vmatpush1.bf16.msra.mxu0 0
    %1904 = vmatprep.subr.bf16.mxu0 0
    %1905 = vmatpush1.bf16.msra.mxu0 0
    %1906 = vmatprep.subr.bf16.mxu0 0
    %1907 = vmatpush1.bf16.msra.mxu0 0
    %1908 = vmatprep.subr.bf16.mxu0 0
    %1909 = vmatpush1.bf16.msra.mxu0 0
    %1910 = vmatprep.subr.bf16.mxu0 0
    %1911 = vmatpush1.bf16.msra.mxu0 0
    %1912 = vmatprep.subr.bf16.mxu0 0
    %1913 = vmatpush1.bf16.msra.mxu0 0
    %1914 = vmatprep.subr.bf16.mxu0 0
    %1915 = vmatpush1.bf16.msra.mxu0 0
    %1916 = vmatprep.subr.bf16.mxu0 0
    %1917 = vmatpush1.bf16.msra.mxu0 0
    %1918 = vmatprep.subr.bf16.mxu0 0
    %1919 = vmatpush1.bf16.msra.mxu0 0
    %1920 = vmatprep.subr.bf16.mxu0 0
    %1921 = vmatpush1.bf16.msra.mxu0 0
    %1922 = vmatprep.subr.bf16.mxu0 0
    %1923 = vmatpush1.bf16.msra.mxu0 0
    %1924 = vmatprep.mubr.bf16.mxu0 0
    %1925 = vmatmul.mubr.bf16.gmra.mrb[0].mxu0 %v1890
    %v1926 = vpop.f32.mrb[0].mxu0
    %v1927 = vadd.f32 0.0, %v1926
    %v1928 = vpop.f32.mrb[0].mxu0
    %v1929 = vpop.f32.mrb[0].mxu0
    %v1930 = vpop.f32.mrb[0].mxu0
    %1931 = vdwg.mxu0
    %v1933 = vsel %vm278, %v1887, 0
    %1935 = vmatprep.subr.bf16.mxu0 0
    %1936 = vmatpush1.bf16.msra.mxu0 %v1060
    %1937 = vmatprep.subr.bf16.mxu0 0
    %1938 = vmatpush1.bf16.msra.mxu0 %v1061
    %1939 = vmatprep.subr.bf16.mxu0 0
    %1940 = vmatpush1.bf16.msra.mxu0 0
    %1941 = vmatprep.subr.bf16.mxu0 0
    %1942 = vmatpush1.bf16.msra.mxu0 0
    %1943 = vmatprep.subr.bf16.mxu0 0
    %1944 = vmatpush1.bf16.msra.mxu0 0
    %1945 = vmatprep.subr.bf16.mxu0 0
    %1946 = vmatpush1.bf16.msra.mxu0 0
    %1947 = vmatprep.subr.bf16.mxu0 0
    %1948 = vmatpush1.bf16.msra.mxu0 0
    %1949 = vmatprep.subr.bf16.mxu0 0
    %1950 = vmatpush1.bf16.msra.mxu0 0
    %1951 = vmatprep.subr.bf16.mxu0 0
    %1952 = vmatpush1.bf16.msra.mxu0 0
    %1953 = vmatprep.subr.bf16.mxu0 0
    %1954 = vmatpush1.bf16.msra.mxu0 0
    %1955 = vmatprep.subr.bf16.mxu0 0
    %1956 = vmatpush1.bf16.msra.mxu0 0
    %1957 = vmatprep.subr.bf16.mxu0 0
    %1958 = vmatpush1.bf16.msra.mxu0 0
    %1959 = vmatprep.subr.bf16.mxu0 0
    %1960 = vmatpush1.bf16.msra.mxu0 0
    %1961 = vmatprep.subr.bf16.mxu0 0
    %1962 = vmatpush1.bf16.msra.mxu0 0
    %1963 = vmatprep.subr.bf16.mxu0 0
    %1964 = vmatpush1.bf16.msra.mxu0 0
    %1965 = vmatprep.subr.bf16.mxu0 0
    %1966 = vmatpush1.bf16.msra.mxu0 0
    %1967 = vmatprep.mubr.bf16.mxu0 0
    %1968 = vmatmul.mubr.bf16.gmra.mrb[0].mxu0 %v1933
    %v1969 = vpop.f32.mrb[0].mxu0
    %v1970 = vadd.f32 %v1927, %v1969
    %v1971 = vpop.f32.mrb[0].mxu0
    %v1972 = vpop.f32.mrb[0].mxu0
    %v1973 = vpop.f32.mrb[0].mxu0
    %1974 = vdwg.mxu0
    %v1975 = vadd.f32 %v1970, %v232
    %v1976 = vxor.u32 %v1975, 2147483648
    %v1977 = vmul.f32 %v1976, 1.442695
    %v1978 = vpow.pop %v1977
    %v1979 = vadd.f32 %v1978, 1.0
    %v1980 = vrcp.pop %v1979
    %v1981 = vmul.f32 1.0, %v1980
    %1982 = vmatprep.subr.bf16.mxu0 0
    %1983 = vmatpush1.bf16.msra.mxu0 %v1132
    %1984 = vmatprep.subr.bf16.mxu0 0
    %1985 = vmatpush1.bf16.msra.mxu0 %v1133
    %1986 = vmatprep.subr.bf16.mxu0 0
    %1987 = vmatpush1.bf16.msra.mxu0 0
    %1988 = vmatprep.subr.bf16.mxu0 0
    %1989 = vmatpush1.bf16.msra.mxu0 0
    %1990 = vmatprep.subr.bf16.mxu0 0
    %1991 = vmatpush1.bf16.msra.mxu0 0
    %1992 = vmatprep.subr.bf16.mxu0 0
    %1993 = vmatpush1.bf16.msra.mxu0 0
    %1994 = vmatprep.subr.bf16.mxu0 0
    %1995 = vmatpush1.bf16.msra.mxu0 0
    %1996 = vmatprep.subr.bf16.mxu0 0
    %1997 = vmatpush1.bf16.msra.mxu0 0
    %1998 = vmatprep.subr.bf16.mxu0 0
    %1999 = vmatpush1.bf16.msra.mxu0 0
    %2000 = vmatprep.subr.bf16.mxu0 0
    %2001 = vmatpush1.bf16.msra.mxu0 0
    %2002 = vmatprep.subr.bf16.mxu0 0
    %2003 = vmatpush1.bf16.msra.mxu0 0
    %2004 = vmatprep.subr.bf16.mxu0 0
    %2005 = vmatpush1.bf16.msra.mxu0 0
    %2006 = vmatprep.subr.bf16.mxu0 0
    %2007 = vmatpush1.bf16.msra.mxu0 0
    %2008 = vmatprep.subr.bf16.mxu0 0
    %2009 = vmatpush1.bf16.msra.mxu0 0
    %2010 = vmatprep.subr.bf16.mxu0 0
    %2011 = vmatpush1.bf16.msra.mxu0 0
    %2012 = vmatprep.subr.bf16.mxu0 0
    %2013 = vmatpush1.bf16.msra.mxu0 0
    %2014 = vmatprep.mubr.bf16.mxu0 0
    %2015 = vmatmul.mubr.bf16.gmra.mrb[0].mxu0 %v1890
    %v2016 = vpop.f32.mrb[0].mxu0
    %v2017 = vadd.f32 0.0, %v2016
    %v2018 = vpop.f32.mrb[0].mxu0
    %v2019 = vpop.f32.mrb[0].mxu0
    %v2020 = vpop.f32.mrb[0].mxu0
    %2021 = vdwg.mxu0
    %2022 = vmatprep.subr.bf16.mxu0 0
    %2023 = vmatpush1.bf16.msra.mxu0 %v1184
    %2024 = vmatprep.subr.bf16.mxu0 0
    %2025 = vmatpush1.bf16.msra.mxu0 %v1185
    %2026 = vmatprep.subr.bf16.mxu0 0
    %2027 = vmatpush1.bf16.msra.mxu0 0
    %2028 = vmatprep.subr.bf16.mxu0 0
    %2029 = vmatpush1.bf16.msra.mxu0 0
    %2030 = vmatprep.subr.bf16.mxu0 0
    %2031 = vmatpush1.bf16.msra.mxu0 0
    %2032 = vmatprep.subr.bf16.mxu0 0
    %2033 = vmatpush1.bf16.msra.mxu0 0
    %2034 = vmatprep.subr.bf16.mxu0 0
    %2035 = vmatpush1.bf16.msra.mxu0 0
    %2036 = vmatprep.subr.bf16.mxu0 0
    %2037 = vmatpush1.bf16.msra.mxu0 0
    %2038 = vmatprep.subr.bf16.mxu0 0
    %2039 = vmatpush1.bf16.msra.mxu0 0
    %2040 = vmatprep.subr.bf16.mxu0 0
    %2041 = vmatpush1.bf16.msra.mxu0 0
    %2042 = vmatprep.subr.bf16.mxu0 0
    %2043 = vmatpush1.bf16.msra.mxu0 0
    %2044 = vmatprep.subr.bf16.mxu0 0
    %2045 = vmatpush1.bf16.msra.mxu0 0
    %2046 = vmatprep.subr.bf16.mxu0 0
    %2047 = vmatpush1.bf16.msra.mxu0 0
    %2048 = vmatprep.subr.bf16.mxu0 0
    %2049 = vmatpush1.bf16.msra.mxu0 0
    %2050 = vmatprep.subr.bf16.mxu0 0
    %2051 = vmatpush1.bf16.msra.mxu0 0
    %2052 = vmatprep.subr.bf16.mxu0 0
    %2053 = vmatpush1.bf16.msra.mxu0 0
    %2054 = vmatprep.mubr.bf16.mxu0 0
    %2055 = vmatmul.mubr.bf16.gmra.mrb[0].mxu0 %v1933
    %v2056 = vpop.f32.mrb[0].mxu0
    %v2057 = vadd.f32 %v2017, %v2056
    %v2058 = vpop.f32.mrb[0].mxu0
    %v2059 = vpop.f32.mrb[0].mxu0
    %v2060 = vpop.f32.mrb[0].mxu0
    %2061 = vdwg.mxu0
    %v2062 = vadd.f32 %v2057, %v240
    %v2063 = vxor.u32 %v2062, 2147483648
    %v2064 = vmul.f32 %v2063, 1.442695
    %v2065 = vpow.pop %v2064
    %v2066 = vadd.f32 %v2065, 1.0
    %v2067 = vrcp.pop %v2066
    %v2068 = vmul.f32 1.0, %v2067
    %2069 = vmatprep.subr.bf16.mxu0 0
    %2070 = vmatpush1.bf16.msra.mxu0 %v1248
    %2071 = vmatprep.subr.bf16.mxu0 0
    %2072 = vmatpush1.bf16.msra.mxu0 %v1249
    %2073 = vmatprep.subr.bf16.mxu0 0
    %2074 = vmatpush1.bf16.msra.mxu0 0
    %2075 = vmatprep.subr.bf16.mxu0 0
    %2076 = vmatpush1.bf16.msra.mxu0 0
    %2077 = vmatprep.subr.bf16.mxu0 0
    %2078 = vmatpush1.bf16.msra.mxu0 0
    %2079 = vmatprep.subr.bf16.mxu0 0
    %2080 = vmatpush1.bf16.msra.mxu0 0
    %2081 = vmatprep.subr.bf16.mxu0 0
    %2082 = vmatpush1.bf16.msra.mxu0 0
    %2083 = vmatprep.subr.bf16.mxu0 0
    %2084 = vmatpush1.bf16.msra.mxu0 0
    %2085 = vmatprep.subr.bf16.mxu0 0
    %2086 = vmatpush1.bf16.msra.mxu0 0
    %2087 = vmatprep.subr.bf16.mxu0 0
    %2088 = vmatpush1.bf16.msra.mxu0 0
    %2089 = vmatprep.subr.bf16.mxu0 0
    %2090 = vmatpush1.bf16.msra.mxu0 0
    %2091 = vmatprep.subr.bf16.mxu0 0
    %2092 = vmatpush1.bf16.msra.mxu0 0
    %2093 = vmatprep.subr.bf16.mxu0 0
    %2094 = vmatpush1.bf16.msra.mxu0 0
    %2095 = vmatprep.subr.bf16.mxu0 0
    %2096 = vmatpush1.bf16.msra.mxu0 0
    %2097 = vmatprep.subr.bf16.mxu0 0
    %2098 = vmatpush1.bf16.msra.mxu0 0
    %2099 = vmatprep.subr.bf16.mxu0 0
    %2100 = vmatpush1.bf16.msra.mxu0 0
    %2101 = vmatprep.mubr.bf16.mxu0 0
    %2102 = vmatmul.mubr.bf16.gmra.mrb[0].mxu0 %v1933
    %v2103 = vpop.f32.mrb[0].mxu0
    %v2104 = vadd.f32 %v248, %v2103
    %v2105 = vpop.f32.mrb[0].mxu0
    %v2106 = vpop.f32.mrb[0].mxu0
    %v2107 = vpop.f32.mrb[0].mxu0
    %2108 = vdwg.mxu0
    %2109 = vmatprep.subr.bf16.mxu0 0
    %2110 = vmatpush1.bf16.msra.mxu0 %v1305
    %2111 = vmatprep.subr.bf16.mxu0 0
    %2112 = vmatpush1.bf16.msra.mxu0 %v1306
    %2113 = vmatprep.subr.bf16.mxu0 0
    %2114 = vmatpush1.bf16.msra.mxu0 0
    %2115 = vmatprep.subr.bf16.mxu0 0
    %2116 = vmatpush1.bf16.msra.mxu0 0
    %2117 = vmatprep.subr.bf16.mxu0 0
    %2118 = vmatpush1.bf16.msra.mxu0 0
    %2119 = vmatprep.subr.bf16.mxu0 0
    %2120 = vmatpush1.bf16.msra.mxu0 0
    %2121 = vmatprep.subr.bf16.mxu0 0
    %2122 = vmatpush1.bf16.msra.mxu0 0
    %2123 = vmatprep.subr.bf16.mxu0 0
    %2124 = vmatpush1.bf16.msra.mxu0 0
    %2125 = vmatprep.subr.bf16.mxu0 0
    %2126 = vmatpush1.bf16.msra.mxu0 0
    %2127 = vmatprep.subr.bf16.mxu0 0
    %2128 = vmatpush1.bf16.msra.mxu0 0
    %2129 = vmatprep.subr.bf16.mxu0 0
    %2130 = vmatpush1.bf16.msra.mxu0 0
    %2131 = vmatprep.subr.bf16.mxu0 0
    %2132 = vmatpush1.bf16.msra.mxu0 0
    %2133 = vmatprep.subr.bf16.mxu0 0
    %2134 = vmatpush1.bf16.msra.mxu0 0
    %2135 = vmatprep.subr.bf16.mxu0 0
    %2136 = vmatpush1.bf16.msra.mxu0 0
    %2137 = vmatprep.subr.bf16.mxu0 0
    %2138 = vmatpush1.bf16.msra.mxu0 0
    %2139 = vmatprep.subr.bf16.mxu0 0
    %2140 = vmatpush1.bf16.msra.mxu0 0
    %2141 = vmatprep.mubr.bf16.mxu0 0
    %2142 = vmatmul.mubr.bf16.gmra.mrb[0].mxu0 %v1890
    %v2143 = vpop.f32.mrb[0].mxu0
    %v2144 = vadd.f32 %v256, %v2143
    %v2145 = vpop.f32.mrb[0].mxu0
    %v2146 = vpop.f32.mrb[0].mxu0
    %v2147 = vpop.f32.mrb[0].mxu0
    %2148 = vdwg.mxu0
    %v2149 = vmul.f32 %v1981, %v2144
    %v2150 = vadd.f32 %v2104, %v2149
    %v2151 = vtanh.pop %v2150
    %v2152 = vsub.f32 1.0, %v2068
    %v2153 = vmul.f32 %v2152, %v2151
    %v2154 = vmul.f32 %v2068, %v1355
    %v2155 = vadd.f32 %v2153, %v2154
    %s2156 = scalar_lea.vmem [#allocation2], 2
    %v2157 = vld [vmem:[%s2156] sm:$0x1]
    %2158 = vmatprep.subr.bf16.mxu0 0
    %2159 = vmatpush1.bf16.msra.mxu0 %v274
    %2160 = vmatprep.subr.bf16.mxu0 0
    %2161 = vmatpush1.bf16.msra.mxu0 %v275
    %2162 = vmatprep.subr.bf16.mxu0 0
    %2163 = vmatpush1.bf16.msra.mxu0 0
    %2164 = vmatprep.subr.bf16.mxu0 0
    %2165 = vmatpush1.bf16.msra.mxu0 0
    %2166 = vmatprep.subr.bf16.mxu0 0
    %2167 = vmatpush1.bf16.msra.mxu0 0
    %2168 = vmatprep.subr.bf16.mxu0 0
    %2169 = vmatpush1.bf16.msra.mxu0 0
    %2170 = vmatprep.subr.bf16.mxu0 0
    %2171 = vmatpush1.bf16.msra.mxu0 0
    %2172 = vmatprep.subr.bf16.mxu0 0
    %2173 = vmatpush1.bf16.msra.mxu0 0
    %2174 = vmatprep.subr.bf16.mxu0 0
    %2175 = vmatpush1.bf16.msra.mxu0 0
    %2176 = vmatprep.subr.bf16.mxu0 0
    %2177 = vmatpush1.bf16.msra.mxu0 0
    %2178 = vmatprep.subr.bf16.mxu0 0
    %2179 = vmatpush1.bf16.msra.mxu0 0
    %2180 = vmatprep.subr.bf16.mxu0 0
    %2181 = vmatpush1.bf16.msra.mxu0 0
    %2182 = vmatprep.subr.bf16.mxu0 0
    %2183 = vmatpush1.bf16.msra.mxu0 0
    %2184 = vmatprep.subr.bf16.mxu0 0
    %2185 = vmatpush1.bf16.msra.mxu0 0
    %2186 = vmatprep.subr.bf16.mxu0 0
    %2187 = vmatpush1.bf16.msra.mxu0 0
    %2188 = vmatprep.subr.bf16.mxu0 0
    %2189 = vmatpush1.bf16.msra.mxu0 0
    %2190 = vmatprep.mubr.bf16.mxu0 0
    %2191 = vmatmul.mubr.bf16.gmra.mrb[0].mxu0 %v1664
    %v2192 = vpop.f32.mrb[0].mxu0
    %v2193 = vadd.f32 0.0, %v2192
    %v2194 = vpop.f32.mrb[0].mxu0
    %v2195 = vpop.f32.mrb[0].mxu0
    %v2196 = vpop.f32.mrb[0].mxu0
    %2197 = vdwg.mxu0
    %v2199 = vsel %vm331, %v2157, 0
    %2201 = vmatprep.subr.bf16.mxu0 0
    %2202 = vmatpush1.bf16.msra.mxu0 %v328
    %2203 = vmatprep.subr.bf16.mxu0 0
    %2204 = vmatpush1.bf16.msra.mxu0 %v337
    %2205 = vmatprep.subr.bf16.mxu0 0
    %2206 = vmatpush1.bf16.msra.mxu0 0
    %2207 = vmatprep.subr.bf16.mxu0 0
    %2208 = vmatpush1.bf16.msra.mxu0 0
    %2209 = vmatprep.subr.bf16.mxu0 0
    %2210 = vmatpush1.bf16.msra.mxu0 0
    %2211 = vmatprep.subr.bf16.mxu0 0
    %2212 = vmatpush1.bf16.msra.mxu0 0
    %2213 = vmatprep.subr.bf16.mxu0 0
    %2214 = vmatpush1.bf16.msra.mxu0 0
    %2215 = vmatprep.subr.bf16.mxu0 0
    %2216 = vmatpush1.bf16.msra.mxu0 0
    %2217 = vmatprep.subr.bf16.mxu0 0
    %2218 = vmatpush1.bf16.msra.mxu0 0
    %2219 = vmatprep.subr.bf16.mxu0 0
    %2220 = vmatpush1.bf16.msra.mxu0 0
    %2221 = vmatprep.subr.bf16.mxu0 0
    %2222 = vmatpush1.bf16.msra.mxu0 0
    %2223 = vmatprep.subr.bf16.mxu0 0
    %2224 = vmatpush1.bf16.msra.mxu0 0
    %2225 = vmatprep.subr.bf16.mxu0 0
    %2226 = vmatpush1.bf16.msra.mxu0 0
    %2227 = vmatprep.subr.bf16.mxu0 0
    %2228 = vmatpush1.bf16.msra.mxu0 0
    %2229 = vmatprep.subr.bf16.mxu0 0
    %2230 = vmatpush1.bf16.msra.mxu0 0
    %2231 = vmatprep.subr.bf16.mxu0 0
    %2232 = vmatpush1.bf16.msra.mxu0 0
    %2233 = vmatprep.mubr.bf16.mxu0 0
    %2234 = vmatmul.mubr.bf16.gmra.mrb[0].mxu0 %v2199
    %v2235 = vpop.f32.mrb[0].mxu0
    %v2236 = vadd.f32 %v2193, %v2235
    %v2237 = vpop.f32.mrb[0].mxu0
    %v2238 = vpop.f32.mrb[0].mxu0
    %v2239 = vpop.f32.mrb[0].mxu0
    %2240 = vdwg.mxu0
    %v2241 = vadd.f32 %v2236, %v170
    %v2242 = vxor.u32 %v2241, 2147483648
    %v2243 = vmul.f32 %v2242, 1.442695
    %v2244 = vpow.pop %v2243
    %v2245 = vadd.f32 %v2244, 1.0
    %v2246 = vrcp.pop %v2245
    %v2247 = vmul.f32 1.0, %v2246
    %2248 = vmatprep.subr.bf16.mxu0 0
    %2249 = vmatpush1.bf16.msra.mxu0 %v403
    %2250 = vmatprep.subr.bf16.mxu0 0
    %2251 = vmatpush1.bf16.msra.mxu0 %v404
    %2252 = vmatprep.subr.bf16.mxu0 0
    %2253 = vmatpush1.bf16.msra.mxu0 0
    %2254 = vmatprep.subr.bf16.mxu0 0
    %2255 = vmatpush1.bf16.msra.mxu0 0
    %2256 = vmatprep.subr.bf16.mxu0 0
    %2257 = vmatpush1.bf16.msra.mxu0 0
    %2258 = vmatprep.subr.bf16.mxu0 0
    %2259 = vmatpush1.bf16.msra.mxu0 0
    %2260 = vmatprep.subr.bf16.mxu0 0
    %2261 = vmatpush1.bf16.msra.mxu0 0
    %2262 = vmatprep.subr.bf16.mxu0 0
    %2263 = vmatpush1.bf16.msra.mxu0 0
    %2264 = vmatprep.subr.bf16.mxu0 0
    %2265 = vmatpush1.bf16.msra.mxu0 0
    %2266 = vmatprep.subr.bf16.mxu0 0
    %2267 = vmatpush1.bf16.msra.mxu0 0
    %2268 = vmatprep.subr.bf16.mxu0 0
    %2269 = vmatpush1.bf16.msra.mxu0 0
    %2270 = vmatprep.subr.bf16.mxu0 0
    %2271 = vmatpush1.bf16.msra.mxu0 0
    %2272 = vmatprep.subr.bf16.mxu0 0
    %2273 = vmatpush1.bf16.msra.mxu0 0
    %2274 = vmatprep.subr.bf16.mxu0 0
    %2275 = vmatpush1.bf16.msra.mxu0 0
    %2276 = vmatprep.subr.bf16.mxu0 0
    %2277 = vmatpush1.bf16.msra.mxu0 0
    %2278 = vmatprep.subr.bf16.mxu0 0
    %2279 = vmatpush1.bf16.msra.mxu0 0
    %2280 = vmatprep.mubr.bf16.mxu0 0
    %2281 = vmatmul.mubr.bf16.gmra.mrb[0].mxu0 %v1664
    %v2282 = vpop.f32.mrb[0].mxu0
    %v2283 = vadd.f32 0.0, %v2282
    %v2284 = vpop.f32.mrb[0].mxu0
    %v2285 = vpop.f32.mrb[0].mxu0
    %v2286 = vpop.f32.mrb[0].mxu0
    %2287 = vdwg.mxu0
    %2288 = vmatprep.subr.bf16.mxu0 0
    %2289 = vmatpush1.bf16.msra.mxu0 %v453
    %2290 = vmatprep.subr.bf16.mxu0 0
    %2291 = vmatpush1.bf16.msra.mxu0 %v457
    %2292 = vmatprep.subr.bf16.mxu0 0
    %2293 = vmatpush1.bf16.msra.mxu0 0
    %2294 = vmatprep.subr.bf16.mxu0 0
    %2295 = vmatpush1.bf16.msra.mxu0 0
    %2296 = vmatprep.subr.bf16.mxu0 0
    %2297 = vmatpush1.bf16.msra.mxu0 0
    %2298 = vmatprep.subr.bf16.mxu0 0
    %2299 = vmatpush1.bf16.msra.mxu0 0
    %2300 = vmatprep.subr.bf16.mxu0 0
    %2301 = vmatpush1.bf16.msra.mxu0 0
    %2302 = vmatprep.subr.bf16.mxu0 0
    %2303 = vmatpush1.bf16.msra.mxu0 0
    %2304 = vmatprep.subr.bf16.mxu0 0
    %2305 = vmatpush1.bf16.msra.mxu0 0
    %2306 = vmatprep.subr.bf16.mxu0 0
    %2307 = vmatpush1.bf16.msra.mxu0 0
    %2308 = vmatprep.subr.bf16.mxu0 0
    %2309 = vmatpush1.bf16.msra.mxu0 0
    %2310 = vmatprep.subr.bf16.mxu0 0
    %2311 = vmatpush1.bf16.msra.mxu0 0
    %2312 = vmatprep.subr.bf16.mxu0 0
    %2313 = vmatpush1.bf16.msra.mxu0 0
    %2314 = vmatprep.subr.bf16.mxu0 0
    %2315 = vmatpush1.bf16.msra.mxu0 0
    %2316 = vmatprep.subr.bf16.mxu0 0
    %2317 = vmatpush1.bf16.msra.mxu0 0
    %2318 = vmatprep.subr.bf16.mxu0 0
    %2319 = vmatpush1.bf16.msra.mxu0 0
    %2320 = vmatprep.mubr.bf16.mxu0 0
    %2321 = vmatmul.mubr.bf16.gmra.mrb[0].mxu0 %v2199
    %v2322 = vpop.f32.mrb[0].mxu0
    %v2323 = vadd.f32 %v2283, %v2322
    %v2324 = vpop.f32.mrb[0].mxu0
    %v2325 = vpop.f32.mrb[0].mxu0
    %v2326 = vpop.f32.mrb[0].mxu0
    %2327 = vdwg.mxu0
    %v2328 = vadd.f32 %v2323, %v178
    %v2329 = vxor.u32 %v2328, 2147483648
    %v2330 = vmul.f32 %v2329, 1.442695
    %v2331 = vpow.pop %v2330
    %v2332 = vadd.f32 %v2331, 1.0
    %v2333 = vrcp.pop %v2332
    %v2334 = vmul.f32 1.0, %v2333
    %2335 = vmatprep.subr.bf16.mxu0 0
    %2336 = vmatpush1.bf16.msra.mxu0 %v516
    %2337 = vmatprep.subr.bf16.mxu0 0
    %2338 = vmatpush1.bf16.msra.mxu0 %v520
    %2339 = vmatprep.subr.bf16.mxu0 0
    %2340 = vmatpush1.bf16.msra.mxu0 0
    %2341 = vmatprep.subr.bf16.mxu0 0
    %2342 = vmatpush1.bf16.msra.mxu0 0
    %2343 = vmatprep.subr.bf16.mxu0 0
    %2344 = vmatpush1.bf16.msra.mxu0 0
    %2345 = vmatprep.subr.bf16.mxu0 0
    %2346 = vmatpush1.bf16.msra.mxu0 0
    %2347 = vmatprep.subr.bf16.mxu0 0
    %2348 = vmatpush1.bf16.msra.mxu0 0
    %2349 = vmatprep.subr.bf16.mxu0 0
    %2350 = vmatpush1.bf16.msra.mxu0 0
    %2351 = vmatprep.subr.bf16.mxu0 0
    %2352 = vmatpush1.bf16.msra.mxu0 0
    %2353 = vmatprep.subr.bf16.mxu0 0
    %2354 = vmatpush1.bf16.msra.mxu0 0
    %2355 = vmatprep.subr.bf16.mxu0 0
    %2356 = vmatpush1.bf16.msra.mxu0 0
    %2357 = vmatprep.subr.bf16.mxu0 0
    %2358 = vmatpush1.bf16.msra.mxu0 0
    %2359 = vmatprep.subr.bf16.mxu0 0
    %2360 = vmatpush1.bf16.msra.mxu0 0
    %2361 = vmatprep.subr.bf16.mxu0 0
    %2362 = vmatpush1.bf16.msra.mxu0 0
    %2363 = vmatprep.subr.bf16.mxu0 0
    %2364 = vmatpush1.bf16.msra.mxu0 0
    %2365 = vmatprep.subr.bf16.mxu0 0
    %2366 = vmatpush1.bf16.msra.mxu0 0
    %2367 = vmatprep.mubr.bf16.mxu0 0
    %2368 = vmatmul.mubr.bf16.gmra.mrb[0].mxu0 %v2199
    %v2369 = vpop.f32.mrb[0].mxu0
    %v2370 = vadd.f32 %v186, %v2369
    %v2371 = vpop.f32.mrb[0].mxu0
    %v2372 = vpop.f32.mrb[0].mxu0
    %v2373 = vpop.f32.mrb[0].mxu0
    %2374 = vdwg.mxu0
    %2375 = vmatprep.subr.bf16.mxu0 0
    %2376 = vmatpush1.bf16.msra.mxu0 %v575
    %2377 = vmatprep.subr.bf16.mxu0 0
    %2378 = vmatpush1.bf16.msra.mxu0 %v576
    %2379 = vmatprep.subr.bf16.mxu0 0
    %2380 = vmatpush1.bf16.msra.mxu0 0
    %2381 = vmatprep.subr.bf16.mxu0 0
    %2382 = vmatpush1.bf16.msra.mxu0 0
    %2383 = vmatprep.subr.bf16.mxu0 0
    %2384 = vmatpush1.bf16.msra.mxu0 0
    %2385 = vmatprep.subr.bf16.mxu0 0
    %2386 = vmatpush1.bf16.msra.mxu0 0
    %2387 = vmatprep.subr.bf16.mxu0 0
    %2388 = vmatpush1.bf16.msra.mxu0 0
    %2389 = vmatprep.subr.bf16.mxu0 0
    %2390 = vmatpush1.bf16.msra.mxu0 0
    %2391 = vmatprep.subr.bf16.mxu0 0
    %2392 = vmatpush1.bf16.msra.mxu0 0
    %2393 = vmatprep.subr.bf16.mxu0 0
    %2394 = vmatpush1.bf16.msra.mxu0 0
    %2395 = vmatprep.subr.bf16.mxu0 0
    %2396 = vmatpush1.bf16.msra.mxu0 0
    %2397 = vmatprep.subr.bf16.mxu0 0
    %2398 = vmatpush1.bf16.msra.mxu0 0
    %2399 = vmatprep.subr.bf16.mxu0 0
    %2400 = vmatpush1.bf16.msra.mxu0 0
    %2401 = vmatprep.subr.bf16.mxu0 0
    %2402 = vmatpush1.bf16.msra.mxu0 0
    %2403 = vmatprep.subr.bf16.mxu0 0
    %2404 = vmatpush1.bf16.msra.mxu0 0
    %2405 = vmatprep.subr.bf16.mxu0 0
    %2406 = vmatpush1.bf16.msra.mxu0 0
    %2407 = vmatprep.mubr.bf16.mxu0 0
    %2408 = vmatmul.mubr.bf16.gmra.mrb[0].mxu0 %v1664
    %v2409 = vpop.f32.mrb[0].mxu0
    %v2410 = vadd.f32 %v194, %v2409
    %v2411 = vpop.f32.mrb[0].mxu0
    %v2412 = vpop.f32.mrb[0].mxu0
    %v2413 = vpop.f32.mrb[0].mxu0
    %2414 = vdwg.mxu0
    %v2415 = vmul.f32 %v2247, %v2410
    %v2416 = vadd.f32 %v2370, %v2415
    %v2417 = vtanh.pop %v2416
    %v2418 = vsub.f32 1.0, %v2334
    %v2419 = vmul.f32 %v2418, %v2417
    %v2420 = vmul.f32 %v2334, %v1621
    %v2421 = vadd.f32 %v2419, %v2420
    %v2422 = vpack.c.bf16 %v2421, %v2421
    %2423 = vmatprep.subr.bf16.mxu0 0
    %2424 = vmatpush1.bf16.msra.mxu0 %v643
    %2425 = vmatprep.subr.bf16.mxu0 0
    %2426 = vmatpush1.bf16.msra.mxu0 %v644
    %2427 = vmatprep.subr.bf16.mxu0 0
    %2428 = vmatpush1.bf16.msra.mxu0 0
    %2429 = vmatprep.subr.bf16.mxu0 0
    %2430 = vmatpush1.bf16.msra.mxu0 0
    %2431 = vmatprep.subr.bf16.mxu0 0
    %2432 = vmatpush1.bf16.msra.mxu0 0
    %2433 = vmatprep.subr.bf16.mxu0 0
    %2434 = vmatpush1.bf16.msra.mxu0 0
    %2435 = vmatprep.subr.bf16.mxu0 0
    %2436 = vmatpush1.bf16.msra.mxu0 0
    %2437 = vmatprep.subr.bf16.mxu0 0
    %2438 = vmatpush1.bf16.msra.mxu0 0
    %2439 = vmatprep.subr.bf16.mxu0 0
    %2440 = vmatpush1.bf16.msra.mxu0 0
    %2441 = vmatprep.subr.bf16.mxu0 0
    %2442 = vmatpush1.bf16.msra.mxu0 0
    %2443 = vmatprep.subr.bf16.mxu0 0
    %2444 = vmatpush1.bf16.msra.mxu0 0
    %2445 = vmatprep.subr.bf16.mxu0 0
    %2446 = vmatpush1.bf16.msra.mxu0 0
    %2447 = vmatprep.subr.bf16.mxu0 0
    %2448 = vmatpush1.bf16.msra.mxu0 0
    %2449 = vmatprep.subr.bf16.mxu0 0
    %2450 = vmatpush1.bf16.msra.mxu0 0
    %2451 = vmatprep.subr.bf16.mxu0 0
    %2452 = vmatpush1.bf16.msra.mxu0 0
    %2453 = vmatprep.subr.bf16.mxu0 0
    %2454 = vmatpush1.bf16.msra.mxu0 0
    %2455 = vmatprep.mubr.bf16.mxu0 0
    %2456 = vmatmul.mubr.bf16.gmra.mrb[0].mxu0 %v1933
    %v2457 = vpop.f32.mrb[0].mxu0
    %v2458 = vadd.f32 0.0, %v2457
    %v2459 = vpop.f32.mrb[0].mxu0
    %v2460 = vpop.f32.mrb[0].mxu0
    %v2461 = vpop.f32.mrb[0].mxu0
    %2462 = vdwg.mxu0
    %v2464 = vsel %vm278, %v2422, 0
    %2466 = vmatprep.subr.bf16.mxu0 0
    %2467 = vmatpush1.bf16.msra.mxu0 %v695
    %2468 = vmatprep.subr.bf16.mxu0 0
    %2469 = vmatpush1.bf16.msra.mxu0 %v696
    %2470 = vmatprep.subr.bf16.mxu0 0
    %2471 = vmatpush1.bf16.msra.mxu0 0
    %2472 = vmatprep.subr.bf16.mxu0 0
    %2473 = vmatpush1.bf16.msra.mxu0 0
    %2474 = vmatprep.subr.bf16.mxu0 0
    %2475 = vmatpush1.bf16.msra.mxu0 0
    %2476 = vmatprep.subr.bf16.mxu0 0
    %2477 = vmatpush1.bf16.msra.mxu0 0
    %2478 = vmatprep.subr.bf16.mxu0 0
    %2479 = vmatpush1.bf16.msra.mxu0 0
    %2480 = vmatprep.subr.bf16.mxu0 0
    %2481 = vmatpush1.bf16.msra.mxu0 0
    %2482 = vmatprep.subr.bf16.mxu0 0
    %2483 = vmatpush1.bf16.msra.mxu0 0
    %2484 = vmatprep.subr.bf16.mxu0 0
    %2485 = vmatpush1.bf16.msra.mxu0 0
    %2486 = vmatprep.subr.bf16.mxu0 0
    %2487 = vmatpush1.bf16.msra.mxu0 0
    %2488 = vmatprep.subr.bf16.mxu0 0
    %2489 = vmatpush1.bf16.msra.mxu0 0
    %2490 = vmatprep.subr.bf16.mxu0 0
    %2491 = vmatpush1.bf16.msra.mxu0 0
    %2492 = vmatprep.subr.bf16.mxu0 0
    %2493 = vmatpush1.bf16.msra.mxu0 0
    %2494 = vmatprep.subr.bf16.mxu0 0
    %2495 = vmatpush1.bf16.msra.mxu0 0
    %2496 = vmatprep.subr.bf16.mxu0 0
    %2497 = vmatpush1.bf16.msra.mxu0 0
    %2498 = vmatprep.mubr.bf16.mxu0 0
    %2499 = vmatmul.mubr.bf16.gmra.mrb[0].mxu0 %v2464
    %v2500 = vpop.f32.mrb[0].mxu0
    %v2501 = vadd.f32 %v2458, %v2500
    %v2502 = vpop.f32.mrb[0].mxu0
    %v2503 = vpop.f32.mrb[0].mxu0
    %v2504 = vpop.f32.mrb[0].mxu0
    %2505 = vdwg.mxu0
    %v2506 = vadd.f32 %v2501, %v201
    %v2507 = vxor.u32 %v2506, 2147483648
    %v2508 = vmul.f32 %v2507, 1.442695
    %v2509 = vpow.pop %v2508
    %v2510 = vadd.f32 %v2509, 1.0
    %v2511 = vrcp.pop %v2510
    %v2512 = vmul.f32 1.0, %v2511
    %2513 = vmatprep.subr.bf16.mxu0 0
    %2514 = vmatpush1.bf16.msra.mxu0 %v767
    %2515 = vmatprep.subr.bf16.mxu0 0
    %2516 = vmatpush1.bf16.msra.mxu0 %v768
    %2517 = vmatprep.subr.bf16.mxu0 0
    %2518 = vmatpush1.bf16.msra.mxu0 0
    %2519 = vmatprep.subr.bf16.mxu0 0
    %2520 = vmatpush1.bf16.msra.mxu0 0
    %2521 = vmatprep.subr.bf16.mxu0 0
    %2522 = vmatpush1.bf16.msra.mxu0 0
    %2523 = vmatprep.subr.bf16.mxu0 0
    %2524 = vmatpush1.bf16.msra.mxu0 0
    %2525 = vmatprep.subr.bf16.mxu0 0
    %2526 = vmatpush1.bf16.msra.mxu0 0
    %2527 = vmatprep.subr.bf16.mxu0 0
    %2528 = vmatpush1.bf16.msra.mxu0 0
    %2529 = vmatprep.subr.bf16.mxu0 0
    %2530 = vmatpush1.bf16.msra.mxu0 0
    %2531 = vmatprep.subr.bf16.mxu0 0
    %2532 = vmatpush1.bf16.msra.mxu0 0
    %2533 = vmatprep.subr.bf16.mxu0 0
    %2534 = vmatpush1.bf16.msra.mxu0 0
    %2535 = vmatprep.subr.bf16.mxu0 0
    %2536 = vmatpush1.bf16.msra.mxu0 0
    %2537 = vmatprep.subr.bf16.mxu0 0
    %2538 = vmatpush1.bf16.msra.mxu0 0
    %2539 = vmatprep.subr.bf16.mxu0 0
    %2540 = vmatpush1.bf16.msra.mxu0 0
    %2541 = vmatprep.subr.bf16.mxu0 0
    %2542 = vmatpush1.bf16.msra.mxu0 0
    %2543 = vmatprep.subr.bf16.mxu0 0
    %2544 = vmatpush1.bf16.msra.mxu0 0
    %2545 = vmatprep.mubr.bf16.mxu0 0
    %2546 = vmatmul.mubr.bf16.gmra.mrb[0].mxu0 %v1933
    %v2547 = vpop.f32.mrb[0].mxu0
    %v2548 = vadd.f32 0.0, %v2547
    %v2549 = vpop.f32.mrb[0].mxu0
    %v2550 = vpop.f32.mrb[0].mxu0
    %v2551 = vpop.f32.mrb[0].mxu0
    %2552 = vdwg.mxu0
    %2553 = vmatprep.subr.bf16.mxu0 0
    %2554 = vmatpush1.bf16.msra.mxu0 %v819
    %2555 = vmatprep.subr.bf16.mxu0 0
    %2556 = vmatpush1.bf16.msra.mxu0 %v820
    %2557 = vmatprep.subr.bf16.mxu0 0
    %2558 = vmatpush1.bf16.msra.mxu0 0
    %2559 = vmatprep.subr.bf16.mxu0 0
    %2560 = vmatpush1.bf16.msra.mxu0 0
    %2561 = vmatprep.subr.bf16.mxu0 0
    %2562 = vmatpush1.bf16.msra.mxu0 0
    %2563 = vmatprep.subr.bf16.mxu0 0
    %2564 = vmatpush1.bf16.msra.mxu0 0
    %2565 = vmatprep.subr.bf16.mxu0 0
    %2566 = vmatpush1.bf16.msra.mxu0 0
    %2567 = vmatprep.subr.bf16.mxu0 0
    %2568 = vmatpush1.bf16.msra.mxu0 0
    %2569 = vmatprep.subr.bf16.mxu0 0
    %2570 = vmatpush1.bf16.msra.mxu0 0
    %2571 = vmatprep.subr.bf16.mxu0 0
    %2572 = vmatpush1.bf16.msra.mxu0 0
    %2573 = vmatprep.subr.bf16.mxu0 0
    %2574 = vmatpush1.bf16.msra.mxu0 0
    %2575 = vmatprep.subr.bf16.mxu0 0
    %2576 = vmatpush1.bf16.msra.mxu0 0
    %2577 = vmatprep.subr.bf16.mxu0 0
    %2578 = vmatpush1.bf16.msra.mxu0 0
    %2579 = vmatprep.subr.bf16.mxu0 0
    %2580 = vmatpush1.bf16.msra.mxu0 0
    %2581 = vmatprep.subr.bf16.mxu0 0
    %2582 = vmatpush1.bf16.msra.mxu0 0
    %2583 = vmatprep.subr.bf16.mxu0 0
    %2584 = vmatpush1.bf16.msra.mxu0 0
    %2585 = vmatprep.mubr.bf16.mxu0 0
    %2586 = vmatmul.mubr.bf16.gmra.mrb[0].mxu0 %v2464
    %v2587 = vpop.f32.mrb[0].mxu0
    %v2588 = vadd.f32 %v2548, %v2587
    %v2589 = vpop.f32.mrb[0].mxu0
    %v2590 = vpop.f32.mrb[0].mxu0
    %v2591 = vpop.f32.mrb[0].mxu0
    %2592 = vdwg.mxu0
    %v2593 = vadd.f32 %v2588, %v209
    %v2594 = vxor.u32 %v2593, 2147483648
    %v2595 = vmul.f32 %v2594, 1.442695
    %v2596 = vpow.pop %v2595
    %v2597 = vadd.f32 %v2596, 1.0
    %v2598 = vrcp.pop %v2597
    %v2599 = vmul.f32 1.0, %v2598
    %2600 = vmatprep.subr.bf16.mxu0 0
    %2601 = vmatpush1.bf16.msra.mxu0 %v883
    %2602 = vmatprep.subr.bf16.mxu0 0
    %2603 = vmatpush1.bf16.msra.mxu0 %v884
    %2604 = vmatprep.subr.bf16.mxu0 0
    %2605 = vmatpush1.bf16.msra.mxu0 0
    %2606 = vmatprep.subr.bf16.mxu0 0
    %2607 = vmatpush1.bf16.msra.mxu0 0
    %2608 = vmatprep.subr.bf16.mxu0 0
    %2609 = vmatpush1.bf16.msra.mxu0 0
    %2610 = vmatprep.subr.bf16.mxu0 0
    %2611 = vmatpush1.bf16.msra.mxu0 0
    %2612 = vmatprep.subr.bf16.mxu0 0
    %2613 = vmatpush1.bf16.msra.mxu0 0
    %2614 = vmatprep.subr.bf16.mxu0 0
    %2615 = vmatpush1.bf16.msra.mxu0 0
    %2616 = vmatprep.subr.bf16.mxu0 0
    %2617 = vmatpush1.bf16.msra.mxu0 0
    %2618 = vmatprep.subr.bf16.mxu0 0
    %2619 = vmatpush1.bf16.msra.mxu0 0
    %2620 = vmatprep.subr.bf16.mxu0 0
    %2621 = vmatpush1.bf16.msra.mxu0 0
    %2622 = vmatprep.subr.bf16.mxu0 0
    %2623 = vmatpush1.bf16.msra.mxu0 0
    %2624 = vmatprep.subr.bf16.mxu0 0
    %2625 = vmatpush1.bf16.msra.mxu0 0
    %2626 = vmatprep.subr.bf16.mxu0 0
    %2627 = vmatpush1.bf16.msra.mxu0 0
    %2628 = vmatprep.subr.bf16.mxu0 0
    %2629 = vmatpush1.bf16.msra.mxu0 0
    %2630 = vmatprep.subr.bf16.mxu0 0
    %2631 = vmatpush1.bf16.msra.mxu0 0
    %2632 = vmatprep.mubr.bf16.mxu0 0
    %2633 = vmatmul.mubr.bf16.gmra.mrb[0].mxu0 %v2464
    %v2634 = vpop.f32.mrb[0].mxu0
    %v2635 = vadd.f32 %v217, %v2634
    %v2636 = vpop.f32.mrb[0].mxu0
    %v2637 = vpop.f32.mrb[0].mxu0
    %v2638 = vpop.f32.mrb[0].mxu0
    %2639 = vdwg.mxu0
    %2640 = vmatprep.subr.bf16.mxu0 0
    %2641 = vmatpush1.bf16.msra.mxu0 %v940
    %2642 = vmatprep.subr.bf16.mxu0 0
    %2643 = vmatpush1.bf16.msra.mxu0 %v941
    %2644 = vmatprep.subr.bf16.mxu0 0
    %2645 = vmatpush1.bf16.msra.mxu0 0
    %2646 = vmatprep.subr.bf16.mxu0 0
    %2647 = vmatpush1.bf16.msra.mxu0 0
    %2648 = vmatprep.subr.bf16.mxu0 0
    %2649 = vmatpush1.bf16.msra.mxu0 0
    %2650 = vmatprep.subr.bf16.mxu0 0
    %2651 = vmatpush1.bf16.msra.mxu0 0
    %2652 = vmatprep.subr.bf16.mxu0 0
    %2653 = vmatpush1.bf16.msra.mxu0 0
    %2654 = vmatprep.subr.bf16.mxu0 0
    %2655 = vmatpush1.bf16.msra.mxu0 0
    %2656 = vmatprep.subr.bf16.mxu0 0
    %2657 = vmatpush1.bf16.msra.mxu0 0
    %2658 = vmatprep.subr.bf16.mxu0 0
    %2659 = vmatpush1.bf16.msra.mxu0 0
    %2660 = vmatprep.subr.bf16.mxu0 0
    %2661 = vmatpush1.bf16.msra.mxu0 0
    %2662 = vmatprep.subr.bf16.mxu0 0
    %2663 = vmatpush1.bf16.msra.mxu0 0
    %2664 = vmatprep.subr.bf16.mxu0 0
    %2665 = vmatpush1.bf16.msra.mxu0 0
    %2666 = vmatprep.subr.bf16.mxu0 0
    %2667 = vmatpush1.bf16.msra.mxu0 0
    %2668 = vmatprep.subr.bf16.mxu0 0
    %2669 = vmatpush1.bf16.msra.mxu0 0
    %2670 = vmatprep.subr.bf16.mxu0 0
    %2671 = vmatpush1.bf16.msra.mxu0 0
    %2672 = vmatprep.mubr.bf16.mxu0 0
    %2673 = vmatmul.mubr.bf16.gmra.mrb[0].mxu0 %v1933
    %v2674 = vpop.f32.mrb[0].mxu0
    %v2675 = vadd.f32 %v225, %v2674
    %v2676 = vpop.f32.mrb[0].mxu0
    %v2677 = vpop.f32.mrb[0].mxu0
    %v2678 = vpop.f32.mrb[0].mxu0
    %2679 = vdwg.mxu0
    %v2680 = vmul.f32 %v2512, %v2675
    %v2681 = vadd.f32 %v2635, %v2680
    %v2682 = vtanh.pop %v2681
    %v2683 = vsub.f32 1.0, %v2599
    %v2684 = vmul.f32 %v2683, %v2682
    %v2685 = vmul.f32 %v2599, %v1886
    %v2686 = vadd.f32 %v2684, %v2685
    %v2687 = vpack.c.bf16 %v2686, %v2686
    %v2688 = vpack.c.bf16 %v2155, %v2155
    %v2690 = vsel %vm278, %v2688, 0
    %2692 = vmatprep.subr.bf16.mxu0 0
    %2693 = vmatpush1.bf16.msra.mxu0 %v1008
    %2694 = vmatprep.subr.bf16.mxu0 0
    %2695 = vmatpush1.bf16.msra.mxu0 %v1009
    %2696 = vmatprep.subr.bf16.mxu0 0
    %2697 = vmatpush1.bf16.msra.mxu0 0
    %2698 = vmatprep.subr.bf16.mxu0 0
    %2699 = vmatpush1.bf16.msra.mxu0 0
    %2700 = vmatprep.subr.bf16.mxu0 0
    %2701 = vmatpush1.bf16.msra.mxu0 0
    %2702 = vmatprep.subr.bf16.mxu0 0
    %2703 = vmatpush1.bf16.msra.mxu0 0
    %2704 = vmatprep.subr.bf16.mxu0 0
    %2705 = vmatpush1.bf16.msra.mxu0 0
    %2706 = vmatprep.subr.bf16.mxu0 0
    %2707 = vmatpush1.bf16.msra.mxu0 0
    %2708 = vmatprep.subr.bf16.mxu0 0
    %2709 = vmatpush1.bf16.msra.mxu0 0
    %2710 = vmatprep.subr.bf16.mxu0 0
    %2711 = vmatpush1.bf16.msra.mxu0 0
    %2712 = vmatprep.subr.bf16.mxu0 0
    %2713 = vmatpush1.bf16.msra.mxu0 0
    %2714 = vmatprep.subr.bf16.mxu0 0
    %2715 = vmatpush1.bf16.msra.mxu0 0
    %2716 = vmatprep.subr.bf16.mxu0 0
    %2717 = vmatpush1.bf16.msra.mxu0 0
    %2718 = vmatprep.subr.bf16.mxu0 0
    %2719 = vmatpush1.bf16.msra.mxu0 0
    %2720 = vmatprep.subr.bf16.mxu0 0
    %2721 = vmatpush1.bf16.msra.mxu0 0
    %2722 = vmatprep.subr.bf16.mxu0 0
    %2723 = vmatpush1.bf16.msra.mxu0 0
    %2724 = vmatprep.mubr.bf16.mxu0 0
    %2725 = vmatmul.mubr.bf16.gmra.mrb[0].mxu0 %v2690
    %v2726 = vpop.f32.mrb[0].mxu0
    %v2727 = vadd.f32 0.0, %v2726
    %v2728 = vpop.f32.mrb[0].mxu0
    %v2729 = vpop.f32.mrb[0].mxu0
    %v2730 = vpop.f32.mrb[0].mxu0
    %2731 = vdwg.mxu0
    %v2733 = vsel %vm278, %v2687, 0
    %2735 = vmatprep.subr.bf16.mxu0 0
    %2736 = vmatpush1.bf16.msra.mxu0 %v1060
    %2737 = vmatprep.subr.bf16.mxu0 0
    %2738 = vmatpush1.bf16.msra.mxu0 %v1061
    %2739 = vmatprep.subr.bf16.mxu0 0
    %2740 = vmatpush1.bf16.msra.mxu0 0
    %2741 = vmatprep.subr.bf16.mxu0 0
    %2742 = vmatpush1.bf16.msra.mxu0 0
    %2743 = vmatprep.subr.bf16.mxu0 0
    %2744 = vmatpush1.bf16.msra.mxu0 0
    %2745 = vmatprep.subr.bf16.mxu0 0
    %2746 = vmatpush1.bf16.msra.mxu0 0
    %2747 = vmatprep.subr.bf16.mxu0 0
    %2748 = vmatpush1.bf16.msra.mxu0 0
    %2749 = vmatprep.subr.bf16.mxu0 0
    %2750 = vmatpush1.bf16.msra.mxu0 0
    %2751 = vmatprep.subr.bf16.mxu0 0
    %2752 = vmatpush1.bf16.msra.mxu0 0
    %2753 = vmatprep.subr.bf16.mxu0 0
    %2754 = vmatpush1.bf16.msra.mxu0 0
    %2755 = vmatprep.subr.bf16.mxu0 0
    %2756 = vmatpush1.bf16.msra.mxu0 0
    %2757 = vmatprep.subr.bf16.mxu0 0
    %2758 = vmatpush1.bf16.msra.mxu0 0
    %2759 = vmatprep.subr.bf16.mxu0 0
    %2760 = vmatpush1.bf16.msra.mxu0 0
    %2761 = vmatprep.subr.bf16.mxu0 0
    %2762 = vmatpush1.bf16.msra.mxu0 0
    %2763 = vmatprep.subr.bf16.mxu0 0
    %2764 = vmatpush1.bf16.msra.mxu0 0
    %2765 = vmatprep.subr.bf16.mxu0 0
    %2766 = vmatpush1.bf16.msra.mxu0 0
    %2767 = vmatprep.mubr.bf16.mxu0 0
    %2768 = vmatmul.mubr.bf16.gmra.mrb[0].mxu0 %v2733
    %v2769 = vpop.f32.mrb[0].mxu0
    %v2770 = vadd.f32 %v2727, %v2769
    %v2771 = vpop.f32.mrb[0].mxu0
    %v2772 = vpop.f32.mrb[0].mxu0
    %v2773 = vpop.f32.mrb[0].mxu0
    %2774 = vdwg.mxu0
    %v2775 = vadd.f32 %v2770, %v232
    %v2776 = vxor.u32 %v2775, 2147483648
    %v2777 = vmul.f32 %v2776, 1.442695
    %v2778 = vpow.pop %v2777
    %v2779 = vadd.f32 %v2778, 1.0
    %v2780 = vrcp.pop %v2779
    %v2781 = vmul.f32 1.0, %v2780
    %2782 = vmatprep.subr.bf16.mxu0 0
    %2783 = vmatpush1.bf16.msra.mxu0 %v1132
    %2784 = vmatprep.subr.bf16.mxu0 0
    %2785 = vmatpush1.bf16.msra.mxu0 %v1133
    %2786 = vmatprep.subr.bf16.mxu0 0
    %2787 = vmatpush1.bf16.msra.mxu0 0
    %2788 = vmatprep.subr.bf16.mxu0 0
    %2789 = vmatpush1.bf16.msra.mxu0 0
    %2790 = vmatprep.subr.bf16.mxu0 0
    %2791 = vmatpush1.bf16.msra.mxu0 0
    %2792 = vmatprep.subr.bf16.mxu0 0
    %2793 = vmatpush1.bf16.msra.mxu0 0
    %2794 = vmatprep.subr.bf16.mxu0 0
    %2795 = vmatpush1.bf16.msra.mxu0 0
    %2796 = vmatprep.subr.bf16.mxu0 0
    %2797 = vmatpush1.bf16.msra.mxu0 0
    %2798 = vmatprep.subr.bf16.mxu0 0
    %2799 = vmatpush1.bf16.msra.mxu0 0
    %2800 = vmatprep.subr.bf16.mxu0 0
    %2801 = vmatpush1.bf16.msra.mxu0 0
    %2802 = vmatprep.subr.bf16.mxu0 0
    %2803 = vmatpush1.bf16.msra.mxu0 0
    %2804 = vmatprep.subr.bf16.mxu0 0
    %2805 = vmatpush1.bf16.msra.mxu0 0
    %2806 = vmatprep.subr.bf16.mxu0 0
    %2807 = vmatpush1.bf16.msra.mxu0 0
    %2808 = vmatprep.subr.bf16.mxu0 0
    %2809 = vmatpush1.bf16.msra.mxu0 0
    %2810 = vmatprep.subr.bf16.mxu0 0
    %2811 = vmatpush1.bf16.msra.mxu0 0
    %2812 = vmatprep.subr.bf16.mxu0 0
    %2813 = vmatpush1.bf16.msra.mxu0 0
    %2814 = vmatprep.mubr.bf16.mxu0 0
    %2815 = vmatmul.mubr.bf16.gmra.mrb[0].mxu0 %v2690
    %v2816 = vpop.f32.mrb[0].mxu0
    %v2817 = vadd.f32 0.0, %v2816
    %v2818 = vpop.f32.mrb[0].mxu0
    %v2819 = vpop.f32.mrb[0].mxu0
    %v2820 = vpop.f32.mrb[0].mxu0
    %2821 = vdwg.mxu0
    %2822 = vmatprep.subr.bf16.mxu0 0
    %2823 = vmatpush1.bf16.msra.mxu0 %v1184
    %2824 = vmatprep.subr.bf16.mxu0 0
    %2825 = vmatpush1.bf16.msra.mxu0 %v1185
    %2826 = vmatprep.subr.bf16.mxu0 0
    %2827 = vmatpush1.bf16.msra.mxu0 0
    %2828 = vmatprep.subr.bf16.mxu0 0
    %2829 = vmatpush1.bf16.msra.mxu0 0
    %2830 = vmatprep.subr.bf16.mxu0 0
    %2831 = vmatpush1.bf16.msra.mxu0 0
    %2832 = vmatprep.subr.bf16.mxu0 0
    %2833 = vmatpush1.bf16.msra.mxu0 0
    %2834 = vmatprep.subr.bf16.mxu0 0
    %2835 = vmatpush1.bf16.msra.mxu0 0
    %2836 = vmatprep.subr.bf16.mxu0 0
    %2837 = vmatpush1.bf16.msra.mxu0 0
    %2838 = vmatprep.subr.bf16.mxu0 0
    %2839 = vmatpush1.bf16.msra.mxu0 0
    %2840 = vmatprep.subr.bf16.mxu0 0
    %2841 = vmatpush1.bf16.msra.mxu0 0
    %2842 = vmatprep.subr.bf16.mxu0 0
    %2843 = vmatpush1.bf16.msra.mxu0 0
    %2844 = vmatprep.subr.bf16.mxu0 0
    %2845 = vmatpush1.bf16.msra.mxu0 0
    %2846 = vmatprep.subr.bf16.mxu0 0
    %2847 = vmatpush1.bf16.msra.mxu0 0
    %2848 = vmatprep.subr.bf16.mxu0 0
    %2849 = vmatpush1.bf16.msra.mxu0 0
    %2850 = vmatprep.subr.bf16.mxu0 0
    %2851 = vmatpush1.bf16.msra.mxu0 0
    %2852 = vmatprep.subr.bf16.mxu0 0
    %2853 = vmatpush1.bf16.msra.mxu0 0
    %2854 = vmatprep.mubr.bf16.mxu0 0
    %2855 = vmatmul.mubr.bf16.gmra.mrb[0].mxu0 %v2733
    %v2856 = vpop.f32.mrb[0].mxu0
    %v2857 = vadd.f32 %v2817, %v2856
    %v2858 = vpop.f32.mrb[0].mxu0
    %v2859 = vpop.f32.mrb[0].mxu0
    %v2860 = vpop.f32.mrb[0].mxu0
    %2861 = vdwg.mxu0
    %v2862 = vadd.f32 %v2857, %v240
    %v2863 = vxor.u32 %v2862, 2147483648
    %v2864 = vmul.f32 %v2863, 1.442695
    %v2865 = vpow.pop %v2864
    %v2866 = vadd.f32 %v2865, 1.0
    %v2867 = vrcp.pop %v2866
    %v2868 = vmul.f32 1.0, %v2867
    %2869 = vmatprep.subr.bf16.mxu0 0
    %2870 = vmatpush1.bf16.msra.mxu0 %v1248
    %2871 = vmatprep.subr.bf16.mxu0 0
    %2872 = vmatpush1.bf16.msra.mxu0 %v1249
    %2873 = vmatprep.subr.bf16.mxu0 0
    %2874 = vmatpush1.bf16.msra.mxu0 0
    %2875 = vmatprep.subr.bf16.mxu0 0
    %2876 = vmatpush1.bf16.msra.mxu0 0
    %2877 = vmatprep.subr.bf16.mxu0 0
    %2878 = vmatpush1.bf16.msra.mxu0 0
    %2879 = vmatprep.subr.bf16.mxu0 0
    %2880 = vmatpush1.bf16.msra.mxu0 0
    %2881 = vmatprep.subr.bf16.mxu0 0
    %2882 = vmatpush1.bf16.msra.mxu0 0
    %2883 = vmatprep.subr.bf16.mxu0 0
    %2884 = vmatpush1.bf16.msra.mxu0 0
    %2885 = vmatprep.subr.bf16.mxu0 0
    %2886 = vmatpush1.bf16.msra.mxu0 0
    %2887 = vmatprep.subr.bf16.mxu0 0
    %2888 = vmatpush1.bf16.msra.mxu0 0
    %2889 = vmatprep.subr.bf16.mxu0 0
    %2890 = vmatpush1.bf16.msra.mxu0 0
    %2891 = vmatprep.subr.bf16.mxu0 0
    %2892 = vmatpush1.bf16.msra.mxu0 0
    %2893 = vmatprep.subr.bf16.mxu0 0
    %2894 = vmatpush1.bf16.msra.mxu0 0
    %2895 = vmatprep.subr.bf16.mxu0 0
    %2896 = vmatpush1.bf16.msra.mxu0 0
    %2897 = vmatprep.subr.bf16.mxu0 0
    %2898 = vmatpush1.bf16.msra.mxu0 0
    %2899 = vmatprep.subr.bf16.mxu0 0
    %2900 = vmatpush1.bf16.msra.mxu0 0
    %2901 = vmatprep.mubr.bf16.mxu0 0
    %2902 = vmatmul.mubr.bf16.gmra.mrb[0].mxu0 %v2733
    %v2903 = vpop.f32.mrb[0].mxu0
    %v2904 = vadd.f32 %v248, %v2903
    %v2905 = vpop.f32.mrb[0].mxu0
    %v2906 = vpop.f32.mrb[0].mxu0
    %v2907 = vpop.f32.mrb[0].mxu0
    %2908 = vdwg.mxu0
    %2909 = vmatprep.subr.bf16.mxu0 0
    %2910 = vmatpush1.bf16.msra.mxu0 %v1305
    %2911 = vmatprep.subr.bf16.mxu0 0
    %2912 = vmatpush1.bf16.msra.mxu0 %v1306
    %2913 = vmatprep.subr.bf16.mxu0 0
    %2914 = vmatpush1.bf16.msra.mxu0 0
    %2915 = vmatprep.subr.bf16.mxu0 0
    %2916 = vmatpush1.bf16.msra.mxu0 0
    %2917 = vmatprep.subr.bf16.mxu0 0
    %2918 = vmatpush1.bf16.msra.mxu0 0
    %2919 = vmatprep.subr.bf16.mxu0 0
    %2920 = vmatpush1.bf16.msra.mxu0 0
    %2921 = vmatprep.subr.bf16.mxu0 0
    %2922 = vmatpush1.bf16.msra.mxu0 0
    %2923 = vmatprep.subr.bf16.mxu0 0
    %2924 = vmatpush1.bf16.msra.mxu0 0
    %2925 = vmatprep.subr.bf16.mxu0 0
    %2926 = vmatpush1.bf16.msra.mxu0 0
    %2927 = vmatprep.subr.bf16.mxu0 0
    %2928 = vmatpush1.bf16.msra.mxu0 0
    %2929 = vmatprep.subr.bf16.mxu0 0
    %2930 = vmatpush1.bf16.msra.mxu0 0
    %2931 = vmatprep.subr.bf16.mxu0 0
    %2932 = vmatpush1.bf16.msra.mxu0 0
    %2933 = vmatprep.subr.bf16.mxu0 0
    %2934 = vmatpush1.bf16.msra.mxu0 0
    %2935 = vmatprep.subr.bf16.mxu0 0
    %2936 = vmatpush1.bf16.msra.mxu0 0
    %2937 = vmatprep.subr.bf16.mxu0 0
    %2938 = vmatpush1.bf16.msra.mxu0 0
    %2939 = vmatprep.subr.bf16.mxu0 0
    %2940 = vmatpush1.bf16.msra.mxu0 0
    %2941 = vmatprep.mubr.bf16.mxu0 0
    %2942 = vmatmul.mubr.bf16.gmra.mrb[0].mxu0 %v2690
    %v2943 = vpop.f32.mrb[0].mxu0
    %v2944 = vadd.f32 %v256, %v2943
    %v2945 = vpop.f32.mrb[0].mxu0
    %v2946 = vpop.f32.mrb[0].mxu0
    %v2947 = vpop.f32.mrb[0].mxu0
    %2948 = vdwg.mxu0
    %v2949 = vmul.f32 %v2781, %v2944
    %v2950 = vadd.f32 %v2904, %v2949
    %v2951 = vtanh.pop %v2950
    %v2952 = vsub.f32 1.0, %v2868
    %v2953 = vmul.f32 %v2952, %v2951
    %v2954 = vmul.f32 %v2868, %v2155
    %v2955 = vadd.f32 %v2953, %v2954
    %s2956 = scalar_lea.vmem [#allocation2], 3
    %v2957 = vld [vmem:[%s2956] sm:$0x1]
    %2958 = vmatprep.subr.bf16.mxu0 0
    %2959 = vmatpush1.bf16.msra.mxu0 %v274
    %2960 = vmatprep.subr.bf16.mxu0 0
    %2961 = vmatpush1.bf16.msra.mxu0 %v275
    %2962 = vmatprep.subr.bf16.mxu0 0
    %2963 = vmatpush1.bf16.msra.mxu0 0
    %2964 = vmatprep.subr.bf16.mxu0 0
    %2965 = vmatpush1.bf16.msra.mxu0 0
    %2966 = vmatprep.subr.bf16.mxu0 0
    %2967 = vmatpush1.bf16.msra.mxu0 0
    %2968 = vmatprep.subr.bf16.mxu0 0
    %2969 = vmatpush1.bf16.msra.mxu0 0
    %2970 = vmatprep.subr.bf16.mxu0 0
    %2971 = vmatpush1.bf16.msra.mxu0 0
    %2972 = vmatprep.subr.bf16.mxu0 0
    %2973 = vmatpush1.bf16.msra.mxu0 0
    %2974 = vmatprep.subr.bf16.mxu0 0
    %2975 = vmatpush1.bf16.msra.mxu0 0
    %2976 = vmatprep.subr.bf16.mxu0 0
    %2977 = vmatpush1.bf16.msra.mxu0 0
    %2978 = vmatprep.subr.bf16.mxu0 0
    %2979 = vmatpush1.bf16.msra.mxu0 0
    %2980 = vmatprep.subr.bf16.mxu0 0
    %2981 = vmatpush1.bf16.msra.mxu0 0
    %2982 = vmatprep.subr.bf16.mxu0 0
    %2983 = vmatpush1.bf16.msra.mxu0 0
    %2984 = vmatprep.subr.bf16.mxu0 0
    %2985 = vmatpush1.bf16.msra.mxu0 0
    %2986 = vmatprep.subr.bf16.mxu0 0
    %2987 = vmatpush1.bf16.msra.mxu0 0
    %2988 = vmatprep.subr.bf16.mxu0 0
    %2989 = vmatpush1.bf16.msra.mxu0 0
    %2990 = vmatprep.mubr.bf16.mxu0 0
    %2991 = vmatmul.mubr.bf16.gmra.mrb[0].mxu0 %v2464
    %v2992 = vpop.f32.mrb[0].mxu0
    %v2993 = vadd.f32 0.0, %v2992
    %v2994 = vpop.f32.mrb[0].mxu0
    %v2995 = vpop.f32.mrb[0].mxu0
    %v2996 = vpop.f32.mrb[0].mxu0
    %2997 = vdwg.mxu0
    %v2999 = vsel %vm331, %v2957, 0
    %3001 = vmatprep.subr.bf16.mxu0 0
    %3002 = vmatpush1.bf16.msra.mxu0 %v328
    %3003 = vmatprep.subr.bf16.mxu0 0
    %3004 = vmatpush1.bf16.msra.mxu0 %v337
    %3005 = vmatprep.subr.bf16.mxu0 0
    %3006 = vmatpush1.bf16.msra.mxu0 0
    %3007 = vmatprep.subr.bf16.mxu0 0
    %3008 = vmatpush1.bf16.msra.mxu0 0
    %3009 = vmatprep.subr.bf16.mxu0 0
    %3010 = vmatpush1.bf16.msra.mxu0 0
    %3011 = vmatprep.subr.bf16.mxu0 0
    %3012 = vmatpush1.bf16.msra.mxu0 0
    %3013 = vmatprep.subr.bf16.mxu0 0
    %3014 = vmatpush1.bf16.msra.mxu0 0
    %3015 = vmatprep.subr.bf16.mxu0 0
    %3016 = vmatpush1.bf16.msra.mxu0 0
    %3017 = vmatprep.subr.bf16.mxu0 0
    %3018 = vmatpush1.bf16.msra.mxu0 0
    %3019 = vmatprep.subr.bf16.mxu0 0
    %3020 = vmatpush1.bf16.msra.mxu0 0
    %3021 = vmatprep.subr.bf16.mxu0 0
    %3022 = vmatpush1.bf16.msra.mxu0 0
    %3023 = vmatprep.subr.bf16.mxu0 0
    %3024 = vmatpush1.bf16.msra.mxu0 0
    %3025 = vmatprep.subr.bf16.mxu0 0
    %3026 = vmatpush1.bf16.msra.mxu0 0
    %3027 = vmatprep.subr.bf16.mxu0 0
    %3028 = vmatpush1.bf16.msra.mxu0 0
    %3029 = vmatprep.subr.bf16.mxu0 0
    %3030 = vmatpush1.bf16.msra.mxu0 0
    %3031 = vmatprep.subr.bf16.mxu0 0
    %3032 = vmatpush1.bf16.msra.mxu0 0
    %3033 = vmatprep.mubr.bf16.mxu0 0
    %3034 = vmatmul.mubr.bf16.gmra.mrb[0].mxu0 %v2999
    %v3035 = vpop.f32.mrb[0].mxu0
    %v3036 = vadd.f32 %v2993, %v3035
    %v3037 = vpop.f32.mrb[0].mxu0
    %v3038 = vpop.f32.mrb[0].mxu0
    %v3039 = vpop.f32.mrb[0].mxu0
    %3040 = vdwg.mxu0
    %v3041 = vadd.f32 %v3036, %v170
    %v3042 = vxor.u32 %v3041, 2147483648
    %v3043 = vmul.f32 %v3042, 1.442695
    %v3044 = vpow.pop %v3043
    %v3045 = vadd.f32 %v3044, 1.0
    %v3046 = vrcp.pop %v3045
    %v3047 = vmul.f32 1.0, %v3046
    %3048 = vmatprep.subr.bf16.mxu0 0
    %3049 = vmatpush1.bf16.msra.mxu0 %v403
    %3050 = vmatprep.subr.bf16.mxu0 0
    %3051 = vmatpush1.bf16.msra.mxu0 %v404
    %3052 = vmatprep.subr.bf16.mxu0 0
    %3053 = vmatpush1.bf16.msra.mxu0 0
    %3054 = vmatprep.subr.bf16.mxu0 0
    %3055 = vmatpush1.bf16.msra.mxu0 0
    %3056 = vmatprep.subr.bf16.mxu0 0
    %3057 = vmatpush1.bf16.msra.mxu0 0
    %3058 = vmatprep.subr.bf16.mxu0 0
    %3059 = vmatpush1.bf16.msra.mxu0 0
    %3060 = vmatprep.subr.bf16.mxu0 0
    %3061 = vmatpush1.bf16.msra.mxu0 0
    %3062 = vmatprep.subr.bf16.mxu0 0
    %3063 = vmatpush1.bf16.msra.mxu0 0
    %3064 = vmatprep.subr.bf16.mxu0 0
    %3065 = vmatpush1.bf16.msra.mxu0 0
    %3066 = vmatprep.subr.bf16.mxu0 0
    %3067 = vmatpush1.bf16.msra.mxu0 0
    %3068 = vmatprep.subr.bf16.mxu0 0
    %3069 = vmatpush1.bf16.msra.mxu0 0
    %3070 = vmatprep.subr.bf16.mxu0 0
    %3071 = vmatpush1.bf16.msra.mxu0 0
    %3072 = vmatprep.subr.bf16.mxu0 0
    %3073 = vmatpush1.bf16.msra.mxu0 0
    %3074 = vmatprep.subr.bf16.mxu0 0
    %3075 = vmatpush1.bf16.msra.mxu0 0
    %3076 = vmatprep.subr.bf16.mxu0 0
    %3077 = vmatpush1.bf16.msra.mxu0 0
    %3078 = vmatprep.subr.bf16.mxu0 0
    %3079 = vmatpush1.bf16.msra.mxu0 0
    %3080 = vmatprep.mubr.bf16.mxu0 0
    %3081 = vmatmul.mubr.bf16.gmra.mrb[0].mxu0 %v2464
    %v3082 = vpop.f32.mrb[0].mxu0
    %v3083 = vadd.f32 0.0, %v3082
    %v3084 = vpop.f32.mrb[0].mxu0
    %v3085 = vpop.f32.mrb[0].mxu0
    %v3086 = vpop.f32.mrb[0].mxu0
    %3087 = vdwg.mxu0
    %3088 = vmatprep.subr.bf16.mxu0 0
    %3089 = vmatpush1.bf16.msra.mxu0 %v453
    %3090 = vmatprep.subr.bf16.mxu0 0
    %3091 = vmatpush1.bf16.msra.mxu0 %v457
    %3092 = vmatprep.subr.bf16.mxu0 0
    %3093 = vmatpush1.bf16.msra.mxu0 0
    %3094 = vmatprep.subr.bf16.mxu0 0
    %3095 = vmatpush1.bf16.msra.mxu0 0
    %3096 = vmatprep.subr.bf16.mxu0 0
    %3097 = vmatpush1.bf16.msra.mxu0 0
    %3098 = vmatprep.subr.bf16.mxu0 0
    %3099 = vmatpush1.bf16.msra.mxu0 0
    %3100 = vmatprep.subr.bf16.mxu0 0
    %3101 = vmatpush1.bf16.msra.mxu0 0
    %3102 = vmatprep.subr.bf16.mxu0 0
    %3103 = vmatpush1.bf16.msra.mxu0 0
    %3104 = vmatprep.subr.bf16.mxu0 0
    %3105 = vmatpush1.bf16.msra.mxu0 0
    %3106 = vmatprep.subr.bf16.mxu0 0
    %3107 = vmatpush1.bf16.msra.mxu0 0
    %3108 = vmatprep.subr.bf16.mxu0 0
    %3109 = vmatpush1.bf16.msra.mxu0 0
    %3110 = vmatprep.subr.bf16.mxu0 0
    %3111 = vmatpush1.bf16.msra.mxu0 0
    %3112 = vmatprep.subr.bf16.mxu0 0
    %3113 = vmatpush1.bf16.msra.mxu0 0
    %3114 = vmatprep.subr.bf16.mxu0 0
    %3115 = vmatpush1.bf16.msra.mxu0 0
    %3116 = vmatprep.subr.bf16.mxu0 0
    %3117 = vmatpush1.bf16.msra.mxu0 0
    %3118 = vmatprep.subr.bf16.mxu0 0
    %3119 = vmatpush1.bf16.msra.mxu0 0
    %3120 = vmatprep.mubr.bf16.mxu0 0
    %3121 = vmatmul.mubr.bf16.gmra.mrb[0].mxu0 %v2999
    %v3122 = vpop.f32.mrb[0].mxu0
    %v3123 = vadd.f32 %v3083, %v3122
    %v3124 = vpop.f32.mrb[0].mxu0
    %v3125 = vpop.f32.mrb[0].mxu0
    %v3126 = vpop.f32.mrb[0].mxu0
    %3127 = vdwg.mxu0
    %v3128 = vadd.f32 %v3123, %v178
    %v3129 = vxor.u32 %v3128, 2147483648
    %v3130 = vmul.f32 %v3129, 1.442695
    %v3131 = vpow.pop %v3130
    %v3132 = vadd.f32 %v3131, 1.0
    %v3133 = vrcp.pop %v3132
    %v3134 = vmul.f32 1.0, %v3133
    %3135 = vmatprep.subr.bf16.mxu0 0
    %3136 = vmatpush1.bf16.msra.mxu0 %v516
    %3137 = vmatprep.subr.bf16.mxu0 0
    %3138 = vmatpush1.bf16.msra.mxu0 %v520
    %3139 = vmatprep.subr.bf16.mxu0 0
    %3140 = vmatpush1.bf16.msra.mxu0 0
    %3141 = vmatprep.subr.bf16.mxu0 0
    %3142 = vmatpush1.bf16.msra.mxu0 0
    %3143 = vmatprep.subr.bf16.mxu0 0
    %3144 = vmatpush1.bf16.msra.mxu0 0
    %3145 = vmatprep.subr.bf16.mxu0 0
    %3146 = vmatpush1.bf16.msra.mxu0 0
    %3147 = vmatprep.subr.bf16.mxu0 0
    %3148 = vmatpush1.bf16.msra.mxu0 0
    %3149 = vmatprep.subr.bf16.mxu0 0
    %3150 = vmatpush1.bf16.msra.mxu0 0
    %3151 = vmatprep.subr.bf16.mxu0 0
    %3152 = vmatpush1.bf16.msra.mxu0 0
    %3153 = vmatprep.subr.bf16.mxu0 0
    %3154 = vmatpush1.bf16.msra.mxu0 0
    %3155 = vmatprep.subr.bf16.mxu0 0
    %3156 = vmatpush1.bf16.msra.mxu0 0
    %3157 = vmatprep.subr.bf16.mxu0 0
    %3158 = vmatpush1.bf16.msra.mxu0 0
    %3159 = vmatprep.subr.bf16.mxu0 0
    %3160 = vmatpush1.bf16.msra.mxu0 0
    %3161 = vmatprep.subr.bf16.mxu0 0
    %3162 = vmatpush1.bf16.msra.mxu0 0
    %3163 = vmatprep.subr.bf16.mxu0 0
    %3164 = vmatpush1.bf16.msra.mxu0 0
    %3165 = vmatprep.subr.bf16.mxu0 0
    %3166 = vmatpush1.bf16.msra.mxu0 0
    %3167 = vmatprep.mubr.bf16.mxu0 0
    %3168 = vmatmul.mubr.bf16.gmra.mrb[0].mxu0 %v2999
    %v3169 = vpop.f32.mrb[0].mxu0
    %v3170 = vadd.f32 %v186, %v3169
    %v3171 = vpop.f32.mrb[0].mxu0
    %v3172 = vpop.f32.mrb[0].mxu0
    %v3173 = vpop.f32.mrb[0].mxu0
    %3174 = vdwg.mxu0
    %3175 = vmatprep.subr.bf16.mxu0 0
    %3176 = vmatpush1.bf16.msra.mxu0 %v575
    %3177 = vmatprep.subr.bf16.mxu0 0
    %3178 = vmatpush1.bf16.msra.mxu0 %v576
    %3179 = vmatprep.subr.bf16.mxu0 0
    %3180 = vmatpush1.bf16.msra.mxu0 0
    %3181 = vmatprep.subr.bf16.mxu0 0
    %3182 = vmatpush1.bf16.msra.mxu0 0
    %3183 = vmatprep.subr.bf16.mxu0 0
    %3184 = vmatpush1.bf16.msra.mxu0 0
    %3185 = vmatprep.subr.bf16.mxu0 0
    %3186 = vmatpush1.bf16.msra.mxu0 0
    %3187 = vmatprep.subr.bf16.mxu0 0
    %3188 = vmatpush1.bf16.msra.mxu0 0
    %3189 = vmatprep.subr.bf16.mxu0 0
    %3190 = vmatpush1.bf16.msra.mxu0 0
    %3191 = vmatprep.subr.bf16.mxu0 0
    %3192 = vmatpush1.bf16.msra.mxu0 0
    %3193 = vmatprep.subr.bf16.mxu0 0
    %3194 = vmatpush1.bf16.msra.mxu0 0
    %3195 = vmatprep.subr.bf16.mxu0 0
    %3196 = vmatpush1.bf16.msra.mxu0 0
    %3197 = vmatprep.subr.bf16.mxu0 0
    %3198 = vmatpush1.bf16.msra.mxu0 0
    %3199 = vmatprep.subr.bf16.mxu0 0
    %3200 = vmatpush1.bf16.msra.mxu0 0
    %3201 = vmatprep.subr.bf16.mxu0 0
    %3202 = vmatpush1.bf16.msra.mxu0 0
    %3203 = vmatprep.subr.bf16.mxu0 0
    %3204 = vmatpush1.bf16.msra.mxu0 0
    %3205 = vmatprep.subr.bf16.mxu0 0
    %3206 = vmatpush1.bf16.msra.mxu0 0
    %3207 = vmatprep.mubr.bf16.mxu0 0
    %3208 = vmatmul.mubr.bf16.gmra.mrb[0].mxu0 %v2464
    %v3209 = vpop.f32.mrb[0].mxu0
    %v3210 = vadd.f32 %v194, %v3209
    %v3211 = vpop.f32.mrb[0].mxu0
    %v3212 = vpop.f32.mrb[0].mxu0
    %v3213 = vpop.f32.mrb[0].mxu0
    %3214 = vdwg.mxu0
    %v3215 = vmul.f32 %v3047, %v3210
    %v3216 = vadd.f32 %v3170, %v3215
    %v3217 = vtanh.pop %v3216
    %v3218 = vsub.f32 1.0, %v3134
    %v3219 = vmul.f32 %v3218, %v3217
    %v3220 = vmul.f32 %v3134, %v2421
    %v3221 = vadd.f32 %v3219, %v3220
    %v3222 = vpack.c.bf16 %v3221, %v3221
    %3223 = vmatprep.subr.bf16.mxu0 0
    %3224 = vmatpush1.bf16.msra.mxu0 %v643
    %3225 = vmatprep.subr.bf16.mxu0 0
    %3226 = vmatpush1.bf16.msra.mxu0 %v644
    %3227 = vmatprep.subr.bf16.mxu0 0
    %3228 = vmatpush1.bf16.msra.mxu0 0
    %3229 = vmatprep.subr.bf16.mxu0 0
    %3230 = vmatpush1.bf16.msra.mxu0 0
    %3231 = vmatprep.subr.bf16.mxu0 0
    %3232 = vmatpush1.bf16.msra.mxu0 0
    %3233 = vmatprep.subr.bf16.mxu0 0
    %3234 = vmatpush1.bf16.msra.mxu0 0
    %3235 = vmatprep.subr.bf16.mxu0 0
    %3236 = vmatpush1.bf16.msra.mxu0 0
    %3237 = vmatprep.subr.bf16.mxu0 0
    %3238 = vmatpush1.bf16.msra.mxu0 0
    %3239 = vmatprep.subr.bf16.mxu0 0
    %3240 = vmatpush1.bf16.msra.mxu0 0
    %3241 = vmatprep.subr.bf16.mxu0 0
    %3242 = vmatpush1.bf16.msra.mxu0 0
    %3243 = vmatprep.subr.bf16.mxu0 0
    %3244 = vmatpush1.bf16.msra.mxu0 0
    %3245 = vmatprep.subr.bf16.mxu0 0
    %3246 = vmatpush1.bf16.msra.mxu0 0
    %3247 = vmatprep.subr.bf16.mxu0 0
    %3248 = vmatpush1.bf16.msra.mxu0 0
    %3249 = vmatprep.subr.bf16.mxu0 0
    %3250 = vmatpush1.bf16.msra.mxu0 0
    %3251 = vmatprep.subr.bf16.mxu0 0
    %3252 = vmatpush1.bf16.msra.mxu0 0
    %3253 = vmatprep.subr.bf16.mxu0 0
    %3254 = vmatpush1.bf16.msra.mxu0 0
    %3255 = vmatprep.mubr.bf16.mxu0 0
    %3256 = vmatmul.mubr.bf16.gmra.mrb[0].mxu0 %v2733
    %v3257 = vpop.f32.mrb[0].mxu0
    %v3258 = vadd.f32 0.0, %v3257
    %v3259 = vpop.f32.mrb[0].mxu0
    %v3260 = vpop.f32.mrb[0].mxu0
    %v3261 = vpop.f32.mrb[0].mxu0
    %3262 = vdwg.mxu0
    %v3264 = vsel %vm278, %v3222, 0
    %3266 = vmatprep.subr.bf16.mxu0 0
    %3267 = vmatpush1.bf16.msra.mxu0 %v695
    %3268 = vmatprep.subr.bf16.mxu0 0
    %3269 = vmatpush1.bf16.msra.mxu0 %v696
    %3270 = vmatprep.subr.bf16.mxu0 0
    %3271 = vmatpush1.bf16.msra.mxu0 0
    %3272 = vmatprep.subr.bf16.mxu0 0
    %3273 = vmatpush1.bf16.msra.mxu0 0
    %3274 = vmatprep.subr.bf16.mxu0 0
    %3275 = vmatpush1.bf16.msra.mxu0 0
    %3276 = vmatprep.subr.bf16.mxu0 0
    %3277 = vmatpush1.bf16.msra.mxu0 0
    %3278 = vmatprep.subr.bf16.mxu0 0
    %3279 = vmatpush1.bf16.msra.mxu0 0
    %3280 = vmatprep.subr.bf16.mxu0 0
    %3281 = vmatpush1.bf16.msra.mxu0 0
    %3282 = vmatprep.subr.bf16.mxu0 0
    %3283 = vmatpush1.bf16.msra.mxu0 0
    %3284 = vmatprep.subr.bf16.mxu0 0
    %3285 = vmatpush1.bf16.msra.mxu0 0
    %3286 = vmatprep.subr.bf16.mxu0 0
    %3287 = vmatpush1.bf16.msra.mxu0 0
    %3288 = vmatprep.subr.bf16.mxu0 0
    %3289 = vmatpush1.bf16.msra.mxu0 0
    %3290 = vmatprep.subr.bf16.mxu0 0
    %3291 = vmatpush1.bf16.msra.mxu0 0
    %3292 = vmatprep.subr.bf16.mxu0 0
    %3293 = vmatpush1.bf16.msra.mxu0 0
    %3294 = vmatprep.subr.bf16.mxu0 0
    %3295 = vmatpush1.bf16.msra.mxu0 0
    %3296 = vmatprep.subr.bf16.mxu0 0
    %3297 = vmatpush1.bf16.msra.mxu0 0
    %3298 = vmatprep.mubr.bf16.mxu0 0
    %3299 = vmatmul.mubr.bf16.gmra.mrb[0].mxu0 %v3264
    %v3300 = vpop.f32.mrb[0].mxu0
    %v3301 = vadd.f32 %v3258, %v3300
    %v3302 = vpop.f32.mrb[0].mxu0
    %v3303 = vpop.f32.mrb[0].mxu0
    %v3304 = vpop.f32.mrb[0].mxu0
    %3305 = vdwg.mxu0
    %v3306 = vadd.f32 %v3301, %v201
    %v3307 = vxor.u32 %v3306, 2147483648
    %v3308 = vmul.f32 %v3307, 1.442695
    %v3309 = vpow.pop %v3308
    %v3310 = vadd.f32 %v3309, 1.0
    %v3311 = vrcp.pop %v3310
    %v3312 = vmul.f32 1.0, %v3311
    %3313 = vmatprep.subr.bf16.mxu0 0
    %3314 = vmatpush1.bf16.msra.mxu0 %v767
    %3315 = vmatprep.subr.bf16.mxu0 0
    %3316 = vmatpush1.bf16.msra.mxu0 %v768
    %3317 = vmatprep.subr.bf16.mxu0 0
    %3318 = vmatpush1.bf16.msra.mxu0 0
    %3319 = vmatprep.subr.bf16.mxu0 0
    %3320 = vmatpush1.bf16.msra.mxu0 0
    %3321 = vmatprep.subr.bf16.mxu0 0
    %3322 = vmatpush1.bf16.msra.mxu0 0
    %3323 = vmatprep.subr.bf16.mxu0 0
    %3324 = vmatpush1.bf16.msra.mxu0 0
    %3325 = vmatprep.subr.bf16.mxu0 0
    %3326 = vmatpush1.bf16.msra.mxu0 0
    %3327 = vmatprep.subr.bf16.mxu0 0
    %3328 = vmatpush1.bf16.msra.mxu0 0
    %3329 = vmatprep.subr.bf16.mxu0 0
    %3330 = vmatpush1.bf16.msra.mxu0 0
    %3331 = vmatprep.subr.bf16.mxu0 0
    %3332 = vmatpush1.bf16.msra.mxu0 0
    %3333 = vmatprep.subr.bf16.mxu0 0
    %3334 = vmatpush1.bf16.msra.mxu0 0
    %3335 = vmatprep.subr.bf16.mxu0 0
    %3336 = vmatpush1.bf16.msra.mxu0 0
    %3337 = vmatprep.subr.bf16.mxu0 0
    %3338 = vmatpush1.bf16.msra.mxu0 0
    %3339 = vmatprep.subr.bf16.mxu0 0
    %3340 = vmatpush1.bf16.msra.mxu0 0
    %3341 = vmatprep.subr.bf16.mxu0 0
    %3342 = vmatpush1.bf16.msra.mxu0 0
    %3343 = vmatprep.subr.bf16.mxu0 0
    %3344 = vmatpush1.bf16.msra.mxu0 0
    %3345 = vmatprep.mubr.bf16.mxu0 0
    %3346 = vmatmul.mubr.bf16.gmra.mrb[0].mxu0 %v2733
    %v3347 = vpop.f32.mrb[0].mxu0
    %v3348 = vadd.f32 0.0, %v3347
    %v3349 = vpop.f32.mrb[0].mxu0
    %v3350 = vpop.f32.mrb[0].mxu0
    %v3351 = vpop.f32.mrb[0].mxu0
    %3352 = vdwg.mxu0
    %3353 = vmatprep.subr.bf16.mxu0 0
    %3354 = vmatpush1.bf16.msra.mxu0 %v819
    %3355 = vmatprep.subr.bf16.mxu0 0
    %3356 = vmatpush1.bf16.msra.mxu0 %v820
    %3357 = vmatprep.subr.bf16.mxu0 0
    %3358 = vmatpush1.bf16.msra.mxu0 0
    %3359 = vmatprep.subr.bf16.mxu0 0
    %3360 = vmatpush1.bf16.msra.mxu0 0
    %3361 = vmatprep.subr.bf16.mxu0 0
    %3362 = vmatpush1.bf16.msra.mxu0 0
    %3363 = vmatprep.subr.bf16.mxu0 0
    %3364 = vmatpush1.bf16.msra.mxu0 0
    %3365 = vmatprep.subr.bf16.mxu0 0
    %3366 = vmatpush1.bf16.msra.mxu0 0
    %3367 = vmatprep.subr.bf16.mxu0 0
    %3368 = vmatpush1.bf16.msra.mxu0 0
    %3369 = vmatprep.subr.bf16.mxu0 0
    %3370 = vmatpush1.bf16.msra.mxu0 0
    %3371 = vmatprep.subr.bf16.mxu0 0
    %3372 = vmatpush1.bf16.msra.mxu0 0
    %3373 = vmatprep.subr.bf16.mxu0 0
    %3374 = vmatpush1.bf16.msra.mxu0 0
    %3375 = vmatprep.subr.bf16.mxu0 0
    %3376 = vmatpush1.bf16.msra.mxu0 0
    %3377 = vmatprep.subr.bf16.mxu0 0
    %3378 = vmatpush1.bf16.msra.mxu0 0
    %3379 = vmatprep.subr.bf16.mxu0 0
    %3380 = vmatpush1.bf16.msra.mxu0 0
    %3381 = vmatprep.subr.bf16.mxu0 0
    %3382 = vmatpush1.bf16.msra.mxu0 0
    %3383 = vmatprep.subr.bf16.mxu0 0
    %3384 = vmatpush1.bf16.msra.mxu0 0
    %3385 = vmatprep.mubr.bf16.mxu0 0
    %3386 = vmatmul.mubr.bf16.gmra.mrb[0].mxu0 %v3264
    %v3387 = vpop.f32.mrb[0].mxu0
    %v3388 = vadd.f32 %v3348, %v3387
    %v3389 = vpop.f32.mrb[0].mxu0
    %v3390 = vpop.f32.mrb[0].mxu0
    %v3391 = vpop.f32.mrb[0].mxu0
    %3392 = vdwg.mxu0
    %v3393 = vadd.f32 %v3388, %v209
    %v3394 = vxor.u32 %v3393, 2147483648
    %v3395 = vmul.f32 %v3394, 1.442695
    %v3396 = vpow.pop %v3395
    %v3397 = vadd.f32 %v3396, 1.0
    %v3398 = vrcp.pop %v3397
    %v3399 = vmul.f32 1.0, %v3398
    %3400 = vmatprep.subr.bf16.mxu0 0
    %3401 = vmatpush1.bf16.msra.mxu0 %v883
    %3402 = vmatprep.subr.bf16.mxu0 0
    %3403 = vmatpush1.bf16.msra.mxu0 %v884
    %3404 = vmatprep.subr.bf16.mxu0 0
    %3405 = vmatpush1.bf16.msra.mxu0 0
    %3406 = vmatprep.subr.bf16.mxu0 0
    %3407 = vmatpush1.bf16.msra.mxu0 0
    %3408 = vmatprep.subr.bf16.mxu0 0
    %3409 = vmatpush1.bf16.msra.mxu0 0
    %3410 = vmatprep.subr.bf16.mxu0 0
    %3411 = vmatpush1.bf16.msra.mxu0 0
    %3412 = vmatprep.subr.bf16.mxu0 0
    %3413 = vmatpush1.bf16.msra.mxu0 0
    %3414 = vmatprep.subr.bf16.mxu0 0
    %3415 = vmatpush1.bf16.msra.mxu0 0
    %3416 = vmatprep.subr.bf16.mxu0 0
    %3417 = vmatpush1.bf16.msra.mxu0 0
    %3418 = vmatprep.subr.bf16.mxu0 0
    %3419 = vmatpush1.bf16.msra.mxu0 0
    %3420 = vmatprep.subr.bf16.mxu0 0
    %3421 = vmatpush1.bf16.msra.mxu0 0
    %3422 = vmatprep.subr.bf16.mxu0 0
    %3423 = vmatpush1.bf16.msra.mxu0 0
    %3424 = vmatprep.subr.bf16.mxu0 0
    %3425 = vmatpush1.bf16.msra.mxu0 0
    %3426 = vmatprep.subr.bf16.mxu0 0
    %3427 = vmatpush1.bf16.msra.mxu0 0
    %3428 = vmatprep.subr.bf16.mxu0 0
    %3429 = vmatpush1.bf16.msra.mxu0 0
    %3430 = vmatprep.subr.bf16.mxu0 0
    %3431 = vmatpush1.bf16.msra.mxu0 0
    %3432 = vmatprep.mubr.bf16.mxu0 0
    %3433 = vmatmul.mubr.bf16.gmra.mrb[0].mxu0 %v3264
    %v3434 = vpop.f32.mrb[0].mxu0
    %v3435 = vadd.f32 %v217, %v3434
    %v3436 = vpop.f32.mrb[0].mxu0
    %v3437 = vpop.f32.mrb[0].mxu0
    %v3438 = vpop.f32.mrb[0].mxu0
    %3439 = vdwg.mxu0
    %3440 = vmatprep.subr.bf16.mxu0 0
    %3441 = vmatpush1.bf16.msra.mxu0 %v940
    %3442 = vmatprep.subr.bf16.mxu0 0
    %3443 = vmatpush1.bf16.msra.mxu0 %v941
    %3444 = vmatprep.subr.bf16.mxu0 0
    %3445 = vmatpush1.bf16.msra.mxu0 0
    %3446 = vmatprep.subr.bf16.mxu0 0
    %3447 = vmatpush1.bf16.msra.mxu0 0
    %3448 = vmatprep.subr.bf16.mxu0 0
    %3449 = vmatpush1.bf16.msra.mxu0 0
    %3450 = vmatprep.subr.bf16.mxu0 0
    %3451 = vmatpush1.bf16.msra.mxu0 0
    %3452 = vmatprep.subr.bf16.mxu0 0
    %3453 = vmatpush1.bf16.msra.mxu0 0
    %3454 = vmatprep.subr.bf16.mxu0 0
    %3455 = vmatpush1.bf16.msra.mxu0 0
    %3456 = vmatprep.subr.bf16.mxu0 0
    %3457 = vmatpush1.bf16.msra.mxu0 0
    %3458 = vmatprep.subr.bf16.mxu0 0
    %3459 = vmatpush1.bf16.msra.mxu0 0
    %3460 = vmatprep.subr.bf16.mxu0 0
    %3461 = vmatpush1.bf16.msra.mxu0 0
    %3462 = vmatprep.subr.bf16.mxu0 0
    %3463 = vmatpush1.bf16.msra.mxu0 0
    %3464 = vmatprep.subr.bf16.mxu0 0
    %3465 = vmatpush1.bf16.msra.mxu0 0
    %3466 = vmatprep.subr.bf16.mxu0 0
    %3467 = vmatpush1.bf16.msra.mxu0 0
    %3468 = vmatprep.subr.bf16.mxu0 0
    %3469 = vmatpush1.bf16.msra.mxu0 0
    %3470 = vmatprep.subr.bf16.mxu0 0
    %3471 = vmatpush1.bf16.msra.mxu0 0
    %3472 = vmatprep.mubr.bf16.mxu0 0
    %3473 = vmatmul.mubr.bf16.gmra.mrb[0].mxu0 %v2733
    %v3474 = vpop.f32.mrb[0].mxu0
    %v3475 = vadd.f32 %v225, %v3474
    %v3476 = vpop.f32.mrb[0].mxu0
    %v3477 = vpop.f32.mrb[0].mxu0
    %v3478 = vpop.f32.mrb[0].mxu0
    %3479 = vdwg.mxu0
    %v3480 = vmul.f32 %v3312, %v3475
    %v3481 = vadd.f32 %v3435, %v3480
    %v3482 = vtanh.pop %v3481
    %v3483 = vsub.f32 1.0, %v3399
    %v3484 = vmul.f32 %v3483, %v3482
    %v3485 = vmul.f32 %v3399, %v2686
    %v3486 = vadd.f32 %v3484, %v3485
    %v3487 = vpack.c.bf16 %v3486, %v3486
    %v3488 = vpack.c.bf16 %v2955, %v2955
    %v3490 = vsel %vm278, %v3488, 0
    %3492 = vmatprep.subr.bf16.mxu0 0
    %3493 = vmatpush1.bf16.msra.mxu0 %v1008
    %3494 = vmatprep.subr.bf16.mxu0 0
    %3495 = vmatpush1.bf16.msra.mxu0 %v1009
    %3496 = vmatprep.subr.bf16.mxu0 0
    %3497 = vmatpush1.bf16.msra.mxu0 0
    %3498 = vmatprep.subr.bf16.mxu0 0
    %3499 = vmatpush1.bf16.msra.mxu0 0
    %3500 = vmatprep.subr.bf16.mxu0 0
    %3501 = vmatpush1.bf16.msra.mxu0 0
    %3502 = vmatprep.subr.bf16.mxu0 0
    %3503 = vmatpush1.bf16.msra.mxu0 0
    %3504 = vmatprep.subr.bf16.mxu0 0
    %3505 = vmatpush1.bf16.msra.mxu0 0
    %3506 = vmatprep.subr.bf16.mxu0 0
    %3507 = vmatpush1.bf16.msra.mxu0 0
    %3508 = vmatprep.subr.bf16.mxu0 0
    %3509 = vmatpush1.bf16.msra.mxu0 0
    %3510 = vmatprep.subr.bf16.mxu0 0
    %3511 = vmatpush1.bf16.msra.mxu0 0
    %3512 = vmatprep.subr.bf16.mxu0 0
    %3513 = vmatpush1.bf16.msra.mxu0 0
    %3514 = vmatprep.subr.bf16.mxu0 0
    %3515 = vmatpush1.bf16.msra.mxu0 0
    %3516 = vmatprep.subr.bf16.mxu0 0
    %3517 = vmatpush1.bf16.msra.mxu0 0
    %3518 = vmatprep.subr.bf16.mxu0 0
    %3519 = vmatpush1.bf16.msra.mxu0 0
    %3520 = vmatprep.subr.bf16.mxu0 0
    %3521 = vmatpush1.bf16.msra.mxu0 0
    %3522 = vmatprep.subr.bf16.mxu0 0
    %3523 = vmatpush1.bf16.msra.mxu0 0
    %3524 = vmatprep.mubr.bf16.mxu0 0
    %3525 = vmatmul.mubr.bf16.gmra.mrb[0].mxu0 %v3490
    %v3526 = vpop.f32.mrb[0].mxu0
    %v3527 = vadd.f32 0.0, %v3526
    %v3528 = vpop.f32.mrb[0].mxu0
    %v3529 = vpop.f32.mrb[0].mxu0
    %v3530 = vpop.f32.mrb[0].mxu0
    %3531 = vdwg.mxu0
    %v3533 = vsel %vm278, %v3487, 0
    %3535 = vmatprep.subr.bf16.mxu0 0
    %3536 = vmatpush1.bf16.msra.mxu0 %v1060
    %3537 = vmatprep.subr.bf16.mxu0 0
    %3538 = vmatpush1.bf16.msra.mxu0 %v1061
    %3539 = vmatprep.subr.bf16.mxu0 0
    %3540 = vmatpush1.bf16.msra.mxu0 0
    %3541 = vmatprep.subr.bf16.mxu0 0
    %3542 = vmatpush1.bf16.msra.mxu0 0
    %3543 = vmatprep.subr.bf16.mxu0 0
    %3544 = vmatpush1.bf16.msra.mxu0 0
    %3545 = vmatprep.subr.bf16.mxu0 0
    %3546 = vmatpush1.bf16.msra.mxu0 0
    %3547 = vmatprep.subr.bf16.mxu0 0
    %3548 = vmatpush1.bf16.msra.mxu0 0
    %3549 = vmatprep.subr.bf16.mxu0 0
    %3550 = vmatpush1.bf16.msra.mxu0 0
    %3551 = vmatprep.subr.bf16.mxu0 0
    %3552 = vmatpush1.bf16.msra.mxu0 0
    %3553 = vmatprep.subr.bf16.mxu0 0
    %3554 = vmatpush1.bf16.msra.mxu0 0
    %3555 = vmatprep.subr.bf16.mxu0 0
    %3556 = vmatpush1.bf16.msra.mxu0 0
    %3557 = vmatprep.subr.bf16.mxu0 0
    %3558 = vmatpush1.bf16.msra.mxu0 0
    %3559 = vmatprep.subr.bf16.mxu0 0
    %3560 = vmatpush1.bf16.msra.mxu0 0
    %3561 = vmatprep.subr.bf16.mxu0 0
    %3562 = vmatpush1.bf16.msra.mxu0 0
    %3563 = vmatprep.subr.bf16.mxu0 0
    %3564 = vmatpush1.bf16.msra.mxu0 0
    %3565 = vmatprep.subr.bf16.mxu0 0
    %3566 = vmatpush1.bf16.msra.mxu0 0
    %3567 = vmatprep.mubr.bf16.mxu0 0
    %3568 = vmatmul.mubr.bf16.gmra.mrb[0].mxu0 %v3533
    %v3569 = vpop.f32.mrb[0].mxu0
    %v3570 = vadd.f32 %v3527, %v3569
    %v3571 = vpop.f32.mrb[0].mxu0
    %v3572 = vpop.f32.mrb[0].mxu0
    %v3573 = vpop.f32.mrb[0].mxu0
    %3574 = vdwg.mxu0
    %v3575 = vadd.f32 %v3570, %v232
    %v3576 = vxor.u32 %v3575, 2147483648
    %v3577 = vmul.f32 %v3576, 1.442695
    %v3578 = vpow.pop %v3577
    %v3579 = vadd.f32 %v3578, 1.0
    %v3580 = vrcp.pop %v3579
    %v3581 = vmul.f32 1.0, %v3580
    %3582 = vmatprep.subr.bf16.mxu0 0
    %3583 = vmatpush1.bf16.msra.mxu0 %v1132
    %3584 = vmatprep.subr.bf16.mxu0 0
    %3585 = vmatpush1.bf16.msra.mxu0 %v1133
    %3586 = vmatprep.subr.bf16.mxu0 0
    %3587 = vmatpush1.bf16.msra.mxu0 0
    %3588 = vmatprep.subr.bf16.mxu0 0
    %3589 = vmatpush1.bf16.msra.mxu0 0
    %3590 = vmatprep.subr.bf16.mxu0 0
    %3591 = vmatpush1.bf16.msra.mxu0 0
    %3592 = vmatprep.subr.bf16.mxu0 0
    %3593 = vmatpush1.bf16.msra.mxu0 0
    %3594 = vmatprep.subr.bf16.mxu0 0
    %3595 = vmatpush1.bf16.msra.mxu0 0
    %3596 = vmatprep.subr.bf16.mxu0 0
    %3597 = vmatpush1.bf16.msra.mxu0 0
    %3598 = vmatprep.subr.bf16.mxu0 0
    %3599 = vmatpush1.bf16.msra.mxu0 0
    %3600 = vmatprep.subr.bf16.mxu0 0
    %3601 = vmatpush1.bf16.msra.mxu0 0
    %3602 = vmatprep.subr.bf16.mxu0 0
    %3603 = vmatpush1.bf16.msra.mxu0 0
    %3604 = vmatprep.subr.bf16.mxu0 0
    %3605 = vmatpush1.bf16.msra.mxu0 0
    %3606 = vmatprep.subr.bf16.mxu0 0
    %3607 = vmatpush1.bf16.msra.mxu0 0
    %3608 = vmatprep.subr.bf16.mxu0 0
    %3609 = vmatpush1.bf16.msra.mxu0 0
    %3610 = vmatprep.subr.bf16.mxu0 0
    %3611 = vmatpush1.bf16.msra.mxu0 0
    %3612 = vmatprep.subr.bf16.mxu0 0
    %3613 = vmatpush1.bf16.msra.mxu0 0
    %3614 = vmatprep.mubr.bf16.mxu0 0
    %3615 = vmatmul.mubr.bf16.gmra.mrb[0].mxu0 %v3490
    %v3616 = vpop.f32.mrb[0].mxu0
    %v3617 = vadd.f32 0.0, %v3616
    %v3618 = vpop.f32.mrb[0].mxu0
    %v3619 = vpop.f32.mrb[0].mxu0
    %v3620 = vpop.f32.mrb[0].mxu0
    %3621 = vdwg.mxu0
    %3622 = vmatprep.subr.bf16.mxu0 0
    %3623 = vmatpush1.bf16.msra.mxu0 %v1184
    %3624 = vmatprep.subr.bf16.mxu0 0
    %3625 = vmatpush1.bf16.msra.mxu0 %v1185
    %3626 = vmatprep.subr.bf16.mxu0 0
    %3627 = vmatpush1.bf16.msra.mxu0 0
    %3628 = vmatprep.subr.bf16.mxu0 0
    %3629 = vmatpush1.bf16.msra.mxu0 0
    %3630 = vmatprep.subr.bf16.mxu0 0
    %3631 = vmatpush1.bf16.msra.mxu0 0
    %3632 = vmatprep.subr.bf16.mxu0 0
    %3633 = vmatpush1.bf16.msra.mxu0 0
    %3634 = vmatprep.subr.bf16.mxu0 0
    %3635 = vmatpush1.bf16.msra.mxu0 0
    %3636 = vmatprep.subr.bf16.mxu0 0
    %3637 = vmatpush1.bf16.msra.mxu0 0
    %3638 = vmatprep.subr.bf16.mxu0 0
    %3639 = vmatpush1.bf16.msra.mxu0 0
    %3640 = vmatprep.subr.bf16.mxu0 0
    %3641 = vmatpush1.bf16.msra.mxu0 0
    %3642 = vmatprep.subr.bf16.mxu0 0
    %3643 = vmatpush1.bf16.msra.mxu0 0
    %3644 = vmatprep.subr.bf16.mxu0 0
    %3645 = vmatpush1.bf16.msra.mxu0 0
    %3646 = vmatprep.subr.bf16.mxu0 0
    %3647 = vmatpush1.bf16.msra.mxu0 0
    %3648 = vmatprep.subr.bf16.mxu0 0
    %3649 = vmatpush1.bf16.msra.mxu0 0
    %3650 = vmatprep.subr.bf16.mxu0 0
    %3651 = vmatpush1.bf16.msra.mxu0 0
    %3652 = vmatprep.subr.bf16.mxu0 0
    %3653 = vmatpush1.bf16.msra.mxu0 0
    %3654 = vmatprep.mubr.bf16.mxu0 0
    %3655 = vmatmul.mubr.bf16.gmra.mrb[0].mxu0 %v3533
    %v3656 = vpop.f32.mrb[0].mxu0
    %v3657 = vadd.f32 %v3617, %v3656
    %v3658 = vpop.f32.mrb[0].mxu0
    %v3659 = vpop.f32.mrb[0].mxu0
    %v3660 = vpop.f32.mrb[0].mxu0
    %3661 = vdwg.mxu0
    %v3662 = vadd.f32 %v3657, %v240
    %v3663 = vxor.u32 %v3662, 2147483648
    %v3664 = vmul.f32 %v3663, 1.442695
    %v3665 = vpow.pop %v3664
    %v3666 = vadd.f32 %v3665, 1.0
    %v3667 = vrcp.pop %v3666
    %v3668 = vmul.f32 1.0, %v3667
    %3669 = vmatprep.subr.bf16.mxu0 0
    %3670 = vmatpush1.bf16.msra.mxu0 %v1248
    %3671 = vmatprep.subr.bf16.mxu0 0
    %3672 = vmatpush1.bf16.msra.mxu0 %v1249
    %3673 = vmatprep.subr.bf16.mxu0 0
    %3674 = vmatpush1.bf16.msra.mxu0 0
    %3675 = vmatprep.subr.bf16.mxu0 0
    %3676 = vmatpush1.bf16.msra.mxu0 0
    %3677 = vmatprep.subr.bf16.mxu0 0
    %3678 = vmatpush1.bf16.msra.mxu0 0
    %3679 = vmatprep.subr.bf16.mxu0 0
    %3680 = vmatpush1.bf16.msra.mxu0 0
    %3681 = vmatprep.subr.bf16.mxu0 0
    %3682 = vmatpush1.bf16.msra.mxu0 0
    %3683 = vmatprep.subr.bf16.mxu0 0
    %3684 = vmatpush1.bf16.msra.mxu0 0
    %3685 = vmatprep.subr.bf16.mxu0 0
    %3686 = vmatpush1.bf16.msra.mxu0 0
    %3687 = vmatprep.subr.bf16.mxu0 0
    %3688 = vmatpush1.bf16.msra.mxu0 0
    %3689 = vmatprep.subr.bf16.mxu0 0
    %3690 = vmatpush1.bf16.msra.mxu0 0
    %3691 = vmatprep.subr.bf16.mxu0 0
    %3692 = vmatpush1.bf16.msra.mxu0 0
    %3693 = vmatprep.subr.bf16.mxu0 0
    %3694 = vmatpush1.bf16.msra.mxu0 0
    %3695 = vmatprep.subr.bf16.mxu0 0
    %3696 = vmatpush1.bf16.msra.mxu0 0
    %3697 = vmatprep.subr.bf16.mxu0 0
    %3698 = vmatpush1.bf16.msra.mxu0 0
    %3699 = vmatprep.subr.bf16.mxu0 0
    %3700 = vmatpush1.bf16.msra.mxu0 0
    %3701 = vmatprep.mubr.bf16.mxu0 0
    %3702 = vmatmul.mubr.bf16.gmra.mrb[0].mxu0 %v3533
    %v3703 = vpop.f32.mrb[0].mxu0
    %v3704 = vadd.f32 %v248, %v3703
    %v3705 = vpop.f32.mrb[0].mxu0
    %v3706 = vpop.f32.mrb[0].mxu0
    %v3707 = vpop.f32.mrb[0].mxu0
    %3708 = vdwg.mxu0
    %3709 = vmatprep.subr.bf16.mxu0 0
    %3710 = vmatpush1.bf16.msra.mxu0 %v1305
    %3711 = vmatprep.subr.bf16.mxu0 0
    %3712 = vmatpush1.bf16.msra.mxu0 %v1306
    %3713 = vmatprep.subr.bf16.mxu0 0
    %3714 = vmatpush1.bf16.msra.mxu0 0
    %3715 = vmatprep.subr.bf16.mxu0 0
    %3716 = vmatpush1.bf16.msra.mxu0 0
    %3717 = vmatprep.subr.bf16.mxu0 0
    %3718 = vmatpush1.bf16.msra.mxu0 0
    %3719 = vmatprep.subr.bf16.mxu0 0
    %3720 = vmatpush1.bf16.msra.mxu0 0
    %3721 = vmatprep.subr.bf16.mxu0 0
    %3722 = vmatpush1.bf16.msra.mxu0 0
    %3723 = vmatprep.subr.bf16.mxu0 0
    %3724 = vmatpush1.bf16.msra.mxu0 0
    %3725 = vmatprep.subr.bf16.mxu0 0
    %3726 = vmatpush1.bf16.msra.mxu0 0
    %3727 = vmatprep.subr.bf16.mxu0 0
    %3728 = vmatpush1.bf16.msra.mxu0 0
    %3729 = vmatprep.subr.bf16.mxu0 0
    %3730 = vmatpush1.bf16.msra.mxu0 0
    %3731 = vmatprep.subr.bf16.mxu0 0
    %3732 = vmatpush1.bf16.msra.mxu0 0
    %3733 = vmatprep.subr.bf16.mxu0 0
    %3734 = vmatpush1.bf16.msra.mxu0 0
    %3735 = vmatprep.subr.bf16.mxu0 0
    %3736 = vmatpush1.bf16.msra.mxu0 0
    %3737 = vmatprep.subr.bf16.mxu0 0
    %3738 = vmatpush1.bf16.msra.mxu0 0
    %3739 = vmatprep.subr.bf16.mxu0 0
    %3740 = vmatpush1.bf16.msra.mxu0 0
    %3741 = vmatprep.mubr.bf16.mxu0 0
    %3742 = vmatmul.mubr.bf16.gmra.mrb[0].mxu0 %v3490
    %v3743 = vpop.f32.mrb[0].mxu0
    %v3744 = vadd.f32 %v256, %v3743
    %v3745 = vpop.f32.mrb[0].mxu0
    %v3746 = vpop.f32.mrb[0].mxu0
    %v3747 = vpop.f32.mrb[0].mxu0
    %3748 = vdwg.mxu0
    %v3749 = vmul.f32 %v3581, %v3744
    %v3750 = vadd.f32 %v3704, %v3749
    %v3751 = vtanh.pop %v3750
    %v3752 = vsub.f32 1.0, %v3668
    %v3753 = vmul.f32 %v3752, %v3751
    %v3754 = vmul.f32 %v3668, %v2955
    %v3755 = vadd.f32 %v3753, %v3754
    %s3756 = scalar_lea.vmem [#allocation2], 4
    %v3757 = vld [vmem:[%s3756] sm:$0x1]
    %3758 = vmatprep.subr.bf16.mxu0 0
    %3759 = vmatpush1.bf16.msra.mxu0 %v274
    %3760 = vmatprep.subr.bf16.mxu0 0
    %3761 = vmatpush1.bf16.msra.mxu0 %v275
    %3762 = vmatprep.subr.bf16.mxu0 0
    %3763 = vmatpush1.bf16.msra.mxu0 0
    %3764 = vmatprep.subr.bf16.mxu0 0
    %3765 = vmatpush1.bf16.msra.mxu0 0
    %3766 = vmatprep.subr.bf16.mxu0 0
    %3767 = vmatpush1.bf16.msra.mxu0 0
    %3768 = vmatprep.subr.bf16.mxu0 0
    %3769 = vmatpush1.bf16.msra.mxu0 0
    %3770 = vmatprep.subr.bf16.mxu0 0
    %3771 = vmatpush1.bf16.msra.mxu0 0
    %3772 = vmatprep.subr.bf16.mxu0 0
    %3773 = vmatpush1.bf16.msra.mxu0 0
    %3774 = vmatprep.subr.bf16.mxu0 0
    %3775 = vmatpush1.bf16.msra.mxu0 0
    %3776 = vmatprep.subr.bf16.mxu0 0
    %3777 = vmatpush1.bf16.msra.mxu0 0
    %3778 = vmatprep.subr.bf16.mxu0 0
    %3779 = vmatpush1.bf16.msra.mxu0 0
    %3780 = vmatprep.subr.bf16.mxu0 0
    %3781 = vmatpush1.bf16.msra.mxu0 0
    %3782 = vmatprep.subr.bf16.mxu0 0
    %3783 = vmatpush1.bf16.msra.mxu0 0
    %3784 = vmatprep.subr.bf16.mxu0 0
    %3785 = vmatpush1.bf16.msra.mxu0 0
    %3786 = vmatprep.subr.bf16.mxu0 0
    %3787 = vmatpush1.bf16.msra.mxu0 0
    %3788 = vmatprep.subr.bf16.mxu0 0
    %3789 = vmatpush1.bf16.msra.mxu0 0
    %3790 = vmatprep.mubr.bf16.mxu0 0
    %3791 = vmatmul.mubr.bf16.gmra.mrb[0].mxu0 %v3264
    %v3792 = vpop.f32.mrb[0].mxu0
    %v3793 = vadd.f32 0.0, %v3792
    %v3794 = vpop.f32.mrb[0].mxu0
    %v3795 = vpop.f32.mrb[0].mxu0
    %v3796 = vpop.f32.mrb[0].mxu0
    %3797 = vdwg.mxu0
    %v3799 = vsel %vm331, %v3757, 0
    %3801 = vmatprep.subr.bf16.mxu0 0
    %3802 = vmatpush1.bf16.msra.mxu0 %v328
    %3803 = vmatprep.subr.bf16.mxu0 0
    %3804 = vmatpush1.bf16.msra.mxu0 %v337
    %3805 = vmatprep.subr.bf16.mxu0 0
    %3806 = vmatpush1.bf16.msra.mxu0 0
    %3807 = vmatprep.subr.bf16.mxu0 0
    %3808 = vmatpush1.bf16.msra.mxu0 0
    %3809 = vmatprep.subr.bf16.mxu0 0
    %3810 = vmatpush1.bf16.msra.mxu0 0
    %3811 = vmatprep.subr.bf16.mxu0 0
    %3812 = vmatpush1.bf16.msra.mxu0 0
    %3813 = vmatprep.subr.bf16.mxu0 0
    %3814 = vmatpush1.bf16.msra.mxu0 0
    %3815 = vmatprep.subr.bf16.mxu0 0
    %3816 = vmatpush1.bf16.msra.mxu0 0
    %3817 = vmatprep.subr.bf16.mxu0 0
    %3818 = vmatpush1.bf16.msra.mxu0 0
    %3819 = vmatprep.subr.bf16.mxu0 0
    %3820 = vmatpush1.bf16.msra.mxu0 0
    %3821 = vmatprep.subr.bf16.mxu0 0
    %3822 = vmatpush1.bf16.msra.mxu0 0
    %3823 = vmatprep.subr.bf16.mxu0 0
    %3824 = vmatpush1.bf16.msra.mxu0 0
    %3825 = vmatprep.subr.bf16.mxu0 0
    %3826 = vmatpush1.bf16.msra.mxu0 0
    %3827 = vmatprep.subr.bf16.mxu0 0
    %3828 = vmatpush1.bf16.msra.mxu0 0
    %3829 = vmatprep.subr.bf16.mxu0 0
    %3830 = vmatpush1.bf16.msra.mxu0 0
    %3831 = vmatprep.subr.bf16.mxu0 0
    %3832 = vmatpush1.bf16.msra.mxu0 0
    %3833 = vmatprep.mubr.bf16.mxu0 0
    %3834 = vmatmul.mubr.bf16.gmra.mrb[0].mxu0 %v3799
    %v3835 = vpop.f32.mrb[0].mxu0
    %v3836 = vadd.f32 %v3793, %v3835
    %v3837 = vpop.f32.mrb[0].mxu0
    %v3838 = vpop.f32.mrb[0].mxu0
    %v3839 = vpop.f32.mrb[0].mxu0
    %3840 = vdwg.mxu0
    %v3841 = vadd.f32 %v3836, %v170
    %v3842 = vxor.u32 %v3841, 2147483648
    %v3843 = vmul.f32 %v3842, 1.442695
    %v3844 = vpow.pop %v3843
    %v3845 = vadd.f32 %v3844, 1.0
    %v3846 = vrcp.pop %v3845
    %v3847 = vmul.f32 1.0, %v3846
    %3848 = vmatprep.subr.bf16.mxu0 0
    %3849 = vmatpush1.bf16.msra.mxu0 %v403
    %3850 = vmatprep.subr.bf16.mxu0 0
    %3851 = vmatpush1.bf16.msra.mxu0 %v404
    %3852 = vmatprep.subr.bf16.mxu0 0
    %3853 = vmatpush1.bf16.msra.mxu0 0
    %3854 = vmatprep.subr.bf16.mxu0 0
    %3855 = vmatpush1.bf16.msra.mxu0 0
    %3856 = vmatprep.subr.bf16.mxu0 0
    %3857 = vmatpush1.bf16.msra.mxu0 0
    %3858 = vmatprep.subr.bf16.mxu0 0
    %3859 = vmatpush1.bf16.msra.mxu0 0
    %3860 = vmatprep.subr.bf16.mxu0 0
    %3861 = vmatpush1.bf16.msra.mxu0 0
    %3862 = vmatprep.subr.bf16.mxu0 0
    %3863 = vmatpush1.bf16.msra.mxu0 0
    %3864 = vmatprep.subr.bf16.mxu0 0
    %3865 = vmatpush1.bf16.msra.mxu0 0
    %3866 = vmatprep.subr.bf16.mxu0 0
    %3867 = vmatpush1.bf16.msra.mxu0 0
    %3868 = vmatprep.subr.bf16.mxu0 0
    %3869 = vmatpush1.bf16.msra.mxu0 0
    %3870 = vmatprep.subr.bf16.mxu0 0
    %3871 = vmatpush1.bf16.msra.mxu0 0
    %3872 = vmatprep.subr.bf16.mxu0 0
    %3873 = vmatpush1.bf16.msra.mxu0 0
    %3874 = vmatprep.subr.bf16.mxu0 0
    %3875 = vmatpush1.bf16.msra.mxu0 0
    %3876 = vmatprep.subr.bf16.mxu0 0
    %3877 = vmatpush1.bf16.msra.mxu0 0
    %3878 = vmatprep.subr.bf16.mxu0 0
    %3879 = vmatpush1.bf16.msra.mxu0 0
    %3880 = vmatprep.mubr.bf16.mxu0 0
    %3881 = vmatmul.mubr.bf16.gmra.mrb[0].mxu0 %v3264
    %v3882 = vpop.f32.mrb[0].mxu0
    %v3883 = vadd.f32 0.0, %v3882
    %v3884 = vpop.f32.mrb[0].mxu0
    %v3885 = vpop.f32.mrb[0].mxu0
    %v3886 = vpop.f32.mrb[0].mxu0
    %3887 = vdwg.mxu0
    %3888 = vmatprep.subr.bf16.mxu0 0
    %3889 = vmatpush1.bf16.msra.mxu0 %v453
    %3890 = vmatprep.subr.bf16.mxu0 0
    %3891 = vmatpush1.bf16.msra.mxu0 %v457
    %3892 = vmatprep.subr.bf16.mxu0 0
    %3893 = vmatpush1.bf16.msra.mxu0 0
    %3894 = vmatprep.subr.bf16.mxu0 0
    %3895 = vmatpush1.bf16.msra.mxu0 0
    %3896 = vmatprep.subr.bf16.mxu0 0
    %3897 = vmatpush1.bf16.msra.mxu0 0
    %3898 = vmatprep.subr.bf16.mxu0 0
    %3899 = vmatpush1.bf16.msra.mxu0 0
    %3900 = vmatprep.subr.bf16.mxu0 0
    %3901 = vmatpush1.bf16.msra.mxu0 0
    %3902 = vmatprep.subr.bf16.mxu0 0
    %3903 = vmatpush1.bf16.msra.mxu0 0
    %3904 = vmatprep.subr.bf16.mxu0 0
    %3905 = vmatpush1.bf16.msra.mxu0 0
    %3906 = vmatprep.subr.bf16.mxu0 0
    %3907 = vmatpush1.bf16.msra.mxu0 0
    %3908 = vmatprep.subr.bf16.mxu0 0
    %3909 = vmatpush1.bf16.msra.mxu0 0
    %3910 = vmatprep.subr.bf16.mxu0 0
    %3911 = vmatpush1.bf16.msra.mxu0 0
    %3912 = vmatprep.subr.bf16.mxu0 0
    %3913 = vmatpush1.bf16.msra.mxu0 0
    %3914 = vmatprep.subr.bf16.mxu0 0
    %3915 = vmatpush1.bf16.msra.mxu0 0
    %3916 = vmatprep.subr.bf16.mxu0 0
    %3917 = vmatpush1.bf16.msra.mxu0 0
    %3918 = vmatprep.subr.bf16.mxu0 0
    %3919 = vmatpush1.bf16.msra.mxu0 0
    %3920 = vmatprep.mubr.bf16.mxu0 0
    %3921 = vmatmul.mubr.bf16.gmra.mrb[0].mxu0 %v3799
    %v3922 = vpop.f32.mrb[0].mxu0
    %v3923 = vadd.f32 %v3883, %v3922
    %v3924 = vpop.f32.mrb[0].mxu0
    %v3925 = vpop.f32.mrb[0].mxu0
    %v3926 = vpop.f32.mrb[0].mxu0
    %3927 = vdwg.mxu0
    %v3928 = vadd.f32 %v3923, %v178
    %v3929 = vxor.u32 %v3928, 2147483648
    %v3930 = vmul.f32 %v3929, 1.442695
    %v3931 = vpow.pop %v3930
    %v3932 = vadd.f32 %v3931, 1.0
    %v3933 = vrcp.pop %v3932
    %v3934 = vmul.f32 1.0, %v3933
    %3935 = vmatprep.subr.bf16.mxu0 0
    %3936 = vmatpush1.bf16.msra.mxu0 %v516
    %3937 = vmatprep.subr.bf16.mxu0 0
    %3938 = vmatpush1.bf16.msra.mxu0 %v520
    %3939 = vmatprep.subr.bf16.mxu0 0
    %3940 = vmatpush1.bf16.msra.mxu0 0
    %3941 = vmatprep.subr.bf16.mxu0 0
    %3942 = vmatpush1.bf16.msra.mxu0 0
    %3943 = vmatprep.subr.bf16.mxu0 0
    %3944 = vmatpush1.bf16.msra.mxu0 0
    %3945 = vmatprep.subr.bf16.mxu0 0
    %3946 = vmatpush1.bf16.msra.mxu0 0
    %3947 = vmatprep.subr.bf16.mxu0 0
    %3948 = vmatpush1.bf16.msra.mxu0 0
    %3949 = vmatprep.subr.bf16.mxu0 0
    %3950 = vmatpush1.bf16.msra.mxu0 0
    %3951 = vmatprep.subr.bf16.mxu0 0
    %3952 = vmatpush1.bf16.msra.mxu0 0
    %3953 = vmatprep.subr.bf16.mxu0 0
    %3954 = vmatpush1.bf16.msra.mxu0 0
    %3955 = vmatprep.subr.bf16.mxu0 0
    %3956 = vmatpush1.bf16.msra.mxu0 0
    %3957 = vmatprep.subr.bf16.mxu0 0
    %3958 = vmatpush1.bf16.msra.mxu0 0
    %3959 = vmatprep.subr.bf16.mxu0 0
    %3960 = vmatpush1.bf16.msra.mxu0 0
    %3961 = vmatprep.subr.bf16.mxu0 0
    %3962 = vmatpush1.bf16.msra.mxu0 0
    %3963 = vmatprep.subr.bf16.mxu0 0
    %3964 = vmatpush1.bf16.msra.mxu0 0
    %3965 = vmatprep.subr.bf16.mxu0 0
    %3966 = vmatpush1.bf16.msra.mxu0 0
    %3967 = vmatprep.mubr.bf16.mxu0 0
    %3968 = vmatmul.mubr.bf16.gmra.mrb[0].mxu0 %v3799
    %v3969 = vpop.f32.mrb[0].mxu0
    %v3970 = vadd.f32 %v186, %v3969
    %v3971 = vpop.f32.mrb[0].mxu0
    %v3972 = vpop.f32.mrb[0].mxu0
    %v3973 = vpop.f32.mrb[0].mxu0
    %3974 = vdwg.mxu0
    %3975 = vmatprep.subr.bf16.mxu0 0
    %3976 = vmatpush1.bf16.msra.mxu0 %v575
    %3977 = vmatprep.subr.bf16.mxu0 0
    %3978 = vmatpush1.bf16.msra.mxu0 %v576
    %3979 = vmatprep.subr.bf16.mxu0 0
    %3980 = vmatpush1.bf16.msra.mxu0 0
    %3981 = vmatprep.subr.bf16.mxu0 0
    %3982 = vmatpush1.bf16.msra.mxu0 0
    %3983 = vmatprep.subr.bf16.mxu0 0
    %3984 = vmatpush1.bf16.msra.mxu0 0
    %3985 = vmatprep.subr.bf16.mxu0 0
    %3986 = vmatpush1.bf16.msra.mxu0 0
    %3987 = vmatprep.subr.bf16.mxu0 0
    %3988 = vmatpush1.bf16.msra.mxu0 0
    %3989 = vmatprep.subr.bf16.mxu0 0
    %3990 = vmatpush1.bf16.msra.mxu0 0
    %3991 = vmatprep.subr.bf16.mxu0 0
    %3992 = vmatpush1.bf16.msra.mxu0 0
    %3993 = vmatprep.subr.bf16.mxu0 0
    %3994 = vmatpush1.bf16.msra.mxu0 0
    %3995 = vmatprep.subr.bf16.mxu0 0
    %3996 = vmatpush1.bf16.msra.mxu0 0
    %3997 = vmatprep.subr.bf16.mxu0 0
    %3998 = vmatpush1.bf16.msra.mxu0 0
    %3999 = vmatprep.subr.bf16.mxu0 0
    %4000 = vmatpush1.bf16.msra.mxu0 0
    %4001 = vmatprep.subr.bf16.mxu0 0
    %4002 = vmatpush1.bf16.msra.mxu0 0
    %4003 = vmatprep.subr.bf16.mxu0 0
    %4004 = vmatpush1.bf16.msra.mxu0 0
    %4005 = vmatprep.subr.bf16.mxu0 0
    %4006 = vmatpush1.bf16.msra.mxu0 0
    %4007 = vmatprep.mubr.bf16.mxu0 0
    %4008 = vmatmul.mubr.bf16.gmra.mrb[0].mxu0 %v3264
    %v4009 = vpop.f32.mrb[0].mxu0
    %v4010 = vadd.f32 %v194, %v4009
    %v4011 = vpop.f32.mrb[0].mxu0
    %v4012 = vpop.f32.mrb[0].mxu0
    %v4013 = vpop.f32.mrb[0].mxu0
    %4014 = vdwg.mxu0
    %v4015 = vmul.f32 %v3847, %v4010
    %v4016 = vadd.f32 %v3970, %v4015
    %v4017 = vtanh.pop %v4016
    %v4018 = vsub.f32 1.0, %v3934
    %v4019 = vmul.f32 %v4018, %v4017
    %v4020 = vmul.f32 %v3934, %v3221
    %v4021 = vadd.f32 %v4019, %v4020
    %v4022 = vpack.c.bf16 %v4021, %v4021
    %4023 = vmatprep.subr.bf16.mxu0 0
    %4024 = vmatpush1.bf16.msra.mxu0 %v643
    %4025 = vmatprep.subr.bf16.mxu0 0
    %4026 = vmatpush1.bf16.msra.mxu0 %v644
    %4027 = vmatprep.subr.bf16.mxu0 0
    %4028 = vmatpush1.bf16.msra.mxu0 0
    %4029 = vmatprep.subr.bf16.mxu0 0
    %4030 = vmatpush1.bf16.msra.mxu0 0
    %4031 = vmatprep.subr.bf16.mxu0 0
    %4032 = vmatpush1.bf16.msra.mxu0 0
    %4033 = vmatprep.subr.bf16.mxu0 0
    %4034 = vmatpush1.bf16.msra.mxu0 0
    %4035 = vmatprep.subr.bf16.mxu0 0
    %4036 = vmatpush1.bf16.msra.mxu0 0
    %4037 = vmatprep.subr.bf16.mxu0 0
    %4038 = vmatpush1.bf16.msra.mxu0 0
    %4039 = vmatprep.subr.bf16.mxu0 0
    %4040 = vmatpush1.bf16.msra.mxu0 0
    %4041 = vmatprep.subr.bf16.mxu0 0
    %4042 = vmatpush1.bf16.msra.mxu0 0
    %4043 = vmatprep.subr.bf16.mxu0 0
    %4044 = vmatpush1.bf16.msra.mxu0 0
    %4045 = vmatprep.subr.bf16.mxu0 0
    %4046 = vmatpush1.bf16.msra.mxu0 0
    %4047 = vmatprep.subr.bf16.mxu0 0
    %4048 = vmatpush1.bf16.msra.mxu0 0
    %4049 = vmatprep.subr.bf16.mxu0 0
    %4050 = vmatpush1.bf16.msra.mxu0 0
    %4051 = vmatprep.subr.bf16.mxu0 0
    %4052 = vmatpush1.bf16.msra.mxu0 0
    %4053 = vmatprep.subr.bf16.mxu0 0
    %4054 = vmatpush1.bf16.msra.mxu0 0
    %4055 = vmatprep.mubr.bf16.mxu0 0
    %4056 = vmatmul.mubr.bf16.gmra.mrb[0].mxu0 %v3533
    %v4057 = vpop.f32.mrb[0].mxu0
    %v4058 = vadd.f32 0.0, %v4057
    %v4059 = vpop.f32.mrb[0].mxu0
    %v4060 = vpop.f32.mrb[0].mxu0
    %v4061 = vpop.f32.mrb[0].mxu0
    %4062 = vdwg.mxu0
    %v4064 = vsel %vm278, %v4022, 0
    %4066 = vmatprep.subr.bf16.mxu0 0
    %4067 = vmatpush1.bf16.msra.mxu0 %v695
    %4068 = vmatprep.subr.bf16.mxu0 0
    %4069 = vmatpush1.bf16.msra.mxu0 %v696
    %4070 = vmatprep.subr.bf16.mxu0 0
    %4071 = vmatpush1.bf16.msra.mxu0 0
    %4072 = vmatprep.subr.bf16.mxu0 0
    %4073 = vmatpush1.bf16.msra.mxu0 0
    %4074 = vmatprep.subr.bf16.mxu0 0
    %4075 = vmatpush1.bf16.msra.mxu0 0
    %4076 = vmatprep.subr.bf16.mxu0 0
    %4077 = vmatpush1.bf16.msra.mxu0 0
    %4078 = vmatprep.subr.bf16.mxu0 0
    %4079 = vmatpush1.bf16.msra.mxu0 0
    %4080 = vmatprep.subr.bf16.mxu0 0
    %4081 = vmatpush1.bf16.msra.mxu0 0
    %4082 = vmatprep.subr.bf16.mxu0 0
    %4083 = vmatpush1.bf16.msra.mxu0 0
    %4084 = vmatprep.subr.bf16.mxu0 0
    %4085 = vmatpush1.bf16.msra.mxu0 0
    %4086 = vmatprep.subr.bf16.mxu0 0
    %4087 = vmatpush1.bf16.msra.mxu0 0
    %4088 = vmatprep.subr.bf16.mxu0 0
    %4089 = vmatpush1.bf16.msra.mxu0 0
    %4090 = vmatprep.subr.bf16.mxu0 0
    %4091 = vmatpush1.bf16.msra.mxu0 0
    %4092 = vmatprep.subr.bf16.mxu0 0
    %4093 = vmatpush1.bf16.msra.mxu0 0
    %4094 = vmatprep.subr.bf16.mxu0 0
    %4095 = vmatpush1.bf16.msra.mxu0 0
    %4096 = vmatprep.subr.bf16.mxu0 0
    %4097 = vmatpush1.bf16.msra.mxu0 0
    %4098 = vmatprep.mubr.bf16.mxu0 0
    %4099 = vmatmul.mubr.bf16.gmra.mrb[0].mxu0 %v4064
    %v4100 = vpop.f32.mrb[0].mxu0
    %v4101 = vadd.f32 %v4058, %v4100
    %v4102 = vpop.f32.mrb[0].mxu0
    %v4103 = vpop.f32.mrb[0].mxu0
    %v4104 = vpop.f32.mrb[0].mxu0
    %4105 = vdwg.mxu0
    %v4106 = vadd.f32 %v4101, %v201
    %v4107 = vxor.u32 %v4106, 2147483648
    %v4108 = vmul.f32 %v4107, 1.442695
    %v4109 = vpow.pop %v4108
    %v4110 = vadd.f32 %v4109, 1.0
    %v4111 = vrcp.pop %v4110
    %v4112 = vmul.f32 1.0, %v4111
    %4113 = vmatprep.subr.bf16.mxu0 0
    %4114 = vmatpush1.bf16.msra.mxu0 %v767
    %4115 = vmatprep.subr.bf16.mxu0 0
    %4116 = vmatpush1.bf16.msra.mxu0 %v768
    %4117 = vmatprep.subr.bf16.mxu0 0
    %4118 = vmatpush1.bf16.msra.mxu0 0
    %4119 = vmatprep.subr.bf16.mxu0 0
    %4120 = vmatpush1.bf16.msra.mxu0 0
    %4121 = vmatprep.subr.bf16.mxu0 0
    %4122 = vmatpush1.bf16.msra.mxu0 0
    %4123 = vmatprep.subr.bf16.mxu0 0
    %4124 = vmatpush1.bf16.msra.mxu0 0
    %4125 = vmatprep.subr.bf16.mxu0 0
    %4126 = vmatpush1.bf16.msra.mxu0 0
    %4127 = vmatprep.subr.bf16.mxu0 0
    %4128 = vmatpush1.bf16.msra.mxu0 0
    %4129 = vmatprep.subr.bf16.mxu0 0
    %4130 = vmatpush1.bf16.msra.mxu0 0
    %4131 = vmatprep.subr.bf16.mxu0 0
    %4132 = vmatpush1.bf16.msra.mxu0 0
    %4133 = vmatprep.subr.bf16.mxu0 0
    %4134 = vmatpush1.bf16.msra.mxu0 0
    %4135 = vmatprep.subr.bf16.mxu0 0
    %4136 = vmatpush1.bf16.msra.mxu0 0
    %4137 = vmatprep.subr.bf16.mxu0 0
    %4138 = vmatpush1.bf16.msra.mxu0 0
    %4139 = vmatprep.subr.bf16.mxu0 0
    %4140 = vmatpush1.bf16.msra.mxu0 0
    %4141 = vmatprep.subr.bf16.mxu0 0
    %4142 = vmatpush1.bf16.msra.mxu0 0
    %4143 = vmatprep.subr.bf16.mxu0 0
    %4144 = vmatpush1.bf16.msra.mxu0 0
    %4145 = vmatprep.mubr.bf16.mxu0 0
    %4146 = vmatmul.mubr.bf16.gmra.mrb[0].mxu0 %v3533
    %v4147 = vpop.f32.mrb[0].mxu0
    %v4148 = vadd.f32 0.0, %v4147
    %v4149 = vpop.f32.mrb[0].mxu0
    %v4150 = vpop.f32.mrb[0].mxu0
    %v4151 = vpop.f32.mrb[0].mxu0
    %4152 = vdwg.mxu0
    %4153 = vmatprep.subr.bf16.mxu0 0
    %4154 = vmatpush1.bf16.msra.mxu0 %v819
    %4155 = vmatprep.subr.bf16.mxu0 0
    %4156 = vmatpush1.bf16.msra.mxu0 %v820
    %4157 = vmatprep.subr.bf16.mxu0 0
    %4158 = vmatpush1.bf16.msra.mxu0 0
    %4159 = vmatprep.subr.bf16.mxu0 0
    %4160 = vmatpush1.bf16.msra.mxu0 0
    %4161 = vmatprep.subr.bf16.mxu0 0
    %4162 = vmatpush1.bf16.msra.mxu0 0
    %4163 = vmatprep.subr.bf16.mxu0 0
    %4164 = vmatpush1.bf16.msra.mxu0 0
    %4165 = vmatprep.subr.bf16.mxu0 0
    %4166 = vmatpush1.bf16.msra.mxu0 0
    %4167 = vmatprep.subr.bf16.mxu0 0
    %4168 = vmatpush1.bf16.msra.mxu0 0
    %4169 = vmatprep.subr.bf16.mxu0 0
    %4170 = vmatpush1.bf16.msra.mxu0 0
    %4171 = vmatprep.subr.bf16.mxu0 0
    %4172 = vmatpush1.bf16.msra.mxu0 0
    %4173 = vmatprep.subr.bf16.mxu0 0
    %4174 = vmatpush1.bf16.msra.mxu0 0
    %4175 = vmatprep.subr.bf16.mxu0 0
    %4176 = vmatpush1.bf16.msra.mxu0 0
    %4177 = vmatprep.subr.bf16.mxu0 0
    %4178 = vmatpush1.bf16.msra.mxu0 0
    %4179 = vmatprep.subr.bf16.mxu0 0
    %4180 = vmatpush1.bf16.msra.mxu0 0
    %4181 = vmatprep.subr.bf16.mxu0 0
    %4182 = vmatpush1.bf16.msra.mxu0 0
    %4183 = vmatprep.subr.bf16.mxu0 0
    %4184 = vmatpush1.bf16.msra.mxu0 0
    %4185 = vmatprep.mubr.bf16.mxu0 0
    %4186 = vmatmul.mubr.bf16.gmra.mrb[0].mxu0 %v4064
    %v4187 = vpop.f32.mrb[0].mxu0
    %v4188 = vadd.f32 %v4148, %v4187
    %v4189 = vpop.f32.mrb[0].mxu0
    %v4190 = vpop.f32.mrb[0].mxu0
    %v4191 = vpop.f32.mrb[0].mxu0
    %4192 = vdwg.mxu0
    %v4193 = vadd.f32 %v4188, %v209
    %v4194 = vxor.u32 %v4193, 2147483648
    %v4195 = vmul.f32 %v4194, 1.442695
    %v4196 = vpow.pop %v4195
    %v4197 = vadd.f32 %v4196, 1.0
    %v4198 = vrcp.pop %v4197
    %v4199 = vmul.f32 1.0, %v4198
    %4200 = vmatprep.subr.bf16.mxu0 0
    %4201 = vmatpush1.bf16.msra.mxu0 %v883
    %4202 = vmatprep.subr.bf16.mxu0 0
    %4203 = vmatpush1.bf16.msra.mxu0 %v884
    %4204 = vmatprep.subr.bf16.mxu0 0
    %4205 = vmatpush1.bf16.msra.mxu0 0
    %4206 = vmatprep.subr.bf16.mxu0 0
    %4207 = vmatpush1.bf16.msra.mxu0 0
    %4208 = vmatprep.subr.bf16.mxu0 0
    %4209 = vmatpush1.bf16.msra.mxu0 0
    %4210 = vmatprep.subr.bf16.mxu0 0
    %4211 = vmatpush1.bf16.msra.mxu0 0
    %4212 = vmatprep.subr.bf16.mxu0 0
    %4213 = vmatpush1.bf16.msra.mxu0 0
    %4214 = vmatprep.subr.bf16.mxu0 0
    %4215 = vmatpush1.bf16.msra.mxu0 0
    %4216 = vmatprep.subr.bf16.mxu0 0
    %4217 = vmatpush1.bf16.msra.mxu0 0
    %4218 = vmatprep.subr.bf16.mxu0 0
    %4219 = vmatpush1.bf16.msra.mxu0 0
    %4220 = vmatprep.subr.bf16.mxu0 0
    %4221 = vmatpush1.bf16.msra.mxu0 0
    %4222 = vmatprep.subr.bf16.mxu0 0
    %4223 = vmatpush1.bf16.msra.mxu0 0
    %4224 = vmatprep.subr.bf16.mxu0 0
    %4225 = vmatpush1.bf16.msra.mxu0 0
    %4226 = vmatprep.subr.bf16.mxu0 0
    %4227 = vmatpush1.bf16.msra.mxu0 0
    %4228 = vmatprep.subr.bf16.mxu0 0
    %4229 = vmatpush1.bf16.msra.mxu0 0
    %4230 = vmatprep.subr.bf16.mxu0 0
    %4231 = vmatpush1.bf16.msra.mxu0 0
    %4232 = vmatprep.mubr.bf16.mxu0 0
    %4233 = vmatmul.mubr.bf16.gmra.mrb[0].mxu0 %v4064
    %v4234 = vpop.f32.mrb[0].mxu0
    %v4235 = vadd.f32 %v217, %v4234
    %v4236 = vpop.f32.mrb[0].mxu0
    %v4237 = vpop.f32.mrb[0].mxu0
    %v4238 = vpop.f32.mrb[0].mxu0
    %4239 = vdwg.mxu0
    %4240 = vmatprep.subr.bf16.mxu0 0
    %4241 = vmatpush1.bf16.msra.mxu0 %v940
    %4242 = vmatprep.subr.bf16.mxu0 0
    %4243 = vmatpush1.bf16.msra.mxu0 %v941
    %4244 = vmatprep.subr.bf16.mxu0 0
    %4245 = vmatpush1.bf16.msra.mxu0 0
    %4246 = vmatprep.subr.bf16.mxu0 0
    %4247 = vmatpush1.bf16.msra.mxu0 0
    %4248 = vmatprep.subr.bf16.mxu0 0
    %4249 = vmatpush1.bf16.msra.mxu0 0
    %4250 = vmatprep.subr.bf16.mxu0 0
    %4251 = vmatpush1.bf16.msra.mxu0 0
    %4252 = vmatprep.subr.bf16.mxu0 0
    %4253 = vmatpush1.bf16.msra.mxu0 0
    %4254 = vmatprep.subr.bf16.mxu0 0
    %4255 = vmatpush1.bf16.msra.mxu0 0
    %4256 = vmatprep.subr.bf16.mxu0 0
    %4257 = vmatpush1.bf16.msra.mxu0 0
    %4258 = vmatprep.subr.bf16.mxu0 0
    %4259 = vmatpush1.bf16.msra.mxu0 0
    %4260 = vmatprep.subr.bf16.mxu0 0
    %4261 = vmatpush1.bf16.msra.mxu0 0
    %4262 = vmatprep.subr.bf16.mxu0 0
    %4263 = vmatpush1.bf16.msra.mxu0 0
    %4264 = vmatprep.subr.bf16.mxu0 0
    %4265 = vmatpush1.bf16.msra.mxu0 0
    %4266 = vmatprep.subr.bf16.mxu0 0
    %4267 = vmatpush1.bf16.msra.mxu0 0
    %4268 = vmatprep.subr.bf16.mxu0 0
    %4269 = vmatpush1.bf16.msra.mxu0 0
    %4270 = vmatprep.subr.bf16.mxu0 0
    %4271 = vmatpush1.bf16.msra.mxu0 0
    %4272 = vmatprep.mubr.bf16.mxu0 0
    %4273 = vmatmul.mubr.bf16.gmra.mrb[0].mxu0 %v3533
    %v4274 = vpop.f32.mrb[0].mxu0
    %v4275 = vadd.f32 %v225, %v4274
    %v4276 = vpop.f32.mrb[0].mxu0
    %v4277 = vpop.f32.mrb[0].mxu0
    %v4278 = vpop.f32.mrb[0].mxu0
    %4279 = vdwg.mxu0
    %v4280 = vmul.f32 %v4112, %v4275
    %v4281 = vadd.f32 %v4235, %v4280
    %v4282 = vtanh.pop %v4281
    %v4283 = vsub.f32 1.0, %v4199
    %v4284 = vmul.f32 %v4283, %v4282
    %v4285 = vmul.f32 %v4199, %v3486
    %v4286 = vadd.f32 %v4284, %v4285
    %v4287 = vpack.c.bf16 %v4286, %v4286
    %v4288 = vpack.c.bf16 %v3755, %v3755
    %v4290 = vsel %vm278, %v4288, 0
    %4292 = vmatprep.subr.bf16.mxu0 0
    %4293 = vmatpush1.bf16.msra.mxu0 %v1008
    %4294 = vmatprep.subr.bf16.mxu0 0
    %4295 = vmatpush1.bf16.msra.mxu0 %v1009
    %4296 = vmatprep.subr.bf16.mxu0 0
    %4297 = vmatpush1.bf16.msra.mxu0 0
    %4298 = vmatprep.subr.bf16.mxu0 0
    %4299 = vmatpush1.bf16.msra.mxu0 0
    %4300 = vmatprep.subr.bf16.mxu0 0
    %4301 = vmatpush1.bf16.msra.mxu0 0
    %4302 = vmatprep.subr.bf16.mxu0 0
    %4303 = vmatpush1.bf16.msra.mxu0 0
    %4304 = vmatprep.subr.bf16.mxu0 0
    %4305 = vmatpush1.bf16.msra.mxu0 0
    %4306 = vmatprep.subr.bf16.mxu0 0
    %4307 = vmatpush1.bf16.msra.mxu0 0
    %4308 = vmatprep.subr.bf16.mxu0 0
    %4309 = vmatpush1.bf16.msra.mxu0 0
    %4310 = vmatprep.subr.bf16.mxu0 0
    %4311 = vmatpush1.bf16.msra.mxu0 0
    %4312 = vmatprep.subr.bf16.mxu0 0
    %4313 = vmatpush1.bf16.msra.mxu0 0
    %4314 = vmatprep.subr.bf16.mxu0 0
    %4315 = vmatpush1.bf16.msra.mxu0 0
    %4316 = vmatprep.subr.bf16.mxu0 0
    %4317 = vmatpush1.bf16.msra.mxu0 0
    %4318 = vmatprep.subr.bf16.mxu0 0
    %4319 = vmatpush1.bf16.msra.mxu0 0
    %4320 = vmatprep.subr.bf16.mxu0 0
    %4321 = vmatpush1.bf16.msra.mxu0 0
    %4322 = vmatprep.subr.bf16.mxu0 0
    %4323 = vmatpush1.bf16.msra.mxu0 0
    %4324 = vmatprep.mubr.bf16.mxu0 0
    %4325 = vmatmul.mubr.bf16.gmra.mrb[0].mxu0 %v4290
    %v4326 = vpop.f32.mrb[0].mxu0
    %v4327 = vadd.f32 0.0, %v4326
    %v4328 = vpop.f32.mrb[0].mxu0
    %v4329 = vpop.f32.mrb[0].mxu0
    %v4330 = vpop.f32.mrb[0].mxu0
    %4331 = vdwg.mxu0
    %v4333 = vsel %vm278, %v4287, 0
    %4335 = vmatprep.subr.bf16.mxu0 0
    %4336 = vmatpush1.bf16.msra.mxu0 %v1060
    %4337 = vmatprep.subr.bf16.mxu0 0
    %4338 = vmatpush1.bf16.msra.mxu0 %v1061
    %4339 = vmatprep.subr.bf16.mxu0 0
    %4340 = vmatpush1.bf16.msra.mxu0 0
    %4341 = vmatprep.subr.bf16.mxu0 0
    %4342 = vmatpush1.bf16.msra.mxu0 0
    %4343 = vmatprep.subr.bf16.mxu0 0
    %4344 = vmatpush1.bf16.msra.mxu0 0
    %4345 = vmatprep.subr.bf16.mxu0 0
    %4346 = vmatpush1.bf16.msra.mxu0 0
    %4347 = vmatprep.subr.bf16.mxu0 0
    %4348 = vmatpush1.bf16.msra.mxu0 0
    %4349 = vmatprep.subr.bf16.mxu0 0
    %4350 = vmatpush1.bf16.msra.mxu0 0
    %4351 = vmatprep.subr.bf16.mxu0 0
    %4352 = vmatpush1.bf16.msra.mxu0 0
    %4353 = vmatprep.subr.bf16.mxu0 0
    %4354 = vmatpush1.bf16.msra.mxu0 0
    %4355 = vmatprep.subr.bf16.mxu0 0
    %4356 = vmatpush1.bf16.msra.mxu0 0
    %4357 = vmatprep.subr.bf16.mxu0 0
    %4358 = vmatpush1.bf16.msra.mxu0 0
    %4359 = vmatprep.subr.bf16.mxu0 0
    %4360 = vmatpush1.bf16.msra.mxu0 0
    %4361 = vmatprep.subr.bf16.mxu0 0
    %4362 = vmatpush1.bf16.msra.mxu0 0
    %4363 = vmatprep.subr.bf16.mxu0 0
    %4364 = vmatpush1.bf16.msra.mxu0 0
    %4365 = vmatprep.subr.bf16.mxu0 0
    %4366 = vmatpush1.bf16.msra.mxu0 0
    %4367 = vmatprep.mubr.bf16.mxu0 0
    %4368 = vmatmul.mubr.bf16.gmra.mrb[0].mxu0 %v4333
    %v4369 = vpop.f32.mrb[0].mxu0
    %v4370 = vadd.f32 %v4327, %v4369
    %v4371 = vpop.f32.mrb[0].mxu0
    %v4372 = vpop.f32.mrb[0].mxu0
    %v4373 = vpop.f32.mrb[0].mxu0
    %4374 = vdwg.mxu0
    %v4375 = vadd.f32 %v4370, %v232
    %v4376 = vxor.u32 %v4375, 2147483648
    %v4377 = vmul.f32 %v4376, 1.442695
    %v4378 = vpow.pop %v4377
    %v4379 = vadd.f32 %v4378, 1.0
    %v4380 = vrcp.pop %v4379
    %v4381 = vmul.f32 1.0, %v4380
    %4382 = vmatprep.subr.bf16.mxu0 0
    %4383 = vmatpush1.bf16.msra.mxu0 %v1132
    %4384 = vmatprep.subr.bf16.mxu0 0
    %4385 = vmatpush1.bf16.msra.mxu0 %v1133
    %4386 = vmatprep.subr.bf16.mxu0 0
    %4387 = vmatpush1.bf16.msra.mxu0 0
    %4388 = vmatprep.subr.bf16.mxu0 0
    %4389 = vmatpush1.bf16.msra.mxu0 0
    %4390 = vmatprep.subr.bf16.mxu0 0
    %4391 = vmatpush1.bf16.msra.mxu0 0
    %4392 = vmatprep.subr.bf16.mxu0 0
    %4393 = vmatpush1.bf16.msra.mxu0 0
    %4394 = vmatprep.subr.bf16.mxu0 0
    %4395 = vmatpush1.bf16.msra.mxu0 0
    %4396 = vmatprep.subr.bf16.mxu0 0
    %4397 = vmatpush1.bf16.msra.mxu0 0
    %4398 = vmatprep.subr.bf16.mxu0 0
    %4399 = vmatpush1.bf16.msra.mxu0 0
    %4400 = vmatprep.subr.bf16.mxu0 0
    %4401 = vmatpush1.bf16.msra.mxu0 0
    %4402 = vmatprep.subr.bf16.mxu0 0
    %4403 = vmatpush1.bf16.msra.mxu0 0
    %4404 = vmatprep.subr.bf16.mxu0 0
    %4405 = vmatpush1.bf16.msra.mxu0 0
    %4406 = vmatprep.subr.bf16.mxu0 0
    %4407 = vmatpush1.bf16.msra.mxu0 0
    %4408 = vmatprep.subr.bf16.mxu0 0
    %4409 = vmatpush1.bf16.msra.mxu0 0
    %4410 = vmatprep.subr.bf16.mxu0 0
    %4411 = vmatpush1.bf16.msra.mxu0 0
    %4412 = vmatprep.subr.bf16.mxu0 0
    %4413 = vmatpush1.bf16.msra.mxu0 0
    %4414 = vmatprep.mubr.bf16.mxu0 0
    %4415 = vmatmul.mubr.bf16.gmra.mrb[0].mxu0 %v4290
    %v4416 = vpop.f32.mrb[0].mxu0
    %v4417 = vadd.f32 0.0, %v4416
    %v4418 = vpop.f32.mrb[0].mxu0
    %v4419 = vpop.f32.mrb[0].mxu0
    %v4420 = vpop.f32.mrb[0].mxu0
    %4421 = vdwg.mxu0
    %4422 = vmatprep.subr.bf16.mxu0 0
    %4423 = vmatpush1.bf16.msra.mxu0 %v1184
    %4424 = vmatprep.subr.bf16.mxu0 0
    %4425 = vmatpush1.bf16.msra.mxu0 %v1185
    %4426 = vmatprep.subr.bf16.mxu0 0
    %4427 = vmatpush1.bf16.msra.mxu0 0
    %4428 = vmatprep.subr.bf16.mxu0 0
    %4429 = vmatpush1.bf16.msra.mxu0 0
    %4430 = vmatprep.subr.bf16.mxu0 0
    %4431 = vmatpush1.bf16.msra.mxu0 0
    %4432 = vmatprep.subr.bf16.mxu0 0
    %4433 = vmatpush1.bf16.msra.mxu0 0
    %4434 = vmatprep.subr.bf16.mxu0 0
    %4435 = vmatpush1.bf16.msra.mxu0 0
    %4436 = vmatprep.subr.bf16.mxu0 0
    %4437 = vmatpush1.bf16.msra.mxu0 0
    %4438 = vmatprep.subr.bf16.mxu0 0
    %4439 = vmatpush1.bf16.msra.mxu0 0
    %4440 = vmatprep.subr.bf16.mxu0 0
    %4441 = vmatpush1.bf16.msra.mxu0 0
    %4442 = vmatprep.subr.bf16.mxu0 0
    %4443 = vmatpush1.bf16.msra.mxu0 0
    %4444 = vmatprep.subr.bf16.mxu0 0
    %4445 = vmatpush1.bf16.msra.mxu0 0
    %4446 = vmatprep.subr.bf16.mxu0 0
    %4447 = vmatpush1.bf16.msra.mxu0 0
    %4448 = vmatprep.subr.bf16.mxu0 0
    %4449 = vmatpush1.bf16.msra.mxu0 0
    %4450 = vmatprep.subr.bf16.mxu0 0
    %4451 = vmatpush1.bf16.msra.mxu0 0
    %4452 = vmatprep.subr.bf16.mxu0 0
    %4453 = vmatpush1.bf16.msra.mxu0 0
    %4454 = vmatprep.mubr.bf16.mxu0 0
    %4455 = vmatmul.mubr.bf16.gmra.mrb[0].mxu0 %v4333
    %v4456 = vpop.f32.mrb[0].mxu0
    %v4457 = vadd.f32 %v4417, %v4456
    %v4458 = vpop.f32.mrb[0].mxu0
    %v4459 = vpop.f32.mrb[0].mxu0
    %v4460 = vpop.f32.mrb[0].mxu0
    %4461 = vdwg.mxu0
    %v4462 = vadd.f32 %v4457, %v240
    %v4463 = vxor.u32 %v4462, 2147483648
    %v4464 = vmul.f32 %v4463, 1.442695
    %v4465 = vpow.pop %v4464
    %v4466 = vadd.f32 %v4465, 1.0
    %v4467 = vrcp.pop %v4466
    %v4468 = vmul.f32 1.0, %v4467
    %4469 = vmatprep.subr.bf16.mxu0 0
    %4470 = vmatpush1.bf16.msra.mxu0 %v1248
    %4471 = vmatprep.subr.bf16.mxu0 0
    %4472 = vmatpush1.bf16.msra.mxu0 %v1249
    %4473 = vmatprep.subr.bf16.mxu0 0
    %4474 = vmatpush1.bf16.msra.mxu0 0
    %4475 = vmatprep.subr.bf16.mxu0 0
    %4476 = vmatpush1.bf16.msra.mxu0 0
    %4477 = vmatprep.subr.bf16.mxu0 0
    %4478 = vmatpush1.bf16.msra.mxu0 0
    %4479 = vmatprep.subr.bf16.mxu0 0
    %4480 = vmatpush1.bf16.msra.mxu0 0
    %4481 = vmatprep.subr.bf16.mxu0 0
    %4482 = vmatpush1.bf16.msra.mxu0 0
    %4483 = vmatprep.subr.bf16.mxu0 0
    %4484 = vmatpush1.bf16.msra.mxu0 0
    %4485 = vmatprep.subr.bf16.mxu0 0
    %4486 = vmatpush1.bf16.msra.mxu0 0
    %4487 = vmatprep.subr.bf16.mxu0 0
    %4488 = vmatpush1.bf16.msra.mxu0 0
    %4489 = vmatprep.subr.bf16.mxu0 0
    %4490 = vmatpush1.bf16.msra.mxu0 0
    %4491 = vmatprep.subr.bf16.mxu0 0
    %4492 = vmatpush1.bf16.msra.mxu0 0
    %4493 = vmatprep.subr.bf16.mxu0 0
    %4494 = vmatpush1.bf16.msra.mxu0 0
    %4495 = vmatprep.subr.bf16.mxu0 0
    %4496 = vmatpush1.bf16.msra.mxu0 0
    %4497 = vmatprep.subr.bf16.mxu0 0
    %4498 = vmatpush1.bf16.msra.mxu0 0
    %4499 = vmatprep.subr.bf16.mxu0 0
    %4500 = vmatpush1.bf16.msra.mxu0 0
    %4501 = vmatprep.mubr.bf16.mxu0 0
    %4502 = vmatmul.mubr.bf16.gmra.mrb[0].mxu0 %v4333
    %v4503 = vpop.f32.mrb[0].mxu0
    %v4504 = vadd.f32 %v248, %v4503
    %v4505 = vpop.f32.mrb[0].mxu0
    %v4506 = vpop.f32.mrb[0].mxu0
    %v4507 = vpop.f32.mrb[0].mxu0
    %4508 = vdwg.mxu0
    %4509 = vmatprep.subr.bf16.mxu0 0
    %4510 = vmatpush1.bf16.msra.mxu0 %v1305
    %4511 = vmatprep.subr.bf16.mxu0 0
    %4512 = vmatpush1.bf16.msra.mxu0 %v1306
    %4513 = vmatprep.subr.bf16.mxu0 0
    %4514 = vmatpush1.bf16.msra.mxu0 0
    %4515 = vmatprep.subr.bf16.mxu0 0
    %4516 = vmatpush1.bf16.msra.mxu0 0
    %4517 = vmatprep.subr.bf16.mxu0 0
    %4518 = vmatpush1.bf16.msra.mxu0 0
    %4519 = vmatprep.subr.bf16.mxu0 0
    %4520 = vmatpush1.bf16.msra.mxu0 0
    %4521 = vmatprep.subr.bf16.mxu0 0
    %4522 = vmatpush1.bf16.msra.mxu0 0
    %4523 = vmatprep.subr.bf16.mxu0 0
    %4524 = vmatpush1.bf16.msra.mxu0 0
    %4525 = vmatprep.subr.bf16.mxu0 0
    %4526 = vmatpush1.bf16.msra.mxu0 0
    %4527 = vmatprep.subr.bf16.mxu0 0
    %4528 = vmatpush1.bf16.msra.mxu0 0
    %4529 = vmatprep.subr.bf16.mxu0 0
    %4530 = vmatpush1.bf16.msra.mxu0 0
    %4531 = vmatprep.subr.bf16.mxu0 0
    %4532 = vmatpush1.bf16.msra.mxu0 0
    %4533 = vmatprep.subr.bf16.mxu0 0
    %4534 = vmatpush1.bf16.msra.mxu0 0
    %4535 = vmatprep.subr.bf16.mxu0 0
    %4536 = vmatpush1.bf16.msra.mxu0 0
    %4537 = vmatprep.subr.bf16.mxu0 0
    %4538 = vmatpush1.bf16.msra.mxu0 0
    %4539 = vmatprep.subr.bf16.mxu0 0
    %4540 = vmatpush1.bf16.msra.mxu0 0
    %4541 = vmatprep.mubr.bf16.mxu0 0
    %4542 = vmatmul.mubr.bf16.gmra.mrb[0].mxu0 %v4290
    %v4543 = vpop.f32.mrb[0].mxu0
    %v4544 = vadd.f32 %v256, %v4543
    %v4545 = vpop.f32.mrb[0].mxu0
    %v4546 = vpop.f32.mrb[0].mxu0
    %v4547 = vpop.f32.mrb[0].mxu0
    %4548 = vdwg.mxu0
    %v4549 = vmul.f32 %v4381, %v4544
    %v4550 = vadd.f32 %v4504, %v4549
    %v4551 = vtanh.pop %v4550
    %v4552 = vsub.f32 1.0, %v4468
    %v4553 = vmul.f32 %v4552, %v4551
    %v4554 = vmul.f32 %v4468, %v3755
    %v4555 = vadd.f32 %v4553, %v4554
    %s4556 = scalar_lea.vmem [#allocation2], 5
    %v4557 = vld [vmem:[%s4556] sm:$0x1]
    %4558 = vmatprep.subr.bf16.mxu0 0
    %4559 = vmatpush1.bf16.msra.mxu0 %v274
    %4560 = vmatprep.subr.bf16.mxu0 0
    %4561 = vmatpush1.bf16.msra.mxu0 %v275
    %4562 = vmatprep.subr.bf16.mxu0 0
    %4563 = vmatpush1.bf16.msra.mxu0 0
    %4564 = vmatprep.subr.bf16.mxu0 0
    %4565 = vmatpush1.bf16.msra.mxu0 0
    %4566 = vmatprep.subr.bf16.mxu0 0
    %4567 = vmatpush1.bf16.msra.mxu0 0
    %4568 = vmatprep.subr.bf16.mxu0 0
    %4569 = vmatpush1.bf16.msra.mxu0 0
    %4570 = vmatprep.subr.bf16.mxu0 0
    %4571 = vmatpush1.bf16.msra.mxu0 0
    %4572 = vmatprep.subr.bf16.mxu0 0
    %4573 = vmatpush1.bf16.msra.mxu0 0
    %4574 = vmatprep.subr.bf16.mxu0 0
    %4575 = vmatpush1.bf16.msra.mxu0 0
    %4576 = vmatprep.subr.bf16.mxu0 0
    %4577 = vmatpush1.bf16.msra.mxu0 0
    %4578 = vmatprep.subr.bf16.mxu0 0
    %4579 = vmatpush1.bf16.msra.mxu0 0
    %4580 = vmatprep.subr.bf16.mxu0 0
    %4581 = vmatpush1.bf16.msra.mxu0 0
    %4582 = vmatprep.subr.bf16.mxu0 0
    %4583 = vmatpush1.bf16.msra.mxu0 0
    %4584 = vmatprep.subr.bf16.mxu0 0
    %4585 = vmatpush1.bf16.msra.mxu0 0
    %4586 = vmatprep.subr.bf16.mxu0 0
    %4587 = vmatpush1.bf16.msra.mxu0 0
    %4588 = vmatprep.subr.bf16.mxu0 0
    %4589 = vmatpush1.bf16.msra.mxu0 0
    %4590 = vmatprep.mubr.bf16.mxu0 0
    %4591 = vmatmul.mubr.bf16.gmra.mrb[0].mxu0 %v4064
    %v4592 = vpop.f32.mrb[0].mxu0
    %v4593 = vadd.f32 0.0, %v4592
    %v4594 = vpop.f32.mrb[0].mxu0
    %v4595 = vpop.f32.mrb[0].mxu0
    %v4596 = vpop.f32.mrb[0].mxu0
    %4597 = vdwg.mxu0
    %v4599 = vsel %vm331, %v4557, 0
    %4601 = vmatprep.subr.bf16.mxu0 0
    %4602 = vmatpush1.bf16.msra.mxu0 %v328
    %4603 = vmatprep.subr.bf16.mxu0 0
    %4604 = vmatpush1.bf16.msra.mxu0 %v337
    %4605 = vmatprep.subr.bf16.mxu0 0
    %4606 = vmatpush1.bf16.msra.mxu0 0
    %4607 = vmatprep.subr.bf16.mxu0 0
    %4608 = vmatpush1.bf16.msra.mxu0 0
    %4609 = vmatprep.subr.bf16.mxu0 0
    %4610 = vmatpush1.bf16.msra.mxu0 0
    %4611 = vmatprep.subr.bf16.mxu0 0
    %4612 = vmatpush1.bf16.msra.mxu0 0
    %4613 = vmatprep.subr.bf16.mxu0 0
    %4614 = vmatpush1.bf16.msra.mxu0 0
    %4615 = vmatprep.subr.bf16.mxu0 0
    %4616 = vmatpush1.bf16.msra.mxu0 0
    %4617 = vmatprep.subr.bf16.mxu0 0
    %4618 = vmatpush1.bf16.msra.mxu0 0
    %4619 = vmatprep.subr.bf16.mxu0 0
    %4620 = vmatpush1.bf16.msra.mxu0 0
    %4621 = vmatprep.subr.bf16.mxu0 0
    %4622 = vmatpush1.bf16.msra.mxu0 0
    %4623 = vmatprep.subr.bf16.mxu0 0
    %4624 = vmatpush1.bf16.msra.mxu0 0
    %4625 = vmatprep.subr.bf16.mxu0 0
    %4626 = vmatpush1.bf16.msra.mxu0 0
    %4627 = vmatprep.subr.bf16.mxu0 0
    %4628 = vmatpush1.bf16.msra.mxu0 0
    %4629 = vmatprep.subr.bf16.mxu0 0
    %4630 = vmatpush1.bf16.msra.mxu0 0
    %4631 = vmatprep.subr.bf16.mxu0 0
    %4632 = vmatpush1.bf16.msra.mxu0 0
    %4633 = vmatprep.mubr.bf16.mxu0 0
    %4634 = vmatmul.mubr.bf16.gmra.mrb[0].mxu0 %v4599
    %v4635 = vpop.f32.mrb[0].mxu0
    %v4636 = vadd.f32 %v4593, %v4635
    %v4637 = vpop.f32.mrb[0].mxu0
    %v4638 = vpop.f32.mrb[0].mxu0
    %v4639 = vpop.f32.mrb[0].mxu0
    %4640 = vdwg.mxu0
    %v4641 = vadd.f32 %v4636, %v170
    %v4642 = vxor.u32 %v4641, 2147483648
    %v4643 = vmul.f32 %v4642, 1.442695
    %v4644 = vpow.pop %v4643
    %v4645 = vadd.f32 %v4644, 1.0
    %v4646 = vrcp.pop %v4645
    %v4647 = vmul.f32 1.0, %v4646
    %4648 = vmatprep.subr.bf16.mxu0 0
    %4649 = vmatpush1.bf16.msra.mxu0 %v403
    %4650 = vmatprep.subr.bf16.mxu0 0
    %4651 = vmatpush1.bf16.msra.mxu0 %v404
    %4652 = vmatprep.subr.bf16.mxu0 0
    %4653 = vmatpush1.bf16.msra.mxu0 0
    %4654 = vmatprep.subr.bf16.mxu0 0
    %4655 = vmatpush1.bf16.msra.mxu0 0
    %4656 = vmatprep.subr.bf16.mxu0 0
    %4657 = vmatpush1.bf16.msra.mxu0 0
    %4658 = vmatprep.subr.bf16.mxu0 0
    %4659 = vmatpush1.bf16.msra.mxu0 0
    %4660 = vmatprep.subr.bf16.mxu0 0
    %4661 = vmatpush1.bf16.msra.mxu0 0
    %4662 = vmatprep.subr.bf16.mxu0 0
    %4663 = vmatpush1.bf16.msra.mxu0 0
    %4664 = vmatprep.subr.bf16.mxu0 0
    %4665 = vmatpush1.bf16.msra.mxu0 0
    %4666 = vmatprep.subr.bf16.mxu0 0
    %4667 = vmatpush1.bf16.msra.mxu0 0
    %4668 = vmatprep.subr.bf16.mxu0 0
    %4669 = vmatpush1.bf16.msra.mxu0 0
    %4670 = vmatprep.subr.bf16.mxu0 0
    %4671 = vmatpush1.bf16.msra.mxu0 0
    %4672 = vmatprep.subr.bf16.mxu0 0
    %4673 = vmatpush1.bf16.msra.mxu0 0
    %4674 = vmatprep.subr.bf16.mxu0 0
    %4675 = vmatpush1.bf16.msra.mxu0 0
    %4676 = vmatprep.subr.bf16.mxu0 0
    %4677 = vmatpush1.bf16.msra.mxu0 0
    %4678 = vmatprep.subr.bf16.mxu0 0
    %4679 = vmatpush1.bf16.msra.mxu0 0
    %4680 = vmatprep.mubr.bf16.mxu0 0
    %4681 = vmatmul.mubr.bf16.gmra.mrb[0].mxu0 %v4064
    %v4682 = vpop.f32.mrb[0].mxu0
    %v4683 = vadd.f32 0.0, %v4682
    %v4684 = vpop.f32.mrb[0].mxu0
    %v4685 = vpop.f32.mrb[0].mxu0
    %v4686 = vpop.f32.mrb[0].mxu0
    %4687 = vdwg.mxu0
    %4688 = vmatprep.subr.bf16.mxu0 0
    %4689 = vmatpush1.bf16.msra.mxu0 %v453
    %4690 = vmatprep.subr.bf16.mxu0 0
    %4691 = vmatpush1.bf16.msra.mxu0 %v457
    %4692 = vmatprep.subr.bf16.mxu0 0
    %4693 = vmatpush1.bf16.msra.mxu0 0
    %4694 = vmatprep.subr.bf16.mxu0 0
    %4695 = vmatpush1.bf16.msra.mxu0 0
    %4696 = vmatprep.subr.bf16.mxu0 0
    %4697 = vmatpush1.bf16.msra.mxu0 0
    %4698 = vmatprep.subr.bf16.mxu0 0
    %4699 = vmatpush1.bf16.msra.mxu0 0
    %4700 = vmatprep.subr.bf16.mxu0 0
    %4701 = vmatpush1.bf16.msra.mxu0 0
    %4702 = vmatprep.subr.bf16.mxu0 0
    %4703 = vmatpush1.bf16.msra.mxu0 0
    %4704 = vmatprep.subr.bf16.mxu0 0
    %4705 = vmatpush1.bf16.msra.mxu0 0
    %4706 = vmatprep.subr.bf16.mxu0 0
    %4707 = vmatpush1.bf16.msra.mxu0 0
    %4708 = vmatprep.subr.bf16.mxu0 0
    %4709 = vmatpush1.bf16.msra.mxu0 0
    %4710 = vmatprep.subr.bf16.mxu0 0
    %4711 = vmatpush1.bf16.msra.mxu0 0
    %4712 = vmatprep.subr.bf16.mxu0 0
    %4713 = vmatpush1.bf16.msra.mxu0 0
    %4714 = vmatprep.subr.bf16.mxu0 0
    %4715 = vmatpush1.bf16.msra.mxu0 0
    %4716 = vmatprep.subr.bf16.mxu0 0
    %4717 = vmatpush1.bf16.msra.mxu0 0
    %4718 = vmatprep.subr.bf16.mxu0 0
    %4719 = vmatpush1.bf16.msra.mxu0 0
    %4720 = vmatprep.mubr.bf16.mxu0 0
    %4721 = vmatmul.mubr.bf16.gmra.mrb[0].mxu0 %v4599
    %v4722 = vpop.f32.mrb[0].mxu0
    %v4723 = vadd.f32 %v4683, %v4722
    %v4724 = vpop.f32.mrb[0].mxu0
    %v4725 = vpop.f32.mrb[0].mxu0
    %v4726 = vpop.f32.mrb[0].mxu0
    %4727 = vdwg.mxu0
    %v4728 = vadd.f32 %v4723, %v178
    %v4729 = vxor.u32 %v4728, 2147483648
    %v4730 = vmul.f32 %v4729, 1.442695
    %v4731 = vpow.pop %v4730
    %v4732 = vadd.f32 %v4731, 1.0
    %v4733 = vrcp.pop %v4732
    %v4734 = vmul.f32 1.0, %v4733
    %4735 = vmatprep.subr.bf16.mxu0 0
    %4736 = vmatpush1.bf16.msra.mxu0 %v516
    %4737 = vmatprep.subr.bf16.mxu0 0
    %4738 = vmatpush1.bf16.msra.mxu0 %v520
    %4739 = vmatprep.subr.bf16.mxu0 0
    %4740 = vmatpush1.bf16.msra.mxu0 0
    %4741 = vmatprep.subr.bf16.mxu0 0
    %4742 = vmatpush1.bf16.msra.mxu0 0
    %4743 = vmatprep.subr.bf16.mxu0 0
    %4744 = vmatpush1.bf16.msra.mxu0 0
    %4745 = vmatprep.subr.bf16.mxu0 0
    %4746 = vmatpush1.bf16.msra.mxu0 0
    %4747 = vmatprep.subr.bf16.mxu0 0
    %4748 = vmatpush1.bf16.msra.mxu0 0
    %4749 = vmatprep.subr.bf16.mxu0 0
    %4750 = vmatpush1.bf16.msra.mxu0 0
    %4751 = vmatprep.subr.bf16.mxu0 0
    %4752 = vmatpush1.bf16.msra.mxu0 0
    %4753 = vmatprep.subr.bf16.mxu0 0
    %4754 = vmatpush1.bf16.msra.mxu0 0
    %4755 = vmatprep.subr.bf16.mxu0 0
    %4756 = vmatpush1.bf16.msra.mxu0 0
    %4757 = vmatprep.subr.bf16.mxu0 0
    %4758 = vmatpush1.bf16.msra.mxu0 0
    %4759 = vmatprep.subr.bf16.mxu0 0
    %4760 = vmatpush1.bf16.msra.mxu0 0
    %4761 = vmatprep.subr.bf16.mxu0 0
    %4762 = vmatpush1.bf16.msra.mxu0 0
    %4763 = vmatprep.subr.bf16.mxu0 0
    %4764 = vmatpush1.bf16.msra.mxu0 0
    %4765 = vmatprep.subr.bf16.mxu0 0
    %4766 = vmatpush1.bf16.msra.mxu0 0
    %4767 = vmatprep.mubr.bf16.mxu0 0
    %4768 = vmatmul.mubr.bf16.gmra.mrb[0].mxu0 %v4599
    %v4769 = vpop.f32.mrb[0].mxu0
    %v4770 = vadd.f32 %v186, %v4769
    %v4771 = vpop.f32.mrb[0].mxu0
    %v4772 = vpop.f32.mrb[0].mxu0
    %v4773 = vpop.f32.mrb[0].mxu0
    %4774 = vdwg.mxu0
    %4775 = vmatprep.subr.bf16.mxu0 0
    %4776 = vmatpush1.bf16.msra.mxu0 %v575
    %4777 = vmatprep.subr.bf16.mxu0 0
    %4778 = vmatpush1.bf16.msra.mxu0 %v576
    %4779 = vmatprep.subr.bf16.mxu0 0
    %4780 = vmatpush1.bf16.msra.mxu0 0
    %4781 = vmatprep.subr.bf16.mxu0 0
    %4782 = vmatpush1.bf16.msra.mxu0 0
    %4783 = vmatprep.subr.bf16.mxu0 0
    %4784 = vmatpush1.bf16.msra.mxu0 0
    %4785 = vmatprep.subr.bf16.mxu0 0
    %4786 = vmatpush1.bf16.msra.mxu0 0
    %4787 = vmatprep.subr.bf16.mxu0 0
    %4788 = vmatpush1.bf16.msra.mxu0 0
    %4789 = vmatprep.subr.bf16.mxu0 0
    %4790 = vmatpush1.bf16.msra.mxu0 0
    %4791 = vmatprep.subr.bf16.mxu0 0
    %4792 = vmatpush1.bf16.msra.mxu0 0
    %4793 = vmatprep.subr.bf16.mxu0 0
    %4794 = vmatpush1.bf16.msra.mxu0 0
    %4795 = vmatprep.subr.bf16.mxu0 0
    %4796 = vmatpush1.bf16.msra.mxu0 0
    %4797 = vmatprep.subr.bf16.mxu0 0
    %4798 = vmatpush1.bf16.msra.mxu0 0
    %4799 = vmatprep.subr.bf16.mxu0 0
    %4800 = vmatpush1.bf16.msra.mxu0 0
    %4801 = vmatprep.subr.bf16.mxu0 0
    %4802 = vmatpush1.bf16.msra.mxu0 0
    %4803 = vmatprep.subr.bf16.mxu0 0
    %4804 = vmatpush1.bf16.msra.mxu0 0
    %4805 = vmatprep.subr.bf16.mxu0 0
    %4806 = vmatpush1.bf16.msra.mxu0 0
    %4807 = vmatprep.mubr.bf16.mxu0 0
    %4808 = vmatmul.mubr.bf16.gmra.mrb[0].mxu0 %v4064
    %v4809 = vpop.f32.mrb[0].mxu0
    %v4810 = vadd.f32 %v194, %v4809
    %v4811 = vpop.f32.mrb[0].mxu0
    %v4812 = vpop.f32.mrb[0].mxu0
    %v4813 = vpop.f32.mrb[0].mxu0
    %4814 = vdwg.mxu0
    %v4815 = vmul.f32 %v4647, %v4810
    %v4816 = vadd.f32 %v4770, %v4815
    %v4817 = vtanh.pop %v4816
    %v4818 = vsub.f32 1.0, %v4734
    %v4819 = vmul.f32 %v4818, %v4817
    %v4820 = vmul.f32 %v4734, %v4021
    %v4821 = vadd.f32 %v4819, %v4820
    %v4822 = vpack.c.bf16 %v4821, %v4821
    %4823 = vmatprep.subr.bf16.mxu0 0
    %4824 = vmatpush1.bf16.msra.mxu0 %v643
    %4825 = vmatprep.subr.bf16.mxu0 0
    %4826 = vmatpush1.bf16.msra.mxu0 %v644
    %4827 = vmatprep.subr.bf16.mxu0 0
    %4828 = vmatpush1.bf16.msra.mxu0 0
    %4829 = vmatprep.subr.bf16.mxu0 0
    %4830 = vmatpush1.bf16.msra.mxu0 0
    %4831 = vmatprep.subr.bf16.mxu0 0
    %4832 = vmatpush1.bf16.msra.mxu0 0
    %4833 = vmatprep.subr.bf16.mxu0 0
    %4834 = vmatpush1.bf16.msra.mxu0 0
    %4835 = vmatprep.subr.bf16.mxu0 0
    %4836 = vmatpush1.bf16.msra.mxu0 0
    %4837 = vmatprep.subr.bf16.mxu0 0
    %4838 = vmatpush1.bf16.msra.mxu0 0
    %4839 = vmatprep.subr.bf16.mxu0 0
    %4840 = vmatpush1.bf16.msra.mxu0 0
    %4841 = vmatprep.subr.bf16.mxu0 0
    %4842 = vmatpush1.bf16.msra.mxu0 0
    %4843 = vmatprep.subr.bf16.mxu0 0
    %4844 = vmatpush1.bf16.msra.mxu0 0
    %4845 = vmatprep.subr.bf16.mxu0 0
    %4846 = vmatpush1.bf16.msra.mxu0 0
    %4847 = vmatprep.subr.bf16.mxu0 0
    %4848 = vmatpush1.bf16.msra.mxu0 0
    %4849 = vmatprep.subr.bf16.mxu0 0
    %4850 = vmatpush1.bf16.msra.mxu0 0
    %4851 = vmatprep.subr.bf16.mxu0 0
    %4852 = vmatpush1.bf16.msra.mxu0 0
    %4853 = vmatprep.subr.bf16.mxu0 0
    %4854 = vmatpush1.bf16.msra.mxu0 0
    %4855 = vmatprep.mubr.bf16.mxu0 0
    %4856 = vmatmul.mubr.bf16.gmra.mrb[0].mxu0 %v4333
    %v4857 = vpop.f32.mrb[0].mxu0
    %v4858 = vadd.f32 0.0, %v4857
    %v4859 = vpop.f32.mrb[0].mxu0
    %v4860 = vpop.f32.mrb[0].mxu0
    %v4861 = vpop.f32.mrb[0].mxu0
    %4862 = vdwg.mxu0
    %v4864 = vsel %vm278, %v4822, 0
    %4866 = vmatprep.subr.bf16.mxu0 0
    %4867 = vmatpush1.bf16.msra.mxu0 %v695
    %4868 = vmatprep.subr.bf16.mxu0 0
    %4869 = vmatpush1.bf16.msra.mxu0 %v696
    %4870 = vmatprep.subr.bf16.mxu0 0
    %4871 = vmatpush1.bf16.msra.mxu0 0
    %4872 = vmatprep.subr.bf16.mxu0 0
    %4873 = vmatpush1.bf16.msra.mxu0 0
    %4874 = vmatprep.subr.bf16.mxu0 0
    %4875 = vmatpush1.bf16.msra.mxu0 0
    %4876 = vmatprep.subr.bf16.mxu0 0
    %4877 = vmatpush1.bf16.msra.mxu0 0
    %4878 = vmatprep.subr.bf16.mxu0 0
    %4879 = vmatpush1.bf16.msra.mxu0 0
    %4880 = vmatprep.subr.bf16.mxu0 0
    %4881 = vmatpush1.bf16.msra.mxu0 0
    %4882 = vmatprep.subr.bf16.mxu0 0
    %4883 = vmatpush1.bf16.msra.mxu0 0
    %4884 = vmatprep.subr.bf16.mxu0 0
    %4885 = vmatpush1.bf16.msra.mxu0 0
    %4886 = vmatprep.subr.bf16.mxu0 0
    %4887 = vmatpush1.bf16.msra.mxu0 0
    %4888 = vmatprep.subr.bf16.mxu0 0
    %4889 = vmatpush1.bf16.msra.mxu0 0
    %4890 = vmatprep.subr.bf16.mxu0 0
    %4891 = vmatpush1.bf16.msra.mxu0 0
    %4892 = vmatprep.subr.bf16.mxu0 0
    %4893 = vmatpush1.bf16.msra.mxu0 0
    %4894 = vmatprep.subr.bf16.mxu0 0
    %4895 = vmatpush1.bf16.msra.mxu0 0
    %4896 = vmatprep.subr.bf16.mxu0 0
    %4897 = vmatpush1.bf16.msra.mxu0 0
    %4898 = vmatprep.mubr.bf16.mxu0 0
    %4899 = vmatmul.mubr.bf16.gmra.mrb[0].mxu0 %v4864
    %v4900 = vpop.f32.mrb[0].mxu0
    %v4901 = vadd.f32 %v4858, %v4900
    %v4902 = vpop.f32.mrb[0].mxu0
    %v4903 = vpop.f32.mrb[0].mxu0
    %v4904 = vpop.f32.mrb[0].mxu0
    %4905 = vdwg.mxu0
    %v4906 = vadd.f32 %v4901, %v201
    %v4907 = vxor.u32 %v4906, 2147483648
    %v4908 = vmul.f32 %v4907, 1.442695
    %v4909 = vpow.pop %v4908
    %v4910 = vadd.f32 %v4909, 1.0
    %v4911 = vrcp.pop %v4910
    %v4912 = vmul.f32 1.0, %v4911
    %4913 = vmatprep.subr.bf16.mxu0 0
    %4914 = vmatpush1.bf16.msra.mxu0 %v767
    %4915 = vmatprep.subr.bf16.mxu0 0
    %4916 = vmatpush1.bf16.msra.mxu0 %v768
    %4917 = vmatprep.subr.bf16.mxu0 0
    %4918 = vmatpush1.bf16.msra.mxu0 0
    %4919 = vmatprep.subr.bf16.mxu0 0
    %4920 = vmatpush1.bf16.msra.mxu0 0
    %4921 = vmatprep.subr.bf16.mxu0 0
    %4922 = vmatpush1.bf16.msra.mxu0 0
    %4923 = vmatprep.subr.bf16.mxu0 0
    %4924 = vmatpush1.bf16.msra.mxu0 0
    %4925 = vmatprep.subr.bf16.mxu0 0
    %4926 = vmatpush1.bf16.msra.mxu0 0
    %4927 = vmatprep.subr.bf16.mxu0 0
    %4928 = vmatpush1.bf16.msra.mxu0 0
    %4929 = vmatprep.subr.bf16.mxu0 0
    %4930 = vmatpush1.bf16.msra.mxu0 0
    %4931 = vmatprep.subr.bf16.mxu0 0
    %4932 = vmatpush1.bf16.msra.mxu0 0
    %4933 = vmatprep.subr.bf16.mxu0 0
    %4934 = vmatpush1.bf16.msra.mxu0 0
    %4935 = vmatprep.subr.bf16.mxu0 0
    %4936 = vmatpush1.bf16.msra.mxu0 0
    %4937 = vmatprep.subr.bf16.mxu0 0
    %4938 = vmatpush1.bf16.msra.mxu0 0
    %4939 = vmatprep.subr.bf16.mxu0 0
    %4940 = vmatpush1.bf16.msra.mxu0 0
    %4941 = vmatprep.subr.bf16.mxu0 0
    %4942 = vmatpush1.bf16.msra.mxu0 0
    %4943 = vmatprep.subr.bf16.mxu0 0
    %4944 = vmatpush1.bf16.msra.mxu0 0
    %4945 = vmatprep.mubr.bf16.mxu0 0
    %4946 = vmatmul.mubr.bf16.gmra.mrb[0].mxu0 %v4333
    %v4947 = vpop.f32.mrb[0].mxu0
    %v4948 = vadd.f32 0.0, %v4947
    %v4949 = vpop.f32.mrb[0].mxu0
    %v4950 = vpop.f32.mrb[0].mxu0
    %v4951 = vpop.f32.mrb[0].mxu0
    %4952 = vdwg.mxu0
    %4953 = vmatprep.subr.bf16.mxu0 0
    %4954 = vmatpush1.bf16.msra.mxu0 %v819
    %4955 = vmatprep.subr.bf16.mxu0 0
    %4956 = vmatpush1.bf16.msra.mxu0 %v820
    %4957 = vmatprep.subr.bf16.mxu0 0
    %4958 = vmatpush1.bf16.msra.mxu0 0
    %4959 = vmatprep.subr.bf16.mxu0 0
    %4960 = vmatpush1.bf16.msra.mxu0 0
    %4961 = vmatprep.subr.bf16.mxu0 0
    %4962 = vmatpush1.bf16.msra.mxu0 0
    %4963 = vmatprep.subr.bf16.mxu0 0
    %4964 = vmatpush1.bf16.msra.mxu0 0
    %4965 = vmatprep.subr.bf16.mxu0 0
    %4966 = vmatpush1.bf16.msra.mxu0 0
    %4967 = vmatprep.subr.bf16.mxu0 0
    %4968 = vmatpush1.bf16.msra.mxu0 0
    %4969 = vmatprep.subr.bf16.mxu0 0
    %4970 = vmatpush1.bf16.msra.mxu0 0
    %4971 = vmatprep.subr.bf16.mxu0 0
    %4972 = vmatpush1.bf16.msra.mxu0 0
    %4973 = vmatprep.subr.bf16.mxu0 0
    %4974 = vmatpush1.bf16.msra.mxu0 0
    %4975 = vmatprep.subr.bf16.mxu0 0
    %4976 = vmatpush1.bf16.msra.mxu0 0
    %4977 = vmatprep.subr.bf16.mxu0 0
    %4978 = vmatpush1.bf16.msra.mxu0 0
    %4979 = vmatprep.subr.bf16.mxu0 0
    %4980 = vmatpush1.bf16.msra.mxu0 0
    %4981 = vmatprep.subr.bf16.mxu0 0
    %4982 = vmatpush1.bf16.msra.mxu0 0
    %4983 = vmatprep.subr.bf16.mxu0 0
    %4984 = vmatpush1.bf16.msra.mxu0 0
    %4985 = vmatprep.mubr.bf16.mxu0 0
    %4986 = vmatmul.mubr.bf16.gmra.mrb[0].mxu0 %v4864
    %v4987 = vpop.f32.mrb[0].mxu0
    %v4988 = vadd.f32 %v4948, %v4987
    %v4989 = vpop.f32.mrb[0].mxu0
    %v4990 = vpop.f32.mrb[0].mxu0
    %v4991 = vpop.f32.mrb[0].mxu0
    %4992 = vdwg.mxu0
    %v4993 = vadd.f32 %v4988, %v209
    %v4994 = vxor.u32 %v4993, 2147483648
    %v4995 = vmul.f32 %v4994, 1.442695
    %v4996 = vpow.pop %v4995
    %v4997 = vadd.f32 %v4996, 1.0
    %v4998 = vrcp.pop %v4997
    %v4999 = vmul.f32 1.0, %v4998
    %5000 = vmatprep.subr.bf16.mxu0 0
    %5001 = vmatpush1.bf16.msra.mxu0 %v883
    %5002 = vmatprep.subr.bf16.mxu0 0
    %5003 = vmatpush1.bf16.msra.mxu0 %v884
    %5004 = vmatprep.subr.bf16.mxu0 0
    %5005 = vmatpush1.bf16.msra.mxu0 0
    %5006 = vmatprep.subr.bf16.mxu0 0
    %5007 = vmatpush1.bf16.msra.mxu0 0
    %5008 = vmatprep.subr.bf16.mxu0 0
    %5009 = vmatpush1.bf16.msra.mxu0 0
    %5010 = vmatprep.subr.bf16.mxu0 0
    %5011 = vmatpush1.bf16.msra.mxu0 0
    %5012 = vmatprep.subr.bf16.mxu0 0
    %5013 = vmatpush1.bf16.msra.mxu0 0
    %5014 = vmatprep.subr.bf16.mxu0 0
    %5015 = vmatpush1.bf16.msra.mxu0 0
    %5016 = vmatprep.subr.bf16.mxu0 0
    %5017 = vmatpush1.bf16.msra.mxu0 0
    %5018 = vmatprep.subr.bf16.mxu0 0
    %5019 = vmatpush1.bf16.msra.mxu0 0
    %5020 = vmatprep.subr.bf16.mxu0 0
    %5021 = vmatpush1.bf16.msra.mxu0 0
    %5022 = vmatprep.subr.bf16.mxu0 0
    %5023 = vmatpush1.bf16.msra.mxu0 0
    %5024 = vmatprep.subr.bf16.mxu0 0
    %5025 = vmatpush1.bf16.msra.mxu0 0
    %5026 = vmatprep.subr.bf16.mxu0 0
    %5027 = vmatpush1.bf16.msra.mxu0 0
    %5028 = vmatprep.subr.bf16.mxu0 0
    %5029 = vmatpush1.bf16.msra.mxu0 0
    %5030 = vmatprep.subr.bf16.mxu0 0
    %5031 = vmatpush1.bf16.msra.mxu0 0
    %5032 = vmatprep.mubr.bf16.mxu0 0
    %5033 = vmatmul.mubr.bf16.gmra.mrb[0].mxu0 %v4864
    %v5034 = vpop.f32.mrb[0].mxu0
    %v5035 = vadd.f32 %v217, %v5034
    %v5036 = vpop.f32.mrb[0].mxu0
    %v5037 = vpop.f32.mrb[0].mxu0
    %v5038 = vpop.f32.mrb[0].mxu0
    %5039 = vdwg.mxu0
    %5040 = vmatprep.subr.bf16.mxu0 0
    %5041 = vmatpush1.bf16.msra.mxu0 %v940
    %5042 = vmatprep.subr.bf16.mxu0 0
    %5043 = vmatpush1.bf16.msra.mxu0 %v941
    %5044 = vmatprep.subr.bf16.mxu0 0
    %5045 = vmatpush1.bf16.msra.mxu0 0
    %5046 = vmatprep.subr.bf16.mxu0 0
    %5047 = vmatpush1.bf16.msra.mxu0 0
    %5048 = vmatprep.subr.bf16.mxu0 0
    %5049 = vmatpush1.bf16.msra.mxu0 0
    %5050 = vmatprep.subr.bf16.mxu0 0
    %5051 = vmatpush1.bf16.msra.mxu0 0
    %5052 = vmatprep.subr.bf16.mxu0 0
    %5053 = vmatpush1.bf16.msra.mxu0 0
    %5054 = vmatprep.subr.bf16.mxu0 0
    %5055 = vmatpush1.bf16.msra.mxu0 0
    %5056 = vmatprep.subr.bf16.mxu0 0
    %5057 = vmatpush1.bf16.msra.mxu0 0
    %5058 = vmatprep.subr.bf16.mxu0 0
    %5059 = vmatpush1.bf16.msra.mxu0 0
    %5060 = vmatprep.subr.bf16.mxu0 0
    %5061 = vmatpush1.bf16.msra.mxu0 0
    %5062 = vmatprep.subr.bf16.mxu0 0
    %5063 = vmatpush1.bf16.msra.mxu0 0
    %5064 = vmatprep.subr.bf16.mxu0 0
    %5065 = vmatpush1.bf16.msra.mxu0 0
    %5066 = vmatprep.subr.bf16.mxu0 0
    %5067 = vmatpush1.bf16.msra.mxu0 0
    %5068 = vmatprep.subr.bf16.mxu0 0
    %5069 = vmatpush1.bf16.msra.mxu0 0
    %5070 = vmatprep.subr.bf16.mxu0 0
    %5071 = vmatpush1.bf16.msra.mxu0 0
    %5072 = vmatprep.mubr.bf16.mxu0 0
    %5073 = vmatmul.mubr.bf16.gmra.mrb[0].mxu0 %v4333
    %v5074 = vpop.f32.mrb[0].mxu0
    %v5075 = vadd.f32 %v225, %v5074
    %v5076 = vpop.f32.mrb[0].mxu0
    %v5077 = vpop.f32.mrb[0].mxu0
    %v5078 = vpop.f32.mrb[0].mxu0
    %5079 = vdwg.mxu0
    %v5080 = vmul.f32 %v4912, %v5075
    %v5081 = vadd.f32 %v5035, %v5080
    %v5082 = vtanh.pop %v5081
    %v5083 = vsub.f32 1.0, %v4999
    %v5084 = vmul.f32 %v5083, %v5082
    %v5085 = vmul.f32 %v4999, %v4286
    %v5086 = vadd.f32 %v5084, %v5085
    %v5087 = vpack.c.bf16 %v5086, %v5086
    %v5088 = vpack.c.bf16 %v4555, %v4555
    %v5090 = vsel %vm278, %v5088, 0
    %5092 = vmatprep.subr.bf16.mxu0 0
    %5093 = vmatpush1.bf16.msra.mxu0 %v1008
    %5094 = vmatprep.subr.bf16.mxu0 0
    %5095 = vmatpush1.bf16.msra.mxu0 %v1009
    %5096 = vmatprep.subr.bf16.mxu0 0
    %5097 = vmatpush1.bf16.msra.mxu0 0
    %5098 = vmatprep.subr.bf16.mxu0 0
    %5099 = vmatpush1.bf16.msra.mxu0 0
    %5100 = vmatprep.subr.bf16.mxu0 0
    %5101 = vmatpush1.bf16.msra.mxu0 0
    %5102 = vmatprep.subr.bf16.mxu0 0
    %5103 = vmatpush1.bf16.msra.mxu0 0
    %5104 = vmatprep.subr.bf16.mxu0 0
    %5105 = vmatpush1.bf16.msra.mxu0 0
    %5106 = vmatprep.subr.bf16.mxu0 0
    %5107 = vmatpush1.bf16.msra.mxu0 0
    %5108 = vmatprep.subr.bf16.mxu0 0
    %5109 = vmatpush1.bf16.msra.mxu0 0
    %5110 = vmatprep.subr.bf16.mxu0 0
    %5111 = vmatpush1.bf16.msra.mxu0 0
    %5112 = vmatprep.subr.bf16.mxu0 0
    %5113 = vmatpush1.bf16.msra.mxu0 0
    %5114 = vmatprep.subr.bf16.mxu0 0
    %5115 = vmatpush1.bf16.msra.mxu0 0
    %5116 = vmatprep.subr.bf16.mxu0 0
    %5117 = vmatpush1.bf16.msra.mxu0 0
    %5118 = vmatprep.subr.bf16.mxu0 0
    %5119 = vmatpush1.bf16.msra.mxu0 0
    %5120 = vmatprep.subr.bf16.mxu0 0
    %5121 = vmatpush1.bf16.msra.mxu0 0
    %5122 = vmatprep.subr.bf16.mxu0 0
    %5123 = vmatpush1.bf16.msra.mxu0 0
    %5124 = vmatprep.mubr.bf16.mxu0 0
    %5125 = vmatmul.mubr.bf16.gmra.mrb[0].mxu0 %v5090
    %v5126 = vpop.f32.mrb[0].mxu0
    %v5127 = vadd.f32 0.0, %v5126
    %v5128 = vpop.f32.mrb[0].mxu0
    %v5129 = vpop.f32.mrb[0].mxu0
    %v5130 = vpop.f32.mrb[0].mxu0
    %5131 = vdwg.mxu0
    %v5133 = vsel %vm278, %v5087, 0
    %5135 = vmatprep.subr.bf16.mxu0 0
    %5136 = vmatpush1.bf16.msra.mxu0 %v1060
    %5137 = vmatprep.subr.bf16.mxu0 0
    %5138 = vmatpush1.bf16.msra.mxu0 %v1061
    %5139 = vmatprep.subr.bf16.mxu0 0
    %5140 = vmatpush1.bf16.msra.mxu0 0
    %5141 = vmatprep.subr.bf16.mxu0 0
    %5142 = vmatpush1.bf16.msra.mxu0 0
    %5143 = vmatprep.subr.bf16.mxu0 0
    %5144 = vmatpush1.bf16.msra.mxu0 0
    %5145 = vmatprep.subr.bf16.mxu0 0
    %5146 = vmatpush1.bf16.msra.mxu0 0
    %5147 = vmatprep.subr.bf16.mxu0 0
    %5148 = vmatpush1.bf16.msra.mxu0 0
    %5149 = vmatprep.subr.bf16.mxu0 0
    %5150 = vmatpush1.bf16.msra.mxu0 0
    %5151 = vmatprep.subr.bf16.mxu0 0
    %5152 = vmatpush1.bf16.msra.mxu0 0
    %5153 = vmatprep.subr.bf16.mxu0 0
    %5154 = vmatpush1.bf16.msra.mxu0 0
    %5155 = vmatprep.subr.bf16.mxu0 0
    %5156 = vmatpush1.bf16.msra.mxu0 0
    %5157 = vmatprep.subr.bf16.mxu0 0
    %5158 = vmatpush1.bf16.msra.mxu0 0
    %5159 = vmatprep.subr.bf16.mxu0 0
    %5160 = vmatpush1.bf16.msra.mxu0 0
    %5161 = vmatprep.subr.bf16.mxu0 0
    %5162 = vmatpush1.bf16.msra.mxu0 0
    %5163 = vmatprep.subr.bf16.mxu0 0
    %5164 = vmatpush1.bf16.msra.mxu0 0
    %5165 = vmatprep.subr.bf16.mxu0 0
    %5166 = vmatpush1.bf16.msra.mxu0 0
    %5167 = vmatprep.mubr.bf16.mxu0 0
    %5168 = vmatmul.mubr.bf16.gmra.mrb[0].mxu0 %v5133
    %v5169 = vpop.f32.mrb[0].mxu0
    %v5170 = vadd.f32 %v5127, %v5169
    %v5171 = vpop.f32.mrb[0].mxu0
    %v5172 = vpop.f32.mrb[0].mxu0
    %v5173 = vpop.f32.mrb[0].mxu0
    %5174 = vdwg.mxu0
    %v5175 = vadd.f32 %v5170, %v232
    %v5176 = vxor.u32 %v5175, 2147483648
    %v5177 = vmul.f32 %v5176, 1.442695
    %v5178 = vpow.pop %v5177
    %v5179 = vadd.f32 %v5178, 1.0
    %v5180 = vrcp.pop %v5179
    %v5181 = vmul.f32 1.0, %v5180
    %5182 = vmatprep.subr.bf16.mxu0 0
    %5183 = vmatpush1.bf16.msra.mxu0 %v1132
    %5184 = vmatprep.subr.bf16.mxu0 0
    %5185 = vmatpush1.bf16.msra.mxu0 %v1133
    %5186 = vmatprep.subr.bf16.mxu0 0
    %5187 = vmatpush1.bf16.msra.mxu0 0
    %5188 = vmatprep.subr.bf16.mxu0 0
    %5189 = vmatpush1.bf16.msra.mxu0 0
    %5190 = vmatprep.subr.bf16.mxu0 0
    %5191 = vmatpush1.bf16.msra.mxu0 0
    %5192 = vmatprep.subr.bf16.mxu0 0
    %5193 = vmatpush1.bf16.msra.mxu0 0
    %5194 = vmatprep.subr.bf16.mxu0 0
    %5195 = vmatpush1.bf16.msra.mxu0 0
    %5196 = vmatprep.subr.bf16.mxu0 0
    %5197 = vmatpush1.bf16.msra.mxu0 0
    %5198 = vmatprep.subr.bf16.mxu0 0
    %5199 = vmatpush1.bf16.msra.mxu0 0
    %5200 = vmatprep.subr.bf16.mxu0 0
    %5201 = vmatpush1.bf16.msra.mxu0 0
    %5202 = vmatprep.subr.bf16.mxu0 0
    %5203 = vmatpush1.bf16.msra.mxu0 0
    %5204 = vmatprep.subr.bf16.mxu0 0
    %5205 = vmatpush1.bf16.msra.mxu0 0
    %5206 = vmatprep.subr.bf16.mxu0 0
    %5207 = vmatpush1.bf16.msra.mxu0 0
    %5208 = vmatprep.subr.bf16.mxu0 0
    %5209 = vmatpush1.bf16.msra.mxu0 0
    %5210 = vmatprep.subr.bf16.mxu0 0
    %5211 = vmatpush1.bf16.msra.mxu0 0
    %5212 = vmatprep.subr.bf16.mxu0 0
    %5213 = vmatpush1.bf16.msra.mxu0 0
    %5214 = vmatprep.mubr.bf16.mxu0 0
    %5215 = vmatmul.mubr.bf16.gmra.mrb[0].mxu0 %v5090
    %v5216 = vpop.f32.mrb[0].mxu0
    %v5217 = vadd.f32 0.0, %v5216
    %v5218 = vpop.f32.mrb[0].mxu0
    %v5219 = vpop.f32.mrb[0].mxu0
    %v5220 = vpop.f32.mrb[0].mxu0
    %5221 = vdwg.mxu0
    %5222 = vmatprep.subr.bf16.mxu0 0
    %5223 = vmatpush1.bf16.msra.mxu0 %v1184
    %5224 = vmatprep.subr.bf16.mxu0 0
    %5225 = vmatpush1.bf16.msra.mxu0 %v1185
    %5226 = vmatprep.subr.bf16.mxu0 0
    %5227 = vmatpush1.bf16.msra.mxu0 0
    %5228 = vmatprep.subr.bf16.mxu0 0
    %5229 = vmatpush1.bf16.msra.mxu0 0
    %5230 = vmatprep.subr.bf16.mxu0 0
    %5231 = vmatpush1.bf16.msra.mxu0 0
    %5232 = vmatprep.subr.bf16.mxu0 0
    %5233 = vmatpush1.bf16.msra.mxu0 0
    %5234 = vmatprep.subr.bf16.mxu0 0
    %5235 = vmatpush1.bf16.msra.mxu0 0
    %5236 = vmatprep.subr.bf16.mxu0 0
    %5237 = vmatpush1.bf16.msra.mxu0 0
    %5238 = vmatprep.subr.bf16.mxu0 0
    %5239 = vmatpush1.bf16.msra.mxu0 0
    %5240 = vmatprep.subr.bf16.mxu0 0
    %5241 = vmatpush1.bf16.msra.mxu0 0
    %5242 = vmatprep.subr.bf16.mxu0 0
    %5243 = vmatpush1.bf16.msra.mxu0 0
    %5244 = vmatprep.subr.bf16.mxu0 0
    %5245 = vmatpush1.bf16.msra.mxu0 0
    %5246 = vmatprep.subr.bf16.mxu0 0
    %5247 = vmatpush1.bf16.msra.mxu0 0
    %5248 = vmatprep.subr.bf16.mxu0 0
    %5249 = vmatpush1.bf16.msra.mxu0 0
    %5250 = vmatprep.subr.bf16.mxu0 0
    %5251 = vmatpush1.bf16.msra.mxu0 0
    %5252 = vmatprep.subr.bf16.mxu0 0
    %5253 = vmatpush1.bf16.msra.mxu0 0
    %5254 = vmatprep.mubr.bf16.mxu0 0
    %5255 = vmatmul.mubr.bf16.gmra.mrb[0].mxu0 %v5133
    %v5256 = vpop.f32.mrb[0].mxu0
    %v5257 = vadd.f32 %v5217, %v5256
    %v5258 = vpop.f32.mrb[0].mxu0
    %v5259 = vpop.f32.mrb[0].mxu0
    %v5260 = vpop.f32.mrb[0].mxu0
    %5261 = vdwg.mxu0
    %v5262 = vadd.f32 %v5257, %v240
    %v5263 = vxor.u32 %v5262, 2147483648
    %v5264 = vmul.f32 %v5263, 1.442695
    %v5265 = vpow.pop %v5264
    %v5266 = vadd.f32 %v5265, 1.0
    %v5267 = vrcp.pop %v5266
    %v5268 = vmul.f32 1.0, %v5267
    %5269 = vmatprep.subr.bf16.mxu0 0
    %5270 = vmatpush1.bf16.msra.mxu0 %v1248
    %5271 = vmatprep.subr.bf16.mxu0 0
    %5272 = vmatpush1.bf16.msra.mxu0 %v1249
    %5273 = vmatprep.subr.bf16.mxu0 0
    %5274 = vmatpush1.bf16.msra.mxu0 0
    %5275 = vmatprep.subr.bf16.mxu0 0
    %5276 = vmatpush1.bf16.msra.mxu0 0
    %5277 = vmatprep.subr.bf16.mxu0 0
    %5278 = vmatpush1.bf16.msra.mxu0 0
    %5279 = vmatprep.subr.bf16.mxu0 0
    %5280 = vmatpush1.bf16.msra.mxu0 0
    %5281 = vmatprep.subr.bf16.mxu0 0
    %5282 = vmatpush1.bf16.msra.mxu0 0
    %5283 = vmatprep.subr.bf16.mxu0 0
    %5284 = vmatpush1.bf16.msra.mxu0 0
    %5285 = vmatprep.subr.bf16.mxu0 0
    %5286 = vmatpush1.bf16.msra.mxu0 0
    %5287 = vmatprep.subr.bf16.mxu0 0
    %5288 = vmatpush1.bf16.msra.mxu0 0
    %5289 = vmatprep.subr.bf16.mxu0 0
    %5290 = vmatpush1.bf16.msra.mxu0 0
    %5291 = vmatprep.subr.bf16.mxu0 0
    %5292 = vmatpush1.bf16.msra.mxu0 0
    %5293 = vmatprep.subr.bf16.mxu0 0
    %5294 = vmatpush1.bf16.msra.mxu0 0
    %5295 = vmatprep.subr.bf16.mxu0 0
    %5296 = vmatpush1.bf16.msra.mxu0 0
    %5297 = vmatprep.subr.bf16.mxu0 0
    %5298 = vmatpush1.bf16.msra.mxu0 0
    %5299 = vmatprep.subr.bf16.mxu0 0
    %5300 = vmatpush1.bf16.msra.mxu0 0
    %5301 = vmatprep.mubr.bf16.mxu0 0
    %5302 = vmatmul.mubr.bf16.gmra.mrb[0].mxu0 %v5133
    %v5303 = vpop.f32.mrb[0].mxu0
    %v5304 = vadd.f32 %v248, %v5303
    %v5305 = vpop.f32.mrb[0].mxu0
    %v5306 = vpop.f32.mrb[0].mxu0
    %v5307 = vpop.f32.mrb[0].mxu0
    %5308 = vdwg.mxu0
    %5309 = vmatprep.subr.bf16.mxu0 0
    %5310 = vmatpush1.bf16.msra.mxu0 %v1305
    %5311 = vmatprep.subr.bf16.mxu0 0
    %5312 = vmatpush1.bf16.msra.mxu0 %v1306
    %5313 = vmatprep.subr.bf16.mxu0 0
    %5314 = vmatpush1.bf16.msra.mxu0 0
    %5315 = vmatprep.subr.bf16.mxu0 0
    %5316 = vmatpush1.bf16.msra.mxu0 0
    %5317 = vmatprep.subr.bf16.mxu0 0
    %5318 = vmatpush1.bf16.msra.mxu0 0
    %5319 = vmatprep.subr.bf16.mxu0 0
    %5320 = vmatpush1.bf16.msra.mxu0 0
    %5321 = vmatprep.subr.bf16.mxu0 0
    %5322 = vmatpush1.bf16.msra.mxu0 0
    %5323 = vmatprep.subr.bf16.mxu0 0
    %5324 = vmatpush1.bf16.msra.mxu0 0
    %5325 = vmatprep.subr.bf16.mxu0 0
    %5326 = vmatpush1.bf16.msra.mxu0 0
    %5327 = vmatprep.subr.bf16.mxu0 0
    %5328 = vmatpush1.bf16.msra.mxu0 0
    %5329 = vmatprep.subr.bf16.mxu0 0
    %5330 = vmatpush1.bf16.msra.mxu0 0
    %5331 = vmatprep.subr.bf16.mxu0 0
    %5332 = vmatpush1.bf16.msra.mxu0 0
    %5333 = vmatprep.subr.bf16.mxu0 0
    %5334 = vmatpush1.bf16.msra.mxu0 0
    %5335 = vmatprep.subr.bf16.mxu0 0
    %5336 = vmatpush1.bf16.msra.mxu0 0
    %5337 = vmatprep.subr.bf16.mxu0 0
    %5338 = vmatpush1.bf16.msra.mxu0 0
    %5339 = vmatprep.subr.bf16.mxu0 0
    %5340 = vmatpush1.bf16.msra.mxu0 0
    %5341 = vmatprep.mubr.bf16.mxu0 0
    %5342 = vmatmul.mubr.bf16.gmra.mrb[0].mxu0 %v5090
    %v5343 = vpop.f32.mrb[0].mxu0
    %v5344 = vadd.f32 %v256, %v5343
    %v5345 = vpop.f32.mrb[0].mxu0
    %v5346 = vpop.f32.mrb[0].mxu0
    %v5347 = vpop.f32.mrb[0].mxu0
    %5348 = vdwg.mxu0
    %v5349 = vmul.f32 %v5181, %v5344
    %v5350 = vadd.f32 %v5304, %v5349
    %v5351 = vtanh.pop %v5350
    %v5352 = vsub.f32 1.0, %v5268
    %v5353 = vmul.f32 %v5352, %v5351
    %v5354 = vmul.f32 %v5268, %v4555
    %v5355 = vadd.f32 %v5353, %v5354
    %s5356 = scalar_lea.vmem [#allocation2], 6
    %v5357 = vld [vmem:[%s5356] sm:$0x1]
    %5358 = vmatprep.subr.bf16.mxu0 0
    %5359 = vmatpush1.bf16.msra.mxu0 %v274
    %5360 = vmatprep.subr.bf16.mxu0 0
    %5361 = vmatpush1.bf16.msra.mxu0 %v275
    %5362 = vmatprep.subr.bf16.mxu0 0
    %5363 = vmatpush1.bf16.msra.mxu0 0
    %5364 = vmatprep.subr.bf16.mxu0 0
    %5365 = vmatpush1.bf16.msra.mxu0 0
    %5366 = vmatprep.subr.bf16.mxu0 0
    %5367 = vmatpush1.bf16.msra.mxu0 0
    %5368 = vmatprep.subr.bf16.mxu0 0
    %5369 = vmatpush1.bf16.msra.mxu0 0
    %5370 = vmatprep.subr.bf16.mxu0 0
    %5371 = vmatpush1.bf16.msra.mxu0 0
    %5372 = vmatprep.subr.bf16.mxu0 0
    %5373 = vmatpush1.bf16.msra.mxu0 0
    %5374 = vmatprep.subr.bf16.mxu0 0
    %5375 = vmatpush1.bf16.msra.mxu0 0
    %5376 = vmatprep.subr.bf16.mxu0 0
    %5377 = vmatpush1.bf16.msra.mxu0 0
    %5378 = vmatprep.subr.bf16.mxu0 0
    %5379 = vmatpush1.bf16.msra.mxu0 0
    %5380 = vmatprep.subr.bf16.mxu0 0
    %5381 = vmatpush1.bf16.msra.mxu0 0
    %5382 = vmatprep.subr.bf16.mxu0 0
    %5383 = vmatpush1.bf16.msra.mxu0 0
    %5384 = vmatprep.subr.bf16.mxu0 0
    %5385 = vmatpush1.bf16.msra.mxu0 0
    %5386 = vmatprep.subr.bf16.mxu0 0
    %5387 = vmatpush1.bf16.msra.mxu0 0
    %5388 = vmatprep.subr.bf16.mxu0 0
    %5389 = vmatpush1.bf16.msra.mxu0 0
    %5390 = vmatprep.mubr.bf16.mxu0 0
    %5391 = vmatmul.mubr.bf16.gmra.mrb[0].mxu0 %v4864
    %v5392 = vpop.f32.mrb[0].mxu0
    %v5393 = vadd.f32 0.0, %v5392
    %v5394 = vpop.f32.mrb[0].mxu0
    %v5395 = vpop.f32.mrb[0].mxu0
    %v5396 = vpop.f32.mrb[0].mxu0
    %5397 = vdwg.mxu0
    %v5399 = vsel %vm331, %v5357, 0
    %5401 = vmatprep.subr.bf16.mxu0 0
    %5402 = vmatpush1.bf16.msra.mxu0 %v328
    %5403 = vmatprep.subr.bf16.mxu0 0
    %5404 = vmatpush1.bf16.msra.mxu0 %v337
    %5405 = vmatprep.subr.bf16.mxu0 0
    %5406 = vmatpush1.bf16.msra.mxu0 0
    %5407 = vmatprep.subr.bf16.mxu0 0
    %5408 = vmatpush1.bf16.msra.mxu0 0
    %5409 = vmatprep.subr.bf16.mxu0 0
    %5410 = vmatpush1.bf16.msra.mxu0 0
    %5411 = vmatprep.subr.bf16.mxu0 0
    %5412 = vmatpush1.bf16.msra.mxu0 0
    %5413 = vmatprep.subr.bf16.mxu0 0
    %5414 = vmatpush1.bf16.msra.mxu0 0
    %5415 = vmatprep.subr.bf16.mxu0 0
    %5416 = vmatpush1.bf16.msra.mxu0 0
    %5417 = vmatprep.subr.bf16.mxu0 0
    %5418 = vmatpush1.bf16.msra.mxu0 0
    %5419 = vmatprep.subr.bf16.mxu0 0
    %5420 = vmatpush1.bf16.msra.mxu0 0
    %5421 = vmatprep.subr.bf16.mxu0 0
    %5422 = vmatpush1.bf16.msra.mxu0 0
    %5423 = vmatprep.subr.bf16.mxu0 0
    %5424 = vmatpush1.bf16.msra.mxu0 0
    %5425 = vmatprep.subr.bf16.mxu0 0
    %5426 = vmatpush1.bf16.msra.mxu0 0
    %5427 = vmatprep.subr.bf16.mxu0 0
    %5428 = vmatpush1.bf16.msra.mxu0 0
    %5429 = vmatprep.subr.bf16.mxu0 0
    %5430 = vmatpush1.bf16.msra.mxu0 0
    %5431 = vmatprep.subr.bf16.mxu0 0
    %5432 = vmatpush1.bf16.msra.mxu0 0
    %5433 = vmatprep.mubr.bf16.mxu0 0
    %5434 = vmatmul.mubr.bf16.gmra.mrb[0].mxu0 %v5399
    %v5435 = vpop.f32.mrb[0].mxu0
    %v5436 = vadd.f32 %v5393, %v5435
    %v5437 = vpop.f32.mrb[0].mxu0
    %v5438 = vpop.f32.mrb[0].mxu0
    %v5439 = vpop.f32.mrb[0].mxu0
    %5440 = vdwg.mxu0
    %v5441 = vadd.f32 %v5436, %v170
    %v5442 = vxor.u32 %v5441, 2147483648
    %v5443 = vmul.f32 %v5442, 1.442695
    %v5444 = vpow.pop %v5443
    %v5445 = vadd.f32 %v5444, 1.0
    %v5446 = vrcp.pop %v5445
    %v5447 = vmul.f32 1.0, %v5446
    %5448 = vmatprep.subr.bf16.mxu0 0
    %5449 = vmatpush1.bf16.msra.mxu0 %v403
    %5450 = vmatprep.subr.bf16.mxu0 0
    %5451 = vmatpush1.bf16.msra.mxu0 %v404
    %5452 = vmatprep.subr.bf16.mxu0 0
    %5453 = vmatpush1.bf16.msra.mxu0 0
    %5454 = vmatprep.subr.bf16.mxu0 0
    %5455 = vmatpush1.bf16.msra.mxu0 0
    %5456 = vmatprep.subr.bf16.mxu0 0
    %5457 = vmatpush1.bf16.msra.mxu0 0
    %5458 = vmatprep.subr.bf16.mxu0 0
    %5459 = vmatpush1.bf16.msra.mxu0 0
    %5460 = vmatprep.subr.bf16.mxu0 0
    %5461 = vmatpush1.bf16.msra.mxu0 0
    %5462 = vmatprep.subr.bf16.mxu0 0
    %5463 = vmatpush1.bf16.msra.mxu0 0
    %5464 = vmatprep.subr.bf16.mxu0 0
    %5465 = vmatpush1.bf16.msra.mxu0 0
    %5466 = vmatprep.subr.bf16.mxu0 0
    %5467 = vmatpush1.bf16.msra.mxu0 0
    %5468 = vmatprep.subr.bf16.mxu0 0
    %5469 = vmatpush1.bf16.msra.mxu0 0
    %5470 = vmatprep.subr.bf16.mxu0 0
    %5471 = vmatpush1.bf16.msra.mxu0 0
    %5472 = vmatprep.subr.bf16.mxu0 0
    %5473 = vmatpush1.bf16.msra.mxu0 0
    %5474 = vmatprep.subr.bf16.mxu0 0
    %5475 = vmatpush1.bf16.msra.mxu0 0
    %5476 = vmatprep.subr.bf16.mxu0 0
    %5477 = vmatpush1.bf16.msra.mxu0 0
    %5478 = vmatprep.subr.bf16.mxu0 0
    %5479 = vmatpush1.bf16.msra.mxu0 0
    %5480 = vmatprep.mubr.bf16.mxu0 0
    %5481 = vmatmul.mubr.bf16.gmra.mrb[0].mxu0 %v4864
    %v5482 = vpop.f32.mrb[0].mxu0
    %v5483 = vadd.f32 0.0, %v5482
    %v5484 = vpop.f32.mrb[0].mxu0
    %v5485 = vpop.f32.mrb[0].mxu0
    %v5486 = vpop.f32.mrb[0].mxu0
    %5487 = vdwg.mxu0
    %5488 = vmatprep.subr.bf16.mxu0 0
    %5489 = vmatpush1.bf16.msra.mxu0 %v453
    %5490 = vmatprep.subr.bf16.mxu0 0
    %5491 = vmatpush1.bf16.msra.mxu0 %v457
    %5492 = vmatprep.subr.bf16.mxu0 0
    %5493 = vmatpush1.bf16.msra.mxu0 0
    %5494 = vmatprep.subr.bf16.mxu0 0
    %5495 = vmatpush1.bf16.msra.mxu0 0
    %5496 = vmatprep.subr.bf16.mxu0 0
    %5497 = vmatpush1.bf16.msra.mxu0 0
    %5498 = vmatprep.subr.bf16.mxu0 0
    %5499 = vmatpush1.bf16.msra.mxu0 0
    %5500 = vmatprep.subr.bf16.mxu0 0
    %5501 = vmatpush1.bf16.msra.mxu0 0
    %5502 = vmatprep.subr.bf16.mxu0 0
    %5503 = vmatpush1.bf16.msra.mxu0 0
    %5504 = vmatprep.subr.bf16.mxu0 0
    %5505 = vmatpush1.bf16.msra.mxu0 0
    %5506 = vmatprep.subr.bf16.mxu0 0
    %5507 = vmatpush1.bf16.msra.mxu0 0
    %5508 = vmatprep.subr.bf16.mxu0 0
    %5509 = vmatpush1.bf16.msra.mxu0 0
    %5510 = vmatprep.subr.bf16.mxu0 0
    %5511 = vmatpush1.bf16.msra.mxu0 0
    %5512 = vmatprep.subr.bf16.mxu0 0
    %5513 = vmatpush1.bf16.msra.mxu0 0
    %5514 = vmatprep.subr.bf16.mxu0 0
    %5515 = vmatpush1.bf16.msra.mxu0 0
    %5516 = vmatprep.subr.bf16.mxu0 0
    %5517 = vmatpush1.bf16.msra.mxu0 0
    %5518 = vmatprep.subr.bf16.mxu0 0
    %5519 = vmatpush1.bf16.msra.mxu0 0
    %5520 = vmatprep.mubr.bf16.mxu0 0
    %5521 = vmatmul.mubr.bf16.gmra.mrb[0].mxu0 %v5399
    %v5522 = vpop.f32.mrb[0].mxu0
    %v5523 = vadd.f32 %v5483, %v5522
    %v5524 = vpop.f32.mrb[0].mxu0
    %v5525 = vpop.f32.mrb[0].mxu0
    %v5526 = vpop.f32.mrb[0].mxu0
    %5527 = vdwg.mxu0
    %v5528 = vadd.f32 %v5523, %v178
    %v5529 = vxor.u32 %v5528, 2147483648
    %v5530 = vmul.f32 %v5529, 1.442695
    %v5531 = vpow.pop %v5530
    %v5532 = vadd.f32 %v5531, 1.0
    %v5533 = vrcp.pop %v5532
    %v5534 = vmul.f32 1.0, %v5533
    %5535 = vmatprep.subr.bf16.mxu0 0
    %5536 = vmatpush1.bf16.msra.mxu0 %v516
    %5537 = vmatprep.subr.bf16.mxu0 0
    %5538 = vmatpush1.bf16.msra.mxu0 %v520
    %5539 = vmatprep.subr.bf16.mxu0 0
    %5540 = vmatpush1.bf16.msra.mxu0 0
    %5541 = vmatprep.subr.bf16.mxu0 0
    %5542 = vmatpush1.bf16.msra.mxu0 0
    %5543 = vmatprep.subr.bf16.mxu0 0
    %5544 = vmatpush1.bf16.msra.mxu0 0
    %5545 = vmatprep.subr.bf16.mxu0 0
    %5546 = vmatpush1.bf16.msra.mxu0 0
    %5547 = vmatprep.subr.bf16.mxu0 0
    %5548 = vmatpush1.bf16.msra.mxu0 0
    %5549 = vmatprep.subr.bf16.mxu0 0
    %5550 = vmatpush1.bf16.msra.mxu0 0
    %5551 = vmatprep.subr.bf16.mxu0 0
    %5552 = vmatpush1.bf16.msra.mxu0 0
    %5553 = vmatprep.subr.bf16.mxu0 0
    %5554 = vmatpush1.bf16.msra.mxu0 0
    %5555 = vmatprep.subr.bf16.mxu0 0
    %5556 = vmatpush1.bf16.msra.mxu0 0
    %5557 = vmatprep.subr.bf16.mxu0 0
    %5558 = vmatpush1.bf16.msra.mxu0 0
    %5559 = vmatprep.subr.bf16.mxu0 0
    %5560 = vmatpush1.bf16.msra.mxu0 0
    %5561 = vmatprep.subr.bf16.mxu0 0
    %5562 = vmatpush1.bf16.msra.mxu0 0
    %5563 = vmatprep.subr.bf16.mxu0 0
    %5564 = vmatpush1.bf16.msra.mxu0 0
    %5565 = vmatprep.subr.bf16.mxu0 0
    %5566 = vmatpush1.bf16.msra.mxu0 0
    %5567 = vmatprep.mubr.bf16.mxu0 0
    %5568 = vmatmul.mubr.bf16.gmra.mrb[0].mxu0 %v5399
    %v5569 = vpop.f32.mrb[0].mxu0
    %v5570 = vadd.f32 %v186, %v5569
    %v5571 = vpop.f32.mrb[0].mxu0
    %v5572 = vpop.f32.mrb[0].mxu0
    %v5573 = vpop.f32.mrb[0].mxu0
    %5574 = vdwg.mxu0
    %5575 = vmatprep.subr.bf16.mxu0 0
    %5576 = vmatpush1.bf16.msra.mxu0 %v575
    %5577 = vmatprep.subr.bf16.mxu0 0
    %5578 = vmatpush1.bf16.msra.mxu0 %v576
    %5579 = vmatprep.subr.bf16.mxu0 0
    %5580 = vmatpush1.bf16.msra.mxu0 0
    %5581 = vmatprep.subr.bf16.mxu0 0
    %5582 = vmatpush1.bf16.msra.mxu0 0
    %5583 = vmatprep.subr.bf16.mxu0 0
    %5584 = vmatpush1.bf16.msra.mxu0 0
    %5585 = vmatprep.subr.bf16.mxu0 0
    %5586 = vmatpush1.bf16.msra.mxu0 0
    %5587 = vmatprep.subr.bf16.mxu0 0
    %5588 = vmatpush1.bf16.msra.mxu0 0
    %5589 = vmatprep.subr.bf16.mxu0 0
    %5590 = vmatpush1.bf16.msra.mxu0 0
    %5591 = vmatprep.subr.bf16.mxu0 0
    %5592 = vmatpush1.bf16.msra.mxu0 0
    %5593 = vmatprep.subr.bf16.mxu0 0
    %5594 = vmatpush1.bf16.msra.mxu0 0
    %5595 = vmatprep.subr.bf16.mxu0 0
    %5596 = vmatpush1.bf16.msra.mxu0 0
    %5597 = vmatprep.subr.bf16.mxu0 0
    %5598 = vmatpush1.bf16.msra.mxu0 0
    %5599 = vmatprep.subr.bf16.mxu0 0
    %5600 = vmatpush1.bf16.msra.mxu0 0
    %5601 = vmatprep.subr.bf16.mxu0 0
    %5602 = vmatpush1.bf16.msra.mxu0 0
    %5603 = vmatprep.subr.bf16.mxu0 0
    %5604 = vmatpush1.bf16.msra.mxu0 0
    %5605 = vmatprep.subr.bf16.mxu0 0
    %5606 = vmatpush1.bf16.msra.mxu0 0
    %5607 = vmatprep.mubr.bf16.mxu0 0
    %5608 = vmatmul.mubr.bf16.gmra.mrb[0].mxu0 %v4864
    %v5609 = vpop.f32.mrb[0].mxu0
    %v5610 = vadd.f32 %v194, %v5609
    %v5611 = vpop.f32.mrb[0].mxu0
    %v5612 = vpop.f32.mrb[0].mxu0
    %v5613 = vpop.f32.mrb[0].mxu0
    %5614 = vdwg.mxu0
    %v5615 = vmul.f32 %v5447, %v5610
    %v5616 = vadd.f32 %v5570, %v5615
    %v5617 = vtanh.pop %v5616
    %v5618 = vsub.f32 1.0, %v5534
    %v5619 = vmul.f32 %v5618, %v5617
    %v5620 = vmul.f32 %v5534, %v4821
    %v5621 = vadd.f32 %v5619, %v5620
    %v5622 = vpack.c.bf16 %v5621, %v5621
    %5623 = vmatprep.subr.bf16.mxu0 0
    %5624 = vmatpush1.bf16.msra.mxu0 %v643
    %5625 = vmatprep.subr.bf16.mxu0 0
    %5626 = vmatpush1.bf16.msra.mxu0 %v644
    %5627 = vmatprep.subr.bf16.mxu0 0
    %5628 = vmatpush1.bf16.msra.mxu0 0
    %5629 = vmatprep.subr.bf16.mxu0 0
    %5630 = vmatpush1.bf16.msra.mxu0 0
    %5631 = vmatprep.subr.bf16.mxu0 0
    %5632 = vmatpush1.bf16.msra.mxu0 0
    %5633 = vmatprep.subr.bf16.mxu0 0
    %5634 = vmatpush1.bf16.msra.mxu0 0
    %5635 = vmatprep.subr.bf16.mxu0 0
    %5636 = vmatpush1.bf16.msra.mxu0 0
    %5637 = vmatprep.subr.bf16.mxu0 0
    %5638 = vmatpush1.bf16.msra.mxu0 0
    %5639 = vmatprep.subr.bf16.mxu0 0
    %5640 = vmatpush1.bf16.msra.mxu0 0
    %5641 = vmatprep.subr.bf16.mxu0 0
    %5642 = vmatpush1.bf16.msra.mxu0 0
    %5643 = vmatprep.subr.bf16.mxu0 0
    %5644 = vmatpush1.bf16.msra.mxu0 0
    %5645 = vmatprep.subr.bf16.mxu0 0
    %5646 = vmatpush1.bf16.msra.mxu0 0
    %5647 = vmatprep.subr.bf16.mxu0 0
    %5648 = vmatpush1.bf16.msra.mxu0 0
    %5649 = vmatprep.subr.bf16.mxu0 0
    %5650 = vmatpush1.bf16.msra.mxu0 0
    %5651 = vmatprep.subr.bf16.mxu0 0
    %5652 = vmatpush1.bf16.msra.mxu0 0
    %5653 = vmatprep.subr.bf16.mxu0 0
    %5654 = vmatpush1.bf16.msra.mxu0 0
    %5655 = vmatprep.mubr.bf16.mxu0 0
    %5656 = vmatmul.mubr.bf16.gmra.mrb[0].mxu0 %v5133
    %v5657 = vpop.f32.mrb[0].mxu0
    %v5658 = vadd.f32 0.0, %v5657
    %v5659 = vpop.f32.mrb[0].mxu0
    %v5660 = vpop.f32.mrb[0].mxu0
    %v5661 = vpop.f32.mrb[0].mxu0
    %5662 = vdwg.mxu0
    %v5664 = vsel %vm278, %v5622, 0
    %5666 = vmatprep.subr.bf16.mxu0 0
    %5667 = vmatpush1.bf16.msra.mxu0 %v695
    %5668 = vmatprep.subr.bf16.mxu0 0
    %5669 = vmatpush1.bf16.msra.mxu0 %v696
    %5670 = vmatprep.subr.bf16.mxu0 0
    %5671 = vmatpush1.bf16.msra.mxu0 0
    %5672 = vmatprep.subr.bf16.mxu0 0
    %5673 = vmatpush1.bf16.msra.mxu0 0
    %5674 = vmatprep.subr.bf16.mxu0 0
    %5675 = vmatpush1.bf16.msra.mxu0 0
    %5676 = vmatprep.subr.bf16.mxu0 0
    %5677 = vmatpush1.bf16.msra.mxu0 0
    %5678 = vmatprep.subr.bf16.mxu0 0
    %5679 = vmatpush1.bf16.msra.mxu0 0
    %5680 = vmatprep.subr.bf16.mxu0 0
    %5681 = vmatpush1.bf16.msra.mxu0 0
    %5682 = vmatprep.subr.bf16.mxu0 0
    %5683 = vmatpush1.bf16.msra.mxu0 0
    %5684 = vmatprep.subr.bf16.mxu0 0
    %5685 = vmatpush1.bf16.msra.mxu0 0
    %5686 = vmatprep.subr.bf16.mxu0 0
    %5687 = vmatpush1.bf16.msra.mxu0 0
    %5688 = vmatprep.subr.bf16.mxu0 0
    %5689 = vmatpush1.bf16.msra.mxu0 0
    %5690 = vmatprep.subr.bf16.mxu0 0
    %5691 = vmatpush1.bf16.msra.mxu0 0
    %5692 = vmatprep.subr.bf16.mxu0 0
    %5693 = vmatpush1.bf16.msra.mxu0 0
    %5694 = vmatprep.subr.bf16.mxu0 0
    %5695 = vmatpush1.bf16.msra.mxu0 0
    %5696 = vmatprep.subr.bf16.mxu0 0
    %5697 = vmatpush1.bf16.msra.mxu0 0
    %5698 = vmatprep.mubr.bf16.mxu0 0
    %5699 = vmatmul.mubr.bf16.gmra.mrb[0].mxu0 %v5664
    %v5700 = vpop.f32.mrb[0].mxu0
    %v5701 = vadd.f32 %v5658, %v5700
    %v5702 = vpop.f32.mrb[0].mxu0
    %v5703 = vpop.f32.mrb[0].mxu0
    %v5704 = vpop.f32.mrb[0].mxu0
    %5705 = vdwg.mxu0
    %v5706 = vadd.f32 %v5701, %v201
    %v5707 = vxor.u32 %v5706, 2147483648
    %v5708 = vmul.f32 %v5707, 1.442695
    %v5709 = vpow.pop %v5708
    %v5710 = vadd.f32 %v5709, 1.0
    %v5711 = vrcp.pop %v5710
    %v5712 = vmul.f32 1.0, %v5711
    %5713 = vmatprep.subr.bf16.mxu0 0
    %5714 = vmatpush1.bf16.msra.mxu0 %v767
    %5715 = vmatprep.subr.bf16.mxu0 0
    %5716 = vmatpush1.bf16.msra.mxu0 %v768
    %5717 = vmatprep.subr.bf16.mxu0 0
    %5718 = vmatpush1.bf16.msra.mxu0 0
    %5719 = vmatprep.subr.bf16.mxu0 0
    %5720 = vmatpush1.bf16.msra.mxu0 0
    %5721 = vmatprep.subr.bf16.mxu0 0
    %5722 = vmatpush1.bf16.msra.mxu0 0
    %5723 = vmatprep.subr.bf16.mxu0 0
    %5724 = vmatpush1.bf16.msra.mxu0 0
    %5725 = vmatprep.subr.bf16.mxu0 0
    %5726 = vmatpush1.bf16.msra.mxu0 0
    %5727 = vmatprep.subr.bf16.mxu0 0
    %5728 = vmatpush1.bf16.msra.mxu0 0
    %5729 = vmatprep.subr.bf16.mxu0 0
    %5730 = vmatpush1.bf16.msra.mxu0 0
    %5731 = vmatprep.subr.bf16.mxu0 0
    %5732 = vmatpush1.bf16.msra.mxu0 0
    %5733 = vmatprep.subr.bf16.mxu0 0
    %5734 = vmatpush1.bf16.msra.mxu0 0
    %5735 = vmatprep.subr.bf16.mxu0 0
    %5736 = vmatpush1.bf16.msra.mxu0 0
    %5737 = vmatprep.subr.bf16.mxu0 0
    %5738 = vmatpush1.bf16.msra.mxu0 0
    %5739 = vmatprep.subr.bf16.mxu0 0
    %5740 = vmatpush1.bf16.msra.mxu0 0
    %5741 = vmatprep.subr.bf16.mxu0 0
    %5742 = vmatpush1.bf16.msra.mxu0 0
    %5743 = vmatprep.subr.bf16.mxu0 0
    %5744 = vmatpush1.bf16.msra.mxu0 0
    %5745 = vmatprep.mubr.bf16.mxu0 0
    %5746 = vmatmul.mubr.bf16.gmra.mrb[0].mxu0 %v5133
    %v5747 = vpop.f32.mrb[0].mxu0
    %v5748 = vadd.f32 0.0, %v5747
    %v5749 = vpop.f32.mrb[0].mxu0
    %v5750 = vpop.f32.mrb[0].mxu0
    %v5751 = vpop.f32.mrb[0].mxu0
    %5752 = vdwg.mxu0
    %5753 = vmatprep.subr.bf16.mxu0 0
    %5754 = vmatpush1.bf16.msra.mxu0 %v819
    %5755 = vmatprep.subr.bf16.mxu0 0
    %5756 = vmatpush1.bf16.msra.mxu0 %v820
    %5757 = vmatprep.subr.bf16.mxu0 0
    %5758 = vmatpush1.bf16.msra.mxu0 0
    %5759 = vmatprep.subr.bf16.mxu0 0
    %5760 = vmatpush1.bf16.msra.mxu0 0
    %5761 = vmatprep.subr.bf16.mxu0 0
    %5762 = vmatpush1.bf16.msra.mxu0 0
    %5763 = vmatprep.subr.bf16.mxu0 0
    %5764 = vmatpush1.bf16.msra.mxu0 0
    %5765 = vmatprep.subr.bf16.mxu0 0
    %5766 = vmatpush1.bf16.msra.mxu0 0
    %5767 = vmatprep.subr.bf16.mxu0 0
    %5768 = vmatpush1.bf16.msra.mxu0 0
    %5769 = vmatprep.subr.bf16.mxu0 0
    %5770 = vmatpush1.bf16.msra.mxu0 0
    %5771 = vmatprep.subr.bf16.mxu0 0
    %5772 = vmatpush1.bf16.msra.mxu0 0
    %5773 = vmatprep.subr.bf16.mxu0 0
    %5774 = vmatpush1.bf16.msra.mxu0 0
    %5775 = vmatprep.subr.bf16.mxu0 0
    %5776 = vmatpush1.bf16.msra.mxu0 0
    %5777 = vmatprep.subr.bf16.mxu0 0
    %5778 = vmatpush1.bf16.msra.mxu0 0
    %5779 = vmatprep.subr.bf16.mxu0 0
    %5780 = vmatpush1.bf16.msra.mxu0 0
    %5781 = vmatprep.subr.bf16.mxu0 0
    %5782 = vmatpush1.bf16.msra.mxu0 0
    %5783 = vmatprep.subr.bf16.mxu0 0
    %5784 = vmatpush1.bf16.msra.mxu0 0
    %5785 = vmatprep.mubr.bf16.mxu0 0
    %5786 = vmatmul.mubr.bf16.gmra.mrb[0].mxu0 %v5664
    %v5787 = vpop.f32.mrb[0].mxu0
    %v5788 = vadd.f32 %v5748, %v5787
    %v5789 = vpop.f32.mrb[0].mxu0
    %v5790 = vpop.f32.mrb[0].mxu0
    %v5791 = vpop.f32.mrb[0].mxu0
    %5792 = vdwg.mxu0
    %v5793 = vadd.f32 %v5788, %v209
    %v5794 = vxor.u32 %v5793, 2147483648
    %v5795 = vmul.f32 %v5794, 1.442695
    %v5796 = vpow.pop %v5795
    %v5797 = vadd.f32 %v5796, 1.0
    %v5798 = vrcp.pop %v5797
    %v5799 = vmul.f32 1.0, %v5798
    %5800 = vmatprep.subr.bf16.mxu0 0
    %5801 = vmatpush1.bf16.msra.mxu0 %v883
    %5802 = vmatprep.subr.bf16.mxu0 0
    %5803 = vmatpush1.bf16.msra.mxu0 %v884
    %5804 = vmatprep.subr.bf16.mxu0 0
    %5805 = vmatpush1.bf16.msra.mxu0 0
    %5806 = vmatprep.subr.bf16.mxu0 0
    %5807 = vmatpush1.bf16.msra.mxu0 0
    %5808 = vmatprep.subr.bf16.mxu0 0
    %5809 = vmatpush1.bf16.msra.mxu0 0
    %5810 = vmatprep.subr.bf16.mxu0 0
    %5811 = vmatpush1.bf16.msra.mxu0 0
    %5812 = vmatprep.subr.bf16.mxu0 0
    %5813 = vmatpush1.bf16.msra.mxu0 0
    %5814 = vmatprep.subr.bf16.mxu0 0
    %5815 = vmatpush1.bf16.msra.mxu0 0
    %5816 = vmatprep.subr.bf16.mxu0 0
    %5817 = vmatpush1.bf16.msra.mxu0 0
    %5818 = vmatprep.subr.bf16.mxu0 0
    %5819 = vmatpush1.bf16.msra.mxu0 0
    %5820 = vmatprep.subr.bf16.mxu0 0
    %5821 = vmatpush1.bf16.msra.mxu0 0
    %5822 = vmatprep.subr.bf16.mxu0 0
    %5823 = vmatpush1.bf16.msra.mxu0 0
    %5824 = vmatprep.subr.bf16.mxu0 0
    %5825 = vmatpush1.bf16.msra.mxu0 0
    %5826 = vmatprep.subr.bf16.mxu0 0
    %5827 = vmatpush1.bf16.msra.mxu0 0
    %5828 = vmatprep.subr.bf16.mxu0 0
    %5829 = vmatpush1.bf16.msra.mxu0 0
    %5830 = vmatprep.subr.bf16.mxu0 0
    %5831 = vmatpush1.bf16.msra.mxu0 0
    %5832 = vmatprep.mubr.bf16.mxu0 0
    %5833 = vmatmul.mubr.bf16.gmra.mrb[0].mxu0 %v5664
    %v5834 = vpop.f32.mrb[0].mxu0
    %v5835 = vadd.f32 %v217, %v5834
    %v5836 = vpop.f32.mrb[0].mxu0
    %v5837 = vpop.f32.mrb[0].mxu0
    %v5838 = vpop.f32.mrb[0].mxu0
    %5839 = vdwg.mxu0
    %5840 = vmatprep.subr.bf16.mxu0 0
    %5841 = vmatpush1.bf16.msra.mxu0 %v940
    %5842 = vmatprep.subr.bf16.mxu0 0
    %5843 = vmatpush1.bf16.msra.mxu0 %v941
    %5844 = vmatprep.subr.bf16.mxu0 0
    %5845 = vmatpush1.bf16.msra.mxu0 0
    %5846 = vmatprep.subr.bf16.mxu0 0
    %5847 = vmatpush1.bf16.msra.mxu0 0
    %5848 = vmatprep.subr.bf16.mxu0 0
    %5849 = vmatpush1.bf16.msra.mxu0 0
    %5850 = vmatprep.subr.bf16.mxu0 0
    %5851 = vmatpush1.bf16.msra.mxu0 0
    %5852 = vmatprep.subr.bf16.mxu0 0
    %5853 = vmatpush1.bf16.msra.mxu0 0
    %5854 = vmatprep.subr.bf16.mxu0 0
    %5855 = vmatpush1.bf16.msra.mxu0 0
    %5856 = vmatprep.subr.bf16.mxu0 0
    %5857 = vmatpush1.bf16.msra.mxu0 0
    %5858 = vmatprep.subr.bf16.mxu0 0
    %5859 = vmatpush1.bf16.msra.mxu0 0
    %5860 = vmatprep.subr.bf16.mxu0 0
    %5861 = vmatpush1.bf16.msra.mxu0 0
    %5862 = vmatprep.subr.bf16.mxu0 0
    %5863 = vmatpush1.bf16.msra.mxu0 0
    %5864 = vmatprep.subr.bf16.mxu0 0
    %5865 = vmatpush1.bf16.msra.mxu0 0
    %5866 = vmatprep.subr.bf16.mxu0 0
    %5867 = vmatpush1.bf16.msra.mxu0 0
    %5868 = vmatprep.subr.bf16.mxu0 0
    %5869 = vmatpush1.bf16.msra.mxu0 0
    %5870 = vmatprep.subr.bf16.mxu0 0
    %5871 = vmatpush1.bf16.msra.mxu0 0
    %5872 = vmatprep.mubr.bf16.mxu0 0
    %5873 = vmatmul.mubr.bf16.gmra.mrb[0].mxu0 %v5133
    %v5874 = vpop.f32.mrb[0].mxu0
    %v5875 = vadd.f32 %v225, %v5874
    %v5876 = vpop.f32.mrb[0].mxu0
    %v5877 = vpop.f32.mrb[0].mxu0
    %v5878 = vpop.f32.mrb[0].mxu0
    %5879 = vdwg.mxu0
    %v5880 = vmul.f32 %v5712, %v5875
    %v5881 = vadd.f32 %v5835, %v5880
    %v5882 = vtanh.pop %v5881
    %v5883 = vsub.f32 1.0, %v5799
    %v5884 = vmul.f32 %v5883, %v5882
    %v5885 = vmul.f32 %v5799, %v5086
    %v5886 = vadd.f32 %v5884, %v5885
    %v5887 = vpack.c.bf16 %v5886, %v5886
    %v5888 = vpack.c.bf16 %v5355, %v5355
    %v5890 = vsel %vm278, %v5888, 0
    %5892 = vmatprep.subr.bf16.mxu0 0
    %5893 = vmatpush1.bf16.msra.mxu0 %v1008
    %5894 = vmatprep.subr.bf16.mxu0 0
    %5895 = vmatpush1.bf16.msra.mxu0 %v1009
    %5896 = vmatprep.subr.bf16.mxu0 0
    %5897 = vmatpush1.bf16.msra.mxu0 0
    %5898 = vmatprep.subr.bf16.mxu0 0
    %5899 = vmatpush1.bf16.msra.mxu0 0
    %5900 = vmatprep.subr.bf16.mxu0 0
    %5901 = vmatpush1.bf16.msra.mxu0 0
    %5902 = vmatprep.subr.bf16.mxu0 0
    %5903 = vmatpush1.bf16.msra.mxu0 0
    %5904 = vmatprep.subr.bf16.mxu0 0
    %5905 = vmatpush1.bf16.msra.mxu0 0
    %5906 = vmatprep.subr.bf16.mxu0 0
    %5907 = vmatpush1.bf16.msra.mxu0 0
    %5908 = vmatprep.subr.bf16.mxu0 0
    %5909 = vmatpush1.bf16.msra.mxu0 0
    %5910 = vmatprep.subr.bf16.mxu0 0
    %5911 = vmatpush1.bf16.msra.mxu0 0
    %5912 = vmatprep.subr.bf16.mxu0 0
    %5913 = vmatpush1.bf16.msra.mxu0 0
    %5914 = vmatprep.subr.bf16.mxu0 0
    %5915 = vmatpush1.bf16.msra.mxu0 0
    %5916 = vmatprep.subr.bf16.mxu0 0
    %5917 = vmatpush1.bf16.msra.mxu0 0
    %5918 = vmatprep.subr.bf16.mxu0 0
    %5919 = vmatpush1.bf16.msra.mxu0 0
    %5920 = vmatprep.subr.bf16.mxu0 0
    %5921 = vmatpush1.bf16.msra.mxu0 0
    %5922 = vmatprep.subr.bf16.mxu0 0
    %5923 = vmatpush1.bf16.msra.mxu0 0
    %5924 = vmatprep.mubr.bf16.mxu0 0
    %5925 = vmatmul.mubr.bf16.gmra.mrb[0].mxu0 %v5890
    %v5926 = vpop.f32.mrb[0].mxu0
    %v5927 = vadd.f32 0.0, %v5926
    %v5928 = vpop.f32.mrb[0].mxu0
    %v5929 = vpop.f32.mrb[0].mxu0
    %v5930 = vpop.f32.mrb[0].mxu0
    %5931 = vdwg.mxu0
    %v5933 = vsel %vm278, %v5887, 0
    %5935 = vmatprep.subr.bf16.mxu0 0
    %5936 = vmatpush1.bf16.msra.mxu0 %v1060
    %5937 = vmatprep.subr.bf16.mxu0 0
    %5938 = vmatpush1.bf16.msra.mxu0 %v1061
    %5939 = vmatprep.subr.bf16.mxu0 0
    %5940 = vmatpush1.bf16.msra.mxu0 0
    %5941 = vmatprep.subr.bf16.mxu0 0
    %5942 = vmatpush1.bf16.msra.mxu0 0
    %5943 = vmatprep.subr.bf16.mxu0 0
    %5944 = vmatpush1.bf16.msra.mxu0 0
    %5945 = vmatprep.subr.bf16.mxu0 0
    %5946 = vmatpush1.bf16.msra.mxu0 0
    %5947 = vmatprep.subr.bf16.mxu0 0
    %5948 = vmatpush1.bf16.msra.mxu0 0
    %5949 = vmatprep.subr.bf16.mxu0 0
    %5950 = vmatpush1.bf16.msra.mxu0 0
    %5951 = vmatprep.subr.bf16.mxu0 0
    %5952 = vmatpush1.bf16.msra.mxu0 0
    %5953 = vmatprep.subr.bf16.mxu0 0
    %5954 = vmatpush1.bf16.msra.mxu0 0
    %5955 = vmatprep.subr.bf16.mxu0 0
    %5956 = vmatpush1.bf16.msra.mxu0 0
    %5957 = vmatprep.subr.bf16.mxu0 0
    %5958 = vmatpush1.bf16.msra.mxu0 0
    %5959 = vmatprep.subr.bf16.mxu0 0
    %5960 = vmatpush1.bf16.msra.mxu0 0
    %5961 = vmatprep.subr.bf16.mxu0 0
    %5962 = vmatpush1.bf16.msra.mxu0 0
    %5963 = vmatprep.subr.bf16.mxu0 0
    %5964 = vmatpush1.bf16.msra.mxu0 0
    %5965 = vmatprep.subr.bf16.mxu0 0
    %5966 = vmatpush1.bf16.msra.mxu0 0
    %5967 = vmatprep.mubr.bf16.mxu0 0
    %5968 = vmatmul.mubr.bf16.gmra.mrb[0].mxu0 %v5933
    %v5969 = vpop.f32.mrb[0].mxu0
    %v5970 = vadd.f32 %v5927, %v5969
    %v5971 = vpop.f32.mrb[0].mxu0
    %v5972 = vpop.f32.mrb[0].mxu0
    %v5973 = vpop.f32.mrb[0].mxu0
    %5974 = vdwg.mxu0
    %v5975 = vadd.f32 %v5970, %v232
    %v5976 = vxor.u32 %v5975, 2147483648
    %v5977 = vmul.f32 %v5976, 1.442695
    %v5978 = vpow.pop %v5977
    %v5979 = vadd.f32 %v5978, 1.0
    %v5980 = vrcp.pop %v5979
    %v5981 = vmul.f32 1.0, %v5980
    %5982 = vmatprep.subr.bf16.mxu0 0
    %5983 = vmatpush1.bf16.msra.mxu0 %v1132
    %5984 = vmatprep.subr.bf16.mxu0 0
    %5985 = vmatpush1.bf16.msra.mxu0 %v1133
    %5986 = vmatprep.subr.bf16.mxu0 0
    %5987 = vmatpush1.bf16.msra.mxu0 0
    %5988 = vmatprep.subr.bf16.mxu0 0
    %5989 = vmatpush1.bf16.msra.mxu0 0
    %5990 = vmatprep.subr.bf16.mxu0 0
    %5991 = vmatpush1.bf16.msra.mxu0 0
    %5992 = vmatprep.subr.bf16.mxu0 0
    %5993 = vmatpush1.bf16.msra.mxu0 0
    %5994 = vmatprep.subr.bf16.mxu0 0
    %5995 = vmatpush1.bf16.msra.mxu0 0
    %5996 = vmatprep.subr.bf16.mxu0 0
    %5997 = vmatpush1.bf16.msra.mxu0 0
    %5998 = vmatprep.subr.bf16.mxu0 0
    %5999 = vmatpush1.bf16.msra.mxu0 0
    %6000 = vmatprep.subr.bf16.mxu0 0
    %6001 = vmatpush1.bf16.msra.mxu0 0
    %6002 = vmatprep.subr.bf16.mxu0 0
    %6003 = vmatpush1.bf16.msra.mxu0 0
    %6004 = vmatprep.subr.bf16.mxu0 0
    %6005 = vmatpush1.bf16.msra.mxu0 0
    %6006 = vmatprep.subr.bf16.mxu0 0
    %6007 = vmatpush1.bf16.msra.mxu0 0
    %6008 = vmatprep.subr.bf16.mxu0 0
    %6009 = vmatpush1.bf16.msra.mxu0 0
    %6010 = vmatprep.subr.bf16.mxu0 0
    %6011 = vmatpush1.bf16.msra.mxu0 0
    %6012 = vmatprep.subr.bf16.mxu0 0
    %6013 = vmatpush1.bf16.msra.mxu0 0
    %6014 = vmatprep.mubr.bf16.mxu0 0
    %6015 = vmatmul.mubr.bf16.gmra.mrb[0].mxu0 %v5890
    %v6016 = vpop.f32.mrb[0].mxu0
    %v6017 = vadd.f32 0.0, %v6016
    %v6018 = vpop.f32.mrb[0].mxu0
    %v6019 = vpop.f32.mrb[0].mxu0
    %v6020 = vpop.f32.mrb[0].mxu0
    %6021 = vdwg.mxu0
    %6022 = vmatprep.subr.bf16.mxu0 0
    %6023 = vmatpush1.bf16.msra.mxu0 %v1184
    %6024 = vmatprep.subr.bf16.mxu0 0
    %6025 = vmatpush1.bf16.msra.mxu0 %v1185
    %6026 = vmatprep.subr.bf16.mxu0 0
    %6027 = vmatpush1.bf16.msra.mxu0 0
    %6028 = vmatprep.subr.bf16.mxu0 0
    %6029 = vmatpush1.bf16.msra.mxu0 0
    %6030 = vmatprep.subr.bf16.mxu0 0
    %6031 = vmatpush1.bf16.msra.mxu0 0
    %6032 = vmatprep.subr.bf16.mxu0 0
    %6033 = vmatpush1.bf16.msra.mxu0 0
    %6034 = vmatprep.subr.bf16.mxu0 0
    %6035 = vmatpush1.bf16.msra.mxu0 0
    %6036 = vmatprep.subr.bf16.mxu0 0
    %6037 = vmatpush1.bf16.msra.mxu0 0
    %6038 = vmatprep.subr.bf16.mxu0 0
    %6039 = vmatpush1.bf16.msra.mxu0 0
    %6040 = vmatprep.subr.bf16.mxu0 0
    %6041 = vmatpush1.bf16.msra.mxu0 0
    %6042 = vmatprep.subr.bf16.mxu0 0
    %6043 = vmatpush1.bf16.msra.mxu0 0
    %6044 = vmatprep.subr.bf16.mxu0 0
    %6045 = vmatpush1.bf16.msra.mxu0 0
    %6046 = vmatprep.subr.bf16.mxu0 0
    %6047 = vmatpush1.bf16.msra.mxu0 0
    %6048 = vmatprep.subr.bf16.mxu0 0
    %6049 = vmatpush1.bf16.msra.mxu0 0
    %6050 = vmatprep.subr.bf16.mxu0 0
    %6051 = vmatpush1.bf16.msra.mxu0 0
    %6052 = vmatprep.subr.bf16.mxu0 0
    %6053 = vmatpush1.bf16.msra.mxu0 0
    %6054 = vmatprep.mubr.bf16.mxu0 0
    %6055 = vmatmul.mubr.bf16.gmra.mrb[0].mxu0 %v5933
    %v6056 = vpop.f32.mrb[0].mxu0
    %v6057 = vadd.f32 %v6017, %v6056
    %v6058 = vpop.f32.mrb[0].mxu0
    %v6059 = vpop.f32.mrb[0].mxu0
    %v6060 = vpop.f32.mrb[0].mxu0
    %6061 = vdwg.mxu0
    %v6062 = vadd.f32 %v6057, %v240
    %v6063 = vxor.u32 %v6062, 2147483648
    %v6064 = vmul.f32 %v6063, 1.442695
    %v6065 = vpow.pop %v6064
    %v6066 = vadd.f32 %v6065, 1.0
    %v6067 = vrcp.pop %v6066
    %v6068 = vmul.f32 1.0, %v6067
    %6069 = vmatprep.subr.bf16.mxu0 0
    %6070 = vmatpush1.bf16.msra.mxu0 %v1248
    %6071 = vmatprep.subr.bf16.mxu0 0
    %6072 = vmatpush1.bf16.msra.mxu0 %v1249
    %6073 = vmatprep.subr.bf16.mxu0 0
    %6074 = vmatpush1.bf16.msra.mxu0 0
    %6075 = vmatprep.subr.bf16.mxu0 0
    %6076 = vmatpush1.bf16.msra.mxu0 0
    %6077 = vmatprep.subr.bf16.mxu0 0
    %6078 = vmatpush1.bf16.msra.mxu0 0
    %6079 = vmatprep.subr.bf16.mxu0 0
    %6080 = vmatpush1.bf16.msra.mxu0 0
    %6081 = vmatprep.subr.bf16.mxu0 0
    %6082 = vmatpush1.bf16.msra.mxu0 0
    %6083 = vmatprep.subr.bf16.mxu0 0
    %6084 = vmatpush1.bf16.msra.mxu0 0
    %6085 = vmatprep.subr.bf16.mxu0 0
    %6086 = vmatpush1.bf16.msra.mxu0 0
    %6087 = vmatprep.subr.bf16.mxu0 0
    %6088 = vmatpush1.bf16.msra.mxu0 0
    %6089 = vmatprep.subr.bf16.mxu0 0
    %6090 = vmatpush1.bf16.msra.mxu0 0
    %6091 = vmatprep.subr.bf16.mxu0 0
    %6092 = vmatpush1.bf16.msra.mxu0 0
    %6093 = vmatprep.subr.bf16.mxu0 0
    %6094 = vmatpush1.bf16.msra.mxu0 0
    %6095 = vmatprep.subr.bf16.mxu0 0
    %6096 = vmatpush1.bf16.msra.mxu0 0
    %6097 = vmatprep.subr.bf16.mxu0 0
    %6098 = vmatpush1.bf16.msra.mxu0 0
    %6099 = vmatprep.subr.bf16.mxu0 0
    %6100 = vmatpush1.bf16.msra.mxu0 0
    %6101 = vmatprep.mubr.bf16.mxu0 0
    %6102 = vmatmul.mubr.bf16.gmra.mrb[0].mxu0 %v5933
    %v6103 = vpop.f32.mrb[0].mxu0
    %v6104 = vadd.f32 %v248, %v6103
    %v6105 = vpop.f32.mrb[0].mxu0
    %v6106 = vpop.f32.mrb[0].mxu0
    %v6107 = vpop.f32.mrb[0].mxu0
    %6108 = vdwg.mxu0
    %6109 = vmatprep.subr.bf16.mxu0 0
    %6110 = vmatpush1.bf16.msra.mxu0 %v1305
    %6111 = vmatprep.subr.bf16.mxu0 0
    %6112 = vmatpush1.bf16.msra.mxu0 %v1306
    %6113 = vmatprep.subr.bf16.mxu0 0
    %6114 = vmatpush1.bf16.msra.mxu0 0
    %6115 = vmatprep.subr.bf16.mxu0 0
    %6116 = vmatpush1.bf16.msra.mxu0 0
    %6117 = vmatprep.subr.bf16.mxu0 0
    %6118 = vmatpush1.bf16.msra.mxu0 0
    %6119 = vmatprep.subr.bf16.mxu0 0
    %6120 = vmatpush1.bf16.msra.mxu0 0
    %6121 = vmatprep.subr.bf16.mxu0 0
    %6122 = vmatpush1.bf16.msra.mxu0 0
    %6123 = vmatprep.subr.bf16.mxu0 0
    %6124 = vmatpush1.bf16.msra.mxu0 0
    %6125 = vmatprep.subr.bf16.mxu0 0
    %6126 = vmatpush1.bf16.msra.mxu0 0
    %6127 = vmatprep.subr.bf16.mxu0 0
    %6128 = vmatpush1.bf16.msra.mxu0 0
    %6129 = vmatprep.subr.bf16.mxu0 0
    %6130 = vmatpush1.bf16.msra.mxu0 0
    %6131 = vmatprep.subr.bf16.mxu0 0
    %6132 = vmatpush1.bf16.msra.mxu0 0
    %6133 = vmatprep.subr.bf16.mxu0 0
    %6134 = vmatpush1.bf16.msra.mxu0 0
    %6135 = vmatprep.subr.bf16.mxu0 0
    %6136 = vmatpush1.bf16.msra.mxu0 0
    %6137 = vmatprep.subr.bf16.mxu0 0
    %6138 = vmatpush1.bf16.msra.mxu0 0
    %6139 = vmatprep.subr.bf16.mxu0 0
    %6140 = vmatpush1.bf16.msra.mxu0 0
    %6141 = vmatprep.mubr.bf16.mxu0 0
    %6142 = vmatmul.mubr.bf16.gmra.mrb[0].mxu0 %v5890
    %v6143 = vpop.f32.mrb[0].mxu0
    %v6144 = vadd.f32 %v256, %v6143
    %v6145 = vpop.f32.mrb[0].mxu0
    %v6146 = vpop.f32.mrb[0].mxu0
    %v6147 = vpop.f32.mrb[0].mxu0
    %6148 = vdwg.mxu0
    %v6149 = vmul.f32 %v5981, %v6144
    %v6150 = vadd.f32 %v6104, %v6149
    %v6151 = vtanh.pop %v6150
    %v6152 = vsub.f32 1.0, %v6068
    %v6153 = vmul.f32 %v6152, %v6151
    %v6154 = vmul.f32 %v6068, %v5355
    %v6155 = vadd.f32 %v6153, %v6154
    %s6156 = scalar_lea.vmem [#allocation2], 7
    %v6157 = vld [vmem:[%s6156] sm:$0x1]
    %6158 = vmatprep.subr.bf16.mxu0 0
    %6159 = vmatpush1.bf16.msra.mxu0 %v274
    %6160 = vmatprep.subr.bf16.mxu0 0
    %6161 = vmatpush1.bf16.msra.mxu0 %v275
    %6162 = vmatprep.subr.bf16.mxu0 0
    %6163 = vmatpush1.bf16.msra.mxu0 0
    %6164 = vmatprep.subr.bf16.mxu0 0
    %6165 = vmatpush1.bf16.msra.mxu0 0
    %6166 = vmatprep.subr.bf16.mxu0 0
    %6167 = vmatpush1.bf16.msra.mxu0 0
    %6168 = vmatprep.subr.bf16.mxu0 0
    %6169 = vmatpush1.bf16.msra.mxu0 0
    %6170 = vmatprep.subr.bf16.mxu0 0
    %6171 = vmatpush1.bf16.msra.mxu0 0
    %6172 = vmatprep.subr.bf16.mxu0 0
    %6173 = vmatpush1.bf16.msra.mxu0 0
    %6174 = vmatprep.subr.bf16.mxu0 0
    %6175 = vmatpush1.bf16.msra.mxu0 0
    %6176 = vmatprep.subr.bf16.mxu0 0
    %6177 = vmatpush1.bf16.msra.mxu0 0
    %6178 = vmatprep.subr.bf16.mxu0 0
    %6179 = vmatpush1.bf16.msra.mxu0 0
    %6180 = vmatprep.subr.bf16.mxu0 0
    %6181 = vmatpush1.bf16.msra.mxu0 0
    %6182 = vmatprep.subr.bf16.mxu0 0
    %6183 = vmatpush1.bf16.msra.mxu0 0
    %6184 = vmatprep.subr.bf16.mxu0 0
    %6185 = vmatpush1.bf16.msra.mxu0 0
    %6186 = vmatprep.subr.bf16.mxu0 0
    %6187 = vmatpush1.bf16.msra.mxu0 0
    %6188 = vmatprep.subr.bf16.mxu0 0
    %6189 = vmatpush1.bf16.msra.mxu0 0
    %6190 = vmatprep.mubr.bf16.mxu0 0
    %6191 = vmatmul.mubr.bf16.gmra.mrb[0].mxu0 %v5664
    %v6192 = vpop.f32.mrb[0].mxu0
    %v6193 = vadd.f32 0.0, %v6192
    %v6194 = vpop.f32.mrb[0].mxu0
    %v6195 = vpop.f32.mrb[0].mxu0
    %v6196 = vpop.f32.mrb[0].mxu0
    %6197 = vdwg.mxu0
    %v6199 = vsel %vm331, %v6157, 0
    %6201 = vmatprep.subr.bf16.mxu0 0
    %6202 = vmatpush1.bf16.msra.mxu0 %v328
    %6203 = vmatprep.subr.bf16.mxu0 0
    %6204 = vmatpush1.bf16.msra.mxu0 %v337
    %6205 = vmatprep.subr.bf16.mxu0 0
    %6206 = vmatpush1.bf16.msra.mxu0 0
    %6207 = vmatprep.subr.bf16.mxu0 0
    %6208 = vmatpush1.bf16.msra.mxu0 0
    %6209 = vmatprep.subr.bf16.mxu0 0
    %6210 = vmatpush1.bf16.msra.mxu0 0
    %6211 = vmatprep.subr.bf16.mxu0 0
    %6212 = vmatpush1.bf16.msra.mxu0 0
    %6213 = vmatprep.subr.bf16.mxu0 0
    %6214 = vmatpush1.bf16.msra.mxu0 0
    %6215 = vmatprep.subr.bf16.mxu0 0
    %6216 = vmatpush1.bf16.msra.mxu0 0
    %6217 = vmatprep.subr.bf16.mxu0 0
    %6218 = vmatpush1.bf16.msra.mxu0 0
    %6219 = vmatprep.subr.bf16.mxu0 0
    %6220 = vmatpush1.bf16.msra.mxu0 0
    %6221 = vmatprep.subr.bf16.mxu0 0
    %6222 = vmatpush1.bf16.msra.mxu0 0
    %6223 = vmatprep.subr.bf16.mxu0 0
    %6224 = vmatpush1.bf16.msra.mxu0 0
    %6225 = vmatprep.subr.bf16.mxu0 0
    %6226 = vmatpush1.bf16.msra.mxu0 0
    %6227 = vmatprep.subr.bf16.mxu0 0
    %6228 = vmatpush1.bf16.msra.mxu0 0
    %6229 = vmatprep.subr.bf16.mxu0 0
    %6230 = vmatpush1.bf16.msra.mxu0 0
    %6231 = vmatprep.subr.bf16.mxu0 0
    %6232 = vmatpush1.bf16.msra.mxu0 0
    %6233 = vmatprep.mubr.bf16.mxu0 0
    %6234 = vmatmul.mubr.bf16.gmra.mrb[0].mxu0 %v6199
    %v6235 = vpop.f32.mrb[0].mxu0
    %v6236 = vadd.f32 %v6193, %v6235
    %v6237 = vpop.f32.mrb[0].mxu0
    %v6238 = vpop.f32.mrb[0].mxu0
    %v6239 = vpop.f32.mrb[0].mxu0
    %6240 = vdwg.mxu0
    %v6241 = vadd.f32 %v6236, %v170
    %v6242 = vxor.u32 %v6241, 2147483648
    %v6243 = vmul.f32 %v6242, 1.442695
    %v6244 = vpow.pop %v6243
    %v6245 = vadd.f32 %v6244, 1.0
    %v6246 = vrcp.pop %v6245
    %v6247 = vmul.f32 1.0, %v6246
    %6248 = vmatprep.subr.bf16.mxu0 0
    %6249 = vmatpush1.bf16.msra.mxu0 %v403
    %6250 = vmatprep.subr.bf16.mxu0 0
    %6251 = vmatpush1.bf16.msra.mxu0 %v404
    %6252 = vmatprep.subr.bf16.mxu0 0
    %6253 = vmatpush1.bf16.msra.mxu0 0
    %6254 = vmatprep.subr.bf16.mxu0 0
    %6255 = vmatpush1.bf16.msra.mxu0 0
    %6256 = vmatprep.subr.bf16.mxu0 0
    %6257 = vmatpush1.bf16.msra.mxu0 0
    %6258 = vmatprep.subr.bf16.mxu0 0
    %6259 = vmatpush1.bf16.msra.mxu0 0
    %6260 = vmatprep.subr.bf16.mxu0 0
    %6261 = vmatpush1.bf16.msra.mxu0 0
    %6262 = vmatprep.subr.bf16.mxu0 0
    %6263 = vmatpush1.bf16.msra.mxu0 0
    %6264 = vmatprep.subr.bf16.mxu0 0
    %6265 = vmatpush1.bf16.msra.mxu0 0
    %6266 = vmatprep.subr.bf16.mxu0 0
    %6267 = vmatpush1.bf16.msra.mxu0 0
    %6268 = vmatprep.subr.bf16.mxu0 0
    %6269 = vmatpush1.bf16.msra.mxu0 0
    %6270 = vmatprep.subr.bf16.mxu0 0
    %6271 = vmatpush1.bf16.msra.mxu0 0
    %6272 = vmatprep.subr.bf16.mxu0 0
    %6273 = vmatpush1.bf16.msra.mxu0 0
    %6274 = vmatprep.subr.bf16.mxu0 0
    %6275 = vmatpush1.bf16.msra.mxu0 0
    %6276 = vmatprep.subr.bf16.mxu0 0
    %6277 = vmatpush1.bf16.msra.mxu0 0
    %6278 = vmatprep.subr.bf16.mxu0 0
    %6279 = vmatpush1.bf16.msra.mxu0 0
    %6280 = vmatprep.mubr.bf16.mxu0 0
    %6281 = vmatmul.mubr.bf16.gmra.mrb[0].mxu0 %v5664
    %v6282 = vpop.f32.mrb[0].mxu0
    %v6283 = vadd.f32 0.0, %v6282
    %v6284 = vpop.f32.mrb[0].mxu0
    %v6285 = vpop.f32.mrb[0].mxu0
    %v6286 = vpop.f32.mrb[0].mxu0
    %6287 = vdwg.mxu0
    %6288 = vmatprep.subr.bf16.mxu0 0
    %6289 = vmatpush1.bf16.msra.mxu0 %v453
    %6290 = vmatprep.subr.bf16.mxu0 0
    %6291 = vmatpush1.bf16.msra.mxu0 %v457
    %6292 = vmatprep.subr.bf16.mxu0 0
    %6293 = vmatpush1.bf16.msra.mxu0 0
    %6294 = vmatprep.subr.bf16.mxu0 0
    %6295 = vmatpush1.bf16.msra.mxu0 0
    %6296 = vmatprep.subr.bf16.mxu0 0
    %6297 = vmatpush1.bf16.msra.mxu0 0
    %6298 = vmatprep.subr.bf16.mxu0 0
    %6299 = vmatpush1.bf16.msra.mxu0 0
    %6300 = vmatprep.subr.bf16.mxu0 0
    %6301 = vmatpush1.bf16.msra.mxu0 0
    %6302 = vmatprep.subr.bf16.mxu0 0
    %6303 = vmatpush1.bf16.msra.mxu0 0
    %6304 = vmatprep.subr.bf16.mxu0 0
    %6305 = vmatpush1.bf16.msra.mxu0 0
    %6306 = vmatprep.subr.bf16.mxu0 0
    %6307 = vmatpush1.bf16.msra.mxu0 0
    %6308 = vmatprep.subr.bf16.mxu0 0
    %6309 = vmatpush1.bf16.msra.mxu0 0
    %6310 = vmatprep.subr.bf16.mxu0 0
    %6311 = vmatpush1.bf16.msra.mxu0 0
    %6312 = vmatprep.subr.bf16.mxu0 0
    %6313 = vmatpush1.bf16.msra.mxu0 0
    %6314 = vmatprep.subr.bf16.mxu0 0
    %6315 = vmatpush1.bf16.msra.mxu0 0
    %6316 = vmatprep.subr.bf16.mxu0 0
    %6317 = vmatpush1.bf16.msra.mxu0 0
    %6318 = vmatprep.subr.bf16.mxu0 0
    %6319 = vmatpush1.bf16.msra.mxu0 0
    %6320 = vmatprep.mubr.bf16.mxu0 0
    %6321 = vmatmul.mubr.bf16.gmra.mrb[0].mxu0 %v6199
    %v6322 = vpop.f32.mrb[0].mxu0
    %v6323 = vadd.f32 %v6283, %v6322
    %v6324 = vpop.f32.mrb[0].mxu0
    %v6325 = vpop.f32.mrb[0].mxu0
    %v6326 = vpop.f32.mrb[0].mxu0
    %6327 = vdwg.mxu0
    %v6328 = vadd.f32 %v6323, %v178
    %v6329 = vxor.u32 %v6328, 2147483648
    %v6330 = vmul.f32 %v6329, 1.442695
    %v6331 = vpow.pop %v6330
    %v6332 = vadd.f32 %v6331, 1.0
    %v6333 = vrcp.pop %v6332
    %v6334 = vmul.f32 1.0, %v6333
    %6335 = vmatprep.subr.bf16.mxu0 0
    %6336 = vmatpush1.bf16.msra.mxu0 %v516
    %6337 = vmatprep.subr.bf16.mxu0 0
    %6338 = vmatpush1.bf16.msra.mxu0 %v520
    %6339 = vmatprep.subr.bf16.mxu0 0
    %6340 = vmatpush1.bf16.msra.mxu0 0
    %6341 = vmatprep.subr.bf16.mxu0 0
    %6342 = vmatpush1.bf16.msra.mxu0 0
    %6343 = vmatprep.subr.bf16.mxu0 0
    %6344 = vmatpush1.bf16.msra.mxu0 0
    %6345 = vmatprep.subr.bf16.mxu0 0
    %6346 = vmatpush1.bf16.msra.mxu0 0
    %6347 = vmatprep.subr.bf16.mxu0 0
    %6348 = vmatpush1.bf16.msra.mxu0 0
    %6349 = vmatprep.subr.bf16.mxu0 0
    %6350 = vmatpush1.bf16.msra.mxu0 0
    %6351 = vmatprep.subr.bf16.mxu0 0
    %6352 = vmatpush1.bf16.msra.mxu0 0
    %6353 = vmatprep.subr.bf16.mxu0 0
    %6354 = vmatpush1.bf16.msra.mxu0 0
    %6355 = vmatprep.subr.bf16.mxu0 0
    %6356 = vmatpush1.bf16.msra.mxu0 0
    %6357 = vmatprep.subr.bf16.mxu0 0
    %6358 = vmatpush1.bf16.msra.mxu0 0
    %6359 = vmatprep.subr.bf16.mxu0 0
    %6360 = vmatpush1.bf16.msra.mxu0 0
    %6361 = vmatprep.subr.bf16.mxu0 0
    %6362 = vmatpush1.bf16.msra.mxu0 0
    %6363 = vmatprep.subr.bf16.mxu0 0
    %6364 = vmatpush1.bf16.msra.mxu0 0
    %6365 = vmatprep.subr.bf16.mxu0 0
    %6366 = vmatpush1.bf16.msra.mxu0 0
    %6367 = vmatprep.mubr.bf16.mxu0 0
    %6368 = vmatmul.mubr.bf16.gmra.mrb[0].mxu0 %v6199
    %v6369 = vpop.f32.mrb[0].mxu0
    %v6370 = vadd.f32 %v186, %v6369
    %v6371 = vpop.f32.mrb[0].mxu0
    %v6372 = vpop.f32.mrb[0].mxu0
    %v6373 = vpop.f32.mrb[0].mxu0
    %6374 = vdwg.mxu0
    %6375 = vmatprep.subr.bf16.mxu0 0
    %6376 = vmatpush1.bf16.msra.mxu0 %v575
    %6377 = vmatprep.subr.bf16.mxu0 0
    %6378 = vmatpush1.bf16.msra.mxu0 %v576
    %6379 = vmatprep.subr.bf16.mxu0 0
    %6380 = vmatpush1.bf16.msra.mxu0 0
    %6381 = vmatprep.subr.bf16.mxu0 0
    %6382 = vmatpush1.bf16.msra.mxu0 0
    %6383 = vmatprep.subr.bf16.mxu0 0
    %6384 = vmatpush1.bf16.msra.mxu0 0
    %6385 = vmatprep.subr.bf16.mxu0 0
    %6386 = vmatpush1.bf16.msra.mxu0 0
    %6387 = vmatprep.subr.bf16.mxu0 0
    %6388 = vmatpush1.bf16.msra.mxu0 0
    %6389 = vmatprep.subr.bf16.mxu0 0
    %6390 = vmatpush1.bf16.msra.mxu0 0
    %6391 = vmatprep.subr.bf16.mxu0 0
    %6392 = vmatpush1.bf16.msra.mxu0 0
    %6393 = vmatprep.subr.bf16.mxu0 0
    %6394 = vmatpush1.bf16.msra.mxu0 0
    %6395 = vmatprep.subr.bf16.mxu0 0
    %6396 = vmatpush1.bf16.msra.mxu0 0
    %6397 = vmatprep.subr.bf16.mxu0 0
    %6398 = vmatpush1.bf16.msra.mxu0 0
    %6399 = vmatprep.subr.bf16.mxu0 0
    %6400 = vmatpush1.bf16.msra.mxu0 0
    %6401 = vmatprep.subr.bf16.mxu0 0
    %6402 = vmatpush1.bf16.msra.mxu0 0
    %6403 = vmatprep.subr.bf16.mxu0 0
    %6404 = vmatpush1.bf16.msra.mxu0 0
    %6405 = vmatprep.subr.bf16.mxu0 0
    %6406 = vmatpush1.bf16.msra.mxu0 0
    %6407 = vmatprep.mubr.bf16.mxu0 0
    %6408 = vmatmul.mubr.bf16.gmra.mrb[0].mxu0 %v5664
    %v6409 = vpop.f32.mrb[0].mxu0
    %v6410 = vadd.f32 %v194, %v6409
    %v6411 = vpop.f32.mrb[0].mxu0
    %v6412 = vpop.f32.mrb[0].mxu0
    %v6413 = vpop.f32.mrb[0].mxu0
    %6414 = vdwg.mxu0
    %v6415 = vmul.f32 %v6247, %v6410
    %v6416 = vadd.f32 %v6370, %v6415
    %v6417 = vtanh.pop %v6416
    %v6418 = vsub.f32 1.0, %v6334
    %v6419 = vmul.f32 %v6418, %v6417
    %v6420 = vmul.f32 %v6334, %v5621
    %v6421 = vadd.f32 %v6419, %v6420
    %v6422 = vpack.c.bf16 %v6421, %v6421
    %6423 = vmatprep.subr.bf16.mxu0 0
    %6424 = vmatpush1.bf16.msra.mxu0 %v643
    %6425 = vmatprep.subr.bf16.mxu0 0
    %6426 = vmatpush1.bf16.msra.mxu0 %v644
    %6427 = vmatprep.subr.bf16.mxu0 0
    %6428 = vmatpush1.bf16.msra.mxu0 0
    %6429 = vmatprep.subr.bf16.mxu0 0
    %6430 = vmatpush1.bf16.msra.mxu0 0
    %6431 = vmatprep.subr.bf16.mxu0 0
    %6432 = vmatpush1.bf16.msra.mxu0 0
    %6433 = vmatprep.subr.bf16.mxu0 0
    %6434 = vmatpush1.bf16.msra.mxu0 0
    %6435 = vmatprep.subr.bf16.mxu0 0
    %6436 = vmatpush1.bf16.msra.mxu0 0
    %6437 = vmatprep.subr.bf16.mxu0 0
    %6438 = vmatpush1.bf16.msra.mxu0 0
    %6439 = vmatprep.subr.bf16.mxu0 0
    %6440 = vmatpush1.bf16.msra.mxu0 0
    %6441 = vmatprep.subr.bf16.mxu0 0
    %6442 = vmatpush1.bf16.msra.mxu0 0
    %6443 = vmatprep.subr.bf16.mxu0 0
    %6444 = vmatpush1.bf16.msra.mxu0 0
    %6445 = vmatprep.subr.bf16.mxu0 0
    %6446 = vmatpush1.bf16.msra.mxu0 0
    %6447 = vmatprep.subr.bf16.mxu0 0
    %6448 = vmatpush1.bf16.msra.mxu0 0
    %6449 = vmatprep.subr.bf16.mxu0 0
    %6450 = vmatpush1.bf16.msra.mxu0 0
    %6451 = vmatprep.subr.bf16.mxu0 0
    %6452 = vmatpush1.bf16.msra.mxu0 0
    %6453 = vmatprep.subr.bf16.mxu0 0
    %6454 = vmatpush1.bf16.msra.mxu0 0
    %6455 = vmatprep.mubr.bf16.mxu0 0
    %6456 = vmatmul.mubr.bf16.gmra.mrb[0].mxu0 %v5933
    %v6457 = vpop.f32.mrb[0].mxu0
    %v6458 = vadd.f32 0.0, %v6457
    %v6459 = vpop.f32.mrb[0].mxu0
    %v6460 = vpop.f32.mrb[0].mxu0
    %v6461 = vpop.f32.mrb[0].mxu0
    %6462 = vdwg.mxu0
    %v6464 = vsel %vm278, %v6422, 0
    %6466 = vmatprep.subr.bf16.mxu0 0
    %6467 = vmatpush1.bf16.msra.mxu0 %v695
    %6468 = vmatprep.subr.bf16.mxu0 0
    %6469 = vmatpush1.bf16.msra.mxu0 %v696
    %6470 = vmatprep.subr.bf16.mxu0 0
    %6471 = vmatpush1.bf16.msra.mxu0 0
    %6472 = vmatprep.subr.bf16.mxu0 0
    %6473 = vmatpush1.bf16.msra.mxu0 0
    %6474 = vmatprep.subr.bf16.mxu0 0
    %6475 = vmatpush1.bf16.msra.mxu0 0
    %6476 = vmatprep.subr.bf16.mxu0 0
    %6477 = vmatpush1.bf16.msra.mxu0 0
    %6478 = vmatprep.subr.bf16.mxu0 0
    %6479 = vmatpush1.bf16.msra.mxu0 0
    %6480 = vmatprep.subr.bf16.mxu0 0
    %6481 = vmatpush1.bf16.msra.mxu0 0
    %6482 = vmatprep.subr.bf16.mxu0 0
    %6483 = vmatpush1.bf16.msra.mxu0 0
    %6484 = vmatprep.subr.bf16.mxu0 0
    %6485 = vmatpush1.bf16.msra.mxu0 0
    %6486 = vmatprep.subr.bf16.mxu0 0
    %6487 = vmatpush1.bf16.msra.mxu0 0
    %6488 = vmatprep.subr.bf16.mxu0 0
    %6489 = vmatpush1.bf16.msra.mxu0 0
    %6490 = vmatprep.subr.bf16.mxu0 0
    %6491 = vmatpush1.bf16.msra.mxu0 0
    %6492 = vmatprep.subr.bf16.mxu0 0
    %6493 = vmatpush1.bf16.msra.mxu0 0
    %6494 = vmatprep.subr.bf16.mxu0 0
    %6495 = vmatpush1.bf16.msra.mxu0 0
    %6496 = vmatprep.subr.bf16.mxu0 0
    %6497 = vmatpush1.bf16.msra.mxu0 0
    %6498 = vmatprep.mubr.bf16.mxu0 0
    %6499 = vmatmul.mubr.bf16.gmra.mrb[0].mxu0 %v6464
    %v6500 = vpop.f32.mrb[0].mxu0
    %v6501 = vadd.f32 %v6458, %v6500
    %v6502 = vpop.f32.mrb[0].mxu0
    %v6503 = vpop.f32.mrb[0].mxu0
    %v6504 = vpop.f32.mrb[0].mxu0
    %6505 = vdwg.mxu0
    %v6506 = vadd.f32 %v6501, %v201
    %v6507 = vxor.u32 %v6506, 2147483648
    %v6508 = vmul.f32 %v6507, 1.442695
    %v6509 = vpow.pop %v6508
    %v6510 = vadd.f32 %v6509, 1.0
    %v6511 = vrcp.pop %v6510
    %v6512 = vmul.f32 1.0, %v6511
    %6513 = vmatprep.subr.bf16.mxu0 0
    %6514 = vmatpush1.bf16.msra.mxu0 %v767
    %6515 = vmatprep.subr.bf16.mxu0 0
    %6516 = vmatpush1.bf16.msra.mxu0 %v768
    %6517 = vmatprep.subr.bf16.mxu0 0
    %6518 = vmatpush1.bf16.msra.mxu0 0
    %6519 = vmatprep.subr.bf16.mxu0 0
    %6520 = vmatpush1.bf16.msra.mxu0 0
    %6521 = vmatprep.subr.bf16.mxu0 0
    %6522 = vmatpush1.bf16.msra.mxu0 0
    %6523 = vmatprep.subr.bf16.mxu0 0
    %6524 = vmatpush1.bf16.msra.mxu0 0
    %6525 = vmatprep.subr.bf16.mxu0 0
    %6526 = vmatpush1.bf16.msra.mxu0 0
    %6527 = vmatprep.subr.bf16.mxu0 0
    %6528 = vmatpush1.bf16.msra.mxu0 0
    %6529 = vmatprep.subr.bf16.mxu0 0
    %6530 = vmatpush1.bf16.msra.mxu0 0
    %6531 = vmatprep.subr.bf16.mxu0 0
    %6532 = vmatpush1.bf16.msra.mxu0 0
    %6533 = vmatprep.subr.bf16.mxu0 0
    %6534 = vmatpush1.bf16.msra.mxu0 0
    %6535 = vmatprep.subr.bf16.mxu0 0
    %6536 = vmatpush1.bf16.msra.mxu0 0
    %6537 = vmatprep.subr.bf16.mxu0 0
    %6538 = vmatpush1.bf16.msra.mxu0 0
    %6539 = vmatprep.subr.bf16.mxu0 0
    %6540 = vmatpush1.bf16.msra.mxu0 0
    %6541 = vmatprep.subr.bf16.mxu0 0
    %6542 = vmatpush1.bf16.msra.mxu0 0
    %6543 = vmatprep.subr.bf16.mxu0 0
    %6544 = vmatpush1.bf16.msra.mxu0 0
    %6545 = vmatprep.mubr.bf16.mxu0 0
    %6546 = vmatmul.mubr.bf16.gmra.mrb[0].mxu0 %v5933
    %v6547 = vpop.f32.mrb[0].mxu0
    %v6548 = vadd.f32 0.0, %v6547
    %v6549 = vpop.f32.mrb[0].mxu0
    %v6550 = vpop.f32.mrb[0].mxu0
    %v6551 = vpop.f32.mrb[0].mxu0
    %6552 = vdwg.mxu0
    %6553 = vmatprep.subr.bf16.mxu0 0
    %6554 = vmatpush1.bf16.msra.mxu0 %v819
    %6555 = vmatprep.subr.bf16.mxu0 0
    %6556 = vmatpush1.bf16.msra.mxu0 %v820
    %6557 = vmatprep.subr.bf16.mxu0 0
    %6558 = vmatpush1.bf16.msra.mxu0 0
    %6559 = vmatprep.subr.bf16.mxu0 0
    %6560 = vmatpush1.bf16.msra.mxu0 0
    %6561 = vmatprep.subr.bf16.mxu0 0
    %6562 = vmatpush1.bf16.msra.mxu0 0
    %6563 = vmatprep.subr.bf16.mxu0 0
    %6564 = vmatpush1.bf16.msra.mxu0 0
    %6565 = vmatprep.subr.bf16.mxu0 0
    %6566 = vmatpush1.bf16.msra.mxu0 0
    %6567 = vmatprep.subr.bf16.mxu0 0
    %6568 = vmatpush1.bf16.msra.mxu0 0
    %6569 = vmatprep.subr.bf16.mxu0 0
    %6570 = vmatpush1.bf16.msra.mxu0 0
    %6571 = vmatprep.subr.bf16.mxu0 0
    %6572 = vmatpush1.bf16.msra.mxu0 0
    %6573 = vmatprep.subr.bf16.mxu0 0
    %6574 = vmatpush1.bf16.msra.mxu0 0
    %6575 = vmatprep.subr.bf16.mxu0 0
    %6576 = vmatpush1.bf16.msra.mxu0 0
    %6577 = vmatprep.subr.bf16.mxu0 0
    %6578 = vmatpush1.bf16.msra.mxu0 0
    %6579 = vmatprep.subr.bf16.mxu0 0
    %6580 = vmatpush1.bf16.msra.mxu0 0
    %6581 = vmatprep.subr.bf16.mxu0 0
    %6582 = vmatpush1.bf16.msra.mxu0 0
    %6583 = vmatprep.subr.bf16.mxu0 0
    %6584 = vmatpush1.bf16.msra.mxu0 0
    %6585 = vmatprep.mubr.bf16.mxu0 0
    %6586 = vmatmul.mubr.bf16.gmra.mrb[0].mxu0 %v6464
    %v6587 = vpop.f32.mrb[0].mxu0
    %v6588 = vadd.f32 %v6548, %v6587
    %v6589 = vpop.f32.mrb[0].mxu0
    %v6590 = vpop.f32.mrb[0].mxu0
    %v6591 = vpop.f32.mrb[0].mxu0
    %6592 = vdwg.mxu0
    %v6593 = vadd.f32 %v6588, %v209
    %v6594 = vxor.u32 %v6593, 2147483648
    %v6595 = vmul.f32 %v6594, 1.442695
    %v6596 = vpow.pop %v6595
    %v6597 = vadd.f32 %v6596, 1.0
    %v6598 = vrcp.pop %v6597
    %v6599 = vmul.f32 1.0, %v6598
    %6600 = vmatprep.subr.bf16.mxu0 0
    %6601 = vmatpush1.bf16.msra.mxu0 %v883
    %6602 = vmatprep.subr.bf16.mxu0 0
    %6603 = vmatpush1.bf16.msra.mxu0 %v884
    %6604 = vmatprep.subr.bf16.mxu0 0
    %6605 = vmatpush1.bf16.msra.mxu0 0
    %6606 = vmatprep.subr.bf16.mxu0 0
    %6607 = vmatpush1.bf16.msra.mxu0 0
    %6608 = vmatprep.subr.bf16.mxu0 0
    %6609 = vmatpush1.bf16.msra.mxu0 0
    %6610 = vmatprep.subr.bf16.mxu0 0
    %6611 = vmatpush1.bf16.msra.mxu0 0
    %6612 = vmatprep.subr.bf16.mxu0 0
    %6613 = vmatpush1.bf16.msra.mxu0 0
    %6614 = vmatprep.subr.bf16.mxu0 0
    %6615 = vmatpush1.bf16.msra.mxu0 0
    %6616 = vmatprep.subr.bf16.mxu0 0
    %6617 = vmatpush1.bf16.msra.mxu0 0
    %6618 = vmatprep.subr.bf16.mxu0 0
    %6619 = vmatpush1.bf16.msra.mxu0 0
    %6620 = vmatprep.subr.bf16.mxu0 0
    %6621 = vmatpush1.bf16.msra.mxu0 0
    %6622 = vmatprep.subr.bf16.mxu0 0
    %6623 = vmatpush1.bf16.msra.mxu0 0
    %6624 = vmatprep.subr.bf16.mxu0 0
    %6625 = vmatpush1.bf16.msra.mxu0 0
    %6626 = vmatprep.subr.bf16.mxu0 0
    %6627 = vmatpush1.bf16.msra.mxu0 0
    %6628 = vmatprep.subr.bf16.mxu0 0
    %6629 = vmatpush1.bf16.msra.mxu0 0
    %6630 = vmatprep.subr.bf16.mxu0 0
    %6631 = vmatpush1.bf16.msra.mxu0 0
    %6632 = vmatprep.mubr.bf16.mxu0 0
    %6633 = vmatmul.mubr.bf16.gmra.mrb[0].mxu0 %v6464
    %v6634 = vpop.f32.mrb[0].mxu0
    %v6635 = vadd.f32 %v217, %v6634
    %v6636 = vpop.f32.mrb[0].mxu0
    %v6637 = vpop.f32.mrb[0].mxu0
    %v6638 = vpop.f32.mrb[0].mxu0
    %6639 = vdwg.mxu0
    %6640 = vmatprep.subr.bf16.mxu0 0
    %6641 = vmatpush1.bf16.msra.mxu0 %v940
    %6642 = vmatprep.subr.bf16.mxu0 0
    %6643 = vmatpush1.bf16.msra.mxu0 %v941
    %6644 = vmatprep.subr.bf16.mxu0 0
    %6645 = vmatpush1.bf16.msra.mxu0 0
    %6646 = vmatprep.subr.bf16.mxu0 0
    %6647 = vmatpush1.bf16.msra.mxu0 0
    %6648 = vmatprep.subr.bf16.mxu0 0
    %6649 = vmatpush1.bf16.msra.mxu0 0
    %6650 = vmatprep.subr.bf16.mxu0 0
    %6651 = vmatpush1.bf16.msra.mxu0 0
    %6652 = vmatprep.subr.bf16.mxu0 0
    %6653 = vmatpush1.bf16.msra.mxu0 0
    %6654 = vmatprep.subr.bf16.mxu0 0
    %6655 = vmatpush1.bf16.msra.mxu0 0
    %6656 = vmatprep.subr.bf16.mxu0 0
    %6657 = vmatpush1.bf16.msra.mxu0 0
    %6658 = vmatprep.subr.bf16.mxu0 0
    %6659 = vmatpush1.bf16.msra.mxu0 0
    %6660 = vmatprep.subr.bf16.mxu0 0
    %6661 = vmatpush1.bf16.msra.mxu0 0
    %6662 = vmatprep.subr.bf16.mxu0 0
    %6663 = vmatpush1.bf16.msra.mxu0 0
    %6664 = vmatprep.subr.bf16.mxu0 0
    %6665 = vmatpush1.bf16.msra.mxu0 0
    %6666 = vmatprep.subr.bf16.mxu0 0
    %6667 = vmatpush1.bf16.msra.mxu0 0
    %6668 = vmatprep.subr.bf16.mxu0 0
    %6669 = vmatpush1.bf16.msra.mxu0 0
    %6670 = vmatprep.subr.bf16.mxu0 0
    %6671 = vmatpush1.bf16.msra.mxu0 0
    %6672 = vmatprep.mubr.bf16.mxu0 0
    %6673 = vmatmul.mubr.bf16.gmra.mrb[0].mxu0 %v5933
    %v6674 = vpop.f32.mrb[0].mxu0
    %v6675 = vadd.f32 %v225, %v6674
    %v6676 = vpop.f32.mrb[0].mxu0
    %v6677 = vpop.f32.mrb[0].mxu0
    %v6678 = vpop.f32.mrb[0].mxu0
    %6679 = vdwg.mxu0
    %v6680 = vmul.f32 %v6512, %v6675
    %v6681 = vadd.f32 %v6635, %v6680
    %v6682 = vtanh.pop %v6681
    %v6683 = vsub.f32 1.0, %v6599
    %v6684 = vmul.f32 %v6683, %v6682
    %v6685 = vmul.f32 %v6599, %v5886
    %v6686 = vadd.f32 %v6684, %v6685
    %v6687 = vpack.c.bf16 %v6686, %v6686
    %v6688 = vpack.c.bf16 %v6155, %v6155
    %v6690 = vsel %vm278, %v6688, 0
    %6692 = vmatprep.subr.bf16.mxu0 0
    %6693 = vmatpush1.bf16.msra.mxu0 %v1008
    %6694 = vmatprep.subr.bf16.mxu0 0
    %6695 = vmatpush1.bf16.msra.mxu0 %v1009
    %6696 = vmatprep.subr.bf16.mxu0 0
    %6697 = vmatpush1.bf16.msra.mxu0 0
    %6698 = vmatprep.subr.bf16.mxu0 0
    %6699 = vmatpush1.bf16.msra.mxu0 0
    %6700 = vmatprep.subr.bf16.mxu0 0
    %6701 = vmatpush1.bf16.msra.mxu0 0
    %6702 = vmatprep.subr.bf16.mxu0 0
    %6703 = vmatpush1.bf16.msra.mxu0 0
    %6704 = vmatprep.subr.bf16.mxu0 0
    %6705 = vmatpush1.bf16.msra.mxu0 0
    %6706 = vmatprep.subr.bf16.mxu0 0
    %6707 = vmatpush1.bf16.msra.mxu0 0
    %6708 = vmatprep.subr.bf16.mxu0 0
    %6709 = vmatpush1.bf16.msra.mxu0 0
    %6710 = vmatprep.subr.bf16.mxu0 0
    %6711 = vmatpush1.bf16.msra.mxu0 0
    %6712 = vmatprep.subr.bf16.mxu0 0
    %6713 = vmatpush1.bf16.msra.mxu0 0
    %6714 = vmatprep.subr.bf16.mxu0 0
    %6715 = vmatpush1.bf16.msra.mxu0 0
    %6716 = vmatprep.subr.bf16.mxu0 0
    %6717 = vmatpush1.bf16.msra.mxu0 0
    %6718 = vmatprep.subr.bf16.mxu0 0
    %6719 = vmatpush1.bf16.msra.mxu0 0
    %6720 = vmatprep.subr.bf16.mxu0 0
    %6721 = vmatpush1.bf16.msra.mxu0 0
    %6722 = vmatprep.subr.bf16.mxu0 0
    %6723 = vmatpush1.bf16.msra.mxu0 0
    %6724 = vmatprep.mubr.bf16.mxu0 0
    %6725 = vmatmul.mubr.bf16.gmra.mrb[0].mxu0 %v6690
    %v6726 = vpop.f32.mrb[0].mxu0
    %v6727 = vadd.f32 0.0, %v6726
    %v6728 = vpop.f32.mrb[0].mxu0
    %v6729 = vpop.f32.mrb[0].mxu0
    %v6730 = vpop.f32.mrb[0].mxu0
    %6731 = vdwg.mxu0
    %v6733 = vsel %vm278, %v6687, 0
    %6735 = vmatprep.subr.bf16.mxu0 0
    %6736 = vmatpush1.bf16.msra.mxu0 %v1060
    %6737 = vmatprep.subr.bf16.mxu0 0
    %6738 = vmatpush1.bf16.msra.mxu0 %v1061
    %6739 = vmatprep.subr.bf16.mxu0 0
    %6740 = vmatpush1.bf16.msra.mxu0 0
    %6741 = vmatprep.subr.bf16.mxu0 0
    %6742 = vmatpush1.bf16.msra.mxu0 0
    %6743 = vmatprep.subr.bf16.mxu0 0
    %6744 = vmatpush1.bf16.msra.mxu0 0
    %6745 = vmatprep.subr.bf16.mxu0 0
    %6746 = vmatpush1.bf16.msra.mxu0 0
    %6747 = vmatprep.subr.bf16.mxu0 0
    %6748 = vmatpush1.bf16.msra.mxu0 0
    %6749 = vmatprep.subr.bf16.mxu0 0
    %6750 = vmatpush1.bf16.msra.mxu0 0
    %6751 = vmatprep.subr.bf16.mxu0 0
    %6752 = vmatpush1.bf16.msra.mxu0 0
    %6753 = vmatprep.subr.bf16.mxu0 0
    %6754 = vmatpush1.bf16.msra.mxu0 0
    %6755 = vmatprep.subr.bf16.mxu0 0
    %6756 = vmatpush1.bf16.msra.mxu0 0
    %6757 = vmatprep.subr.bf16.mxu0 0
    %6758 = vmatpush1.bf16.msra.mxu0 0
    %6759 = vmatprep.subr.bf16.mxu0 0
    %6760 = vmatpush1.bf16.msra.mxu0 0
    %6761 = vmatprep.subr.bf16.mxu0 0
    %6762 = vmatpush1.bf16.msra.mxu0 0
    %6763 = vmatprep.subr.bf16.mxu0 0
    %6764 = vmatpush1.bf16.msra.mxu0 0
    %6765 = vmatprep.subr.bf16.mxu0 0
    %6766 = vmatpush1.bf16.msra.mxu0 0
    %6767 = vmatprep.mubr.bf16.mxu0 0
    %6768 = vmatmul.mubr.bf16.gmra.mrb[0].mxu0 %v6733
    %v6769 = vpop.f32.mrb[0].mxu0
    %v6770 = vadd.f32 %v6727, %v6769
    %v6771 = vpop.f32.mrb[0].mxu0
    %v6772 = vpop.f32.mrb[0].mxu0
    %v6773 = vpop.f32.mrb[0].mxu0
    %6774 = vdwg.mxu0
    %v6775 = vadd.f32 %v6770, %v232
    %v6776 = vxor.u32 %v6775, 2147483648
    %v6777 = vmul.f32 %v6776, 1.442695
    %v6778 = vpow.pop %v6777
    %v6779 = vadd.f32 %v6778, 1.0
    %v6780 = vrcp.pop %v6779
    %v6781 = vmul.f32 1.0, %v6780
    %6782 = vmatprep.subr.bf16.mxu0 0
    %6783 = vmatpush1.bf16.msra.mxu0 %v1132
    %6784 = vmatprep.subr.bf16.mxu0 0
    %6785 = vmatpush1.bf16.msra.mxu0 %v1133
    %6786 = vmatprep.subr.bf16.mxu0 0
    %6787 = vmatpush1.bf16.msra.mxu0 0
    %6788 = vmatprep.subr.bf16.mxu0 0
    %6789 = vmatpush1.bf16.msra.mxu0 0
    %6790 = vmatprep.subr.bf16.mxu0 0
    %6791 = vmatpush1.bf16.msra.mxu0 0
    %6792 = vmatprep.subr.bf16.mxu0 0
    %6793 = vmatpush1.bf16.msra.mxu0 0
    %6794 = vmatprep.subr.bf16.mxu0 0
    %6795 = vmatpush1.bf16.msra.mxu0 0
    %6796 = vmatprep.subr.bf16.mxu0 0
    %6797 = vmatpush1.bf16.msra.mxu0 0
    %6798 = vmatprep.subr.bf16.mxu0 0
    %6799 = vmatpush1.bf16.msra.mxu0 0
    %6800 = vmatprep.subr.bf16.mxu0 0
    %6801 = vmatpush1.bf16.msra.mxu0 0
    %6802 = vmatprep.subr.bf16.mxu0 0
    %6803 = vmatpush1.bf16.msra.mxu0 0
    %6804 = vmatprep.subr.bf16.mxu0 0
    %6805 = vmatpush1.bf16.msra.mxu0 0
    %6806 = vmatprep.subr.bf16.mxu0 0
    %6807 = vmatpush1.bf16.msra.mxu0 0
    %6808 = vmatprep.subr.bf16.mxu0 0
    %6809 = vmatpush1.bf16.msra.mxu0 0
    %6810 = vmatprep.subr.bf16.mxu0 0
    %6811 = vmatpush1.bf16.msra.mxu0 0
    %6812 = vmatprep.subr.bf16.mxu0 0
    %6813 = vmatpush1.bf16.msra.mxu0 0
    %6814 = vmatprep.mubr.bf16.mxu0 0
    %6815 = vmatmul.mubr.bf16.gmra.mrb[0].mxu0 %v6690
    %v6816 = vpop.f32.mrb[0].mxu0
    %v6817 = vadd.f32 0.0, %v6816
    %v6818 = vpop.f32.mrb[0].mxu0
    %v6819 = vpop.f32.mrb[0].mxu0
    %v6820 = vpop.f32.mrb[0].mxu0
    %6821 = vdwg.mxu0
    %6822 = vmatprep.subr.bf16.mxu0 0
    %6823 = vmatpush1.bf16.msra.mxu0 %v1184
    %6824 = vmatprep.subr.bf16.mxu0 0
    %6825 = vmatpush1.bf16.msra.mxu0 %v1185
    %6826 = vmatprep.subr.bf16.mxu0 0
    %6827 = vmatpush1.bf16.msra.mxu0 0
    %6828 = vmatprep.subr.bf16.mxu0 0
    %6829 = vmatpush1.bf16.msra.mxu0 0
    %6830 = vmatprep.subr.bf16.mxu0 0
    %6831 = vmatpush1.bf16.msra.mxu0 0
    %6832 = vmatprep.subr.bf16.mxu0 0
    %6833 = vmatpush1.bf16.msra.mxu0 0
    %6834 = vmatprep.subr.bf16.mxu0 0
    %6835 = vmatpush1.bf16.msra.mxu0 0
    %6836 = vmatprep.subr.bf16.mxu0 0
    %6837 = vmatpush1.bf16.msra.mxu0 0
    %6838 = vmatprep.subr.bf16.mxu0 0
    %6839 = vmatpush1.bf16.msra.mxu0 0
    %6840 = vmatprep.subr.bf16.mxu0 0
    %6841 = vmatpush1.bf16.msra.mxu0 0
    %6842 = vmatprep.subr.bf16.mxu0 0
    %6843 = vmatpush1.bf16.msra.mxu0 0
    %6844 = vmatprep.subr.bf16.mxu0 0
    %6845 = vmatpush1.bf16.msra.mxu0 0
    %6846 = vmatprep.subr.bf16.mxu0 0
    %6847 = vmatpush1.bf16.msra.mxu0 0
    %6848 = vmatprep.subr.bf16.mxu0 0
    %6849 = vmatpush1.bf16.msra.mxu0 0
    %6850 = vmatprep.subr.bf16.mxu0 0
    %6851 = vmatpush1.bf16.msra.mxu0 0
    %6852 = vmatprep.subr.bf16.mxu0 0
    %6853 = vmatpush1.bf16.msra.mxu0 0
    %6854 = vmatprep.mubr.bf16.mxu0 0
    %6855 = vmatmul.mubr.bf16.gmra.mrb[0].mxu0 %v6733
    %v6856 = vpop.f32.mrb[0].mxu0
    %v6857 = vadd.f32 %v6817, %v6856
    %v6858 = vpop.f32.mrb[0].mxu0
    %v6859 = vpop.f32.mrb[0].mxu0
    %v6860 = vpop.f32.mrb[0].mxu0
    %6861 = vdwg.mxu0
    %v6862 = vadd.f32 %v6857, %v240
    %v6863 = vxor.u32 %v6862, 2147483648
    %v6864 = vmul.f32 %v6863, 1.442695
    %v6865 = vpow.pop %v6864
    %v6866 = vadd.f32 %v6865, 1.0
    %v6867 = vrcp.pop %v6866
    %v6868 = vmul.f32 1.0, %v6867
    %6869 = vmatprep.subr.bf16.mxu0 0
    %6870 = vmatpush1.bf16.msra.mxu0 %v1248
    %6871 = vmatprep.subr.bf16.mxu0 0
    %6872 = vmatpush1.bf16.msra.mxu0 %v1249
    %6873 = vmatprep.subr.bf16.mxu0 0
    %6874 = vmatpush1.bf16.msra.mxu0 0
    %6875 = vmatprep.subr.bf16.mxu0 0
    %6876 = vmatpush1.bf16.msra.mxu0 0
    %6877 = vmatprep.subr.bf16.mxu0 0
    %6878 = vmatpush1.bf16.msra.mxu0 0
    %6879 = vmatprep.subr.bf16.mxu0 0
    %6880 = vmatpush1.bf16.msra.mxu0 0
    %6881 = vmatprep.subr.bf16.mxu0 0
    %6882 = vmatpush1.bf16.msra.mxu0 0
    %6883 = vmatprep.subr.bf16.mxu0 0
    %6884 = vmatpush1.bf16.msra.mxu0 0
    %6885 = vmatprep.subr.bf16.mxu0 0
    %6886 = vmatpush1.bf16.msra.mxu0 0
    %6887 = vmatprep.subr.bf16.mxu0 0
    %6888 = vmatpush1.bf16.msra.mxu0 0
    %6889 = vmatprep.subr.bf16.mxu0 0
    %6890 = vmatpush1.bf16.msra.mxu0 0
    %6891 = vmatprep.subr.bf16.mxu0 0
    %6892 = vmatpush1.bf16.msra.mxu0 0
    %6893 = vmatprep.subr.bf16.mxu0 0
    %6894 = vmatpush1.bf16.msra.mxu0 0
    %6895 = vmatprep.subr.bf16.mxu0 0
    %6896 = vmatpush1.bf16.msra.mxu0 0
    %6897 = vmatprep.subr.bf16.mxu0 0
    %6898 = vmatpush1.bf16.msra.mxu0 0
    %6899 = vmatprep.subr.bf16.mxu0 0
    %6900 = vmatpush1.bf16.msra.mxu0 0
    %6901 = vmatprep.mubr.bf16.mxu0 0
    %6902 = vmatmul.mubr.bf16.gmra.mrb[0].mxu0 %v6733
    %v6903 = vpop.f32.mrb[0].mxu0
    %v6904 = vadd.f32 %v248, %v6903
    %v6905 = vpop.f32.mrb[0].mxu0
    %v6906 = vpop.f32.mrb[0].mxu0
    %v6907 = vpop.f32.mrb[0].mxu0
    %6908 = vdwg.mxu0
    %6909 = vmatprep.subr.bf16.mxu0 0
    %6910 = vmatpush1.bf16.msra.mxu0 %v1305
    %6911 = vmatprep.subr.bf16.mxu0 0
    %6912 = vmatpush1.bf16.msra.mxu0 %v1306
    %6913 = vmatprep.subr.bf16.mxu0 0
    %6914 = vmatpush1.bf16.msra.mxu0 0
    %6915 = vmatprep.subr.bf16.mxu0 0
    %6916 = vmatpush1.bf16.msra.mxu0 0
    %6917 = vmatprep.subr.bf16.mxu0 0
    %6918 = vmatpush1.bf16.msra.mxu0 0
    %6919 = vmatprep.subr.bf16.mxu0 0
    %6920 = vmatpush1.bf16.msra.mxu0 0
    %6921 = vmatprep.subr.bf16.mxu0 0
    %6922 = vmatpush1.bf16.msra.mxu0 0
    %6923 = vmatprep.subr.bf16.mxu0 0
    %6924 = vmatpush1.bf16.msra.mxu0 0
    %6925 = vmatprep.subr.bf16.mxu0 0
    %6926 = vmatpush1.bf16.msra.mxu0 0
    %6927 = vmatprep.subr.bf16.mxu0 0
    %6928 = vmatpush1.bf16.msra.mxu0 0
    %6929 = vmatprep.subr.bf16.mxu0 0
    %6930 = vmatpush1.bf16.msra.mxu0 0
    %6931 = vmatprep.subr.bf16.mxu0 0
    %6932 = vmatpush1.bf16.msra.mxu0 0
    %6933 = vmatprep.subr.bf16.mxu0 0
    %6934 = vmatpush1.bf16.msra.mxu0 0
    %6935 = vmatprep.subr.bf16.mxu0 0
    %6936 = vmatpush1.bf16.msra.mxu0 0
    %6937 = vmatprep.subr.bf16.mxu0 0
    %6938 = vmatpush1.bf16.msra.mxu0 0
    %6939 = vmatprep.subr.bf16.mxu0 0
    %6940 = vmatpush1.bf16.msra.mxu0 0
    %6941 = vmatprep.mubr.bf16.mxu0 0
    %6942 = vmatmul.mubr.bf16.gmra.mrb[0].mxu0 %v6690
    %v6943 = vpop.f32.mrb[0].mxu0
    %v6944 = vadd.f32 %v256, %v6943
    %v6945 = vpop.f32.mrb[0].mxu0
    %v6946 = vpop.f32.mrb[0].mxu0
    %v6947 = vpop.f32.mrb[0].mxu0
    %6948 = vdwg.mxu0
    %v6949 = vmul.f32 %v6781, %v6944
    %v6950 = vadd.f32 %v6904, %v6949
    %v6951 = vtanh.pop %v6950
    %v6952 = vsub.f32 1.0, %v6868
    %v6953 = vmul.f32 %v6952, %v6951
    %v6954 = vmul.f32 %v6868, %v6155
    %v6955 = vadd.f32 %v6953, %v6954
    %v6956 = vld [vmem:[%s10] sm:$0xff]
    %v6957 = vld [vmem:[%s10 + $0x8] sm:$0xff]
    %v6958 = vld [vmem:[%s10 + $0x10] sm:$0xff]
    %v6959 = vld [vmem:[%s10 + $0x18] sm:$0xff]
    %v6960 = vld [vmem:[%s11] sm:$0x1]
    %v6962 = vlaneseq
    %v6963 = vshrl.u32 %v6962, 7
    %v6964 = vsub.s32 0, %v6963
    %v6965 = vrot.slane %v6960, %v6964
    %v6968 = vsel %vm278, %v6955, 0
    %6970 = vmatprep.subr.mxu0 0.0
    %6971 = vmatpush1.msra.mxu0 %v6956
    %6972 = vmatprep.subr.mxu0 0.0
    %6973 = vmatpush1.msra.mxu0 %v6957
    %6974 = vmatprep.subr.mxu0 0.0
    %6975 = vmatpush1.msra.mxu0 %v6958
    %6976 = vmatprep.subr.mxu0 0.0
    %6977 = vmatpush1.msra.mxu0 %v6959
    %6978 = vmatprep.subr.mxu0 0.0
    %6979 = vmatpush1.msra.mxu0 0.0
    %6980 = vmatprep.subr.mxu0 0.0
    %6981 = vmatpush1.msra.mxu0 0.0
    %6982 = vmatprep.subr.mxu0 0.0
    %6983 = vmatpush1.msra.mxu0 0.0
    %6984 = vmatprep.subr.mxu0 0.0
    %6985 = vmatpush1.msra.mxu0 0.0
    %6986 = vmatprep.subr.mxu0 0.0
    %6987 = vmatpush1.msra.mxu0 0.0
    %6988 = vmatprep.subr.mxu0 0.0
    %6989 = vmatpush1.msra.mxu0 0.0
    %6990 = vmatprep.subr.mxu0 0.0
    %6991 = vmatpush1.msra.mxu0 0.0
    %6992 = vmatprep.subr.mxu0 0.0
    %6993 = vmatpush1.msra.mxu0 0.0
    %6994 = vmatprep.subr.mxu0 0.0
    %6995 = vmatpush1.msra.mxu0 0.0
    %6996 = vmatprep.subr.mxu0 0.0
    %6997 = vmatpush1.msra.mxu0 0.0
    %6998 = vmatprep.subr.mxu0 0.0
    %6999 = vmatpush1.msra.mxu0 0.0
    %7000 = vmatprep.subr.mxu0 0.0
    %7001 = vmatpush1.msra.mxu0 0.0
    %7002 = vmatprep.subr.mxu0 0.0
    %7003 = vmatpush1.msra.mxu0 0.0
    %7004 = vmatprep.subr.mxu0 0.0
    %7005 = vmatpush1.msra.mxu0 0.0
    %7006 = vmatprep.subr.mxu0 0.0
    %7007 = vmatpush1.msra.mxu0 0.0
    %7008 = vmatprep.subr.mxu0 0.0
    %7009 = vmatpush1.msra.mxu0 0.0
    %7010 = vmatprep.subr.mxu0 0.0
    %7011 = vmatpush1.msra.mxu0 0.0
    %7012 = vmatprep.subr.mxu0 0.0
    %7013 = vmatpush1.msra.mxu0 0.0
    %7014 = vmatprep.subr.mxu0 0.0
    %7015 = vmatpush1.msra.mxu0 0.0
    %7016 = vmatprep.subr.mxu0 0.0
    %7017 = vmatpush1.msra.mxu0 0.0
    %7018 = vmatprep.subr.mxu0 0.0
    %7019 = vmatpush1.msra.mxu0 0.0
    %7020 = vmatprep.subr.mxu0 0.0
    %7021 = vmatpush1.msra.mxu0 0.0
    %7022 = vmatprep.subr.mxu0 0.0
    %7023 = vmatpush1.msra.mxu0 0.0
    %7024 = vmatprep.subr.mxu0 0.0
    %7025 = vmatpush1.msra.mxu0 0.0
    %7026 = vmatprep.subr.mxu0 0.0
    %7027 = vmatpush1.msra.mxu0 0.0
    %7028 = vmatprep.subr.mxu0 0.0
    %7029 = vmatpush1.msra.mxu0 0.0
    %7030 = vmatprep.subr.mxu0 0.0
    %7031 = vmatpush1.msra.mxu0 0.0
    %7032 = vmatprep.subr.mxu0 0.0
    %7033 = vmatpush1.msra.mxu0 0.0
    %7034 = vmatprep.mubr.f32.mxu0 0.0
    %7035 = vmatmul.mubr.f32.gmra.mrb[0].mxu0 %v6968
    %v7036 = vpop.f32.mrb[0].mxu0
    %v7037 = vadd.f32 %v6965, %v7036
    %v7038 = vpop.f32.mrb[0].mxu0
    %7039 = vdwg.mxu0
    %7040 = vst [vmem:[#allocation17] sm:$0x3] %v7037
    // Predicated region
    $region86: #{tpu_custom_call.1} parent=1 // pred_check
      _
    $region87: #{tpu_custom_call.1} parent=1 // pred_check_branch
      %7042 = sbr.rel (0) target = $region89
    $region88: #{tpu_custom_call.1} parent=1 // pred_region
      %s7044 = ssub.s32 32, 32
      %7045 = vsyncadd [#allocation4], %s7044
      %s7047 = sshll.u32 [#allocation17], 4
      %s7048 = int_to_ptr.vmem [resolvable:$true] %s7047
      %7050 = dma.vmem_to_hbm [thread:$0]  %s7048, 32, %s12, [#allocation4]
    $region89: #{tpu_custom_call.1} parent=1 // pred_fallthru
      _
    // Predicated region
    $region90: #{tpu_custom_call.1} parent=1 // pred_check
      _
    $region91: #{tpu_custom_call.1} parent=1 // pred_check_branch
      %7052 = sbr.rel (0) target = $region93
    $region92: #{tpu_custom_call.1} parent=1 // pred_region
      %7053 = dma.done [#allocation4], 32
    $region93: #{tpu_custom_call.1} parent=1 // pred_fallthru
      _
    %7054 = vsyncpa [#allocation3], 1
    %7055 = vsyncpa [#allocation6], 1
    %7056 = vsyncpa [#allocation9], 1
    %7057 = vsyncpa [#allocation12], 1
    %7058 = vsyncpa [#allocation15], 1
    %7059 = vsyncpa [#allocation4], 1

</llo_original>
